<compile_context>
chip_gen: v5e
topology: v5e:2x2
jax: 0.10.0
libtpu: 0.0.40
codegen_flags: <defaults>
</compile_context>

<pallas_src>
import functools
import math

import jax
import jax.numpy as jnp
import numpy as np
from jax.experimental import pallas as pl
from jax.experimental.pallas import tpu as pltpu


# ----------------------------- fused Pallas kernel ---------------------------


def _make_fused_kernel(B, T, V, E, H, O, n_layers, num_dirs):
    """Fused forward: embedding + LSTM stack (bidirectional) + FC + sigmoid.

    Everything (layers, directions, time) is a static Python loop -> fully unrolled,
    one basic block, all slices static.
    """
    LD = n_layers * num_dirs
    in_dims = [E] + [num_dirs * H] * (n_layers - 1)
    f32 = jnp.float32

    def kernel(tok_ref, emb_ref, wih_ref, whh_ref, b_ref, fcw_ref, fcb_ref,
               st0_ref, sig_ref, stout_ref, xg_a, xg_b, slab_a, slab_b):
        xg_bufs = (xg_a, xg_b)          # gate-aligned hoisted input projections
        slab_bufs = (slab_a, slab_b)    # per-layer output slabs (ping-pong)

        # ---- embedding: one batched one-hot @ table matmul (time-major slab) ----
        tok = tok_ref[...]                                       # (T*B, 1) int32
        iota_v = jax.lax.broadcasted_iota(jnp.int32, (T * B, V), 1)
        onehot = jnp.where(tok == iota_v, 1.0, 0.0).astype(f32)  # (T*B, V)
        x_slab = jnp.dot(onehot, emb_ref[...],
                         preferred_element_type=f32)             # (T*B, E)

        fc_h = [None] * num_dirs   # last-timestep hidden of the final layer (per dir)

        for layer in range(n_layers):
            in_dim = in_dims[layer]
            xg = xg_bufs[layer % 2]
            if layer == 0:
                lin = x_slab                                     # (T*B, E)
            else:
                lin = slab_bufs[(layer - 1) % 2][...]            # (T*B, num_dirs*H)
                # TODO(synk): inter-layer LSTM dropout (drop_prob) skipped — eval mode.

            # hoisted, gate-aligned input projections (+ combined bias), OFF the h->h chain
            for d in range(num_dirs):
                for k in range(4):
                    gidx = (layer * num_dirs + d) * 4 + k
                    proj = jnp.dot(lin, wih_ref[gidx, :in_dim, :],
                                   preferred_element_type=f32)   # (T*B, H)
                    xg[d * 4 + k] = proj + b_ref[gidx]           # (1,H) bias broadcast

            h = [st0_ref[layer * num_dirs + d] for d in range(num_dirs)]
            c = [st0_ref[LD + layer * num_dirs + d] for d in range(num_dirs)]

            # fwd & bwd recurrences interleaved per step -> two independent chains in flight
            for step in range(T):
                for d in range(num_dirs):
                    t = step if d == 0 else T - 1 - step
                    base = (layer * num_dirs + d) * 4
                    rs = t * B
                    hd = h[d]
                    # PyTorch gate order: i, f, g, o — every operand already gate-aligned.
                    i_g = jax.nn.sigmoid(
                        xg[d * 4 + 0, rs:rs + B, :]
                        + jnp.dot(hd, whh_ref[base + 0], preferred_element_type=f32))
                    f_g = jax.nn.sigmoid(
                        xg[d * 4 + 1, rs:rs + B, :]
                        + jnp.dot(hd, whh_ref[base + 1], preferred_element_type=f32))
                    g_g = jnp.tanh(
                        xg[d * 4 + 2, rs:rs + B, :]
                        + jnp.dot(hd, whh_ref[base + 2], preferred_element_type=f32))
                    o_g = jax.nn.sigmoid(
                        xg[d * 4 + 3, rs:rs + B, :]
                        + jnp.dot(hd, whh_ref[base + 3], preferred_element_type=f32))
                    c[d] = f_g * c[d] + i_g * g_g
                    h[d] = o_g * jnp.tanh(c[d])
                    if layer + 1 < n_layers:
                        slab_bufs[layer % 2][rs:rs + B, d * H:(d + 1) * H] = h[d]
                    if layer == n_layers - 1 and t == T - 1:
                        fc_h[d] = h[d]

            # final states written once per (layer, direction)
            for d in range(num_dirs):
                stout_ref[layer * num_dirs + d] = h[d]
                stout_ref[LD + layer * num_dirs + d] = c[d]

        # ---- nn.Dropout(0.3) is identity in eval -> Linear -> Sigmoid (last timestep only) ----
        acc = fcb_ref[...]                                       # (1, O)
        for d in range(num_dirs):
            acc = acc + jnp.dot(fc_h[d], fcw_ref[d * H:(d + 1) * H, :],
                                preferred_element_type=f32)
        sig_ref[...] = jax.nn.sigmoid(acc)                       # (B, O)

    return kernel


def _full_block(shape):
    ndim = len(shape)
    return pl.BlockSpec(shape, lambda i, _n=ndim: (0,) * _n)


# ----------------------------- forward wrapper --------------------------------


@functools.partial(jax.jit, static_argnames=("n_layers", "bidirectional"))
def refactory_rnn_forward(params, x_tokens, hidden, *, n_layers, bidirectional=True):
    h0_all, c0_all = hidden
    B, T = x_tokens.shape
    num_dirs = 2 if bidirectional else 1
    V, E = params["embedding"].shape
    H = h0_all.shape[-1]
    O = params["fc_w"].shape[-1]
    LD = n_layers * num_dirs

    in_dims = [E] + [num_dirs * H] * (n_layers - 1)
    in_max = max(in_dims)

    # ---- pack weights into a few dense arrays (fewer, larger input DMAs), gate-split ----
    wih_blocks, whh_blocks, b_blocks = [], [], []
    for layer in range(n_layers):
        for d in range(num_dirs):
            w_ih = params[f"w_ih_l{layer}_d{d}"]                 # (in_dim, 4H)
            w_hh = params[f"w_hh_l{layer}_d{d}"]                 # (H, 4H)
            b = params[f"b_l{layer}_d{d}"]                       # (1, 4H)
            pad = in_max - w_ih.shape[0]
            if pad:
                w_ih = jnp.pad(w_ih, ((0, pad), (0, 0)))
            for k in range(4):
                wih_blocks.append(w_ih[:, k * H:(k + 1) * H])
                whh_blocks.append(w_hh[:, k * H:(k + 1) * H])
                b_blocks.append(b[:, k * H:(k + 1) * H])
    wih_packed = jnp.stack(wih_blocks)                           # (LD*4, in_max, H)
    whh_packed = jnp.stack(whh_blocks)                           # (LD*4, H, H)
    b_packed = jnp.stack(b_blocks)                               # (LD*4, 1, H)
    state0 = jnp.concatenate([h0_all, c0_all], axis=0)           # (2*LD, B, H)

    # time-major token column so the kernel's slabs index rows t*B + b
    tok_col = x_tokens.astype(jnp.int32).T.reshape(T * B, 1)

    inputs = [tok_col, params["embedding"], wih_packed, whh_packed, b_packed,
              params["fc_w"], params["fc_b"], state0]

    out_shape = (jax.ShapeDtypeStruct((B, O), jnp.float32),
                 jax.ShapeDtypeStruct((2 * LD, B, H), jnp.float32))

    kernel = _make_fused_kernel(B=B, T=T, V=V, E=E, H=H, O=O,
                                n_layers=n_layers, num_dirs=num_dirs)

    sig, state_out = pl.pallas_call(
        kernel,
        out_shape=out_shape,
        grid_spec=pltpu.PrefetchScalarGridSpec(
            num_scalar_prefetch=0,
            grid=(1,),
            in_specs=[_full_block(a.shape) for a in inputs],
            out_specs=[_full_block(s.shape) for s in out_shape],
            scratch_shapes=[
                pltpu.VMEM((num_dirs * 4, T * B, H), jnp.float32),   # xg slab A
                pltpu.VMEM((num_dirs * 4, T * B, H), jnp.float32),   # xg slab B
                pltpu.VMEM((T * B, num_dirs * H), jnp.float32),      # layer out slab A
                pltpu.VMEM((T * B, num_dirs * H), jnp.float32),      # layer out slab B
            ]),
        compiler_params=pltpu.CompilerParams(
            dimension_semantics=("arbitrary",)),
    )(*inputs)

    # sig_out = sigmoid(fc(out)).view(B, -1)[:, -1]: only the last timestep's last output
    # unit is consumed — exactly what the kernel computed.
    sig_out = sig[:, -1]
    h_n, c_n = state_out[:LD], state_out[LD:]
    return sig_out, (h_n, c_n)


# ----------------------------- params / hidden init ---------------------------


def init_params(key, vocab_size, output_size, embedding_dim, hidden_dim,
                n_layers, bidirectional=True):
    params = {}
    num_dirs = 2 if bidirectional else 1
    k_emb, key = jax.random.split(key)
    params["embedding"] = jax.random.normal(
        k_emb, (vocab_size, embedding_dim), jnp.float32)

    bound = 1.0 / math.sqrt(hidden_dim)
    for layer in range(n_layers):
        in_dim = embedding_dim if layer == 0 else hidden_dim * num_dirs
        for d in range(num_dirs):
            k1, k2, k3, k4, key = jax.random.split(key, 5)
            # Stored pre-transposed: (in_dim, 4H) and (H, 4H); bias combined (1, 4H).
            params[f"w_ih_l{layer}_d{d}"] = jax.random.uniform(
                k1, (in_dim, 4 * hidden_dim), jnp.float32, -bound, bound)
            params[f"w_hh_l{layer}_d{d}"] = jax.random.uniform(
                k2, (hidden_dim, 4 * hidden_dim), jnp.float32, -bound, bound)
            b_ih = jax.random.uniform(k3, (4 * hidden_dim,), jnp.float32, -bound, bound)
            b_hh = jax.random.uniform(k4, (4 * hidden_dim,), jnp.float32, -bound, bound)
            params[f"b_l{layer}_d{d}"] = (b_ih + b_hh)[None, :]

    fc_in = hidden_dim * num_dirs
    fb = 1.0 / math.sqrt(fc_in)
    k5, k6, key = jax.random.split(key, 3)
    params["fc_w"] = jax.random.uniform(k5, (fc_in, output_size), jnp.float32, -fb, fb)
    params["fc_b"] = jax.random.uniform(k6, (1, output_size), jnp.float32, -fb, fb)
    return params


def init_hidden(batch_size, hidden_dim, n_layers, bidirectional=True):
    num = 2 if bidirectional else 1
    shape = (n_layers * num, batch_size, hidden_dim)
    return (jnp.zeros(shape, jnp.float32), jnp.zeros(shape, jnp.float32))


# ----------------------------- pure-JAX reference -----------------------------


@functools.partial(jax.jit, static_argnames=("n_layers", "bidirectional"))
def _reference_forward(params, x_tokens, hidden, *, n_layers, bidirectional=True):
    """Plain-JAX reference with the PyTorch module's semantics (eval mode)."""
    h0_all, c0_all = hidden
    B, T = x_tokens.shape
    num_dirs = 2 if bidirectional else 1
    H = h0_all.shape[-1]

    layer_in = jnp.take(params["embedding"], x_tokens.astype(jnp.int32), axis=0)  # (B,T,E)
    hn, cn = [], []
    for layer in range(n_layers):
        outs = []
        for d in range(num_dirs):
            w_ih = params[f"w_ih_l{layer}_d{d}"]
            w_hh = params[f"w_hh_l{layer}_d{d}"]
            b = params[f"b_l{layer}_d{d}"]
            idx = layer * num_dirs + d
            h, c = h0_all[idx], c0_all[idx]
            order = range(T) if d == 0 else range(T - 1, -1, -1)
            ys = [None] * T
            for t in order:
                g = layer_in[:, t, :] @ w_ih + h @ w_hh + b
                i_g = jax.nn.sigmoid(g[:, :H])
                f_g = jax.nn.sigmoid(g[:, H:2 * H])
                g_g = jnp.tanh(g[:, 2 * H:3 * H])
                o_g = jax.nn.sigmoid(g[:, 3 * H:])
                c = f_g * c + i_g * g_g
                h = o_g * jnp.tanh(c)
                ys[t] = h
            hn.append(h)
            cn.append(c)
            outs.append(jnp.stack(ys, axis=1))           # (B, T, H)
        layer_in = jnp.concatenate(outs, axis=-1)        # (B, T, num_dirs*H)
    out = jax.nn.sigmoid(layer_in @ params["fc_w"] + params["fc_b"])   # (B, T, O)
    sig_out = out.reshape(B, -1)[:, -1]
    return sig_out, (jnp.stack(hn), jnp.stack(cn))


# ----------------------------- main --------------------------------------------


if __name__ == "__main__":
    vocab_size = 50
    output_size = 1
    embedding_dim = 16
    hidden_dim = 32
    n_layers = 2
    bidirectional = True

    batch_size = 2
    seq_len = 8

    key = jax.random.PRNGKey(0)
    k_params, k_x = jax.random.split(key)

    params = init_params(k_params, vocab_size, output_size, embedding_dim,
                         hidden_dim, n_layers, bidirectional)
    x = jax.random.randint(k_x, (batch_size, seq_len), 0, vocab_size, jnp.int32)
    hidden = init_hidden(batch_size, hidden_dim, n_layers, bidirectional)

    sig_out, (h_n, c_n) = refactory_rnn_forward(
        params, x, hidden, n_layers=n_layers, bidirectional=bidirectional)
    jax.block_until_ready((sig_out, h_n, c_n))

    num_dirs = 2 if bidirectional else 1
    assert sig_out.shape == (batch_size,)
    assert h_n.shape == (n_layers * num_dirs, batch_size, hidden_dim)
    assert c_n.shape == (n_layers * num_dirs, batch_size, hidden_dim)

    # numeric check against the pure-JAX reference (eval-mode PyTorch semantics)
    ref_sig, (ref_h, ref_c) = _reference_forward(
        params, x, hidden, n_layers=n_layers, bidirectional=bidirectional)
    np.testing.assert_allclose(np.asarray(sig_out), np.asarray(ref_sig),
                               rtol=5e-3, atol=5e-3)
    np.testing.assert_allclose(np.asarray(h_n), np.asarray(ref_h),
                               rtol=5e-3, atol=5e-3)
    np.testing.assert_allclose(np.asarray(c_n), np.asarray(ref_c),
                               rtol=5e-3, atol=5e-3)

    print("KERNEL_OK")
</pallas_src>

<mosaic_0001>
module attributes {stable_mosaic.version = 11 : i64} {
  func.func @kernel(%arg0: i32, %arg1: memref<16x1xi32, #tpu.memory_space<vmem>>, %arg2: memref<50x16xf32, #tpu.memory_space<vmem>>, %arg3: memref<16x64x32xf32, #tpu.memory_space<vmem>>, %arg4: memref<16x32x32xf32, #tpu.memory_space<vmem>>, %arg5: memref<16x1x32xf32, #tpu.memory_space<vmem>>, %arg6: memref<64x1xf32, #tpu.memory_space<vmem>>, %arg7: memref<1x1xf32, #tpu.memory_space<vmem>>, %arg8: memref<8x2x32xf32, #tpu.memory_space<vmem>>, %arg9: memref<2x1xf32, #tpu.memory_space<vmem>>, %arg10: memref<8x2x32xf32, #tpu.memory_space<vmem>>, %arg11: memref<8x16x32xf32, #tpu.memory_space<vmem>>, %arg12: memref<8x16x32xf32, #tpu.memory_space<vmem>>, %arg13: memref<16x64xf32, #tpu.memory_space<vmem>>, %arg14: memref<16x64xf32, #tpu.memory_space<vmem>>) attributes {dimension_semantics = [#tpu.dimension_semantics<arbitrary>], iteration_bounds = array<i64: 1>, scalar_prefetch = 0 : i64, scratch_operands = 4 : i64, tpu.core_type = #tpu.core_type<tc>, window_params = [{pipeline_mode = #tpu.pipeline_mode<synchronous>, transform_indices = @transform_0, window_bounds = array<i64: 16, 1>}, {pipeline_mode = #tpu.pipeline_mode<synchronous>, transform_indices = @transform_1, window_bounds = array<i64: 50, 16>}, {pipeline_mode = #tpu.pipeline_mode<synchronous>, transform_indices = @transform_2, window_bounds = array<i64: 16, 64, 32>}, {pipeline_mode = #tpu.pipeline_mode<synchronous>, transform_indices = @transform_3, window_bounds = array<i64: 16, 32, 32>}, {pipeline_mode = #tpu.pipeline_mode<synchronous>, transform_indices = @transform_4, window_bounds = array<i64: 16, 1, 32>}, {pipeline_mode = #tpu.pipeline_mode<synchronous>, transform_indices = @transform_5, window_bounds = array<i64: 64, 1>}, {pipeline_mode = #tpu.pipeline_mode<synchronous>, transform_indices = @transform_6, window_bounds = array<i64: 1, 1>}, {pipeline_mode = #tpu.pipeline_mode<synchronous>, transform_indices = @transform_7, window_bounds = array<i64: 8, 2, 32>}, {pipeline_mode = #tpu.pipeline_mode<synchronous>, transform_indices = @transform_8, window_bounds = array<i64: 2, 1>}, {pipeline_mode = #tpu.pipeline_mode<synchronous>, transform_indices = @transform_9, window_bounds = array<i64: 8, 2, 32>}]} {
    %c0 = arith.constant 0 : index
    %c0_0 = arith.constant 0 : index
    %0 = vector.load %arg1[%c0, %c0_0] : memref<16x1xi32, #tpu.memory_space<vmem>>, vector<16x1xi32>
    %1 = tpu.iota {dimensions = array<i32: 1>} : vector<16x50xi32>
    %2 = vector.broadcast %0 : vector<16x1xi32> to vector<16x50xi32>
    %3 = arith.cmpi eq, %2, %1 : vector<16x50xi32>
    %cst = arith.constant 1.000000e+00 : f32
    %cst_1 = arith.constant 0.000000e+00 : f32
    %4 = vector.broadcast %cst : f32 to vector<16x50xf32>
    %5 = vector.broadcast %cst_1 : f32 to vector<16x50xf32>
    %6 = arith.select %3, %4, %5 : vector<16x50xi1>, vector<16x50xf32>
    %c0_2 = arith.constant 0 : index
    %c0_3 = arith.constant 0 : index
    %7 = vector.load %arg2[%c0_2, %c0_3] : memref<50x16xf32, #tpu.memory_space<vmem>>, vector<50x16xf32>
    %cst_4 = arith.constant dense<0.000000e+00> : vector<16x16xf32>
    %8 = tpu.matmul %6, %7, %cst_4 {dimension_numbers = #tpu.dot_dimension_numbers<[1], [0], [0], [1], [0, 0, 1, 1], [], []>} : vector<16x50xf32>, vector<50x16xf32>, vector<16x16xf32> -> vector<16x16xf32>
    %c0_5 = arith.constant 0 : index
    %c0_6 = arith.constant 0 : index
    %c0_7 = arith.constant 0 : index
    %9 = vector.load %arg3[%c0_5, %c0_6, %c0_7] : memref<16x64x32xf32, #tpu.memory_space<vmem>>, vector<1x16x32xf32>
    %10 = vector.shape_cast %9 : vector<1x16x32xf32> to vector<16x32xf32>
    %cst_8 = arith.constant dense<0.000000e+00> : vector<16x32xf32>
    %11 = tpu.matmul %8, %10, %cst_8 {dimension_numbers = #tpu.dot_dimension_numbers<[1], [0], [0], [1], [0, 0, 1, 1], [], []>} : vector<16x16xf32>, vector<16x32xf32>, vector<16x32xf32> -> vector<16x32xf32>
    %c0_9 = arith.constant 0 : index
    %c0_10 = arith.constant 0 : index
    %c0_11 = arith.constant 0 : index
    %12 = vector.load %arg5[%c0_9, %c0_10, %c0_11] : memref<16x1x32xf32, #tpu.memory_space<vmem>>, vector<1x1x32xf32>
    %13 = vector.shape_cast %12 : vector<1x1x32xf32> to vector<1x32xf32>
    %14 = vector.broadcast %13 : vector<1x32xf32> to vector<16x32xf32>
    %15 = arith.addf %11, %14 : vector<16x32xf32>
    %c0_12 = arith.constant 0 : index
    %c0_13 = arith.constant 0 : index
    %c0_14 = arith.constant 0 : index
    %16 = vector.load %arg11[%c0_12, %c0_13, %c0_14] : memref<8x16x32xf32, #tpu.memory_space<vmem>>, vector<1x16x32xf32>
    %17 = vector.shape_cast %16 : vector<1x16x32xf32> to vector<16x32xf32>
    %18 = vector.shape_cast %15 : vector<16x32xf32> to vector<1x16x32xf32>
    tpu.vector_store %arg11[%c0_12, %c0_13, %c0_14], %18 {strides = array<i32>} : memref<8x16x32xf32, #tpu.memory_space<vmem>>, vector<1x16x32xf32>,
    %c1 = arith.constant 1 : index
    %c0_15 = arith.constant 0 : index
    %c0_16 = arith.constant 0 : index
    %19 = vector.load %arg3[%c1, %c0_15, %c0_16] : memref<16x64x32xf32, #tpu.memory_space<vmem>>, vector<1x16x32xf32>
    %20 = vector.shape_cast %19 : vector<1x16x32xf32> to vector<16x32xf32>
    %cst_17 = arith.constant dense<0.000000e+00> : vector<16x32xf32>
    %21 = tpu.matmul %8, %20, %cst_17 {dimension_numbers = #tpu.dot_dimension_numbers<[1], [0], [0], [1], [0, 0, 1, 1], [], []>} : vector<16x16xf32>, vector<16x32xf32>, vector<16x32xf32> -> vector<16x32xf32>
    %c1_18 = arith.constant 1 : index
    %c0_19 = arith.constant 0 : index
    %c0_20 = arith.constant 0 : index
    %22 = vector.load %arg5[%c1_18, %c0_19, %c0_20] : memref<16x1x32xf32, #tpu.memory_space<vmem>>, vector<1x1x32xf32>
    %23 = vector.shape_cast %22 : vector<1x1x32xf32> to vector<1x32xf32>
    %24 = vector.broadcast %23 : vector<1x32xf32> to vector<16x32xf32>
    %25 = arith.addf %21, %24 : vector<16x32xf32>
    %c1_21 = arith.constant 1 : index
    %c0_22 = arith.constant 0 : index
    %c0_23 = arith.constant 0 : index
    %26 = vector.load %arg11[%c1_21, %c0_22, %c0_23] : memref<8x16x32xf32, #tpu.memory_space<vmem>>, vector<1x16x32xf32>
    %27 = vector.shape_cast %26 : vector<1x16x32xf32> to vector<16x32xf32>
    %28 = vector.shape_cast %25 : vector<16x32xf32> to vector<1x16x32xf32>
    tpu.vector_store %arg11[%c1_21, %c0_22, %c0_23], %28 {strides = array<i32>} : memref<8x16x32xf32, #tpu.memory_space<vmem>>, vector<1x16x32xf32>,
    %c2 = arith.constant 2 : index
    %c0_24 = arith.constant 0 : index
    %c0_25 = arith.constant 0 : index
    %29 = vector.load %arg3[%c2, %c0_24, %c0_25] : memref<16x64x32xf32, #tpu.memory_space<vmem>>, vector<1x16x32xf32>
    %30 = vector.shape_cast %29 : vector<1x16x32xf32> to vector<16x32xf32>
    %cst_26 = arith.constant dense<0.000000e+00> : vector<16x32xf32>
    %31 = tpu.matmul %8, %30, %cst_26 {dimension_numbers = #tpu.dot_dimension_numbers<[1], [0], [0], [1], [0, 0, 1, 1], [], []>} : vector<16x16xf32>, vector<16x32xf32>, vector<16x32xf32> -> vector<16x32xf32>
    %c2_27 = arith.constant 2 : index
    %c0_28 = arith.constant 0 : index
    %c0_29 = arith.constant 0 : index
    %32 = vector.load %arg5[%c2_27, %c0_28, %c0_29] : memref<16x1x32xf32, #tpu.memory_space<vmem>>, vector<1x1x32xf32>
    %33 = vector.shape_cast %32 : vector<1x1x32xf32> to vector<1x32xf32>
    %34 = vector.broadcast %33 : vector<1x32xf32> to vector<16x32xf32>
    %35 = arith.addf %31, %34 : vector<16x32xf32>
    %c2_30 = arith.constant 2 : index
    %c0_31 = arith.constant 0 : index
    %c0_32 = arith.constant 0 : index
    %36 = vector.load %arg11[%c2_30, %c0_31, %c0_32] : memref<8x16x32xf32, #tpu.memory_space<vmem>>, vector<1x16x32xf32>
    %37 = vector.shape_cast %36 : vector<1x16x32xf32> to vector<16x32xf32>
    %38 = vector.shape_cast %35 : vector<16x32xf32> to vector<1x16x32xf32>
    tpu.vector_store %arg11[%c2_30, %c0_31, %c0_32], %38 {strides = array<i32>} : memref<8x16x32xf32, #tpu.memory_space<vmem>>, vector<1x16x32xf32>,
    %c3 = arith.constant 3 : index
    %c0_33 = arith.constant 0 : index
    %c0_34 = arith.constant 0 : index
    %39 = vector.load %arg3[%c3, %c0_33, %c0_34] : memref<16x64x32xf32, #tpu.memory_space<vmem>>, vector<1x16x32xf32>
    %40 = vector.shape_cast %39 : vector<1x16x32xf32> to vector<16x32xf32>
    %cst_35 = arith.constant dense<0.000000e+00> : vector<16x32xf32>
    %41 = tpu.matmul %8, %40, %cst_35 {dimension_numbers = #tpu.dot_dimension_numbers<[1], [0], [0], [1], [0, 0, 1, 1], [], []>} : vector<16x16xf32>, vector<16x32xf32>, vector<16x32xf32> -> vector<16x32xf32>
    %c3_36 = arith.constant 3 : index
    %c0_37 = arith.constant 0 : index
    %c0_38 = arith.constant 0 : index
    %42 = vector.load %arg5[%c3_36, %c0_37, %c0_38] : memref<16x1x32xf32, #tpu.memory_space<vmem>>, vector<1x1x32xf32>
    %43 = vector.shape_cast %42 : vector<1x1x32xf32> to vector<1x32xf32>
    %44 = vector.broadcast %43 : vector<1x32xf32> to vector<16x32xf32>
    %45 = arith.addf %41, %44 : vector<16x32xf32>
    %c3_39 = arith.constant 3 : index
    %c0_40 = arith.constant 0 : index
    %c0_41 = arith.constant 0 : index
    %46 = vector.load %arg11[%c3_39, %c0_40, %c0_41] : memref<8x16x32xf32, #tpu.memory_space<vmem>>, vector<1x16x32xf32>
    %47 = vector.shape_cast %46 : vector<1x16x32xf32> to vector<16x32xf32>
    %48 = vector.shape_cast %45 : vector<16x32xf32> to vector<1x16x32xf32>
    tpu.vector_store %arg11[%c3_39, %c0_40, %c0_41], %48 {strides = array<i32>} : memref<8x16x32xf32, #tpu.memory_space<vmem>>, vector<1x16x32xf32>,
    %c4 = arith.constant 4 : index
    %c0_42 = arith.constant 0 : index
    %c0_43 = arith.constant 0 : index
    %49 = vector.load %arg3[%c4, %c0_42, %c0_43] : memref<16x64x32xf32, #tpu.memory_space<vmem>>, vector<1x16x32xf32>
    %50 = vector.shape_cast %49 : vector<1x16x32xf32> to vector<16x32xf32>
    %cst_44 = arith.constant dense<0.000000e+00> : vector<16x32xf32>
    %51 = tpu.matmul %8, %50, %cst_44 {dimension_numbers = #tpu.dot_dimension_numbers<[1], [0], [0], [1], [0, 0, 1, 1], [], []>} : vector<16x16xf32>, vector<16x32xf32>, vector<16x32xf32> -> vector<16x32xf32>
    %c4_45 = arith.constant 4 : index
    %c0_46 = arith.constant 0 : index
    %c0_47 = arith.constant 0 : index
    %52 = vector.load %arg5[%c4_45, %c0_46, %c0_47] : memref<16x1x32xf32, #tpu.memory_space<vmem>>, vector<1x1x32xf32>
    %53 = vector.shape_cast %52 : vector<1x1x32xf32> to vector<1x32xf32>
    %54 = vector.broadcast %53 : vector<1x32xf32> to vector<16x32xf32>
    %55 = arith.addf %51, %54 : vector<16x32xf32>
    %c4_48 = arith.constant 4 : index
    %c0_49 = arith.constant 0 : index
    %c0_50 = arith.constant 0 : index
    %56 = vector.load %arg11[%c4_48, %c0_49, %c0_50] : memref<8x16x32xf32, #tpu.memory_space<vmem>>, vector<1x16x32xf32>
    %57 = vector.shape_cast %56 : vector<1x16x32xf32> to vector<16x32xf32>
    %58 = vector.shape_cast %55 : vector<16x32xf32> to vector<1x16x32xf32>
    tpu.vector_store %arg11[%c4_48, %c0_49, %c0_50], %58 {strides = array<i32>} : memref<8x16x32xf32, #tpu.memory_space<vmem>>, vector<1x16x32xf32>,
    %c5 = arith.constant 5 : index
    %c0_51 = arith.constant 0 : index
    %c0_52 = arith.constant 0 : index
    %59 = vector.load %arg3[%c5, %c0_51, %c0_52] : memref<16x64x32xf32, #tpu.memory_space<vmem>>, vector<1x16x32xf32>
    %60 = vector.shape_cast %59 : vector<1x16x32xf32> to vector<16x32xf32>
    %cst_53 = arith.constant dense<0.000000e+00> : vector<16x32xf32>
    %61 = tpu.matmul %8, %60, %cst_53 {dimension_numbers = #tpu.dot_dimension_numbers<[1], [0], [0], [1], [0, 0, 1, 1], [], []>} : vector<16x16xf32>, vector<16x32xf32>, vector<16x32xf32> -> vector<16x32xf32>
    %c5_54 = arith.constant 5 : index
    %c0_55 = arith.constant 0 : index
    %c0_56 = arith.constant 0 : index
    %62 = vector.load %arg5[%c5_54, %c0_55, %c0_56] : memref<16x1x32xf32, #tpu.memory_space<vmem>>, vector<1x1x32xf32>
    %63 = vector.shape_cast %62 : vector<1x1x32xf32> to vector<1x32xf32>
    %64 = vector.broadcast %63 : vector<1x32xf32> to vector<16x32xf32>
    %65 = arith.addf %61, %64 : vector<16x32xf32>
    %c5_57 = arith.constant 5 : index
    %c0_58 = arith.constant 0 : index
    %c0_59 = arith.constant 0 : index
    %66 = vector.load %arg11[%c5_57, %c0_58, %c0_59] : memref<8x16x32xf32, #tpu.memory_space<vmem>>, vector<1x16x32xf32>
    %67 = vector.shape_cast %66 : vector<1x16x32xf32> to vector<16x32xf32>
    %68 = vector.shape_cast %65 : vector<16x32xf32> to vector<1x16x32xf32>
    tpu.vector_store %arg11[%c5_57, %c0_58, %c0_59], %68 {strides = array<i32>} : memref<8x16x32xf32, #tpu.memory_space<vmem>>, vector<1x16x32xf32>,
    %c6 = arith.constant 6 : index
    %c0_60 = arith.constant 0 : index
    %c0_61 = arith.constant 0 : index
    %69 = vector.load %arg3[%c6, %c0_60, %c0_61] : memref<16x64x32xf32, #tpu.memory_space<vmem>>, vector<1x16x32xf32>
    %70 = vector.shape_cast %69 : vector<1x16x32xf32> to vector<16x32xf32>
    %cst_62 = arith.constant dense<0.000000e+00> : vector<16x32xf32>
    %71 = tpu.matmul %8, %70, %cst_62 {dimension_numbers = #tpu.dot_dimension_numbers<[1], [0], [0], [1], [0, 0, 1, 1], [], []>} : vector<16x16xf32>, vector<16x32xf32>, vector<16x32xf32> -> vector<16x32xf32>
    %c6_63 = arith.constant 6 : index
    %c0_64 = arith.constant 0 : index
    %c0_65 = arith.constant 0 : index
    %72 = vector.load %arg5[%c6_63, %c0_64, %c0_65] : memref<16x1x32xf32, #tpu.memory_space<vmem>>, vector<1x1x32xf32>
    %73 = vector.shape_cast %72 : vector<1x1x32xf32> to vector<1x32xf32>
    %74 = vector.broadcast %73 : vector<1x32xf32> to vector<16x32xf32>
    %75 = arith.addf %71, %74 : vector<16x32xf32>
    %c6_66 = arith.constant 6 : index
    %c0_67 = arith.constant 0 : index
    %c0_68 = arith.constant 0 : index
    %76 = vector.load %arg11[%c6_66, %c0_67, %c0_68] : memref<8x16x32xf32, #tpu.memory_space<vmem>>, vector<1x16x32xf32>
    %77 = vector.shape_cast %76 : vector<1x16x32xf32> to vector<16x32xf32>
    %78 = vector.shape_cast %75 : vector<16x32xf32> to vector<1x16x32xf32>
    tpu.vector_store %arg11[%c6_66, %c0_67, %c0_68], %78 {strides = array<i32>} : memref<8x16x32xf32, #tpu.memory_space<vmem>>, vector<1x16x32xf32>,
    %c7 = arith.constant 7 : index
    %c0_69 = arith.constant 0 : index
    %c0_70 = arith.constant 0 : index
    %79 = vector.load %arg3[%c7, %c0_69, %c0_70] : memref<16x64x32xf32, #tpu.memory_space<vmem>>, vector<1x16x32xf32>
    %80 = vector.shape_cast %79 : vector<1x16x32xf32> to vector<16x32xf32>
    %cst_71 = arith.constant dense<0.000000e+00> : vector<16x32xf32>
    %81 = tpu.matmul %8, %80, %cst_71 {dimension_numbers = #tpu.dot_dimension_numbers<[1], [0], [0], [1], [0, 0, 1, 1], [], []>} : vector<16x16xf32>, vector<16x32xf32>, vector<16x32xf32> -> vector<16x32xf32>
    %c7_72 = arith.constant 7 : index
    %c0_73 = arith.constant 0 : index
    %c0_74 = arith.constant 0 : index
    %82 = vector.load %arg5[%c7_72, %c0_73, %c0_74] : memref<16x1x32xf32, #tpu.memory_space<vmem>>, vector<1x1x32xf32>
    %83 = vector.shape_cast %82 : vector<1x1x32xf32> to vector<1x32xf32>
    %84 = vector.broadcast %83 : vector<1x32xf32> to vector<16x32xf32>
    %85 = arith.addf %81, %84 : vector<16x32xf32>
    %c7_75 = arith.constant 7 : index
    %c0_76 = arith.constant 0 : index
    %c0_77 = arith.constant 0 : index
    %86 = vector.load %arg11[%c7_75, %c0_76, %c0_77] : memref<8x16x32xf32, #tpu.memory_space<vmem>>, vector<1x16x32xf32>
    %87 = vector.shape_cast %86 : vector<1x16x32xf32> to vector<16x32xf32>
    %88 = vector.shape_cast %85 : vector<16x32xf32> to vector<1x16x32xf32>
    tpu.vector_store %arg11[%c7_75, %c0_76, %c0_77], %88 {strides = array<i32>} : memref<8x16x32xf32, #tpu.memory_space<vmem>>, vector<1x16x32xf32>,
    %c0_78 = arith.constant 0 : index
    %c0_79 = arith.constant 0 : index
    %c0_80 = arith.constant 0 : index
    %89 = vector.load %arg8[%c0_78, %c0_79, %c0_80] : memref<8x2x32xf32, #tpu.memory_space<vmem>>, vector<1x2x32xf32>
    %90 = vector.shape_cast %89 : vector<1x2x32xf32> to vector<2x32xf32>
    %c1_81 = arith.constant 1 : index
    %c0_82 = arith.constant 0 : index
    %c0_83 = arith.constant 0 : index
    %91 = vector.load %arg8[%c1_81, %c0_82, %c0_83] : memref<8x2x32xf32, #tpu.memory_space<vmem>>, vector<1x2x32xf32>
    %92 = vector.shape_cast %91 : vector<1x2x32xf32> to vector<2x32xf32>
    %c4_84 = arith.constant 4 : index
    %c0_85 = arith.constant 0 : index
    %c0_86 = arith.constant 0 : index
    %93 = vector.load %arg8[%c4_84, %c0_85, %c0_86] : memref<8x2x32xf32, #tpu.memory_space<vmem>>, vector<1x2x32xf32>
    %94 = vector.shape_cast %93 : vector<1x2x32xf32> to vector<2x32xf32>
    %c5_87 = arith.constant 5 : index
    %c0_88 = arith.constant 0 : index
    %c0_89 = arith.constant 0 : index
    %95 = vector.load %arg8[%c5_87, %c0_88, %c0_89] : memref<8x2x32xf32, #tpu.memory_space<vmem>>, vector<1x2x32xf32>
    %96 = vector.shape_cast %95 : vector<1x2x32xf32> to vector<2x32xf32>
    %c0_90 = arith.constant 0 : index
    %c0_91 = arith.constant 0 : index
    %c0_92 = arith.constant 0 : index
    %97 = vector.load %arg11[%c0_90, %c0_91, %c0_92] : memref<8x16x32xf32, #tpu.memory_space<vmem>>, vector<1x2x32xf32>
    %98 = vector.shape_cast %97 : vector<1x2x32xf32> to vector<2x32xf32>
    %c0_93 = arith.constant 0 : index
    %c0_94 = arith.constant 0 : index
    %c0_95 = arith.constant 0 : index
    %99 = vector.load %arg4[%c0_93, %c0_94, %c0_95] : memref<16x32x32xf32, #tpu.memory_space<vmem>>, vector<1x32x32xf32>
    %100 = vector.shape_cast %99 : vector<1x32x32xf32> to vector<32x32xf32>
    %cst_96 = arith.constant dense<0.000000e+00> : vector<2x32xf32>
    %101 = tpu.matmul %90, %100, %cst_96 {dimension_numbers = #tpu.dot_dimension_numbers<[1], [0], [0], [1], [0, 0, 1, 1], [], []>} : vector<2x32xf32>, vector<32x32xf32>, vector<2x32xf32> -> vector<2x32xf32>
    %102 = arith.addf %98, %101 : vector<2x32xf32>
    %103 = arith.negf %102 : vector<2x32xf32>
    %104 = math.exp %103 : vector<2x32xf32>
    %cst_97 = arith.constant 1.000000e+00 : f32
    %105 = vector.broadcast %cst_97 : f32 to vector<2x32xf32>
    %106 = arith.addf %105, %104 : vector<2x32xf32>
    %107 = arith.divf %105, %106 : vector<2x32xf32>
    %c1_98 = arith.constant 1 : index
    %c0_99 = arith.constant 0 : index
    %c0_100 = arith.constant 0 : index
    %108 = vector.load %arg11[%c1_98, %c0_99, %c0_100] : memref<8x16x32xf32, #tpu.memory_space<vmem>>, vector<1x2x32xf32>
    %109 = vector.shape_cast %108 : vector<1x2x32xf32> to vector<2x32xf32>
    %c1_101 = arith.constant 1 : index
    %c0_102 = arith.constant 0 : index
    %c0_103 = arith.constant 0 : index
    %110 = vector.load %arg4[%c1_101, %c0_102, %c0_103] : memref<16x32x32xf32, #tpu.memory_space<vmem>>, vector<1x32x32xf32>
    %111 = vector.shape_cast %110 : vector<1x32x32xf32> to vector<32x32xf32>
    %cst_104 = arith.constant dense<0.000000e+00> : vector<2x32xf32>
    %112 = tpu.matmul %90, %111, %cst_104 {dimension_numbers = #tpu.dot_dimension_numbers<[1], [0], [0], [1], [0, 0, 1, 1], [], []>} : vector<2x32xf32>, vector<32x32xf32>, vector<2x32xf32> -> vector<2x32xf32>
    %113 = arith.addf %109, %112 : vector<2x32xf32>
    %114 = arith.negf %113 : vector<2x32xf32>
    %115 = math.exp %114 : vector<2x32xf32>
    %cst_105 = arith.constant 1.000000e+00 : f32
    %116 = vector.broadcast %cst_105 : f32 to vector<2x32xf32>
    %117 = arith.addf %116, %115 : vector<2x32xf32>
    %118 = arith.divf %116, %117 : vector<2x32xf32>
    %c2_106 = arith.constant 2 : index
    %c0_107 = arith.constant 0 : index
    %c0_108 = arith.constant 0 : index
    %119 = vector.load %arg11[%c2_106, %c0_107, %c0_108] : memref<8x16x32xf32, #tpu.memory_space<vmem>>, vector<1x2x32xf32>
    %120 = vector.shape_cast %119 : vector<1x2x32xf32> to vector<2x32xf32>
    %c2_109 = arith.constant 2 : index
    %c0_110 = arith.constant 0 : index
    %c0_111 = arith.constant 0 : index
    %121 = vector.load %arg4[%c2_109, %c0_110, %c0_111] : memref<16x32x32xf32, #tpu.memory_space<vmem>>, vector<1x32x32xf32>
    %122 = vector.shape_cast %121 : vector<1x32x32xf32> to vector<32x32xf32>
    %cst_112 = arith.constant dense<0.000000e+00> : vector<2x32xf32>
    %123 = tpu.matmul %90, %122, %cst_112 {dimension_numbers = #tpu.dot_dimension_numbers<[1], [0], [0], [1], [0, 0, 1, 1], [], []>} : vector<2x32xf32>, vector<32x32xf32>, vector<2x32xf32> -> vector<2x32xf32>
    %124 = arith.addf %120, %123 : vector<2x32xf32>
    %125 = math.tanh %124 : vector<2x32xf32>
    %c3_113 = arith.constant 3 : index
    %c0_114 = arith.constant 0 : index
    %c0_115 = arith.constant 0 : index
    %126 = vector.load %arg11[%c3_113, %c0_114, %c0_115] : memref<8x16x32xf32, #tpu.memory_space<vmem>>, vector<1x2x32xf32>
    %127 = vector.shape_cast %126 : vector<1x2x32xf32> to vector<2x32xf32>
    %c3_116 = arith.constant 3 : index
    %c0_117 = arith.constant 0 : index
    %c0_118 = arith.constant 0 : index
    %128 = vector.load %arg4[%c3_116, %c0_117, %c0_118] : memref<16x32x32xf32, #tpu.memory_space<vmem>>, vector<1x32x32xf32>
    %129 = vector.shape_cast %128 : vector<1x32x32xf32> to vector<32x32xf32>
    %cst_119 = arith.constant dense<0.000000e+00> : vector<2x32xf32>
    %130 = tpu.matmul %90, %129, %cst_119 {dimension_numbers = #tpu.dot_dimension_numbers<[1], [0], [0], [1], [0, 0, 1, 1], [], []>} : vector<2x32xf32>, vector<32x32xf32>, vector<2x32xf32> -> vector<2x32xf32>
    %131 = arith.addf %127, %130 : vector<2x32xf32>
    %132 = arith.negf %131 : vector<2x32xf32>
    %133 = math.exp %132 : vector<2x32xf32>
    %cst_120 = arith.constant 1.000000e+00 : f32
    %134 = vector.broadcast %cst_120 : f32 to vector<2x32xf32>
    %135 = arith.addf %134, %133 : vector<2x32xf32>
    %136 = arith.divf %134, %135 : vector<2x32xf32>
    %137 = arith.mulf %118, %94 : vector<2x32xf32>
    %138 = arith.mulf %107, %125 : vector<2x32xf32>
    %139 = arith.addf %137, %138 : vector<2x32xf32>
    %140 = math.tanh %139 : vector<2x32xf32>
    %141 = arith.mulf %136, %140 : vector<2x32xf32>
    %c0_121 = arith.constant 0 : index
    %c0_122 = arith.constant 0 : index
    %142 = vector.load %arg13[%c0_121, %c0_122] : memref<16x64xf32, #tpu.memory_space<vmem>>, vector<2x32xf32>
    tpu.vector_store %arg13[%c0_121, %c0_122], %141 {strides = array<i32>} : memref<16x64xf32, #tpu.memory_space<vmem>>, vector<2x32xf32>,
    %c4_123 = arith.constant 4 : index
    %c14 = arith.constant 14 : index
    %c0_124 = arith.constant 0 : index
    %143 = vector.load %arg11[%c4_123, %c14, %c0_124] : memref<8x16x32xf32, #tpu.memory_space<vmem>>, vector<1x2x32xf32>
    %144 = vector.shape_cast %143 : vector<1x2x32xf32> to vector<2x32xf32>
    %c4_125 = arith.constant 4 : index
    %c0_126 = arith.constant 0 : index
    %c0_127 = arith.constant 0 : index
    %145 = vector.load %arg4[%c4_125, %c0_126, %c0_127] : memref<16x32x32xf32, #tpu.memory_space<vmem>>, vector<1x32x32xf32>
    %146 = vector.shape_cast %145 : vector<1x32x32xf32> to vector<32x32xf32>
    %cst_128 = arith.constant dense<0.000000e+00> : vector<2x32xf32>
    %147 = tpu.matmul %92, %146, %cst_128 {dimension_numbers = #tpu.dot_dimension_numbers<[1], [0], [0], [1], [0, 0, 1, 1], [], []>} : vector<2x32xf32>, vector<32x32xf32>, vector<2x32xf32> -> vector<2x32xf32>
    %148 = arith.addf %144, %147 : vector<2x32xf32>
    %149 = arith.negf %148 : vector<2x32xf32>
    %150 = math.exp %149 : vector<2x32xf32>
    %cst_129 = arith.constant 1.000000e+00 : f32
    %151 = vector.broadcast %cst_129 : f32 to vector<2x32xf32>
    %152 = arith.addf %151, %150 : vector<2x32xf32>
    %153 = arith.divf %151, %152 : vector<2x32xf32>
    %c5_130 = arith.constant 5 : index
    %c14_131 = arith.constant 14 : index
    %c0_132 = arith.constant 0 : index
    %154 = vector.load %arg11[%c5_130, %c14_131, %c0_132] : memref<8x16x32xf32, #tpu.memory_space<vmem>>, vector<1x2x32xf32>
    %155 = vector.shape_cast %154 : vector<1x2x32xf32> to vector<2x32xf32>
    %c5_133 = arith.constant 5 : index
    %c0_134 = arith.constant 0 : index
    %c0_135 = arith.constant 0 : index
    %156 = vector.load %arg4[%c5_133, %c0_134, %c0_135] : memref<16x32x32xf32, #tpu.memory_space<vmem>>, vector<1x32x32xf32>
    %157 = vector.shape_cast %156 : vector<1x32x32xf32> to vector<32x32xf32>
    %cst_136 = arith.constant dense<0.000000e+00> : vector<2x32xf32>
    %158 = tpu.matmul %92, %157, %cst_136 {dimension_numbers = #tpu.dot_dimension_numbers<[1], [0], [0], [1], [0, 0, 1, 1], [], []>} : vector<2x32xf32>, vector<32x32xf32>, vector<2x32xf32> -> vector<2x32xf32>
    %159 = arith.addf %155, %158 : vector<2x32xf32>
    %160 = arith.negf %159 : vector<2x32xf32>
    %161 = math.exp %160 : vector<2x32xf32>
    %cst_137 = arith.constant 1.000000e+00 : f32
    %162 = vector.broadcast %cst_137 : f32 to vector<2x32xf32>
    %163 = arith.addf %162, %161 : vector<2x32xf32>
    %164 = arith.divf %162, %163 : vector<2x32xf32>
    %c6_138 = arith.constant 6 : index
    %c14_139 = arith.constant 14 : index
    %c0_140 = arith.constant 0 : index
    %165 = vector.load %arg11[%c6_138, %c14_139, %c0_140] : memref<8x16x32xf32, #tpu.memory_space<vmem>>, vector<1x2x32xf32>
    %166 = vector.shape_cast %165 : vector<1x2x32xf32> to vector<2x32xf32>
    %c6_141 = arith.constant 6 : index
    %c0_142 = arith.constant 0 : index
    %c0_143 = arith.constant 0 : index
    %167 = vector.load %arg4[%c6_141, %c0_142, %c0_143] : memref<16x32x32xf32, #tpu.memory_space<vmem>>, vector<1x32x32xf32>
    %168 = vector.shape_cast %167 : vector<1x32x32xf32> to vector<32x32xf32>
    %cst_144 = arith.constant dense<0.000000e+00> : vector<2x32xf32>
    %169 = tpu.matmul %92, %168, %cst_144 {dimension_numbers = #tpu.dot_dimension_numbers<[1], [0], [0], [1], [0, 0, 1, 1], [], []>} : vector<2x32xf32>, vector<32x32xf32>, vector<2x32xf32> -> vector<2x32xf32>
    %170 = arith.addf %166, %169 : vector<2x32xf32>
    %171 = math.tanh %170 : vector<2x32xf32>
    %c7_145 = arith.constant 7 : index
    %c14_146 = arith.constant 14 : index
    %c0_147 = arith.constant 0 : index
    %172 = vector.load %arg11[%c7_145, %c14_146, %c0_147] : memref<8x16x32xf32, #tpu.memory_space<vmem>>, vector<1x2x32xf32>
    %173 = vector.shape_cast %172 : vector<1x2x32xf32> to vector<2x32xf32>
    %c7_148 = arith.constant 7 : index
    %c0_149 = arith.constant 0 : index
    %c0_150 = arith.constant 0 : index
    %174 = vector.load %arg4[%c7_148, %c0_149, %c0_150] : memref<16x32x32xf32, #tpu.memory_space<vmem>>, vector<1x32x32xf32>
    %175 = vector.shape_cast %174 : vector<1x32x32xf32> to vector<32x32xf32>
    %cst_151 = arith.constant dense<0.000000e+00> : vector<2x32xf32>
    %176 = tpu.matmul %92, %175, %cst_151 {dimension_numbers = #tpu.dot_dimension_numbers<[1], [0], [0], [1], [0, 0, 1, 1], [], []>} : vector<2x32xf32>, vector<32x32xf32>, vector<2x32xf32> -> vector<2x32xf32>
    %177 = arith.addf %173, %176 : vector<2x32xf32>
    %178 = arith.negf %177 : vector<2x32xf32>
    %179 = math.exp %178 : vector<2x32xf32>
    %cst_152 = arith.constant 1.000000e+00 : f32
    %180 = vector.broadcast %cst_152 : f32 to vector<2x32xf32>
    %181 = arith.addf %180, %179 : vector<2x32xf32>
    %182 = arith.divf %180, %181 : vector<2x32xf32>
    %183 = arith.mulf %164, %96 : vector<2x32xf32>
    %184 = arith.mulf %153, %171 : vector<2x32xf32>
    %185 = arith.addf %183, %184 : vector<2x32xf32>
    %186 = math.tanh %185 : vector<2x32xf32>
    %187 = arith.mulf %182, %186 : vector<2x32xf32>
    %c14_153 = arith.constant 14 : index
    %c32 = arith.constant 32 : index
    %188 = vector.load %arg13[%c14_153, %c32] : memref<16x64xf32, #tpu.memory_space<vmem>>, vector<2x32xf32>
    tpu.vector_store %arg13[%c14_153, %c32], %187 {strides = array<i32>} : memref<16x64xf32, #tpu.memory_space<vmem>>, vector<2x32xf32>,
    %c0_154 = arith.constant 0 : index
    %c2_155 = arith.constant 2 : index
    %c0_156 = arith.constant 0 : index
    %189 = vector.load %arg11[%c0_154, %c2_155, %c0_156] : memref<8x16x32xf32, #tpu.memory_space<vmem>>, vector<1x2x32xf32>
    %190 = vector.shape_cast %189 : vector<1x2x32xf32> to vector<2x32xf32>
    %c0_157 = arith.constant 0 : index
    %c0_158 = arith.constant 0 : index
    %c0_159 = arith.constant 0 : index
    %191 = vector.load %arg4[%c0_157, %c0_158, %c0_159] : memref<16x32x32xf32, #tpu.memory_space<vmem>>, vector<1x32x32xf32>
    %192 = vector.shape_cast %191 : vector<1x32x32xf32> to vector<32x32xf32>
    %cst_160 = arith.constant dense<0.000000e+00> : vector<2x32xf32>
    %193 = tpu.matmul %141, %192, %cst_160 {dimension_numbers = #tpu.dot_dimension_numbers<[1], [0], [0], [1], [0, 0, 1, 1], [], []>} : vector<2x32xf32>, vector<32x32xf32>, vector<2x32xf32> -> vector<2x32xf32>
    %194 = arith.addf %190, %193 : vector<2x32xf32>
    %195 = arith.negf %194 : vector<2x32xf32>
    %196 = math.exp %195 : vector<2x32xf32>
    %cst_161 = arith.constant 1.000000e+00 : f32
    %197 = vector.broadcast %cst_161 : f32 to vector<2x32xf32>
    %198 = arith.addf %197, %196 : vector<2x32xf32>
    %199 = arith.divf %197, %198 : vector<2x32xf32>
    %c1_162 = arith.constant 1 : index
    %c2_163 = arith.constant 2 : index
    %c0_164 = arith.constant 0 : index
    %200 = vector.load %arg11[%c1_162, %c2_163, %c0_164] : memref<8x16x32xf32, #tpu.memory_space<vmem>>, vector<1x2x32xf32>
    %201 = vector.shape_cast %200 : vector<1x2x32xf32> to vector<2x32xf32>
    %c1_165 = arith.constant 1 : index
    %c0_166 = arith.constant 0 : index
    %c0_167 = arith.constant 0 : index
    %202 = vector.load %arg4[%c1_165, %c0_166, %c0_167] : memref<16x32x32xf32, #tpu.memory_space<vmem>>, vector<1x32x32xf32>
    %203 = vector.shape_cast %202 : vector<1x32x32xf32> to vector<32x32xf32>
    %cst_168 = arith.constant dense<0.000000e+00> : vector<2x32xf32>
    %204 = tpu.matmul %141, %203, %cst_168 {dimension_numbers = #tpu.dot_dimension_numbers<[1], [0], [0], [1], [0, 0, 1, 1], [], []>} : vector<2x32xf32>, vector<32x32xf32>, vector<2x32xf32> -> vector<2x32xf32>
    %205 = arith.addf %201, %204 : vector<2x32xf32>
    %206 = arith.negf %205 : vector<2x32xf32>
    %207 = math.exp %206 : vector<2x32xf32>
    %cst_169 = arith.constant 1.000000e+00 : f32
    %208 = vector.broadcast %cst_169 : f32 to vector<2x32xf32>
    %209 = arith.addf %208, %207 : vector<2x32xf32>
    %210 = arith.divf %208, %209 : vector<2x32xf32>
    %c2_170 = arith.constant 2 : index
    %c2_171 = arith.constant 2 : index
    %c0_172 = arith.constant 0 : index
    %211 = vector.load %arg11[%c2_170, %c2_171, %c0_172] : memref<8x16x32xf32, #tpu.memory_space<vmem>>, vector<1x2x32xf32>
    %212 = vector.shape_cast %211 : vector<1x2x32xf32> to vector<2x32xf32>
    %c2_173 = arith.constant 2 : index
    %c0_174 = arith.constant 0 : index
    %c0_175 = arith.constant 0 : index
    %213 = vector.load %arg4[%c2_173, %c0_174, %c0_175] : memref<16x32x32xf32, #tpu.memory_space<vmem>>, vector<1x32x32xf32>
    %214 = vector.shape_cast %213 : vector<1x32x32xf32> to vector<32x32xf32>
    %cst_176 = arith.constant dense<0.000000e+00> : vector<2x32xf32>
    %215 = tpu.matmul %141, %214, %cst_176 {dimension_numbers = #tpu.dot_dimension_numbers<[1], [0], [0], [1], [0, 0, 1, 1], [], []>} : vector<2x32xf32>, vector<32x32xf32>, vector<2x32xf32> -> vector<2x32xf32>
    %216 = arith.addf %212, %215 : vector<2x32xf32>
    %217 = math.tanh %216 : vector<2x32xf32>
    %c3_177 = arith.constant 3 : index
    %c2_178 = arith.constant 2 : index
    %c0_179 = arith.constant 0 : index
    %218 = vector.load %arg11[%c3_177, %c2_178, %c0_179] : memref<8x16x32xf32, #tpu.memory_space<vmem>>, vector<1x2x32xf32>
    %219 = vector.shape_cast %218 : vector<1x2x32xf32> to vector<2x32xf32>
    %c3_180 = arith.constant 3 : index
    %c0_181 = arith.constant 0 : index
    %c0_182 = arith.constant 0 : index
    %220 = vector.load %arg4[%c3_180, %c0_181, %c0_182] : memref<16x32x32xf32, #tpu.memory_space<vmem>>, vector<1x32x32xf32>
    %221 = vector.shape_cast %220 : vector<1x32x32xf32> to vector<32x32xf32>
    %cst_183 = arith.constant dense<0.000000e+00> : vector<2x32xf32>
    %222 = tpu.matmul %141, %221, %cst_183 {dimension_numbers = #tpu.dot_dimension_numbers<[1], [0], [0], [1], [0, 0, 1, 1], [], []>} : vector<2x32xf32>, vector<32x32xf32>, vector<2x32xf32> -> vector<2x32xf32>
    %223 = arith.addf %219, %222 : vector<2x32xf32>
    %224 = arith.negf %223 : vector<2x32xf32>
    %225 = math.exp %224 : vector<2x32xf32>
    %cst_184 = arith.constant 1.000000e+00 : f32
    %226 = vector.broadcast %cst_184 : f32 to vector<2x32xf32>
    %227 = arith.addf %226, %225 : vector<2x32xf32>
    %228 = arith.divf %226, %227 : vector<2x32xf32>
    %229 = arith.mulf %210, %139 : vector<2x32xf32>
    %230 = arith.mulf %199, %217 : vector<2x32xf32>
    %231 = arith.addf %229, %230 : vector<2x32xf32>
    %232 = math.tanh %231 : vector<2x32xf32>
    %233 = arith.mulf %228, %232 : vector<2x32xf32>
    %c2_185 = arith.constant 2 : index
    %c0_186 = arith.constant 0 : index
    %234 = vector.load %arg13[%c2_185, %c0_186] : memref<16x64xf32, #tpu.memory_space<vmem>>, vector<2x32xf32>
    tpu.vector_store %arg13[%c2_185, %c0_186], %233 {strides = array<i32>} : memref<16x64xf32, #tpu.memory_space<vmem>>, vector<2x32xf32>,
    %c4_187 = arith.constant 4 : index
    %c12 = arith.constant 12 : index
    %c0_188 = arith.constant 0 : index
    %235 = vector.load %arg11[%c4_187, %c12, %c0_188] : memref<8x16x32xf32, #tpu.memory_space<vmem>>, vector<1x2x32xf32>
    %236 = vector.shape_cast %235 : vector<1x2x32xf32> to vector<2x32xf32>
    %c4_189 = arith.constant 4 : index
    %c0_190 = arith.constant 0 : index
    %c0_191 = arith.constant 0 : index
    %237 = vector.load %arg4[%c4_189, %c0_190, %c0_191] : memref<16x32x32xf32, #tpu.memory_space<vmem>>, vector<1x32x32xf32>
    %238 = vector.shape_cast %237 : vector<1x32x32xf32> to vector<32x32xf32>
    %cst_192 = arith.constant dense<0.000000e+00> : vector<2x32xf32>
    %239 = tpu.matmul %187, %238, %cst_192 {dimension_numbers = #tpu.dot_dimension_numbers<[1], [0], [0], [1], [0, 0, 1, 1], [], []>} : vector<2x32xf32>, vector<32x32xf32>, vector<2x32xf32> -> vector<2x32xf32>
    %240 = arith.addf %236, %239 : vector<2x32xf32>
    %241 = arith.negf %240 : vector<2x32xf32>
    %242 = math.exp %241 : vector<2x32xf32>
    %cst_193 = arith.constant 1.000000e+00 : f32
    %243 = vector.broadcast %cst_193 : f32 to vector<2x32xf32>
    %244 = arith.addf %243, %242 : vector<2x32xf32>
    %245 = arith.divf %243, %244 : vector<2x32xf32>
    %c5_194 = arith.constant 5 : index
    %c12_195 = arith.constant 12 : index
    %c0_196 = arith.constant 0 : index
    %246 = vector.load %arg11[%c5_194, %c12_195, %c0_196] : memref<8x16x32xf32, #tpu.memory_space<vmem>>, vector<1x2x32xf32>
    %247 = vector.shape_cast %246 : vector<1x2x32xf32> to vector<2x32xf32>
    %c5_197 = arith.constant 5 : index
    %c0_198 = arith.constant 0 : index
    %c0_199 = arith.constant 0 : index
    %248 = vector.load %arg4[%c5_197, %c0_198, %c0_199] : memref<16x32x32xf32, #tpu.memory_space<vmem>>, vector<1x32x32xf32>
    %249 = vector.shape_cast %248 : vector<1x32x32xf32> to vector<32x32xf32>
    %cst_200 = arith.constant dense<0.000000e+00> : vector<2x32xf32>
    %250 = tpu.matmul %187, %249, %cst_200 {dimension_numbers = #tpu.dot_dimension_numbers<[1], [0], [0], [1], [0, 0, 1, 1], [], []>} : vector<2x32xf32>, vector<32x32xf32>, vector<2x32xf32> -> vector<2x32xf32>
    %251 = arith.addf %247, %250 : vector<2x32xf32>
    %252 = arith.negf %251 : vector<2x32xf32>
    %253 = math.exp %252 : vector<2x32xf32>
    %cst_201 = arith.constant 1.000000e+00 : f32
    %254 = vector.broadcast %cst_201 : f32 to vector<2x32xf32>
    %255 = arith.addf %254, %253 : vector<2x32xf32>
    %256 = arith.divf %254, %255 : vector<2x32xf32>
    %c6_202 = arith.constant 6 : index
    %c12_203 = arith.constant 12 : index
    %c0_204 = arith.constant 0 : index
    %257 = vector.load %arg11[%c6_202, %c12_203, %c0_204] : memref<8x16x32xf32, #tpu.memory_space<vmem>>, vector<1x2x32xf32>
    %258 = vector.shape_cast %257 : vector<1x2x32xf32> to vector<2x32xf32>
    %c6_205 = arith.constant 6 : index
    %c0_206 = arith.constant 0 : index
    %c0_207 = arith.constant 0 : index
    %259 = vector.load %arg4[%c6_205, %c0_206, %c0_207] : memref<16x32x32xf32, #tpu.memory_space<vmem>>, vector<1x32x32xf32>
    %260 = vector.shape_cast %259 : vector<1x32x32xf32> to vector<32x32xf32>
    %cst_208 = arith.constant dense<0.000000e+00> : vector<2x32xf32>
    %261 = tpu.matmul %187, %260, %cst_208 {dimension_numbers = #tpu.dot_dimension_numbers<[1], [0], [0], [1], [0, 0, 1, 1], [], []>} : vector<2x32xf32>, vector<32x32xf32>, vector<2x32xf32> -> vector<2x32xf32>
    %262 = arith.addf %258, %261 : vector<2x32xf32>
    %263 = math.tanh %262 : vector<2x32xf32>
    %c7_209 = arith.constant 7 : index
    %c12_210 = arith.constant 12 : index
    %c0_211 = arith.constant 0 : index
    %264 = vector.load %arg11[%c7_209, %c12_210, %c0_211] : memref<8x16x32xf32, #tpu.memory_space<vmem>>, vector<1x2x32xf32>
    %265 = vector.shape_cast %264 : vector<1x2x32xf32> to vector<2x32xf32>
    %c7_212 = arith.constant 7 : index
    %c0_213 = arith.constant 0 : index
    %c0_214 = arith.constant 0 : index
    %266 = vector.load %arg4[%c7_212, %c0_213, %c0_214] : memref<16x32x32xf32, #tpu.memory_space<vmem>>, vector<1x32x32xf32>
    %267 = vector.shape_cast %266 : vector<1x32x32xf32> to vector<32x32xf32>
    %cst_215 = arith.constant dense<0.000000e+00> : vector<2x32xf32>
    %268 = tpu.matmul %187, %267, %cst_215 {dimension_numbers = #tpu.dot_dimension_numbers<[1], [0], [0], [1], [0, 0, 1, 1], [], []>} : vector<2x32xf32>, vector<32x32xf32>, vector<2x32xf32> -> vector<2x32xf32>
    %269 = arith.addf %265, %268 : vector<2x32xf32>
    %270 = arith.negf %269 : vector<2x32xf32>
    %271 = math.exp %270 : vector<2x32xf32>
    %cst_216 = arith.constant 1.000000e+00 : f32
    %272 = vector.broadcast %cst_216 : f32 to vector<2x32xf32>
    %273 = arith.addf %272, %271 : vector<2x32xf32>
    %274 = arith.divf %272, %273 : vector<2x32xf32>
    %275 = arith.mulf %256, %185 : vector<2x32xf32>
    %276 = arith.mulf %245, %263 : vector<2x32xf32>
    %277 = arith.addf %275, %276 : vector<2x32xf32>
    %278 = math.tanh %277 : vector<2x32xf32>
    %279 = arith.mulf %274, %278 : vector<2x32xf32>
    %c12_217 = arith.constant 12 : index
    %c32_218 = arith.constant 32 : index
    %280 = vector.load %arg13[%c12_217, %c32_218] : memref<16x64xf32, #tpu.memory_space<vmem>>, vector<2x32xf32>
    tpu.vector_store %arg13[%c12_217, %c32_218], %279 {strides = array<i32>} : memref<16x64xf32, #tpu.memory_space<vmem>>, vector<2x32xf32>,
    %c0_219 = arith.constant 0 : index
    %c4_220 = arith.constant 4 : index
    %c0_221 = arith.constant 0 : index
    %281 = vector.load %arg11[%c0_219, %c4_220, %c0_221] : memref<8x16x32xf32, #tpu.memory_space<vmem>>, vector<1x2x32xf32>
    %282 = vector.shape_cast %281 : vector<1x2x32xf32> to vector<2x32xf32>
    %c0_222 = arith.constant 0 : index
    %c0_223 = arith.constant 0 : index
    %c0_224 = arith.constant 0 : index
    %283 = vector.load %arg4[%c0_222, %c0_223, %c0_224] : memref<16x32x32xf32, #tpu.memory_space<vmem>>, vector<1x32x32xf32>
    %284 = vector.shape_cast %283 : vector<1x32x32xf32> to vector<32x32xf32>
    %cst_225 = arith.constant dense<0.000000e+00> : vector<2x32xf32>
    %285 = tpu.matmul %233, %284, %cst_225 {dimension_numbers = #tpu.dot_dimension_numbers<[1], [0], [0], [1], [0, 0, 1, 1], [], []>} : vector<2x32xf32>, vector<32x32xf32>, vector<2x32xf32> -> vector<2x32xf32>
    %286 = arith.addf %282, %285 : vector<2x32xf32>
    %287 = arith.negf %286 : vector<2x32xf32>
    %288 = math.exp %287 : vector<2x32xf32>
    %cst_226 = arith.constant 1.000000e+00 : f32
    %289 = vector.broadcast %cst_226 : f32 to vector<2x32xf32>
    %290 = arith.addf %289, %288 : vector<2x32xf32>
    %291 = arith.divf %289, %290 : vector<2x32xf32>
    %c1_227 = arith.constant 1 : index
    %c4_228 = arith.constant 4 : index
    %c0_229 = arith.constant 0 : index
    %292 = vector.load %arg11[%c1_227, %c4_228, %c0_229] : memref<8x16x32xf32, #tpu.memory_space<vmem>>, vector<1x2x32xf32>
    %293 = vector.shape_cast %292 : vector<1x2x32xf32> to vector<2x32xf32>
    %c1_230 = arith.constant 1 : index
    %c0_231 = arith.constant 0 : index
    %c0_232 = arith.constant 0 : index
    %294 = vector.load %arg4[%c1_230, %c0_231, %c0_232] : memref<16x32x32xf32, #tpu.memory_space<vmem>>, vector<1x32x32xf32>
    %295 = vector.shape_cast %294 : vector<1x32x32xf32> to vector<32x32xf32>
    %cst_233 = arith.constant dense<0.000000e+00> : vector<2x32xf32>
    %296 = tpu.matmul %233, %295, %cst_233 {dimension_numbers = #tpu.dot_dimension_numbers<[1], [0], [0], [1], [0, 0, 1, 1], [], []>} : vector<2x32xf32>, vector<32x32xf32>, vector<2x32xf32> -> vector<2x32xf32>
    %297 = arith.addf %293, %296 : vector<2x32xf32>
    %298 = arith.negf %297 : vector<2x32xf32>
    %299 = math.exp %298 : vector<2x32xf32>
    %cst_234 = arith.constant 1.000000e+00 : f32
    %300 = vector.broadcast %cst_234 : f32 to vector<2x32xf32>
    %301 = arith.addf %300, %299 : vector<2x32xf32>
    %302 = arith.divf %300, %301 : vector<2x32xf32>
    %c2_235 = arith.constant 2 : index
    %c4_236 = arith.constant 4 : index
    %c0_237 = arith.constant 0 : index
    %303 = vector.load %arg11[%c2_235, %c4_236, %c0_237] : memref<8x16x32xf32, #tpu.memory_space<vmem>>, vector<1x2x32xf32>
    %304 = vector.shape_cast %303 : vector<1x2x32xf32> to vector<2x32xf32>
    %c2_238 = arith.constant 2 : index
    %c0_239 = arith.constant 0 : index
    %c0_240 = arith.constant 0 : index
    %305 = vector.load %arg4[%c2_238, %c0_239, %c0_240] : memref<16x32x32xf32, #tpu.memory_space<vmem>>, vector<1x32x32xf32>
    %306 = vector.shape_cast %305 : vector<1x32x32xf32> to vector<32x32xf32>
    %cst_241 = arith.constant dense<0.000000e+00> : vector<2x32xf32>
    %307 = tpu.matmul %233, %306, %cst_241 {dimension_numbers = #tpu.dot_dimension_numbers<[1], [0], [0], [1], [0, 0, 1, 1], [], []>} : vector<2x32xf32>, vector<32x32xf32>, vector<2x32xf32> -> vector<2x32xf32>
    %308 = arith.addf %304, %307 : vector<2x32xf32>
    %309 = math.tanh %308 : vector<2x32xf32>
    %c3_242 = arith.constant 3 : index
    %c4_243 = arith.constant 4 : index
    %c0_244 = arith.constant 0 : index
    %310 = vector.load %arg11[%c3_242, %c4_243, %c0_244] : memref<8x16x32xf32, #tpu.memory_space<vmem>>, vector<1x2x32xf32>
    %311 = vector.shape_cast %310 : vector<1x2x32xf32> to vector<2x32xf32>
    %c3_245 = arith.constant 3 : index
    %c0_246 = arith.constant 0 : index
    %c0_247 = arith.constant 0 : index
    %312 = vector.load %arg4[%c3_245, %c0_246, %c0_247] : memref<16x32x32xf32, #tpu.memory_space<vmem>>, vector<1x32x32xf32>
    %313 = vector.shape_cast %312 : vector<1x32x32xf32> to vector<32x32xf32>
    %cst_248 = arith.constant dense<0.000000e+00> : vector<2x32xf32>
    %314 = tpu.matmul %233, %313, %cst_248 {dimension_numbers = #tpu.dot_dimension_numbers<[1], [0], [0], [1], [0, 0, 1, 1], [], []>} : vector<2x32xf32>, vector<32x32xf32>, vector<2x32xf32> -> vector<2x32xf32>
    %315 = arith.addf %311, %314 : vector<2x32xf32>
    %316 = arith.negf %315 : vector<2x32xf32>
    %317 = math.exp %316 : vector<2x32xf32>
    %cst_249 = arith.constant 1.000000e+00 : f32
    %318 = vector.broadcast %cst_249 : f32 to vector<2x32xf32>
    %319 = arith.addf %318, %317 : vector<2x32xf32>
    %320 = arith.divf %318, %319 : vector<2x32xf32>
    %321 = arith.mulf %302, %231 : vector<2x32xf32>
    %322 = arith.mulf %291, %309 : vector<2x32xf32>
    %323 = arith.addf %321, %322 : vector<2x32xf32>
    %324 = math.tanh %323 : vector<2x32xf32>
    %325 = arith.mulf %320, %324 : vector<2x32xf32>
    %c4_250 = arith.constant 4 : index
    %c0_251 = arith.constant 0 : index
    %326 = vector.load %arg13[%c4_250, %c0_251] : memref<16x64xf32, #tpu.memory_space<vmem>>, vector<2x32xf32>
    tpu.vector_store %arg13[%c4_250, %c0_251], %325 {strides = array<i32>} : memref<16x64xf32, #tpu.memory_space<vmem>>, vector<2x32xf32>,
    %c4_252 = arith.constant 4 : index
    %c10 = arith.constant 10 : index
    %c0_253 = arith.constant 0 : index
    %327 = vector.load %arg11[%c4_252, %c10, %c0_253] : memref<8x16x32xf32, #tpu.memory_space<vmem>>, vector<1x2x32xf32>
    %328 = vector.shape_cast %327 : vector<1x2x32xf32> to vector<2x32xf32>
    %c4_254 = arith.constant 4 : index
    %c0_255 = arith.constant 0 : index
    %c0_256 = arith.constant 0 : index
    %329 = vector.load %arg4[%c4_254, %c0_255, %c0_256] : memref<16x32x32xf32, #tpu.memory_space<vmem>>, vector<1x32x32xf32>
    %330 = vector.shape_cast %329 : vector<1x32x32xf32> to vector<32x32xf32>
    %cst_257 = arith.constant dense<0.000000e+00> : vector<2x32xf32>
    %331 = tpu.matmul %279, %330, %cst_257 {dimension_numbers = #tpu.dot_dimension_numbers<[1], [0], [0], [1], [0, 0, 1, 1], [], []>} : vector<2x32xf32>, vector<32x32xf32>, vector<2x32xf32> -> vector<2x32xf32>
    %332 = arith.addf %328, %331 : vector<2x32xf32>
    %333 = arith.negf %332 : vector<2x32xf32>
    %334 = math.exp %333 : vector<2x32xf32>
    %cst_258 = arith.constant 1.000000e+00 : f32
    %335 = vector.broadcast %cst_258 : f32 to vector<2x32xf32>
    %336 = arith.addf %335, %334 : vector<2x32xf32>
    %337 = arith.divf %335, %336 : vector<2x32xf32>
    %c5_259 = arith.constant 5 : index
    %c10_260 = arith.constant 10 : index
    %c0_261 = arith.constant 0 : index
    %338 = vector.load %arg11[%c5_259, %c10_260, %c0_261] : memref<8x16x32xf32, #tpu.memory_space<vmem>>, vector<1x2x32xf32>
    %339 = vector.shape_cast %338 : vector<1x2x32xf32> to vector<2x32xf32>
    %c5_262 = arith.constant 5 : index
    %c0_263 = arith.constant 0 : index
    %c0_264 = arith.constant 0 : index
    %340 = vector.load %arg4[%c5_262, %c0_263, %c0_264] : memref<16x32x32xf32, #tpu.memory_space<vmem>>, vector<1x32x32xf32>
    %341 = vector.shape_cast %340 : vector<1x32x32xf32> to vector<32x32xf32>
    %cst_265 = arith.constant dense<0.000000e+00> : vector<2x32xf32>
    %342 = tpu.matmul %279, %341, %cst_265 {dimension_numbers = #tpu.dot_dimension_numbers<[1], [0], [0], [1], [0, 0, 1, 1], [], []>} : vector<2x32xf32>, vector<32x32xf32>, vector<2x32xf32> -> vector<2x32xf32>
    %343 = arith.addf %339, %342 : vector<2x32xf32>
    %344 = arith.negf %343 : vector<2x32xf32>
    %345 = math.exp %344 : vector<2x32xf32>
    %cst_266 = arith.constant 1.000000e+00 : f32
    %346 = vector.broadcast %cst_266 : f32 to vector<2x32xf32>
    %347 = arith.addf %346, %345 : vector<2x32xf32>
    %348 = arith.divf %346, %347 : vector<2x32xf32>
    %c6_267 = arith.constant 6 : index
    %c10_268 = arith.constant 10 : index
    %c0_269 = arith.constant 0 : index
    %349 = vector.load %arg11[%c6_267, %c10_268, %c0_269] : memref<8x16x32xf32, #tpu.memory_space<vmem>>, vector<1x2x32xf32>
    %350 = vector.shape_cast %349 : vector<1x2x32xf32> to vector<2x32xf32>
    %c6_270 = arith.constant 6 : index
    %c0_271 = arith.constant 0 : index
    %c0_272 = arith.constant 0 : index
    %351 = vector.load %arg4[%c6_270, %c0_271, %c0_272] : memref<16x32x32xf32, #tpu.memory_space<vmem>>, vector<1x32x32xf32>
    %352 = vector.shape_cast %351 : vector<1x32x32xf32> to vector<32x32xf32>
    %cst_273 = arith.constant dense<0.000000e+00> : vector<2x32xf32>
    %353 = tpu.matmul %279, %352, %cst_273 {dimension_numbers = #tpu.dot_dimension_numbers<[1], [0], [0], [1], [0, 0, 1, 1], [], []>} : vector<2x32xf32>, vector<32x32xf32>, vector<2x32xf32> -> vector<2x32xf32>
    %354 = arith.addf %350, %353 : vector<2x32xf32>
    %355 = math.tanh %354 : vector<2x32xf32>
    %c7_274 = arith.constant 7 : index
    %c10_275 = arith.constant 10 : index
    %c0_276 = arith.constant 0 : index
    %356 = vector.load %arg11[%c7_274, %c10_275, %c0_276] : memref<8x16x32xf32, #tpu.memory_space<vmem>>, vector<1x2x32xf32>
    %357 = vector.shape_cast %356 : vector<1x2x32xf32> to vector<2x32xf32>
    %c7_277 = arith.constant 7 : index
    %c0_278 = arith.constant 0 : index
    %c0_279 = arith.constant 0 : index
    %358 = vector.load %arg4[%c7_277, %c0_278, %c0_279] : memref<16x32x32xf32, #tpu.memory_space<vmem>>, vector<1x32x32xf32>
    %359 = vector.shape_cast %358 : vector<1x32x32xf32> to vector<32x32xf32>
    %cst_280 = arith.constant dense<0.000000e+00> : vector<2x32xf32>
    %360 = tpu.matmul %279, %359, %cst_280 {dimension_numbers = #tpu.dot_dimension_numbers<[1], [0], [0], [1], [0, 0, 1, 1], [], []>} : vector<2x32xf32>, vector<32x32xf32>, vector<2x32xf32> -> vector<2x32xf32>
    %361 = arith.addf %357, %360 : vector<2x32xf32>
    %362 = arith.negf %361 : vector<2x32xf32>
    %363 = math.exp %362 : vector<2x32xf32>
    %cst_281 = arith.constant 1.000000e+00 : f32
    %364 = vector.broadcast %cst_281 : f32 to vector<2x32xf32>
    %365 = arith.addf %364, %363 : vector<2x32xf32>
    %366 = arith.divf %364, %365 : vector<2x32xf32>
    %367 = arith.mulf %348, %277 : vector<2x32xf32>
    %368 = arith.mulf %337, %355 : vector<2x32xf32>
    %369 = arith.addf %367, %368 : vector<2x32xf32>
    %370 = math.tanh %369 : vector<2x32xf32>
    %371 = arith.mulf %366, %370 : vector<2x32xf32>
    %c10_282 = arith.constant 10 : index
    %c32_283 = arith.constant 32 : index
    %372 = vector.load %arg13[%c10_282, %c32_283] : memref<16x64xf32, #tpu.memory_space<vmem>>, vector<2x32xf32>
    tpu.vector_store %arg13[%c10_282, %c32_283], %371 {strides = array<i32>} : memref<16x64xf32, #tpu.memory_space<vmem>>, vector<2x32xf32>,
    %c0_284 = arith.constant 0 : index
    %c6_285 = arith.constant 6 : index
    %c0_286 = arith.constant 0 : index
    %373 = vector.load %arg11[%c0_284, %c6_285, %c0_286] : memref<8x16x32xf32, #tpu.memory_space<vmem>>, vector<1x2x32xf32>
    %374 = vector.shape_cast %373 : vector<1x2x32xf32> to vector<2x32xf32>
    %c0_287 = arith.constant 0 : index
    %c0_288 = arith.constant 0 : index
    %c0_289 = arith.constant 0 : index
    %375 = vector.load %arg4[%c0_287, %c0_288, %c0_289] : memref<16x32x32xf32, #tpu.memory_space<vmem>>, vector<1x32x32xf32>
    %376 = vector.shape_cast %375 : vector<1x32x32xf32> to vector<32x32xf32>
    %cst_290 = arith.constant dense<0.000000e+00> : vector<2x32xf32>
    %377 = tpu.matmul %325, %376, %cst_290 {dimension_numbers = #tpu.dot_dimension_numbers<[1], [0], [0], [1], [0, 0, 1, 1], [], []>} : vector<2x32xf32>, vector<32x32xf32>, vector<2x32xf32> -> vector<2x32xf32>
    %378 = arith.addf %374, %377 : vector<2x32xf32>
    %379 = arith.negf %378 : vector<2x32xf32>
    %380 = math.exp %379 : vector<2x32xf32>
    %cst_291 = arith.constant 1.000000e+00 : f32
    %381 = vector.broadcast %cst_291 : f32 to vector<2x32xf32>
    %382 = arith.addf %381, %380 : vector<2x32xf32>
    %383 = arith.divf %381, %382 : vector<2x32xf32>
    %c1_292 = arith.constant 1 : index
    %c6_293 = arith.constant 6 : index
    %c0_294 = arith.constant 0 : index
    %384 = vector.load %arg11[%c1_292, %c6_293, %c0_294] : memref<8x16x32xf32, #tpu.memory_space<vmem>>, vector<1x2x32xf32>
    %385 = vector.shape_cast %384 : vector<1x2x32xf32> to vector<2x32xf32>
    %c1_295 = arith.constant 1 : index
    %c0_296 = arith.constant 0 : index
    %c0_297 = arith.constant 0 : index
    %386 = vector.load %arg4[%c1_295, %c0_296, %c0_297] : memref<16x32x32xf32, #tpu.memory_space<vmem>>, vector<1x32x32xf32>
    %387 = vector.shape_cast %386 : vector<1x32x32xf32> to vector<32x32xf32>
    %cst_298 = arith.constant dense<0.000000e+00> : vector<2x32xf32>
    %388 = tpu.matmul %325, %387, %cst_298 {dimension_numbers = #tpu.dot_dimension_numbers<[1], [0], [0], [1], [0, 0, 1, 1], [], []>} : vector<2x32xf32>, vector<32x32xf32>, vector<2x32xf32> -> vector<2x32xf32>
    %389 = arith.addf %385, %388 : vector<2x32xf32>
    %390 = arith.negf %389 : vector<2x32xf32>
    %391 = math.exp %390 : vector<2x32xf32>
    %cst_299 = arith.constant 1.000000e+00 : f32
    %392 = vector.broadcast %cst_299 : f32 to vector<2x32xf32>
    %393 = arith.addf %392, %391 : vector<2x32xf32>
    %394 = arith.divf %392, %393 : vector<2x32xf32>
    %c2_300 = arith.constant 2 : index
    %c6_301 = arith.constant 6 : index
    %c0_302 = arith.constant 0 : index
    %395 = vector.load %arg11[%c2_300, %c6_301, %c0_302] : memref<8x16x32xf32, #tpu.memory_space<vmem>>, vector<1x2x32xf32>
    %396 = vector.shape_cast %395 : vector<1x2x32xf32> to vector<2x32xf32>
    %c2_303 = arith.constant 2 : index
    %c0_304 = arith.constant 0 : index
    %c0_305 = arith.constant 0 : index
    %397 = vector.load %arg4[%c2_303, %c0_304, %c0_305] : memref<16x32x32xf32, #tpu.memory_space<vmem>>, vector<1x32x32xf32>
    %398 = vector.shape_cast %397 : vector<1x32x32xf32> to vector<32x32xf32>
    %cst_306 = arith.constant dense<0.000000e+00> : vector<2x32xf32>
    %399 = tpu.matmul %325, %398, %cst_306 {dimension_numbers = #tpu.dot_dimension_numbers<[1], [0], [0], [1], [0, 0, 1, 1], [], []>} : vector<2x32xf32>, vector<32x32xf32>, vector<2x32xf32> -> vector<2x32xf32>
    %400 = arith.addf %396, %399 : vector<2x32xf32>
    %401 = math.tanh %400 : vector<2x32xf32>
    %c3_307 = arith.constant 3 : index
    %c6_308 = arith.constant 6 : index
    %c0_309 = arith.constant 0 : index
    %402 = vector.load %arg11[%c3_307, %c6_308, %c0_309] : memref<8x16x32xf32, #tpu.memory_space<vmem>>, vector<1x2x32xf32>
    %403 = vector.shape_cast %402 : vector<1x2x32xf32> to vector<2x32xf32>
    %c3_310 = arith.constant 3 : index
    %c0_311 = arith.constant 0 : index
    %c0_312 = arith.constant 0 : index
    %404 = vector.load %arg4[%c3_310, %c0_311, %c0_312] : memref<16x32x32xf32, #tpu.memory_space<vmem>>, vector<1x32x32xf32>
    %405 = vector.shape_cast %404 : vector<1x32x32xf32> to vector<32x32xf32>
    %cst_313 = arith.constant dense<0.000000e+00> : vector<2x32xf32>
    %406 = tpu.matmul %325, %405, %cst_313 {dimension_numbers = #tpu.dot_dimension_numbers<[1], [0], [0], [1], [0, 0, 1, 1], [], []>} : vector<2x32xf32>, vector<32x32xf32>, vector<2x32xf32> -> vector<2x32xf32>
    %407 = arith.addf %403, %406 : vector<2x32xf32>
    %408 = arith.negf %407 : vector<2x32xf32>
    %409 = math.exp %408 : vector<2x32xf32>
    %cst_314 = arith.constant 1.000000e+00 : f32
    %410 = vector.broadcast %cst_314 : f32 to vector<2x32xf32>
    %411 = arith.addf %410, %409 : vector<2x32xf32>
    %412 = arith.divf %410, %411 : vector<2x32xf32>
    %413 = arith.mulf %394, %323 : vector<2x32xf32>
    %414 = arith.mulf %383, %401 : vector<2x32xf32>
    %415 = arith.addf %413, %414 : vector<2x32xf32>
    %416 = math.tanh %415 : vector<2x32xf32>
    %417 = arith.mulf %412, %416 : vector<2x32xf32>
    %c6_315 = arith.constant 6 : index
    %c0_316 = arith.constant 0 : index
    %418 = vector.load %arg13[%c6_315, %c0_316] : memref<16x64xf32, #tpu.memory_space<vmem>>, vector<2x32xf32>
    tpu.vector_store %arg13[%c6_315, %c0_316], %417 {strides = array<i32>} : memref<16x64xf32, #tpu.memory_space<vmem>>, vector<2x32xf32>,
    %c4_317 = arith.constant 4 : index
    %c8 = arith.constant 8 : index
    %c0_318 = arith.constant 0 : index
    %419 = vector.load %arg11[%c4_317, %c8, %c0_318] : memref<8x16x32xf32, #tpu.memory_space<vmem>>, vector<1x2x32xf32>
    %420 = vector.shape_cast %419 : vector<1x2x32xf32> to vector<2x32xf32>
    %c4_319 = arith.constant 4 : index
    %c0_320 = arith.constant 0 : index
    %c0_321 = arith.constant 0 : index
    %421 = vector.load %arg4[%c4_319, %c0_320, %c0_321] : memref<16x32x32xf32, #tpu.memory_space<vmem>>, vector<1x32x32xf32>
    %422 = vector.shape_cast %421 : vector<1x32x32xf32> to vector<32x32xf32>
    %cst_322 = arith.constant dense<0.000000e+00> : vector<2x32xf32>
    %423 = tpu.matmul %371, %422, %cst_322 {dimension_numbers = #tpu.dot_dimension_numbers<[1], [0], [0], [1], [0, 0, 1, 1], [], []>} : vector<2x32xf32>, vector<32x32xf32>, vector<2x32xf32> -> vector<2x32xf32>
    %424 = arith.addf %420, %423 : vector<2x32xf32>
    %425 = arith.negf %424 : vector<2x32xf32>
    %426 = math.exp %425 : vector<2x32xf32>
    %cst_323 = arith.constant 1.000000e+00 : f32
    %427 = vector.broadcast %cst_323 : f32 to vector<2x32xf32>
    %428 = arith.addf %427, %426 : vector<2x32xf32>
    %429 = arith.divf %427, %428 : vector<2x32xf32>
    %c5_324 = arith.constant 5 : index
    %c8_325 = arith.constant 8 : index
    %c0_326 = arith.constant 0 : index
    %430 = vector.load %arg11[%c5_324, %c8_325, %c0_326] : memref<8x16x32xf32, #tpu.memory_space<vmem>>, vector<1x2x32xf32>
    %431 = vector.shape_cast %430 : vector<1x2x32xf32> to vector<2x32xf32>
    %c5_327 = arith.constant 5 : index
    %c0_328 = arith.constant 0 : index
    %c0_329 = arith.constant 0 : index
    %432 = vector.load %arg4[%c5_327, %c0_328, %c0_329] : memref<16x32x32xf32, #tpu.memory_space<vmem>>, vector<1x32x32xf32>
    %433 = vector.shape_cast %432 : vector<1x32x32xf32> to vector<32x32xf32>
    %cst_330 = arith.constant dense<0.000000e+00> : vector<2x32xf32>
    %434 = tpu.matmul %371, %433, %cst_330 {dimension_numbers = #tpu.dot_dimension_numbers<[1], [0], [0], [1], [0, 0, 1, 1], [], []>} : vector<2x32xf32>, vector<32x32xf32>, vector<2x32xf32> -> vector<2x32xf32>
    %435 = arith.addf %431, %434 : vector<2x32xf32>
    %436 = arith.negf %435 : vector<2x32xf32>
    %437 = math.exp %436 : vector<2x32xf32>
    %cst_331 = arith.constant 1.000000e+00 : f32
    %438 = vector.broadcast %cst_331 : f32 to vector<2x32xf32>
    %439 = arith.addf %438, %437 : vector<2x32xf32>
    %440 = arith.divf %438, %439 : vector<2x32xf32>
    %c6_332 = arith.constant 6 : index
    %c8_333 = arith.constant 8 : index
    %c0_334 = arith.constant 0 : index
    %441 = vector.load %arg11[%c6_332, %c8_333, %c0_334] : memref<8x16x32xf32, #tpu.memory_space<vmem>>, vector<1x2x32xf32>
    %442 = vector.shape_cast %441 : vector<1x2x32xf32> to vector<2x32xf32>
    %c6_335 = arith.constant 6 : index
    %c0_336 = arith.constant 0 : index
    %c0_337 = arith.constant 0 : index
    %443 = vector.load %arg4[%c6_335, %c0_336, %c0_337] : memref<16x32x32xf32, #tpu.memory_space<vmem>>, vector<1x32x32xf32>
    %444 = vector.shape_cast %443 : vector<1x32x32xf32> to vector<32x32xf32>
    %cst_338 = arith.constant dense<0.000000e+00> : vector<2x32xf32>
    %445 = tpu.matmul %371, %444, %cst_338 {dimension_numbers = #tpu.dot_dimension_numbers<[1], [0], [0], [1], [0, 0, 1, 1], [], []>} : vector<2x32xf32>, vector<32x32xf32>, vector<2x32xf32> -> vector<2x32xf32>
    %446 = arith.addf %442, %445 : vector<2x32xf32>
    %447 = math.tanh %446 : vector<2x32xf32>
    %c7_339 = arith.constant 7 : index
    %c8_340 = arith.constant 8 : index
    %c0_341 = arith.constant 0 : index
    %448 = vector.load %arg11[%c7_339, %c8_340, %c0_341] : memref<8x16x32xf32, #tpu.memory_space<vmem>>, vector<1x2x32xf32>
    %449 = vector.shape_cast %448 : vector<1x2x32xf32> to vector<2x32xf32>
    %c7_342 = arith.constant 7 : index
    %c0_343 = arith.constant 0 : index
    %c0_344 = arith.constant 0 : index
    %450 = vector.load %arg4[%c7_342, %c0_343, %c0_344] : memref<16x32x32xf32, #tpu.memory_space<vmem>>, vector<1x32x32xf32>
    %451 = vector.shape_cast %450 : vector<1x32x32xf32> to vector<32x32xf32>
    %cst_345 = arith.constant dense<0.000000e+00> : vector<2x32xf32>
    %452 = tpu.matmul %371, %451, %cst_345 {dimension_numbers = #tpu.dot_dimension_numbers<[1], [0], [0], [1], [0, 0, 1, 1], [], []>} : vector<2x32xf32>, vector<32x32xf32>, vector<2x32xf32> -> vector<2x32xf32>
    %453 = arith.addf %449, %452 : vector<2x32xf32>
    %454 = arith.negf %453 : vector<2x32xf32>
    %455 = math.exp %454 : vector<2x32xf32>
    %cst_346 = arith.constant 1.000000e+00 : f32
    %456 = vector.broadcast %cst_346 : f32 to vector<2x32xf32>
    %457 = arith.addf %456, %455 : vector<2x32xf32>
    %458 = arith.divf %456, %457 : vector<2x32xf32>
    %459 = arith.mulf %440, %369 : vector<2x32xf32>
    %460 = arith.mulf %429, %447 : vector<2x32xf32>
    %461 = arith.addf %459, %460 : vector<2x32xf32>
    %462 = math.tanh %461 : vector<2x32xf32>
    %463 = arith.mulf %458, %462 : vector<2x32xf32>
    %c8_347 = arith.constant 8 : index
    %c32_348 = arith.constant 32 : index
    %464 = vector.load %arg13[%c8_347, %c32_348] : memref<16x64xf32, #tpu.memory_space<vmem>>, vector<2x32xf32>
    tpu.vector_store %arg13[%c8_347, %c32_348], %463 {strides = array<i32>} : memref<16x64xf32, #tpu.memory_space<vmem>>, vector<2x32xf32>,
    %c0_349 = arith.constant 0 : index
    %c8_350 = arith.constant 8 : index
    %c0_351 = arith.constant 0 : index
    %465 = vector.load %arg11[%c0_349, %c8_350, %c0_351] : memref<8x16x32xf32, #tpu.memory_space<vmem>>, vector<1x2x32xf32>
    %466 = vector.shape_cast %465 : vector<1x2x32xf32> to vector<2x32xf32>
    %c0_352 = arith.constant 0 : index
    %c0_353 = arith.constant 0 : index
    %c0_354 = arith.constant 0 : index
    %467 = vector.load %arg4[%c0_352, %c0_353, %c0_354] : memref<16x32x32xf32, #tpu.memory_space<vmem>>, vector<1x32x32xf32>
    %468 = vector.shape_cast %467 : vector<1x32x32xf32> to vector<32x32xf32>
    %cst_355 = arith.constant dense<0.000000e+00> : vector<2x32xf32>
    %469 = tpu.matmul %417, %468, %cst_355 {dimension_numbers = #tpu.dot_dimension_numbers<[1], [0], [0], [1], [0, 0, 1, 1], [], []>} : vector<2x32xf32>, vector<32x32xf32>, vector<2x32xf32> -> vector<2x32xf32>
    %470 = arith.addf %466, %469 : vector<2x32xf32>
    %471 = arith.negf %470 : vector<2x32xf32>
    %472 = math.exp %471 : vector<2x32xf32>
    %cst_356 = arith.constant 1.000000e+00 : f32
    %473 = vector.broadcast %cst_356 : f32 to vector<2x32xf32>
    %474 = arith.addf %473, %472 : vector<2x32xf32>
    %475 = arith.divf %473, %474 : vector<2x32xf32>
    %c1_357 = arith.constant 1 : index
    %c8_358 = arith.constant 8 : index
    %c0_359 = arith.constant 0 : index
    %476 = vector.load %arg11[%c1_357, %c8_358, %c0_359] : memref<8x16x32xf32, #tpu.memory_space<vmem>>, vector<1x2x32xf32>
    %477 = vector.shape_cast %476 : vector<1x2x32xf32> to vector<2x32xf32>
    %c1_360 = arith.constant 1 : index
    %c0_361 = arith.constant 0 : index
    %c0_362 = arith.constant 0 : index
    %478 = vector.load %arg4[%c1_360, %c0_361, %c0_362] : memref<16x32x32xf32, #tpu.memory_space<vmem>>, vector<1x32x32xf32>
    %479 = vector.shape_cast %478 : vector<1x32x32xf32> to vector<32x32xf32>
    %cst_363 = arith.constant dense<0.000000e+00> : vector<2x32xf32>
    %480 = tpu.matmul %417, %479, %cst_363 {dimension_numbers = #tpu.dot_dimension_numbers<[1], [0], [0], [1], [0, 0, 1, 1], [], []>} : vector<2x32xf32>, vector<32x32xf32>, vector<2x32xf32> -> vector<2x32xf32>
    %481 = arith.addf %477, %480 : vector<2x32xf32>
    %482 = arith.negf %481 : vector<2x32xf32>
    %483 = math.exp %482 : vector<2x32xf32>
    %cst_364 = arith.constant 1.000000e+00 : f32
    %484 = vector.broadcast %cst_364 : f32 to vector<2x32xf32>
    %485 = arith.addf %484, %483 : vector<2x32xf32>
    %486 = arith.divf %484, %485 : vector<2x32xf32>
    %c2_365 = arith.constant 2 : index
    %c8_366 = arith.constant 8 : index
    %c0_367 = arith.constant 0 : index
    %487 = vector.load %arg11[%c2_365, %c8_366, %c0_367] : memref<8x16x32xf32, #tpu.memory_space<vmem>>, vector<1x2x32xf32>
    %488 = vector.shape_cast %487 : vector<1x2x32xf32> to vector<2x32xf32>
    %c2_368 = arith.constant 2 : index
    %c0_369 = arith.constant 0 : index
    %c0_370 = arith.constant 0 : index
    %489 = vector.load %arg4[%c2_368, %c0_369, %c0_370] : memref<16x32x32xf32, #tpu.memory_space<vmem>>, vector<1x32x32xf32>
    %490 = vector.shape_cast %489 : vector<1x32x32xf32> to vector<32x32xf32>
    %cst_371 = arith.constant dense<0.000000e+00> : vector<2x32xf32>
    %491 = tpu.matmul %417, %490, %cst_371 {dimension_numbers = #tpu.dot_dimension_numbers<[1], [0], [0], [1], [0, 0, 1, 1], [], []>} : vector<2x32xf32>, vector<32x32xf32>, vector<2x32xf32> -> vector<2x32xf32>
    %492 = arith.addf %488, %491 : vector<2x32xf32>
    %493 = math.tanh %492 : vector<2x32xf32>
    %c3_372 = arith.constant 3 : index
    %c8_373 = arith.constant 8 : index
    %c0_374 = arith.constant 0 : index
    %494 = vector.load %arg11[%c3_372, %c8_373, %c0_374] : memref<8x16x32xf32, #tpu.memory_space<vmem>>, vector<1x2x32xf32>
    %495 = vector.shape_cast %494 : vector<1x2x32xf32> to vector<2x32xf32>
    %c3_375 = arith.constant 3 : index
    %c0_376 = arith.constant 0 : index
    %c0_377 = arith.constant 0 : index
    %496 = vector.load %arg4[%c3_375, %c0_376, %c0_377] : memref<16x32x32xf32, #tpu.memory_space<vmem>>, vector<1x32x32xf32>
    %497 = vector.shape_cast %496 : vector<1x32x32xf32> to vector<32x32xf32>
    %cst_378 = arith.constant dense<0.000000e+00> : vector<2x32xf32>
    %498 = tpu.matmul %417, %497, %cst_378 {dimension_numbers = #tpu.dot_dimension_numbers<[1], [0], [0], [1], [0, 0, 1, 1], [], []>} : vector<2x32xf32>, vector<32x32xf32>, vector<2x32xf32> -> vector<2x32xf32>
    %499 = arith.addf %495, %498 : vector<2x32xf32>
    %500 = arith.negf %499 : vector<2x32xf32>
    %501 = math.exp %500 : vector<2x32xf32>
    %cst_379 = arith.constant 1.000000e+00 : f32
    %502 = vector.broadcast %cst_379 : f32 to vector<2x32xf32>
    %503 = arith.addf %502, %501 : vector<2x32xf32>
    %504 = arith.divf %502, %503 : vector<2x32xf32>
    %505 = arith.mulf %486, %415 : vector<2x32xf32>
    %506 = arith.mulf %475, %493 : vector<2x32xf32>
    %507 = arith.addf %505, %506 : vector<2x32xf32>
    %508 = math.tanh %507 : vector<2x32xf32>
    %509 = arith.mulf %504, %508 : vector<2x32xf32>
    %c8_380 = arith.constant 8 : index
    %c0_381 = arith.constant 0 : index
    %510 = vector.load %arg13[%c8_380, %c0_381] : memref<16x64xf32, #tpu.memory_space<vmem>>, vector<2x32xf32>
    tpu.vector_store %arg13[%c8_380, %c0_381], %509 {strides = array<i32>} : memref<16x64xf32, #tpu.memory_space<vmem>>, vector<2x32xf32>,
    %c4_382 = arith.constant 4 : index
    %c6_383 = arith.constant 6 : index
    %c0_384 = arith.constant 0 : index
    %511 = vector.load %arg11[%c4_382, %c6_383, %c0_384] : memref<8x16x32xf32, #tpu.memory_space<vmem>>, vector<1x2x32xf32>
    %512 = vector.shape_cast %511 : vector<1x2x32xf32> to vector<2x32xf32>
    %c4_385 = arith.constant 4 : index
    %c0_386 = arith.constant 0 : index
    %c0_387 = arith.constant 0 : index
    %513 = vector.load %arg4[%c4_385, %c0_386, %c0_387] : memref<16x32x32xf32, #tpu.memory_space<vmem>>, vector<1x32x32xf32>
    %514 = vector.shape_cast %513 : vector<1x32x32xf32> to vector<32x32xf32>
    %cst_388 = arith.constant dense<0.000000e+00> : vector<2x32xf32>
    %515 = tpu.matmul %463, %514, %cst_388 {dimension_numbers = #tpu.dot_dimension_numbers<[1], [0], [0], [1], [0, 0, 1, 1], [], []>} : vector<2x32xf32>, vector<32x32xf32>, vector<2x32xf32> -> vector<2x32xf32>
    %516 = arith.addf %512, %515 : vector<2x32xf32>
    %517 = arith.negf %516 : vector<2x32xf32>
    %518 = math.exp %517 : vector<2x32xf32>
    %cst_389 = arith.constant 1.000000e+00 : f32
    %519 = vector.broadcast %cst_389 : f32 to vector<2x32xf32>
    %520 = arith.addf %519, %518 : vector<2x32xf32>
    %521 = arith.divf %519, %520 : vector<2x32xf32>
    %c5_390 = arith.constant 5 : index
    %c6_391 = arith.constant 6 : index
    %c0_392 = arith.constant 0 : index
    %522 = vector.load %arg11[%c5_390, %c6_391, %c0_392] : memref<8x16x32xf32, #tpu.memory_space<vmem>>, vector<1x2x32xf32>
    %523 = vector.shape_cast %522 : vector<1x2x32xf32> to vector<2x32xf32>
    %c5_393 = arith.constant 5 : index
    %c0_394 = arith.constant 0 : index
    %c0_395 = arith.constant 0 : index
    %524 = vector.load %arg4[%c5_393, %c0_394, %c0_395] : memref<16x32x32xf32, #tpu.memory_space<vmem>>, vector<1x32x32xf32>
    %525 = vector.shape_cast %524 : vector<1x32x32xf32> to vector<32x32xf32>
    %cst_396 = arith.constant dense<0.000000e+00> : vector<2x32xf32>
    %526 = tpu.matmul %463, %525, %cst_396 {dimension_numbers = #tpu.dot_dimension_numbers<[1], [0], [0], [1], [0, 0, 1, 1], [], []>} : vector<2x32xf32>, vector<32x32xf32>, vector<2x32xf32> -> vector<2x32xf32>
    %527 = arith.addf %523, %526 : vector<2x32xf32>
    %528 = arith.negf %527 : vector<2x32xf32>
    %529 = math.exp %528 : vector<2x32xf32>
    %cst_397 = arith.constant 1.000000e+00 : f32
    %530 = vector.broadcast %cst_397 : f32 to vector<2x32xf32>
    %531 = arith.addf %530, %529 : vector<2x32xf32>
    %532 = arith.divf %530, %531 : vector<2x32xf32>
    %c6_398 = arith.constant 6 : index
    %c6_399 = arith.constant 6 : index
    %c0_400 = arith.constant 0 : index
    %533 = vector.load %arg11[%c6_398, %c6_399, %c0_400] : memref<8x16x32xf32, #tpu.memory_space<vmem>>, vector<1x2x32xf32>
    %534 = vector.shape_cast %533 : vector<1x2x32xf32> to vector<2x32xf32>
    %c6_401 = arith.constant 6 : index
    %c0_402 = arith.constant 0 : index
    %c0_403 = arith.constant 0 : index
    %535 = vector.load %arg4[%c6_401, %c0_402, %c0_403] : memref<16x32x32xf32, #tpu.memory_space<vmem>>, vector<1x32x32xf32>
    %536 = vector.shape_cast %535 : vector<1x32x32xf32> to vector<32x32xf32>
    %cst_404 = arith.constant dense<0.000000e+00> : vector<2x32xf32>
    %537 = tpu.matmul %463, %536, %cst_404 {dimension_numbers = #tpu.dot_dimension_numbers<[1], [0], [0], [1], [0, 0, 1, 1], [], []>} : vector<2x32xf32>, vector<32x32xf32>, vector<2x32xf32> -> vector<2x32xf32>
    %538 = arith.addf %534, %537 : vector<2x32xf32>
    %539 = math.tanh %538 : vector<2x32xf32>
    %c7_405 = arith.constant 7 : index
    %c6_406 = arith.constant 6 : index
    %c0_407 = arith.constant 0 : index
    %540 = vector.load %arg11[%c7_405, %c6_406, %c0_407] : memref<8x16x32xf32, #tpu.memory_space<vmem>>, vector<1x2x32xf32>
    %541 = vector.shape_cast %540 : vector<1x2x32xf32> to vector<2x32xf32>
    %c7_408 = arith.constant 7 : index
    %c0_409 = arith.constant 0 : index
    %c0_410 = arith.constant 0 : index
    %542 = vector.load %arg4[%c7_408, %c0_409, %c0_410] : memref<16x32x32xf32, #tpu.memory_space<vmem>>, vector<1x32x32xf32>
    %543 = vector.shape_cast %542 : vector<1x32x32xf32> to vector<32x32xf32>
    %cst_411 = arith.constant dense<0.000000e+00> : vector<2x32xf32>
    %544 = tpu.matmul %463, %543, %cst_411 {dimension_numbers = #tpu.dot_dimension_numbers<[1], [0], [0], [1], [0, 0, 1, 1], [], []>} : vector<2x32xf32>, vector<32x32xf32>, vector<2x32xf32> -> vector<2x32xf32>
    %545 = arith.addf %541, %544 : vector<2x32xf32>
    %546 = arith.negf %545 : vector<2x32xf32>
    %547 = math.exp %546 : vector<2x32xf32>
    %cst_412 = arith.constant 1.000000e+00 : f32
    %548 = vector.broadcast %cst_412 : f32 to vector<2x32xf32>
    %549 = arith.addf %548, %547 : vector<2x32xf32>
    %550 = arith.divf %548, %549 : vector<2x32xf32>
    %551 = arith.mulf %532, %461 : vector<2x32xf32>
    %552 = arith.mulf %521, %539 : vector<2x32xf32>
    %553 = arith.addf %551, %552 : vector<2x32xf32>
    %554 = math.tanh %553 : vector<2x32xf32>
    %555 = arith.mulf %550, %554 : vector<2x32xf32>
    %c6_413 = arith.constant 6 : index
    %c32_414 = arith.constant 32 : index
    %556 = vector.load %arg13[%c6_413, %c32_414] : memref<16x64xf32, #tpu.memory_space<vmem>>, vector<2x32xf32>
    tpu.vector_store %arg13[%c6_413, %c32_414], %555 {strides = array<i32>} : memref<16x64xf32, #tpu.memory_space<vmem>>, vector<2x32xf32>,
    %c0_415 = arith.constant 0 : index
    %c10_416 = arith.constant 10 : index
    %c0_417 = arith.constant 0 : index
    %557 = vector.load %arg11[%c0_415, %c10_416, %c0_417] : memref<8x16x32xf32, #tpu.memory_space<vmem>>, vector<1x2x32xf32>
    %558 = vector.shape_cast %557 : vector<1x2x32xf32> to vector<2x32xf32>
    %c0_418 = arith.constant 0 : index
    %c0_419 = arith.constant 0 : index
    %c0_420 = arith.constant 0 : index
    %559 = vector.load %arg4[%c0_418, %c0_419, %c0_420] : memref<16x32x32xf32, #tpu.memory_space<vmem>>, vector<1x32x32xf32>
    %560 = vector.shape_cast %559 : vector<1x32x32xf32> to vector<32x32xf32>
    %cst_421 = arith.constant dense<0.000000e+00> : vector<2x32xf32>
    %561 = tpu.matmul %509, %560, %cst_421 {dimension_numbers = #tpu.dot_dimension_numbers<[1], [0], [0], [1], [0, 0, 1, 1], [], []>} : vector<2x32xf32>, vector<32x32xf32>, vector<2x32xf32> -> vector<2x32xf32>
    %562 = arith.addf %558, %561 : vector<2x32xf32>
    %563 = arith.negf %562 : vector<2x32xf32>
    %564 = math.exp %563 : vector<2x32xf32>
    %cst_422 = arith.constant 1.000000e+00 : f32
    %565 = vector.broadcast %cst_422 : f32 to vector<2x32xf32>
    %566 = arith.addf %565, %564 : vector<2x32xf32>
    %567 = arith.divf %565, %566 : vector<2x32xf32>
    %c1_423 = arith.constant 1 : index
    %c10_424 = arith.constant 10 : index
    %c0_425 = arith.constant 0 : index
    %568 = vector.load %arg11[%c1_423, %c10_424, %c0_425] : memref<8x16x32xf32, #tpu.memory_space<vmem>>, vector<1x2x32xf32>
    %569 = vector.shape_cast %568 : vector<1x2x32xf32> to vector<2x32xf32>
    %c1_426 = arith.constant 1 : index
    %c0_427 = arith.constant 0 : index
    %c0_428 = arith.constant 0 : index
    %570 = vector.load %arg4[%c1_426, %c0_427, %c0_428] : memref<16x32x32xf32, #tpu.memory_space<vmem>>, vector<1x32x32xf32>
    %571 = vector.shape_cast %570 : vector<1x32x32xf32> to vector<32x32xf32>
    %cst_429 = arith.constant dense<0.000000e+00> : vector<2x32xf32>
    %572 = tpu.matmul %509, %571, %cst_429 {dimension_numbers = #tpu.dot_dimension_numbers<[1], [0], [0], [1], [0, 0, 1, 1], [], []>} : vector<2x32xf32>, vector<32x32xf32>, vector<2x32xf32> -> vector<2x32xf32>
    %573 = arith.addf %569, %572 : vector<2x32xf32>
    %574 = arith.negf %573 : vector<2x32xf32>
    %575 = math.exp %574 : vector<2x32xf32>
    %cst_430 = arith.constant 1.000000e+00 : f32
    %576 = vector.broadcast %cst_430 : f32 to vector<2x32xf32>
    %577 = arith.addf %576, %575 : vector<2x32xf32>
    %578 = arith.divf %576, %577 : vector<2x32xf32>
    %c2_431 = arith.constant 2 : index
    %c10_432 = arith.constant 10 : index
    %c0_433 = arith.constant 0 : index
    %579 = vector.load %arg11[%c2_431, %c10_432, %c0_433] : memref<8x16x32xf32, #tpu.memory_space<vmem>>, vector<1x2x32xf32>
    %580 = vector.shape_cast %579 : vector<1x2x32xf32> to vector<2x32xf32>
    %c2_434 = arith.constant 2 : index
    %c0_435 = arith.constant 0 : index
    %c0_436 = arith.constant 0 : index
    %581 = vector.load %arg4[%c2_434, %c0_435, %c0_436] : memref<16x32x32xf32, #tpu.memory_space<vmem>>, vector<1x32x32xf32>
    %582 = vector.shape_cast %581 : vector<1x32x32xf32> to vector<32x32xf32>
    %cst_437 = arith.constant dense<0.000000e+00> : vector<2x32xf32>
    %583 = tpu.matmul %509, %582, %cst_437 {dimension_numbers = #tpu.dot_dimension_numbers<[1], [0], [0], [1], [0, 0, 1, 1], [], []>} : vector<2x32xf32>, vector<32x32xf32>, vector<2x32xf32> -> vector<2x32xf32>
    %584 = arith.addf %580, %583 : vector<2x32xf32>
    %585 = math.tanh %584 : vector<2x32xf32>
    %c3_438 = arith.constant 3 : index
    %c10_439 = arith.constant 10 : index
    %c0_440 = arith.constant 0 : index
    %586 = vector.load %arg11[%c3_438, %c10_439, %c0_440] : memref<8x16x32xf32, #tpu.memory_space<vmem>>, vector<1x2x32xf32>
    %587 = vector.shape_cast %586 : vector<1x2x32xf32> to vector<2x32xf32>
    %c3_441 = arith.constant 3 : index
    %c0_442 = arith.constant 0 : index
    %c0_443 = arith.constant 0 : index
    %588 = vector.load %arg4[%c3_441, %c0_442, %c0_443] : memref<16x32x32xf32, #tpu.memory_space<vmem>>, vector<1x32x32xf32>
    %589 = vector.shape_cast %588 : vector<1x32x32xf32> to vector<32x32xf32>
    %cst_444 = arith.constant dense<0.000000e+00> : vector<2x32xf32>
    %590 = tpu.matmul %509, %589, %cst_444 {dimension_numbers = #tpu.dot_dimension_numbers<[1], [0], [0], [1], [0, 0, 1, 1], [], []>} : vector<2x32xf32>, vector<32x32xf32>, vector<2x32xf32> -> vector<2x32xf32>
    %591 = arith.addf %587, %590 : vector<2x32xf32>
    %592 = arith.negf %591 : vector<2x32xf32>
    %593 = math.exp %592 : vector<2x32xf32>
    %cst_445 = arith.constant 1.000000e+00 : f32
    %594 = vector.broadcast %cst_445 : f32 to vector<2x32xf32>
    %595 = arith.addf %594, %593 : vector<2x32xf32>
    %596 = arith.divf %594, %595 : vector<2x32xf32>
    %597 = arith.mulf %578, %507 : vector<2x32xf32>
    %598 = arith.mulf %567, %585 : vector<2x32xf32>
    %599 = arith.addf %597, %598 : vector<2x32xf32>
    %600 = math.tanh %599 : vector<2x32xf32>
    %601 = arith.mulf %596, %600 : vector<2x32xf32>
    %c10_446 = arith.constant 10 : index
    %c0_447 = arith.constant 0 : index
    %602 = vector.load %arg13[%c10_446, %c0_447] : memref<16x64xf32, #tpu.memory_space<vmem>>, vector<2x32xf32>
    tpu.vector_store %arg13[%c10_446, %c0_447], %601 {strides = array<i32>} : memref<16x64xf32, #tpu.memory_space<vmem>>, vector<2x32xf32>,
    %c4_448 = arith.constant 4 : index
    %c4_449 = arith.constant 4 : index
    %c0_450 = arith.constant 0 : index
    %603 = vector.load %arg11[%c4_448, %c4_449, %c0_450] : memref<8x16x32xf32, #tpu.memory_space<vmem>>, vector<1x2x32xf32>
    %604 = vector.shape_cast %603 : vector<1x2x32xf32> to vector<2x32xf32>
    %c4_451 = arith.constant 4 : index
    %c0_452 = arith.constant 0 : index
    %c0_453 = arith.constant 0 : index
    %605 = vector.load %arg4[%c4_451, %c0_452, %c0_453] : memref<16x32x32xf32, #tpu.memory_space<vmem>>, vector<1x32x32xf32>
    %606 = vector.shape_cast %605 : vector<1x32x32xf32> to vector<32x32xf32>
    %cst_454 = arith.constant dense<0.000000e+00> : vector<2x32xf32>
    %607 = tpu.matmul %555, %606, %cst_454 {dimension_numbers = #tpu.dot_dimension_numbers<[1], [0], [0], [1], [0, 0, 1, 1], [], []>} : vector<2x32xf32>, vector<32x32xf32>, vector<2x32xf32> -> vector<2x32xf32>
    %608 = arith.addf %604, %607 : vector<2x32xf32>
    %609 = arith.negf %608 : vector<2x32xf32>
    %610 = math.exp %609 : vector<2x32xf32>
    %cst_455 = arith.constant 1.000000e+00 : f32
    %611 = vector.broadcast %cst_455 : f32 to vector<2x32xf32>
    %612 = arith.addf %611, %610 : vector<2x32xf32>
    %613 = arith.divf %611, %612 : vector<2x32xf32>
    %c5_456 = arith.constant 5 : index
    %c4_457 = arith.constant 4 : index
    %c0_458 = arith.constant 0 : index
    %614 = vector.load %arg11[%c5_456, %c4_457, %c0_458] : memref<8x16x32xf32, #tpu.memory_space<vmem>>, vector<1x2x32xf32>
    %615 = vector.shape_cast %614 : vector<1x2x32xf32> to vector<2x32xf32>
    %c5_459 = arith.constant 5 : index
    %c0_460 = arith.constant 0 : index
    %c0_461 = arith.constant 0 : index
    %616 = vector.load %arg4[%c5_459, %c0_460, %c0_461] : memref<16x32x32xf32, #tpu.memory_space<vmem>>, vector<1x32x32xf32>
    %617 = vector.shape_cast %616 : vector<1x32x32xf32> to vector<32x32xf32>
    %cst_462 = arith.constant dense<0.000000e+00> : vector<2x32xf32>
    %618 = tpu.matmul %555, %617, %cst_462 {dimension_numbers = #tpu.dot_dimension_numbers<[1], [0], [0], [1], [0, 0, 1, 1], [], []>} : vector<2x32xf32>, vector<32x32xf32>, vector<2x32xf32> -> vector<2x32xf32>
    %619 = arith.addf %615, %618 : vector<2x32xf32>
    %620 = arith.negf %619 : vector<2x32xf32>
    %621 = math.exp %620 : vector<2x32xf32>
    %cst_463 = arith.constant 1.000000e+00 : f32
    %622 = vector.broadcast %cst_463 : f32 to vector<2x32xf32>
    %623 = arith.addf %622, %621 : vector<2x32xf32>
    %624 = arith.divf %622, %623 : vector<2x32xf32>
    %c6_464 = arith.constant 6 : index
    %c4_465 = arith.constant 4 : index
    %c0_466 = arith.constant 0 : index
    %625 = vector.load %arg11[%c6_464, %c4_465, %c0_466] : memref<8x16x32xf32, #tpu.memory_space<vmem>>, vector<1x2x32xf32>
    %626 = vector.shape_cast %625 : vector<1x2x32xf32> to vector<2x32xf32>
    %c6_467 = arith.constant 6 : index
    %c0_468 = arith.constant 0 : index
    %c0_469 = arith.constant 0 : index
    %627 = vector.load %arg4[%c6_467, %c0_468, %c0_469] : memref<16x32x32xf32, #tpu.memory_space<vmem>>, vector<1x32x32xf32>
    %628 = vector.shape_cast %627 : vector<1x32x32xf32> to vector<32x32xf32>
    %cst_470 = arith.constant dense<0.000000e+00> : vector<2x32xf32>
    %629 = tpu.matmul %555, %628, %cst_470 {dimension_numbers = #tpu.dot_dimension_numbers<[1], [0], [0], [1], [0, 0, 1, 1], [], []>} : vector<2x32xf32>, vector<32x32xf32>, vector<2x32xf32> -> vector<2x32xf32>
    %630 = arith.addf %626, %629 : vector<2x32xf32>
    %631 = math.tanh %630 : vector<2x32xf32>
    %c7_471 = arith.constant 7 : index
    %c4_472 = arith.constant 4 : index
    %c0_473 = arith.constant 0 : index
    %632 = vector.load %arg11[%c7_471, %c4_472, %c0_473] : memref<8x16x32xf32, #tpu.memory_space<vmem>>, vector<1x2x32xf32>
    %633 = vector.shape_cast %632 : vector<1x2x32xf32> to vector<2x32xf32>
    %c7_474 = arith.constant 7 : index
    %c0_475 = arith.constant 0 : index
    %c0_476 = arith.constant 0 : index
    %634 = vector.load %arg4[%c7_474, %c0_475, %c0_476] : memref<16x32x32xf32, #tpu.memory_space<vmem>>, vector<1x32x32xf32>
    %635 = vector.shape_cast %634 : vector<1x32x32xf32> to vector<32x32xf32>
    %cst_477 = arith.constant dense<0.000000e+00> : vector<2x32xf32>
    %636 = tpu.matmul %555, %635, %cst_477 {dimension_numbers = #tpu.dot_dimension_numbers<[1], [0], [0], [1], [0, 0, 1, 1], [], []>} : vector<2x32xf32>, vector<32x32xf32>, vector<2x32xf32> -> vector<2x32xf32>
    %637 = arith.addf %633, %636 : vector<2x32xf32>
    %638 = arith.negf %637 : vector<2x32xf32>
    %639 = math.exp %638 : vector<2x32xf32>
    %cst_478 = arith.constant 1.000000e+00 : f32
    %640 = vector.broadcast %cst_478 : f32 to vector<2x32xf32>
    %641 = arith.addf %640, %639 : vector<2x32xf32>
    %642 = arith.divf %640, %641 : vector<2x32xf32>
    %643 = arith.mulf %624, %553 : vector<2x32xf32>
    %644 = arith.mulf %613, %631 : vector<2x32xf32>
    %645 = arith.addf %643, %644 : vector<2x32xf32>
    %646 = math.tanh %645 : vector<2x32xf32>
    %647 = arith.mulf %642, %646 : vector<2x32xf32>
    %c4_479 = arith.constant 4 : index
    %c32_480 = arith.constant 32 : index
    %648 = vector.load %arg13[%c4_479, %c32_480] : memref<16x64xf32, #tpu.memory_space<vmem>>, vector<2x32xf32>
    tpu.vector_store %arg13[%c4_479, %c32_480], %647 {strides = array<i32>} : memref<16x64xf32, #tpu.memory_space<vmem>>, vector<2x32xf32>,
    %c0_481 = arith.constant 0 : index
    %c12_482 = arith.constant 12 : index
    %c0_483 = arith.constant 0 : index
    %649 = vector.load %arg11[%c0_481, %c12_482, %c0_483] : memref<8x16x32xf32, #tpu.memory_space<vmem>>, vector<1x2x32xf32>
    %650 = vector.shape_cast %649 : vector<1x2x32xf32> to vector<2x32xf32>
    %c0_484 = arith.constant 0 : index
    %c0_485 = arith.constant 0 : index
    %c0_486 = arith.constant 0 : index
    %651 = vector.load %arg4[%c0_484, %c0_485, %c0_486] : memref<16x32x32xf32, #tpu.memory_space<vmem>>, vector<1x32x32xf32>
    %652 = vector.shape_cast %651 : vector<1x32x32xf32> to vector<32x32xf32>
    %cst_487 = arith.constant dense<0.000000e+00> : vector<2x32xf32>
    %653 = tpu.matmul %601, %652, %cst_487 {dimension_numbers = #tpu.dot_dimension_numbers<[1], [0], [0], [1], [0, 0, 1, 1], [], []>} : vector<2x32xf32>, vector<32x32xf32>, vector<2x32xf32> -> vector<2x32xf32>
    %654 = arith.addf %650, %653 : vector<2x32xf32>
    %655 = arith.negf %654 : vector<2x32xf32>
    %656 = math.exp %655 : vector<2x32xf32>
    %cst_488 = arith.constant 1.000000e+00 : f32
    %657 = vector.broadcast %cst_488 : f32 to vector<2x32xf32>
    %658 = arith.addf %657, %656 : vector<2x32xf32>
    %659 = arith.divf %657, %658 : vector<2x32xf32>
    %c1_489 = arith.constant 1 : index
    %c12_490 = arith.constant 12 : index
    %c0_491 = arith.constant 0 : index
    %660 = vector.load %arg11[%c1_489, %c12_490, %c0_491] : memref<8x16x32xf32, #tpu.memory_space<vmem>>, vector<1x2x32xf32>
    %661 = vector.shape_cast %660 : vector<1x2x32xf32> to vector<2x32xf32>
    %c1_492 = arith.constant 1 : index
    %c0_493 = arith.constant 0 : index
    %c0_494 = arith.constant 0 : index
    %662 = vector.load %arg4[%c1_492, %c0_493, %c0_494] : memref<16x32x32xf32, #tpu.memory_space<vmem>>, vector<1x32x32xf32>
    %663 = vector.shape_cast %662 : vector<1x32x32xf32> to vector<32x32xf32>
    %cst_495 = arith.constant dense<0.000000e+00> : vector<2x32xf32>
    %664 = tpu.matmul %601, %663, %cst_495 {dimension_numbers = #tpu.dot_dimension_numbers<[1], [0], [0], [1], [0, 0, 1, 1], [], []>} : vector<2x32xf32>, vector<32x32xf32>, vector<2x32xf32> -> vector<2x32xf32>
    %665 = arith.addf %661, %664 : vector<2x32xf32>
    %666 = arith.negf %665 : vector<2x32xf32>
    %667 = math.exp %666 : vector<2x32xf32>
    %cst_496 = arith.constant 1.000000e+00 : f32
    %668 = vector.broadcast %cst_496 : f32 to vector<2x32xf32>
    %669 = arith.addf %668, %667 : vector<2x32xf32>
    %670 = arith.divf %668, %669 : vector<2x32xf32>
    %c2_497 = arith.constant 2 : index
    %c12_498 = arith.constant 12 : index
    %c0_499 = arith.constant 0 : index
    %671 = vector.load %arg11[%c2_497, %c12_498, %c0_499] : memref<8x16x32xf32, #tpu.memory_space<vmem>>, vector<1x2x32xf32>
    %672 = vector.shape_cast %671 : vector<1x2x32xf32> to vector<2x32xf32>
    %c2_500 = arith.constant 2 : index
    %c0_501 = arith.constant 0 : index
    %c0_502 = arith.constant 0 : index
    %673 = vector.load %arg4[%c2_500, %c0_501, %c0_502] : memref<16x32x32xf32, #tpu.memory_space<vmem>>, vector<1x32x32xf32>
    %674 = vector.shape_cast %673 : vector<1x32x32xf32> to vector<32x32xf32>
    %cst_503 = arith.constant dense<0.000000e+00> : vector<2x32xf32>
    %675 = tpu.matmul %601, %674, %cst_503 {dimension_numbers = #tpu.dot_dimension_numbers<[1], [0], [0], [1], [0, 0, 1, 1], [], []>} : vector<2x32xf32>, vector<32x32xf32>, vector<2x32xf32> -> vector<2x32xf32>
    %676 = arith.addf %672, %675 : vector<2x32xf32>
    %677 = math.tanh %676 : vector<2x32xf32>
    %c3_504 = arith.constant 3 : index
    %c12_505 = arith.constant 12 : index
    %c0_506 = arith.constant 0 : index
    %678 = vector.load %arg11[%c3_504, %c12_505, %c0_506] : memref<8x16x32xf32, #tpu.memory_space<vmem>>, vector<1x2x32xf32>
    %679 = vector.shape_cast %678 : vector<1x2x32xf32> to vector<2x32xf32>
    %c3_507 = arith.constant 3 : index
    %c0_508 = arith.constant 0 : index
    %c0_509 = arith.constant 0 : index
    %680 = vector.load %arg4[%c3_507, %c0_508, %c0_509] : memref<16x32x32xf32, #tpu.memory_space<vmem>>, vector<1x32x32xf32>
    %681 = vector.shape_cast %680 : vector<1x32x32xf32> to vector<32x32xf32>
    %cst_510 = arith.constant dense<0.000000e+00> : vector<2x32xf32>
    %682 = tpu.matmul %601, %681, %cst_510 {dimension_numbers = #tpu.dot_dimension_numbers<[1], [0], [0], [1], [0, 0, 1, 1], [], []>} : vector<2x32xf32>, vector<32x32xf32>, vector<2x32xf32> -> vector<2x32xf32>
    %683 = arith.addf %679, %682 : vector<2x32xf32>
    %684 = arith.negf %683 : vector<2x32xf32>
    %685 = math.exp %684 : vector<2x32xf32>
    %cst_511 = arith.constant 1.000000e+00 : f32
    %686 = vector.broadcast %cst_511 : f32 to vector<2x32xf32>
    %687 = arith.addf %686, %685 : vector<2x32xf32>
    %688 = arith.divf %686, %687 : vector<2x32xf32>
    %689 = arith.mulf %670, %599 : vector<2x32xf32>
    %690 = arith.mulf %659, %677 : vector<2x32xf32>
    %691 = arith.addf %689, %690 : vector<2x32xf32>
    %692 = math.tanh %691 : vector<2x32xf32>
    %693 = arith.mulf %688, %692 : vector<2x32xf32>
    %c12_512 = arith.constant 12 : index
    %c0_513 = arith.constant 0 : index
    %694 = vector.load %arg13[%c12_512, %c0_513] : memref<16x64xf32, #tpu.memory_space<vmem>>, vector<2x32xf32>
    tpu.vector_store %arg13[%c12_512, %c0_513], %693 {strides = array<i32>} : memref<16x64xf32, #tpu.memory_space<vmem>>, vector<2x32xf32>,
    %c4_514 = arith.constant 4 : index
    %c2_515 = arith.constant 2 : index
    %c0_516 = arith.constant 0 : index
    %695 = vector.load %arg11[%c4_514, %c2_515, %c0_516] : memref<8x16x32xf32, #tpu.memory_space<vmem>>, vector<1x2x32xf32>
    %696 = vector.shape_cast %695 : vector<1x2x32xf32> to vector<2x32xf32>
    %c4_517 = arith.constant 4 : index
    %c0_518 = arith.constant 0 : index
    %c0_519 = arith.constant 0 : index
    %697 = vector.load %arg4[%c4_517, %c0_518, %c0_519] : memref<16x32x32xf32, #tpu.memory_space<vmem>>, vector<1x32x32xf32>
    %698 = vector.shape_cast %697 : vector<1x32x32xf32> to vector<32x32xf32>
    %cst_520 = arith.constant dense<0.000000e+00> : vector<2x32xf32>
    %699 = tpu.matmul %647, %698, %cst_520 {dimension_numbers = #tpu.dot_dimension_numbers<[1], [0], [0], [1], [0, 0, 1, 1], [], []>} : vector<2x32xf32>, vector<32x32xf32>, vector<2x32xf32> -> vector<2x32xf32>
    %700 = arith.addf %696, %699 : vector<2x32xf32>
    %701 = arith.negf %700 : vector<2x32xf32>
    %702 = math.exp %701 : vector<2x32xf32>
    %cst_521 = arith.constant 1.000000e+00 : f32
    %703 = vector.broadcast %cst_521 : f32 to vector<2x32xf32>
    %704 = arith.addf %703, %702 : vector<2x32xf32>
    %705 = arith.divf %703, %704 : vector<2x32xf32>
    %c5_522 = arith.constant 5 : index
    %c2_523 = arith.constant 2 : index
    %c0_524 = arith.constant 0 : index
    %706 = vector.load %arg11[%c5_522, %c2_523, %c0_524] : memref<8x16x32xf32, #tpu.memory_space<vmem>>, vector<1x2x32xf32>
    %707 = vector.shape_cast %706 : vector<1x2x32xf32> to vector<2x32xf32>
    %c5_525 = arith.constant 5 : index
    %c0_526 = arith.constant 0 : index
    %c0_527 = arith.constant 0 : index
    %708 = vector.load %arg4[%c5_525, %c0_526, %c0_527] : memref<16x32x32xf32, #tpu.memory_space<vmem>>, vector<1x32x32xf32>
    %709 = vector.shape_cast %708 : vector<1x32x32xf32> to vector<32x32xf32>
    %cst_528 = arith.constant dense<0.000000e+00> : vector<2x32xf32>
    %710 = tpu.matmul %647, %709, %cst_528 {dimension_numbers = #tpu.dot_dimension_numbers<[1], [0], [0], [1], [0, 0, 1, 1], [], []>} : vector<2x32xf32>, vector<32x32xf32>, vector<2x32xf32> -> vector<2x32xf32>
    %711 = arith.addf %707, %710 : vector<2x32xf32>
    %712 = arith.negf %711 : vector<2x32xf32>
    %713 = math.exp %712 : vector<2x32xf32>
    %cst_529 = arith.constant 1.000000e+00 : f32
    %714 = vector.broadcast %cst_529 : f32 to vector<2x32xf32>
    %715 = arith.addf %714, %713 : vector<2x32xf32>
    %716 = arith.divf %714, %715 : vector<2x32xf32>
    %c6_530 = arith.constant 6 : index
    %c2_531 = arith.constant 2 : index
    %c0_532 = arith.constant 0 : index
    %717 = vector.load %arg11[%c6_530, %c2_531, %c0_532] : memref<8x16x32xf32, #tpu.memory_space<vmem>>, vector<1x2x32xf32>
    %718 = vector.shape_cast %717 : vector<1x2x32xf32> to vector<2x32xf32>
    %c6_533 = arith.constant 6 : index
    %c0_534 = arith.constant 0 : index
    %c0_535 = arith.constant 0 : index
    %719 = vector.load %arg4[%c6_533, %c0_534, %c0_535] : memref<16x32x32xf32, #tpu.memory_space<vmem>>, vector<1x32x32xf32>
    %720 = vector.shape_cast %719 : vector<1x32x32xf32> to vector<32x32xf32>
    %cst_536 = arith.constant dense<0.000000e+00> : vector<2x32xf32>
    %721 = tpu.matmul %647, %720, %cst_536 {dimension_numbers = #tpu.dot_dimension_numbers<[1], [0], [0], [1], [0, 0, 1, 1], [], []>} : vector<2x32xf32>, vector<32x32xf32>, vector<2x32xf32> -> vector<2x32xf32>
    %722 = arith.addf %718, %721 : vector<2x32xf32>
    %723 = math.tanh %722 : vector<2x32xf32>
    %c7_537 = arith.constant 7 : index
    %c2_538 = arith.constant 2 : index
    %c0_539 = arith.constant 0 : index
    %724 = vector.load %arg11[%c7_537, %c2_538, %c0_539] : memref<8x16x32xf32, #tpu.memory_space<vmem>>, vector<1x2x32xf32>
    %725 = vector.shape_cast %724 : vector<1x2x32xf32> to vector<2x32xf32>
    %c7_540 = arith.constant 7 : index
    %c0_541 = arith.constant 0 : index
    %c0_542 = arith.constant 0 : index
    %726 = vector.load %arg4[%c7_540, %c0_541, %c0_542] : memref<16x32x32xf32, #tpu.memory_space<vmem>>, vector<1x32x32xf32>
    %727 = vector.shape_cast %726 : vector<1x32x32xf32> to vector<32x32xf32>
    %cst_543 = arith.constant dense<0.000000e+00> : vector<2x32xf32>
    %728 = tpu.matmul %647, %727, %cst_543 {dimension_numbers = #tpu.dot_dimension_numbers<[1], [0], [0], [1], [0, 0, 1, 1], [], []>} : vector<2x32xf32>, vector<32x32xf32>, vector<2x32xf32> -> vector<2x32xf32>
    %729 = arith.addf %725, %728 : vector<2x32xf32>
    %730 = arith.negf %729 : vector<2x32xf32>
    %731 = math.exp %730 : vector<2x32xf32>
    %cst_544 = arith.constant 1.000000e+00 : f32
    %732 = vector.broadcast %cst_544 : f32 to vector<2x32xf32>
    %733 = arith.addf %732, %731 : vector<2x32xf32>
    %734 = arith.divf %732, %733 : vector<2x32xf32>
    %735 = arith.mulf %716, %645 : vector<2x32xf32>
    %736 = arith.mulf %705, %723 : vector<2x32xf32>
    %737 = arith.addf %735, %736 : vector<2x32xf32>
    %738 = math.tanh %737 : vector<2x32xf32>
    %739 = arith.mulf %734, %738 : vector<2x32xf32>
    %c2_545 = arith.constant 2 : index
    %c32_546 = arith.constant 32 : index
    %740 = vector.load %arg13[%c2_545, %c32_546] : memref<16x64xf32, #tpu.memory_space<vmem>>, vector<2x32xf32>
    tpu.vector_store %arg13[%c2_545, %c32_546], %739 {strides = array<i32>} : memref<16x64xf32, #tpu.memory_space<vmem>>, vector<2x32xf32>,
    %c0_547 = arith.constant 0 : index
    %c14_548 = arith.constant 14 : index
    %c0_549 = arith.constant 0 : index
    %741 = vector.load %arg11[%c0_547, %c14_548, %c0_549] : memref<8x16x32xf32, #tpu.memory_space<vmem>>, vector<1x2x32xf32>
    %742 = vector.shape_cast %741 : vector<1x2x32xf32> to vector<2x32xf32>
    %c0_550 = arith.constant 0 : index
    %c0_551 = arith.constant 0 : index
    %c0_552 = arith.constant 0 : index
    %743 = vector.load %arg4[%c0_550, %c0_551, %c0_552] : memref<16x32x32xf32, #tpu.memory_space<vmem>>, vector<1x32x32xf32>
    %744 = vector.shape_cast %743 : vector<1x32x32xf32> to vector<32x32xf32>
    %cst_553 = arith.constant dense<0.000000e+00> : vector<2x32xf32>
    %745 = tpu.matmul %693, %744, %cst_553 {dimension_numbers = #tpu.dot_dimension_numbers<[1], [0], [0], [1], [0, 0, 1, 1], [], []>} : vector<2x32xf32>, vector<32x32xf32>, vector<2x32xf32> -> vector<2x32xf32>
    %746 = arith.addf %742, %745 : vector<2x32xf32>
    %747 = arith.negf %746 : vector<2x32xf32>
    %748 = math.exp %747 : vector<2x32xf32>
    %cst_554 = arith.constant 1.000000e+00 : f32
    %749 = vector.broadcast %cst_554 : f32 to vector<2x32xf32>
    %750 = arith.addf %749, %748 : vector<2x32xf32>
    %751 = arith.divf %749, %750 : vector<2x32xf32>
    %c1_555 = arith.constant 1 : index
    %c14_556 = arith.constant 14 : index
    %c0_557 = arith.constant 0 : index
    %752 = vector.load %arg11[%c1_555, %c14_556, %c0_557] : memref<8x16x32xf32, #tpu.memory_space<vmem>>, vector<1x2x32xf32>
    %753 = vector.shape_cast %752 : vector<1x2x32xf32> to vector<2x32xf32>
    %c1_558 = arith.constant 1 : index
    %c0_559 = arith.constant 0 : index
    %c0_560 = arith.constant 0 : index
    %754 = vector.load %arg4[%c1_558, %c0_559, %c0_560] : memref<16x32x32xf32, #tpu.memory_space<vmem>>, vector<1x32x32xf32>
    %755 = vector.shape_cast %754 : vector<1x32x32xf32> to vector<32x32xf32>
    %cst_561 = arith.constant dense<0.000000e+00> : vector<2x32xf32>
    %756 = tpu.matmul %693, %755, %cst_561 {dimension_numbers = #tpu.dot_dimension_numbers<[1], [0], [0], [1], [0, 0, 1, 1], [], []>} : vector<2x32xf32>, vector<32x32xf32>, vector<2x32xf32> -> vector<2x32xf32>
    %757 = arith.addf %753, %756 : vector<2x32xf32>
    %758 = arith.negf %757 : vector<2x32xf32>
    %759 = math.exp %758 : vector<2x32xf32>
    %cst_562 = arith.constant 1.000000e+00 : f32
    %760 = vector.broadcast %cst_562 : f32 to vector<2x32xf32>
    %761 = arith.addf %760, %759 : vector<2x32xf32>
    %762 = arith.divf %760, %761 : vector<2x32xf32>
    %c2_563 = arith.constant 2 : index
    %c14_564 = arith.constant 14 : index
    %c0_565 = arith.constant 0 : index
    %763 = vector.load %arg11[%c2_563, %c14_564, %c0_565] : memref<8x16x32xf32, #tpu.memory_space<vmem>>, vector<1x2x32xf32>
    %764 = vector.shape_cast %763 : vector<1x2x32xf32> to vector<2x32xf32>
    %c2_566 = arith.constant 2 : index
    %c0_567 = arith.constant 0 : index
    %c0_568 = arith.constant 0 : index
    %765 = vector.load %arg4[%c2_566, %c0_567, %c0_568] : memref<16x32x32xf32, #tpu.memory_space<vmem>>, vector<1x32x32xf32>
    %766 = vector.shape_cast %765 : vector<1x32x32xf32> to vector<32x32xf32>
    %cst_569 = arith.constant dense<0.000000e+00> : vector<2x32xf32>
    %767 = tpu.matmul %693, %766, %cst_569 {dimension_numbers = #tpu.dot_dimension_numbers<[1], [0], [0], [1], [0, 0, 1, 1], [], []>} : vector<2x32xf32>, vector<32x32xf32>, vector<2x32xf32> -> vector<2x32xf32>
    %768 = arith.addf %764, %767 : vector<2x32xf32>
    %769 = math.tanh %768 : vector<2x32xf32>
    %c3_570 = arith.constant 3 : index
    %c14_571 = arith.constant 14 : index
    %c0_572 = arith.constant 0 : index
    %770 = vector.load %arg11[%c3_570, %c14_571, %c0_572] : memref<8x16x32xf32, #tpu.memory_space<vmem>>, vector<1x2x32xf32>
    %771 = vector.shape_cast %770 : vector<1x2x32xf32> to vector<2x32xf32>
    %c3_573 = arith.constant 3 : index
    %c0_574 = arith.constant 0 : index
    %c0_575 = arith.constant 0 : index
    %772 = vector.load %arg4[%c3_573, %c0_574, %c0_575] : memref<16x32x32xf32, #tpu.memory_space<vmem>>, vector<1x32x32xf32>
    %773 = vector.shape_cast %772 : vector<1x32x32xf32> to vector<32x32xf32>
    %cst_576 = arith.constant dense<0.000000e+00> : vector<2x32xf32>
    %774 = tpu.matmul %693, %773, %cst_576 {dimension_numbers = #tpu.dot_dimension_numbers<[1], [0], [0], [1], [0, 0, 1, 1], [], []>} : vector<2x32xf32>, vector<32x32xf32>, vector<2x32xf32> -> vector<2x32xf32>
    %775 = arith.addf %771, %774 : vector<2x32xf32>
    %776 = arith.negf %775 : vector<2x32xf32>
    %777 = math.exp %776 : vector<2x32xf32>
    %cst_577 = arith.constant 1.000000e+00 : f32
    %778 = vector.broadcast %cst_577 : f32 to vector<2x32xf32>
    %779 = arith.addf %778, %777 : vector<2x32xf32>
    %780 = arith.divf %778, %779 : vector<2x32xf32>
    %781 = arith.mulf %762, %691 : vector<2x32xf32>
    %782 = arith.mulf %751, %769 : vector<2x32xf32>
    %783 = arith.addf %781, %782 : vector<2x32xf32>
    %784 = math.tanh %783 : vector<2x32xf32>
    %785 = arith.mulf %780, %784 : vector<2x32xf32>
    %c14_578 = arith.constant 14 : index
    %c0_579 = arith.constant 0 : index
    %786 = vector.load %arg13[%c14_578, %c0_579] : memref<16x64xf32, #tpu.memory_space<vmem>>, vector<2x32xf32>
    tpu.vector_store %arg13[%c14_578, %c0_579], %785 {strides = array<i32>} : memref<16x64xf32, #tpu.memory_space<vmem>>, vector<2x32xf32>,
    %c4_580 = arith.constant 4 : index
    %c0_581 = arith.constant 0 : index
    %c0_582 = arith.constant 0 : index
    %787 = vector.load %arg11[%c4_580, %c0_581, %c0_582] : memref<8x16x32xf32, #tpu.memory_space<vmem>>, vector<1x2x32xf32>
    %788 = vector.shape_cast %787 : vector<1x2x32xf32> to vector<2x32xf32>
    %c4_583 = arith.constant 4 : index
    %c0_584 = arith.constant 0 : index
    %c0_585 = arith.constant 0 : index
    %789 = vector.load %arg4[%c4_583, %c0_584, %c0_585] : memref<16x32x32xf32, #tpu.memory_space<vmem>>, vector<1x32x32xf32>
    %790 = vector.shape_cast %789 : vector<1x32x32xf32> to vector<32x32xf32>
    %cst_586 = arith.constant dense<0.000000e+00> : vector<2x32xf32>
    %791 = tpu.matmul %739, %790, %cst_586 {dimension_numbers = #tpu.dot_dimension_numbers<[1], [0], [0], [1], [0, 0, 1, 1], [], []>} : vector<2x32xf32>, vector<32x32xf32>, vector<2x32xf32> -> vector<2x32xf32>
    %792 = arith.addf %788, %791 : vector<2x32xf32>
    %793 = arith.negf %792 : vector<2x32xf32>
    %794 = math.exp %793 : vector<2x32xf32>
    %cst_587 = arith.constant 1.000000e+00 : f32
    %795 = vector.broadcast %cst_587 : f32 to vector<2x32xf32>
    %796 = arith.addf %795, %794 : vector<2x32xf32>
    %797 = arith.divf %795, %796 : vector<2x32xf32>
    %c5_588 = arith.constant 5 : index
    %c0_589 = arith.constant 0 : index
    %c0_590 = arith.constant 0 : index
    %798 = vector.load %arg11[%c5_588, %c0_589, %c0_590] : memref<8x16x32xf32, #tpu.memory_space<vmem>>, vector<1x2x32xf32>
    %799 = vector.shape_cast %798 : vector<1x2x32xf32> to vector<2x32xf32>
    %c5_591 = arith.constant 5 : index
    %c0_592 = arith.constant 0 : index
    %c0_593 = arith.constant 0 : index
    %800 = vector.load %arg4[%c5_591, %c0_592, %c0_593] : memref<16x32x32xf32, #tpu.memory_space<vmem>>, vector<1x32x32xf32>
    %801 = vector.shape_cast %800 : vector<1x32x32xf32> to vector<32x32xf32>
    %cst_594 = arith.constant dense<0.000000e+00> : vector<2x32xf32>
    %802 = tpu.matmul %739, %801, %cst_594 {dimension_numbers = #tpu.dot_dimension_numbers<[1], [0], [0], [1], [0, 0, 1, 1], [], []>} : vector<2x32xf32>, vector<32x32xf32>, vector<2x32xf32> -> vector<2x32xf32>
    %803 = arith.addf %799, %802 : vector<2x32xf32>
    %804 = arith.negf %803 : vector<2x32xf32>
    %805 = math.exp %804 : vector<2x32xf32>
    %cst_595 = arith.constant 1.000000e+00 : f32
    %806 = vector.broadcast %cst_595 : f32 to vector<2x32xf32>
    %807 = arith.addf %806, %805 : vector<2x32xf32>
    %808 = arith.divf %806, %807 : vector<2x32xf32>
    %c6_596 = arith.constant 6 : index
    %c0_597 = arith.constant 0 : index
    %c0_598 = arith.constant 0 : index
    %809 = vector.load %arg11[%c6_596, %c0_597, %c0_598] : memref<8x16x32xf32, #tpu.memory_space<vmem>>, vector<1x2x32xf32>
    %810 = vector.shape_cast %809 : vector<1x2x32xf32> to vector<2x32xf32>
    %c6_599 = arith.constant 6 : index
    %c0_600 = arith.constant 0 : index
    %c0_601 = arith.constant 0 : index
    %811 = vector.load %arg4[%c6_599, %c0_600, %c0_601] : memref<16x32x32xf32, #tpu.memory_space<vmem>>, vector<1x32x32xf32>
    %812 = vector.shape_cast %811 : vector<1x32x32xf32> to vector<32x32xf32>
    %cst_602 = arith.constant dense<0.000000e+00> : vector<2x32xf32>
    %813 = tpu.matmul %739, %812, %cst_602 {dimension_numbers = #tpu.dot_dimension_numbers<[1], [0], [0], [1], [0, 0, 1, 1], [], []>} : vector<2x32xf32>, vector<32x32xf32>, vector<2x32xf32> -> vector<2x32xf32>
    %814 = arith.addf %810, %813 : vector<2x32xf32>
    %815 = math.tanh %814 : vector<2x32xf32>
    %c7_603 = arith.constant 7 : index
    %c0_604 = arith.constant 0 : index
    %c0_605 = arith.constant 0 : index
    %816 = vector.load %arg11[%c7_603, %c0_604, %c0_605] : memref<8x16x32xf32, #tpu.memory_space<vmem>>, vector<1x2x32xf32>
    %817 = vector.shape_cast %816 : vector<1x2x32xf32> to vector<2x32xf32>
    %c7_606 = arith.constant 7 : index
    %c0_607 = arith.constant 0 : index
    %c0_608 = arith.constant 0 : index
    %818 = vector.load %arg4[%c7_606, %c0_607, %c0_608] : memref<16x32x32xf32, #tpu.memory_space<vmem>>, vector<1x32x32xf32>
    %819 = vector.shape_cast %818 : vector<1x32x32xf32> to vector<32x32xf32>
    %cst_609 = arith.constant dense<0.000000e+00> : vector<2x32xf32>
    %820 = tpu.matmul %739, %819, %cst_609 {dimension_numbers = #tpu.dot_dimension_numbers<[1], [0], [0], [1], [0, 0, 1, 1], [], []>} : vector<2x32xf32>, vector<32x32xf32>, vector<2x32xf32> -> vector<2x32xf32>
    %821 = arith.addf %817, %820 : vector<2x32xf32>
    %822 = arith.negf %821 : vector<2x32xf32>
    %823 = math.exp %822 : vector<2x32xf32>
    %cst_610 = arith.constant 1.000000e+00 : f32
    %824 = vector.broadcast %cst_610 : f32 to vector<2x32xf32>
    %825 = arith.addf %824, %823 : vector<2x32xf32>
    %826 = arith.divf %824, %825 : vector<2x32xf32>
    %827 = arith.mulf %808, %737 : vector<2x32xf32>
    %828 = arith.mulf %797, %815 : vector<2x32xf32>
    %829 = arith.addf %827, %828 : vector<2x32xf32>
    %830 = math.tanh %829 : vector<2x32xf32>
    %831 = arith.mulf %826, %830 : vector<2x32xf32>
    %c0_611 = arith.constant 0 : index
    %c32_612 = arith.constant 32 : index
    %832 = vector.load %arg13[%c0_611, %c32_612] : memref<16x64xf32, #tpu.memory_space<vmem>>, vector<2x32xf32>
    tpu.vector_store %arg13[%c0_611, %c32_612], %831 {strides = array<i32>} : memref<16x64xf32, #tpu.memory_space<vmem>>, vector<2x32xf32>,
    %c0_613 = arith.constant 0 : index
    %c0_614 = arith.constant 0 : index
    %c0_615 = arith.constant 0 : index
    %833 = vector.load %arg10[%c0_613, %c0_614, %c0_615] : memref<8x2x32xf32, #tpu.memory_space<vmem>>, vector<1x2x32xf32>
    %834 = vector.shape_cast %833 : vector<1x2x32xf32> to vector<2x32xf32>
    %835 = vector.shape_cast %785 : vector<2x32xf32> to vector<1x2x32xf32>
    tpu.vector_store %arg10[%c0_613, %c0_614, %c0_615], %835 {strides = array<i32>} : memref<8x2x32xf32, #tpu.memory_space<vmem>>, vector<1x2x32xf32>,
    %c4_616 = arith.constant 4 : index
    %c0_617 = arith.constant 0 : index
    %c0_618 = arith.constant 0 : index
    %836 = vector.load %arg10[%c4_616, %c0_617, %c0_618] : memref<8x2x32xf32, #tpu.memory_space<vmem>>, vector<1x2x32xf32>
    %837 = vector.shape_cast %836 : vector<1x2x32xf32> to vector<2x32xf32>
    %838 = vector.shape_cast %783 : vector<2x32xf32> to vector<1x2x32xf32>
    tpu.vector_store %arg10[%c4_616, %c0_617, %c0_618], %838 {strides = array<i32>} : memref<8x2x32xf32, #tpu.memory_space<vmem>>, vector<1x2x32xf32>,
    %c1_619 = arith.constant 1 : index
    %c0_620 = arith.constant 0 : index
    %c0_621 = arith.constant 0 : index
    %839 = vector.load %arg10[%c1_619, %c0_620, %c0_621] : memref<8x2x32xf32, #tpu.memory_space<vmem>>, vector<1x2x32xf32>
    %840 = vector.shape_cast %839 : vector<1x2x32xf32> to vector<2x32xf32>
    %841 = vector.shape_cast %831 : vector<2x32xf32> to vector<1x2x32xf32>
    tpu.vector_store %arg10[%c1_619, %c0_620, %c0_621], %841 {strides = array<i32>} : memref<8x2x32xf32, #tpu.memory_space<vmem>>, vector<1x2x32xf32>,
    %c5_622 = arith.constant 5 : index
    %c0_623 = arith.constant 0 : index
    %c0_624 = arith.constant 0 : index
    %842 = vector.load %arg10[%c5_622, %c0_623, %c0_624] : memref<8x2x32xf32, #tpu.memory_space<vmem>>, vector<1x2x32xf32>
    %843 = vector.shape_cast %842 : vector<1x2x32xf32> to vector<2x32xf32>
    %844 = vector.shape_cast %829 : vector<2x32xf32> to vector<1x2x32xf32>
    tpu.vector_store %arg10[%c5_622, %c0_623, %c0_624], %844 {strides = array<i32>} : memref<8x2x32xf32, #tpu.memory_space<vmem>>, vector<1x2x32xf32>,
    %c0_625 = arith.constant 0 : index
    %c0_626 = arith.constant 0 : index
    %845 = vector.load %arg13[%c0_625, %c0_626] : memref<16x64xf32, #tpu.memory_space<vmem>>, vector<16x64xf32>
    %c8_627 = arith.constant 8 : index
    %c0_628 = arith.constant 0 : index
    %c0_629 = arith.constant 0 : index
    %846 = vector.load %arg3[%c8_627, %c0_628, %c0_629] : memref<16x64x32xf32, #tpu.memory_space<vmem>>, vector<1x64x32xf32>
    %847 = vector.shape_cast %846 : vector<1x64x32xf32> to vector<64x32xf32>
    %cst_630 = arith.constant dense<0.000000e+00> : vector<16x32xf32>
    %848 = tpu.matmul %845, %847, %cst_630 {dimension_numbers = #tpu.dot_dimension_numbers<[1], [0], [0], [1], [0, 0, 1, 1], [], []>} : vector<16x64xf32>, vector<64x32xf32>, vector<16x32xf32> -> vector<16x32xf32>
    %c8_631 = arith.constant 8 : index
    %c0_632 = arith.constant 0 : index
    %c0_633 = arith.constant 0 : index
    %849 = vector.load %arg5[%c8_631, %c0_632, %c0_633] : memref<16x1x32xf32, #tpu.memory_space<vmem>>, vector<1x1x32xf32>
    %850 = vector.shape_cast %849 : vector<1x1x32xf32> to vector<1x32xf32>
    %851 = vector.broadcast %850 : vector<1x32xf32> to vector<16x32xf32>
    %852 = arith.addf %848, %851 : vector<16x32xf32>
    %c0_634 = arith.constant 0 : index
    %c0_635 = arith.constant 0 : index
    %c0_636 = arith.constant 0 : index
    %853 = vector.load %arg12[%c0_634, %c0_635, %c0_636] : memref<8x16x32xf32, #tpu.memory_space<vmem>>, vector<1x16x32xf32>
    %854 = vector.shape_cast %853 : vector<1x16x32xf32> to vector<16x32xf32>
    %855 = vector.shape_cast %852 : vector<16x32xf32> to vector<1x16x32xf32>
    tpu.vector_store %arg12[%c0_634, %c0_635, %c0_636], %855 {strides = array<i32>} : memref<8x16x32xf32, #tpu.memory_space<vmem>>, vector<1x16x32xf32>,
    %c9 = arith.constant 9 : index
    %c0_637 = arith.constant 0 : index
    %c0_638 = arith.constant 0 : index
    %856 = vector.load %arg3[%c9, %c0_637, %c0_638] : memref<16x64x32xf32, #tpu.memory_space<vmem>>, vector<1x64x32xf32>
    %857 = vector.shape_cast %856 : vector<1x64x32xf32> to vector<64x32xf32>
    %cst_639 = arith.constant dense<0.000000e+00> : vector<16x32xf32>
    %858 = tpu.matmul %845, %857, %cst_639 {dimension_numbers = #tpu.dot_dimension_numbers<[1], [0], [0], [1], [0, 0, 1, 1], [], []>} : vector<16x64xf32>, vector<64x32xf32>, vector<16x32xf32> -> vector<16x32xf32>
    %c9_640 = arith.constant 9 : index
    %c0_641 = arith.constant 0 : index
    %c0_642 = arith.constant 0 : index
    %859 = vector.load %arg5[%c9_640, %c0_641, %c0_642] : memref<16x1x32xf32, #tpu.memory_space<vmem>>, vector<1x1x32xf32>
    %860 = vector.shape_cast %859 : vector<1x1x32xf32> to vector<1x32xf32>
    %861 = vector.broadcast %860 : vector<1x32xf32> to vector<16x32xf32>
    %862 = arith.addf %858, %861 : vector<16x32xf32>
    %c1_643 = arith.constant 1 : index
    %c0_644 = arith.constant 0 : index
    %c0_645 = arith.constant 0 : index
    %863 = vector.load %arg12[%c1_643, %c0_644, %c0_645] : memref<8x16x32xf32, #tpu.memory_space<vmem>>, vector<1x16x32xf32>
    %864 = vector.shape_cast %863 : vector<1x16x32xf32> to vector<16x32xf32>
    %865 = vector.shape_cast %862 : vector<16x32xf32> to vector<1x16x32xf32>
    tpu.vector_store %arg12[%c1_643, %c0_644, %c0_645], %865 {strides = array<i32>} : memref<8x16x32xf32, #tpu.memory_space<vmem>>, vector<1x16x32xf32>,
    %c10_646 = arith.constant 10 : index
    %c0_647 = arith.constant 0 : index
    %c0_648 = arith.constant 0 : index
    %866 = vector.load %arg3[%c10_646, %c0_647, %c0_648] : memref<16x64x32xf32, #tpu.memory_space<vmem>>, vector<1x64x32xf32>
    %867 = vector.shape_cast %866 : vector<1x64x32xf32> to vector<64x32xf32>
    %cst_649 = arith.constant dense<0.000000e+00> : vector<16x32xf32>
    %868 = tpu.matmul %845, %867, %cst_649 {dimension_numbers = #tpu.dot_dimension_numbers<[1], [0], [0], [1], [0, 0, 1, 1], [], []>} : vector<16x64xf32>, vector<64x32xf32>, vector<16x32xf32> -> vector<16x32xf32>
    %c10_650 = arith.constant 10 : index
    %c0_651 = arith.constant 0 : index
    %c0_652 = arith.constant 0 : index
    %869 = vector.load %arg5[%c10_650, %c0_651, %c0_652] : memref<16x1x32xf32, #tpu.memory_space<vmem>>, vector<1x1x32xf32>
    %870 = vector.shape_cast %869 : vector<1x1x32xf32> to vector<1x32xf32>
    %871 = vector.broadcast %870 : vector<1x32xf32> to vector<16x32xf32>
    %872 = arith.addf %868, %871 : vector<16x32xf32>
    %c2_653 = arith.constant 2 : index
    %c0_654 = arith.constant 0 : index
    %c0_655 = arith.constant 0 : index
    %873 = vector.load %arg12[%c2_653, %c0_654, %c0_655] : memref<8x16x32xf32, #tpu.memory_space<vmem>>, vector<1x16x32xf32>
    %874 = vector.shape_cast %873 : vector<1x16x32xf32> to vector<16x32xf32>
    %875 = vector.shape_cast %872 : vector<16x32xf32> to vector<1x16x32xf32>
    tpu.vector_store %arg12[%c2_653, %c0_654, %c0_655], %875 {strides = array<i32>} : memref<8x16x32xf32, #tpu.memory_space<vmem>>, vector<1x16x32xf32>,
    %c11 = arith.constant 11 : index
    %c0_656 = arith.constant 0 : index
    %c0_657 = arith.constant 0 : index
    %876 = vector.load %arg3[%c11, %c0_656, %c0_657] : memref<16x64x32xf32, #tpu.memory_space<vmem>>, vector<1x64x32xf32>
    %877 = vector.shape_cast %876 : vector<1x64x32xf32> to vector<64x32xf32>
    %cst_658 = arith.constant dense<0.000000e+00> : vector<16x32xf32>
    %878 = tpu.matmul %845, %877, %cst_658 {dimension_numbers = #tpu.dot_dimension_numbers<[1], [0], [0], [1], [0, 0, 1, 1], [], []>} : vector<16x64xf32>, vector<64x32xf32>, vector<16x32xf32> -> vector<16x32xf32>
    %c11_659 = arith.constant 11 : index
    %c0_660 = arith.constant 0 : index
    %c0_661 = arith.constant 0 : index
    %879 = vector.load %arg5[%c11_659, %c0_660, %c0_661] : memref<16x1x32xf32, #tpu.memory_space<vmem>>, vector<1x1x32xf32>
    %880 = vector.shape_cast %879 : vector<1x1x32xf32> to vector<1x32xf32>
    %881 = vector.broadcast %880 : vector<1x32xf32> to vector<16x32xf32>
    %882 = arith.addf %878, %881 : vector<16x32xf32>
    %c3_662 = arith.constant 3 : index
    %c0_663 = arith.constant 0 : index
    %c0_664 = arith.constant 0 : index
    %883 = vector.load %arg12[%c3_662, %c0_663, %c0_664] : memref<8x16x32xf32, #tpu.memory_space<vmem>>, vector<1x16x32xf32>
    %884 = vector.shape_cast %883 : vector<1x16x32xf32> to vector<16x32xf32>
    %885 = vector.shape_cast %882 : vector<16x32xf32> to vector<1x16x32xf32>
    tpu.vector_store %arg12[%c3_662, %c0_663, %c0_664], %885 {strides = array<i32>} : memref<8x16x32xf32, #tpu.memory_space<vmem>>, vector<1x16x32xf32>,
    %c12_665 = arith.constant 12 : index
    %c0_666 = arith.constant 0 : index
    %c0_667 = arith.constant 0 : index
    %886 = vector.load %arg3[%c12_665, %c0_666, %c0_667] : memref<16x64x32xf32, #tpu.memory_space<vmem>>, vector<1x64x32xf32>
    %887 = vector.shape_cast %886 : vector<1x64x32xf32> to vector<64x32xf32>
    %cst_668 = arith.constant dense<0.000000e+00> : vector<16x32xf32>
    %888 = tpu.matmul %845, %887, %cst_668 {dimension_numbers = #tpu.dot_dimension_numbers<[1], [0], [0], [1], [0, 0, 1, 1], [], []>} : vector<16x64xf32>, vector<64x32xf32>, vector<16x32xf32> -> vector<16x32xf32>
    %c12_669 = arith.constant 12 : index
    %c0_670 = arith.constant 0 : index
    %c0_671 = arith.constant 0 : index
    %889 = vector.load %arg5[%c12_669, %c0_670, %c0_671] : memref<16x1x32xf32, #tpu.memory_space<vmem>>, vector<1x1x32xf32>
    %890 = vector.shape_cast %889 : vector<1x1x32xf32> to vector<1x32xf32>
    %891 = vector.broadcast %890 : vector<1x32xf32> to vector<16x32xf32>
    %892 = arith.addf %888, %891 : vector<16x32xf32>
    %c4_672 = arith.constant 4 : index
    %c0_673 = arith.constant 0 : index
    %c0_674 = arith.constant 0 : index
    %893 = vector.load %arg12[%c4_672, %c0_673, %c0_674] : memref<8x16x32xf32, #tpu.memory_space<vmem>>, vector<1x16x32xf32>
    %894 = vector.shape_cast %893 : vector<1x16x32xf32> to vector<16x32xf32>
    %895 = vector.shape_cast %892 : vector<16x32xf32> to vector<1x16x32xf32>
    tpu.vector_store %arg12[%c4_672, %c0_673, %c0_674], %895 {strides = array<i32>} : memref<8x16x32xf32, #tpu.memory_space<vmem>>, vector<1x16x32xf32>,
    %c13 = arith.constant 13 : index
    %c0_675 = arith.constant 0 : index
    %c0_676 = arith.constant 0 : index
    %896 = vector.load %arg3[%c13, %c0_675, %c0_676] : memref<16x64x32xf32, #tpu.memory_space<vmem>>, vector<1x64x32xf32>
    %897 = vector.shape_cast %896 : vector<1x64x32xf32> to vector<64x32xf32>
    %cst_677 = arith.constant dense<0.000000e+00> : vector<16x32xf32>
    %898 = tpu.matmul %845, %897, %cst_677 {dimension_numbers = #tpu.dot_dimension_numbers<[1], [0], [0], [1], [0, 0, 1, 1], [], []>} : vector<16x64xf32>, vector<64x32xf32>, vector<16x32xf32> -> vector<16x32xf32>
    %c13_678 = arith.constant 13 : index
    %c0_679 = arith.constant 0 : index
    %c0_680 = arith.constant 0 : index
    %899 = vector.load %arg5[%c13_678, %c0_679, %c0_680] : memref<16x1x32xf32, #tpu.memory_space<vmem>>, vector<1x1x32xf32>
    %900 = vector.shape_cast %899 : vector<1x1x32xf32> to vector<1x32xf32>
    %901 = vector.broadcast %900 : vector<1x32xf32> to vector<16x32xf32>
    %902 = arith.addf %898, %901 : vector<16x32xf32>
    %c5_681 = arith.constant 5 : index
    %c0_682 = arith.constant 0 : index
    %c0_683 = arith.constant 0 : index
    %903 = vector.load %arg12[%c5_681, %c0_682, %c0_683] : memref<8x16x32xf32, #tpu.memory_space<vmem>>, vector<1x16x32xf32>
    %904 = vector.shape_cast %903 : vector<1x16x32xf32> to vector<16x32xf32>
    %905 = vector.shape_cast %902 : vector<16x32xf32> to vector<1x16x32xf32>
    tpu.vector_store %arg12[%c5_681, %c0_682, %c0_683], %905 {strides = array<i32>} : memref<8x16x32xf32, #tpu.memory_space<vmem>>, vector<1x16x32xf32>,
    %c14_684 = arith.constant 14 : index
    %c0_685 = arith.constant 0 : index
    %c0_686 = arith.constant 0 : index
    %906 = vector.load %arg3[%c14_684, %c0_685, %c0_686] : memref<16x64x32xf32, #tpu.memory_space<vmem>>, vector<1x64x32xf32>
    %907 = vector.shape_cast %906 : vector<1x64x32xf32> to vector<64x32xf32>
    %cst_687 = arith.constant dense<0.000000e+00> : vector<16x32xf32>
    %908 = tpu.matmul %845, %907, %cst_687 {dimension_numbers = #tpu.dot_dimension_numbers<[1], [0], [0], [1], [0, 0, 1, 1], [], []>} : vector<16x64xf32>, vector<64x32xf32>, vector<16x32xf32> -> vector<16x32xf32>
    %c14_688 = arith.constant 14 : index
    %c0_689 = arith.constant 0 : index
    %c0_690 = arith.constant 0 : index
    %909 = vector.load %arg5[%c14_688, %c0_689, %c0_690] : memref<16x1x32xf32, #tpu.memory_space<vmem>>, vector<1x1x32xf32>
    %910 = vector.shape_cast %909 : vector<1x1x32xf32> to vector<1x32xf32>
    %911 = vector.broadcast %910 : vector<1x32xf32> to vector<16x32xf32>
    %912 = arith.addf %908, %911 : vector<16x32xf32>
    %c6_691 = arith.constant 6 : index
    %c0_692 = arith.constant 0 : index
    %c0_693 = arith.constant 0 : index
    %913 = vector.load %arg12[%c6_691, %c0_692, %c0_693] : memref<8x16x32xf32, #tpu.memory_space<vmem>>, vector<1x16x32xf32>
    %914 = vector.shape_cast %913 : vector<1x16x32xf32> to vector<16x32xf32>
    %915 = vector.shape_cast %912 : vector<16x32xf32> to vector<1x16x32xf32>
    tpu.vector_store %arg12[%c6_691, %c0_692, %c0_693], %915 {strides = array<i32>} : memref<8x16x32xf32, #tpu.memory_space<vmem>>, vector<1x16x32xf32>,
    %c15 = arith.constant 15 : index
    %c0_694 = arith.constant 0 : index
    %c0_695 = arith.constant 0 : index
    %916 = vector.load %arg3[%c15, %c0_694, %c0_695] : memref<16x64x32xf32, #tpu.memory_space<vmem>>, vector<1x64x32xf32>
    %917 = vector.shape_cast %916 : vector<1x64x32xf32> to vector<64x32xf32>
    %cst_696 = arith.constant dense<0.000000e+00> : vector<16x32xf32>
    %918 = tpu.matmul %845, %917, %cst_696 {dimension_numbers = #tpu.dot_dimension_numbers<[1], [0], [0], [1], [0, 0, 1, 1], [], []>} : vector<16x64xf32>, vector<64x32xf32>, vector<16x32xf32> -> vector<16x32xf32>
    %c15_697 = arith.constant 15 : index
    %c0_698 = arith.constant 0 : index
    %c0_699 = arith.constant 0 : index
    %919 = vector.load %arg5[%c15_697, %c0_698, %c0_699] : memref<16x1x32xf32, #tpu.memory_space<vmem>>, vector<1x1x32xf32>
    %920 = vector.shape_cast %919 : vector<1x1x32xf32> to vector<1x32xf32>
    %921 = vector.broadcast %920 : vector<1x32xf32> to vector<16x32xf32>
    %922 = arith.addf %918, %921 : vector<16x32xf32>
    %c7_700 = arith.constant 7 : index
    %c0_701 = arith.constant 0 : index
    %c0_702 = arith.constant 0 : index
    %923 = vector.load %arg12[%c7_700, %c0_701, %c0_702] : memref<8x16x32xf32, #tpu.memory_space<vmem>>, vector<1x16x32xf32>
    %924 = vector.shape_cast %923 : vector<1x16x32xf32> to vector<16x32xf32>
    %925 = vector.shape_cast %922 : vector<16x32xf32> to vector<1x16x32xf32>
    tpu.vector_store %arg12[%c7_700, %c0_701, %c0_702], %925 {strides = array<i32>} : memref<8x16x32xf32, #tpu.memory_space<vmem>>, vector<1x16x32xf32>,
    %c2_703 = arith.constant 2 : index
    %c0_704 = arith.constant 0 : index
    %c0_705 = arith.constant 0 : index
    %926 = vector.load %arg8[%c2_703, %c0_704, %c0_705] : memref<8x2x32xf32, #tpu.memory_space<vmem>>, vector<1x2x32xf32>
    %927 = vector.shape_cast %926 : vector<1x2x32xf32> to vector<2x32xf32>
    %c3_706 = arith.constant 3 : index
    %c0_707 = arith.constant 0 : index
    %c0_708 = arith.constant 0 : index
    %928 = vector.load %arg8[%c3_706, %c0_707, %c0_708] : memref<8x2x32xf32, #tpu.memory_space<vmem>>, vector<1x2x32xf32>
    %929 = vector.shape_cast %928 : vector<1x2x32xf32> to vector<2x32xf32>
    %c6_709 = arith.constant 6 : index
    %c0_710 = arith.constant 0 : index
    %c0_711 = arith.constant 0 : index
    %930 = vector.load %arg8[%c6_709, %c0_710, %c0_711] : memref<8x2x32xf32, #tpu.memory_space<vmem>>, vector<1x2x32xf32>
    %931 = vector.shape_cast %930 : vector<1x2x32xf32> to vector<2x32xf32>
    %c7_712 = arith.constant 7 : index
    %c0_713 = arith.constant 0 : index
    %c0_714 = arith.constant 0 : index
    %932 = vector.load %arg8[%c7_712, %c0_713, %c0_714] : memref<8x2x32xf32, #tpu.memory_space<vmem>>, vector<1x2x32xf32>
    %933 = vector.shape_cast %932 : vector<1x2x32xf32> to vector<2x32xf32>
    %c0_715 = arith.constant 0 : index
    %c0_716 = arith.constant 0 : index
    %c0_717 = arith.constant 0 : index
    %934 = vector.load %arg12[%c0_715, %c0_716, %c0_717] : memref<8x16x32xf32, #tpu.memory_space<vmem>>, vector<1x2x32xf32>
    %935 = vector.shape_cast %934 : vector<1x2x32xf32> to vector<2x32xf32>
    %c8_718 = arith.constant 8 : index
    %c0_719 = arith.constant 0 : index
    %c0_720 = arith.constant 0 : index
    %936 = vector.load %arg4[%c8_718, %c0_719, %c0_720] : memref<16x32x32xf32, #tpu.memory_space<vmem>>, vector<1x32x32xf32>
    %937 = vector.shape_cast %936 : vector<1x32x32xf32> to vector<32x32xf32>
    %cst_721 = arith.constant dense<0.000000e+00> : vector<2x32xf32>
    %938 = tpu.matmul %927, %937, %cst_721 {dimension_numbers = #tpu.dot_dimension_numbers<[1], [0], [0], [1], [0, 0, 1, 1], [], []>} : vector<2x32xf32>, vector<32x32xf32>, vector<2x32xf32> -> vector<2x32xf32>
    %939 = arith.addf %935, %938 : vector<2x32xf32>
    %940 = arith.negf %939 : vector<2x32xf32>
    %941 = math.exp %940 : vector<2x32xf32>
    %cst_722 = arith.constant 1.000000e+00 : f32
    %942 = vector.broadcast %cst_722 : f32 to vector<2x32xf32>
    %943 = arith.addf %942, %941 : vector<2x32xf32>
    %944 = arith.divf %942, %943 : vector<2x32xf32>
    %c1_723 = arith.constant 1 : index
    %c0_724 = arith.constant 0 : index
    %c0_725 = arith.constant 0 : index
    %945 = vector.load %arg12[%c1_723, %c0_724, %c0_725] : memref<8x16x32xf32, #tpu.memory_space<vmem>>, vector<1x2x32xf32>
    %946 = vector.shape_cast %945 : vector<1x2x32xf32> to vector<2x32xf32>
    %c9_726 = arith.constant 9 : index
    %c0_727 = arith.constant 0 : index
    %c0_728 = arith.constant 0 : index
    %947 = vector.load %arg4[%c9_726, %c0_727, %c0_728] : memref<16x32x32xf32, #tpu.memory_space<vmem>>, vector<1x32x32xf32>
    %948 = vector.shape_cast %947 : vector<1x32x32xf32> to vector<32x32xf32>
    %cst_729 = arith.constant dense<0.000000e+00> : vector<2x32xf32>
    %949 = tpu.matmul %927, %948, %cst_729 {dimension_numbers = #tpu.dot_dimension_numbers<[1], [0], [0], [1], [0, 0, 1, 1], [], []>} : vector<2x32xf32>, vector<32x32xf32>, vector<2x32xf32> -> vector<2x32xf32>
    %950 = arith.addf %946, %949 : vector<2x32xf32>
    %951 = arith.negf %950 : vector<2x32xf32>
    %952 = math.exp %951 : vector<2x32xf32>
    %cst_730 = arith.constant 1.000000e+00 : f32
    %953 = vector.broadcast %cst_730 : f32 to vector<2x32xf32>
    %954 = arith.addf %953, %952 : vector<2x32xf32>
    %955 = arith.divf %953, %954 : vector<2x32xf32>
    %c2_731 = arith.constant 2 : index
    %c0_732 = arith.constant 0 : index
    %c0_733 = arith.constant 0 : index
    %956 = vector.load %arg12[%c2_731, %c0_732, %c0_733] : memref<8x16x32xf32, #tpu.memory_space<vmem>>, vector<1x2x32xf32>
    %957 = vector.shape_cast %956 : vector<1x2x32xf32> to vector<2x32xf32>
    %c10_734 = arith.constant 10 : index
    %c0_735 = arith.constant 0 : index
    %c0_736 = arith.constant 0 : index
    %958 = vector.load %arg4[%c10_734, %c0_735, %c0_736] : memref<16x32x32xf32, #tpu.memory_space<vmem>>, vector<1x32x32xf32>
    %959 = vector.shape_cast %958 : vector<1x32x32xf32> to vector<32x32xf32>
    %cst_737 = arith.constant dense<0.000000e+00> : vector<2x32xf32>
    %960 = tpu.matmul %927, %959, %cst_737 {dimension_numbers = #tpu.dot_dimension_numbers<[1], [0], [0], [1], [0, 0, 1, 1], [], []>} : vector<2x32xf32>, vector<32x32xf32>, vector<2x32xf32> -> vector<2x32xf32>
    %961 = arith.addf %957, %960 : vector<2x32xf32>
    %962 = math.tanh %961 : vector<2x32xf32>
    %c3_738 = arith.constant 3 : index
    %c0_739 = arith.constant 0 : index
    %c0_740 = arith.constant 0 : index
    %963 = vector.load %arg12[%c3_738, %c0_739, %c0_740] : memref<8x16x32xf32, #tpu.memory_space<vmem>>, vector<1x2x32xf32>
    %964 = vector.shape_cast %963 : vector<1x2x32xf32> to vector<2x32xf32>
    %c11_741 = arith.constant 11 : index
    %c0_742 = arith.constant 0 : index
    %c0_743 = arith.constant 0 : index
    %965 = vector.load %arg4[%c11_741, %c0_742, %c0_743] : memref<16x32x32xf32, #tpu.memory_space<vmem>>, vector<1x32x32xf32>
    %966 = vector.shape_cast %965 : vector<1x32x32xf32> to vector<32x32xf32>
    %cst_744 = arith.constant dense<0.000000e+00> : vector<2x32xf32>
    %967 = tpu.matmul %927, %966, %cst_744 {dimension_numbers = #tpu.dot_dimension_numbers<[1], [0], [0], [1], [0, 0, 1, 1], [], []>} : vector<2x32xf32>, vector<32x32xf32>, vector<2x32xf32> -> vector<2x32xf32>
    %968 = arith.addf %964, %967 : vector<2x32xf32>
    %969 = arith.negf %968 : vector<2x32xf32>
    %970 = math.exp %969 : vector<2x32xf32>
    %cst_745 = arith.constant 1.000000e+00 : f32
    %971 = vector.broadcast %cst_745 : f32 to vector<2x32xf32>
    %972 = arith.addf %971, %970 : vector<2x32xf32>
    %973 = arith.divf %971, %972 : vector<2x32xf32>
    %974 = arith.mulf %955, %931 : vector<2x32xf32>
    %975 = arith.mulf %944, %962 : vector<2x32xf32>
    %976 = arith.addf %974, %975 : vector<2x32xf32>
    %977 = math.tanh %976 : vector<2x32xf32>
    %978 = arith.mulf %973, %977 : vector<2x32xf32>
    %c4_746 = arith.constant 4 : index
    %c14_747 = arith.constant 14 : index
    %c0_748 = arith.constant 0 : index
    %979 = vector.load %arg12[%c4_746, %c14_747, %c0_748] : memref<8x16x32xf32, #tpu.memory_space<vmem>>, vector<1x2x32xf32>
    %980 = vector.shape_cast %979 : vector<1x2x32xf32> to vector<2x32xf32>
    %c12_749 = arith.constant 12 : index
    %c0_750 = arith.constant 0 : index
    %c0_751 = arith.constant 0 : index
    %981 = vector.load %arg4[%c12_749, %c0_750, %c0_751] : memref<16x32x32xf32, #tpu.memory_space<vmem>>, vector<1x32x32xf32>
    %982 = vector.shape_cast %981 : vector<1x32x32xf32> to vector<32x32xf32>
    %cst_752 = arith.constant dense<0.000000e+00> : vector<2x32xf32>
    %983 = tpu.matmul %929, %982, %cst_752 {dimension_numbers = #tpu.dot_dimension_numbers<[1], [0], [0], [1], [0, 0, 1, 1], [], []>} : vector<2x32xf32>, vector<32x32xf32>, vector<2x32xf32> -> vector<2x32xf32>
    %984 = arith.addf %980, %983 : vector<2x32xf32>
    %985 = arith.negf %984 : vector<2x32xf32>
    %986 = math.exp %985 : vector<2x32xf32>
    %cst_753 = arith.constant 1.000000e+00 : f32
    %987 = vector.broadcast %cst_753 : f32 to vector<2x32xf32>
    %988 = arith.addf %987, %986 : vector<2x32xf32>
    %989 = arith.divf %987, %988 : vector<2x32xf32>
    %c5_754 = arith.constant 5 : index
    %c14_755 = arith.constant 14 : index
    %c0_756 = arith.constant 0 : index
    %990 = vector.load %arg12[%c5_754, %c14_755, %c0_756] : memref<8x16x32xf32, #tpu.memory_space<vmem>>, vector<1x2x32xf32>
    %991 = vector.shape_cast %990 : vector<1x2x32xf32> to vector<2x32xf32>
    %c13_757 = arith.constant 13 : index
    %c0_758 = arith.constant 0 : index
    %c0_759 = arith.constant 0 : index
    %992 = vector.load %arg4[%c13_757, %c0_758, %c0_759] : memref<16x32x32xf32, #tpu.memory_space<vmem>>, vector<1x32x32xf32>
    %993 = vector.shape_cast %992 : vector<1x32x32xf32> to vector<32x32xf32>
    %cst_760 = arith.constant dense<0.000000e+00> : vector<2x32xf32>
    %994 = tpu.matmul %929, %993, %cst_760 {dimension_numbers = #tpu.dot_dimension_numbers<[1], [0], [0], [1], [0, 0, 1, 1], [], []>} : vector<2x32xf32>, vector<32x32xf32>, vector<2x32xf32> -> vector<2x32xf32>
    %995 = arith.addf %991, %994 : vector<2x32xf32>
    %996 = arith.negf %995 : vector<2x32xf32>
    %997 = math.exp %996 : vector<2x32xf32>
    %cst_761 = arith.constant 1.000000e+00 : f32
    %998 = vector.broadcast %cst_761 : f32 to vector<2x32xf32>
    %999 = arith.addf %998, %997 : vector<2x32xf32>
    %1000 = arith.divf %998, %999 : vector<2x32xf32>
    %c6_762 = arith.constant 6 : index
    %c14_763 = arith.constant 14 : index
    %c0_764 = arith.constant 0 : index
    %1001 = vector.load %arg12[%c6_762, %c14_763, %c0_764] : memref<8x16x32xf32, #tpu.memory_space<vmem>>, vector<1x2x32xf32>
    %1002 = vector.shape_cast %1001 : vector<1x2x32xf32> to vector<2x32xf32>
    %c14_765 = arith.constant 14 : index
    %c0_766 = arith.constant 0 : index
    %c0_767 = arith.constant 0 : index
    %1003 = vector.load %arg4[%c14_765, %c0_766, %c0_767] : memref<16x32x32xf32, #tpu.memory_space<vmem>>, vector<1x32x32xf32>
    %1004 = vector.shape_cast %1003 : vector<1x32x32xf32> to vector<32x32xf32>
    %cst_768 = arith.constant dense<0.000000e+00> : vector<2x32xf32>
    %1005 = tpu.matmul %929, %1004, %cst_768 {dimension_numbers = #tpu.dot_dimension_numbers<[1], [0], [0], [1], [0, 0, 1, 1], [], []>} : vector<2x32xf32>, vector<32x32xf32>, vector<2x32xf32> -> vector<2x32xf32>
    %1006 = arith.addf %1002, %1005 : vector<2x32xf32>
    %1007 = math.tanh %1006 : vector<2x32xf32>
    %c7_769 = arith.constant 7 : index
    %c14_770 = arith.constant 14 : index
    %c0_771 = arith.constant 0 : index
    %1008 = vector.load %arg12[%c7_769, %c14_770, %c0_771] : memref<8x16x32xf32, #tpu.memory_space<vmem>>, vector<1x2x32xf32>
    %1009 = vector.shape_cast %1008 : vector<1x2x32xf32> to vector<2x32xf32>
    %c15_772 = arith.constant 15 : index
    %c0_773 = arith.constant 0 : index
    %c0_774 = arith.constant 0 : index
    %1010 = vector.load %arg4[%c15_772, %c0_773, %c0_774] : memref<16x32x32xf32, #tpu.memory_space<vmem>>, vector<1x32x32xf32>
    %1011 = vector.shape_cast %1010 : vector<1x32x32xf32> to vector<32x32xf32>
    %cst_775 = arith.constant dense<0.000000e+00> : vector<2x32xf32>
    %1012 = tpu.matmul %929, %1011, %cst_775 {dimension_numbers = #tpu.dot_dimension_numbers<[1], [0], [0], [1], [0, 0, 1, 1], [], []>} : vector<2x32xf32>, vector<32x32xf32>, vector<2x32xf32> -> vector<2x32xf32>
    %1013 = arith.addf %1009, %1012 : vector<2x32xf32>
    %1014 = arith.negf %1013 : vector<2x32xf32>
    %1015 = math.exp %1014 : vector<2x32xf32>
    %cst_776 = arith.constant 1.000000e+00 : f32
    %1016 = vector.broadcast %cst_776 : f32 to vector<2x32xf32>
    %1017 = arith.addf %1016, %1015 : vector<2x32xf32>
    %1018 = arith.divf %1016, %1017 : vector<2x32xf32>
    %1019 = arith.mulf %1000, %933 : vector<2x32xf32>
    %1020 = arith.mulf %989, %1007 : vector<2x32xf32>
    %1021 = arith.addf %1019, %1020 : vector<2x32xf32>
    %1022 = math.tanh %1021 : vector<2x32xf32>
    %1023 = arith.mulf %1018, %1022 : vector<2x32xf32>
    %c0_777 = arith.constant 0 : index
    %c2_778 = arith.constant 2 : index
    %c0_779 = arith.constant 0 : index
    %1024 = vector.load %arg12[%c0_777, %c2_778, %c0_779] : memref<8x16x32xf32, #tpu.memory_space<vmem>>, vector<1x2x32xf32>
    %1025 = vector.shape_cast %1024 : vector<1x2x32xf32> to vector<2x32xf32>
    %c8_780 = arith.constant 8 : index
    %c0_781 = arith.constant 0 : index
    %c0_782 = arith.constant 0 : index
    %1026 = vector.load %arg4[%c8_780, %c0_781, %c0_782] : memref<16x32x32xf32, #tpu.memory_space<vmem>>, vector<1x32x32xf32>
    %1027 = vector.shape_cast %1026 : vector<1x32x32xf32> to vector<32x32xf32>
    %cst_783 = arith.constant dense<0.000000e+00> : vector<2x32xf32>
    %1028 = tpu.matmul %978, %1027, %cst_783 {dimension_numbers = #tpu.dot_dimension_numbers<[1], [0], [0], [1], [0, 0, 1, 1], [], []>} : vector<2x32xf32>, vector<32x32xf32>, vector<2x32xf32> -> vector<2x32xf32>
    %1029 = arith.addf %1025, %1028 : vector<2x32xf32>
    %1030 = arith.negf %1029 : vector<2x32xf32>
    %1031 = math.exp %1030 : vector<2x32xf32>
    %cst_784 = arith.constant 1.000000e+00 : f32
    %1032 = vector.broadcast %cst_784 : f32 to vector<2x32xf32>
    %1033 = arith.addf %1032, %1031 : vector<2x32xf32>
    %1034 = arith.divf %1032, %1033 : vector<2x32xf32>
    %c1_785 = arith.constant 1 : index
    %c2_786 = arith.constant 2 : index
    %c0_787 = arith.constant 0 : index
    %1035 = vector.load %arg12[%c1_785, %c2_786, %c0_787] : memref<8x16x32xf32, #tpu.memory_space<vmem>>, vector<1x2x32xf32>
    %1036 = vector.shape_cast %1035 : vector<1x2x32xf32> to vector<2x32xf32>
    %c9_788 = arith.constant 9 : index
    %c0_789 = arith.constant 0 : index
    %c0_790 = arith.constant 0 : index
    %1037 = vector.load %arg4[%c9_788, %c0_789, %c0_790] : memref<16x32x32xf32, #tpu.memory_space<vmem>>, vector<1x32x32xf32>
    %1038 = vector.shape_cast %1037 : vector<1x32x32xf32> to vector<32x32xf32>
    %cst_791 = arith.constant dense<0.000000e+00> : vector<2x32xf32>
    %1039 = tpu.matmul %978, %1038, %cst_791 {dimension_numbers = #tpu.dot_dimension_numbers<[1], [0], [0], [1], [0, 0, 1, 1], [], []>} : vector<2x32xf32>, vector<32x32xf32>, vector<2x32xf32> -> vector<2x32xf32>
    %1040 = arith.addf %1036, %1039 : vector<2x32xf32>
    %1041 = arith.negf %1040 : vector<2x32xf32>
    %1042 = math.exp %1041 : vector<2x32xf32>
    %cst_792 = arith.constant 1.000000e+00 : f32
    %1043 = vector.broadcast %cst_792 : f32 to vector<2x32xf32>
    %1044 = arith.addf %1043, %1042 : vector<2x32xf32>
    %1045 = arith.divf %1043, %1044 : vector<2x32xf32>
    %c2_793 = arith.constant 2 : index
    %c2_794 = arith.constant 2 : index
    %c0_795 = arith.constant 0 : index
    %1046 = vector.load %arg12[%c2_793, %c2_794, %c0_795] : memref<8x16x32xf32, #tpu.memory_space<vmem>>, vector<1x2x32xf32>
    %1047 = vector.shape_cast %1046 : vector<1x2x32xf32> to vector<2x32xf32>
    %c10_796 = arith.constant 10 : index
    %c0_797 = arith.constant 0 : index
    %c0_798 = arith.constant 0 : index
    %1048 = vector.load %arg4[%c10_796, %c0_797, %c0_798] : memref<16x32x32xf32, #tpu.memory_space<vmem>>, vector<1x32x32xf32>
    %1049 = vector.shape_cast %1048 : vector<1x32x32xf32> to vector<32x32xf32>
    %cst_799 = arith.constant dense<0.000000e+00> : vector<2x32xf32>
    %1050 = tpu.matmul %978, %1049, %cst_799 {dimension_numbers = #tpu.dot_dimension_numbers<[1], [0], [0], [1], [0, 0, 1, 1], [], []>} : vector<2x32xf32>, vector<32x32xf32>, vector<2x32xf32> -> vector<2x32xf32>
    %1051 = arith.addf %1047, %1050 : vector<2x32xf32>
    %1052 = math.tanh %1051 : vector<2x32xf32>
    %c3_800 = arith.constant 3 : index
    %c2_801 = arith.constant 2 : index
    %c0_802 = arith.constant 0 : index
    %1053 = vector.load %arg12[%c3_800, %c2_801, %c0_802] : memref<8x16x32xf32, #tpu.memory_space<vmem>>, vector<1x2x32xf32>
    %1054 = vector.shape_cast %1053 : vector<1x2x32xf32> to vector<2x32xf32>
    %c11_803 = arith.constant 11 : index
    %c0_804 = arith.constant 0 : index
    %c0_805 = arith.constant 0 : index
    %1055 = vector.load %arg4[%c11_803, %c0_804, %c0_805] : memref<16x32x32xf32, #tpu.memory_space<vmem>>, vector<1x32x32xf32>
    %1056 = vector.shape_cast %1055 : vector<1x32x32xf32> to vector<32x32xf32>
    %cst_806 = arith.constant dense<0.000000e+00> : vector<2x32xf32>
    %1057 = tpu.matmul %978, %1056, %cst_806 {dimension_numbers = #tpu.dot_dimension_numbers<[1], [0], [0], [1], [0, 0, 1, 1], [], []>} : vector<2x32xf32>, vector<32x32xf32>, vector<2x32xf32> -> vector<2x32xf32>
    %1058 = arith.addf %1054, %1057 : vector<2x32xf32>
    %1059 = arith.negf %1058 : vector<2x32xf32>
    %1060 = math.exp %1059 : vector<2x32xf32>
    %cst_807 = arith.constant 1.000000e+00 : f32
    %1061 = vector.broadcast %cst_807 : f32 to vector<2x32xf32>
    %1062 = arith.addf %1061, %1060 : vector<2x32xf32>
    %1063 = arith.divf %1061, %1062 : vector<2x32xf32>
    %1064 = arith.mulf %1045, %976 : vector<2x32xf32>
    %1065 = arith.mulf %1034, %1052 : vector<2x32xf32>
    %1066 = arith.addf %1064, %1065 : vector<2x32xf32>
    %1067 = math.tanh %1066 : vector<2x32xf32>
    %1068 = arith.mulf %1063, %1067 : vector<2x32xf32>
    %c4_808 = arith.constant 4 : index
    %c12_809 = arith.constant 12 : index
    %c0_810 = arith.constant 0 : index
    %1069 = vector.load %arg12[%c4_808, %c12_809, %c0_810] : memref<8x16x32xf32, #tpu.memory_space<vmem>>, vector<1x2x32xf32>
    %1070 = vector.shape_cast %1069 : vector<1x2x32xf32> to vector<2x32xf32>
    %c12_811 = arith.constant 12 : index
    %c0_812 = arith.constant 0 : index
    %c0_813 = arith.constant 0 : index
    %1071 = vector.load %arg4[%c12_811, %c0_812, %c0_813] : memref<16x32x32xf32, #tpu.memory_space<vmem>>, vector<1x32x32xf32>
    %1072 = vector.shape_cast %1071 : vector<1x32x32xf32> to vector<32x32xf32>
    %cst_814 = arith.constant dense<0.000000e+00> : vector<2x32xf32>
    %1073 = tpu.matmul %1023, %1072, %cst_814 {dimension_numbers = #tpu.dot_dimension_numbers<[1], [0], [0], [1], [0, 0, 1, 1], [], []>} : vector<2x32xf32>, vector<32x32xf32>, vector<2x32xf32> -> vector<2x32xf32>
    %1074 = arith.addf %1070, %1073 : vector<2x32xf32>
    %1075 = arith.negf %1074 : vector<2x32xf32>
    %1076 = math.exp %1075 : vector<2x32xf32>
    %cst_815 = arith.constant 1.000000e+00 : f32
    %1077 = vector.broadcast %cst_815 : f32 to vector<2x32xf32>
    %1078 = arith.addf %1077, %1076 : vector<2x32xf32>
    %1079 = arith.divf %1077, %1078 : vector<2x32xf32>
    %c5_816 = arith.constant 5 : index
    %c12_817 = arith.constant 12 : index
    %c0_818 = arith.constant 0 : index
    %1080 = vector.load %arg12[%c5_816, %c12_817, %c0_818] : memref<8x16x32xf32, #tpu.memory_space<vmem>>, vector<1x2x32xf32>
    %1081 = vector.shape_cast %1080 : vector<1x2x32xf32> to vector<2x32xf32>
    %c13_819 = arith.constant 13 : index
    %c0_820 = arith.constant 0 : index
    %c0_821 = arith.constant 0 : index
    %1082 = vector.load %arg4[%c13_819, %c0_820, %c0_821] : memref<16x32x32xf32, #tpu.memory_space<vmem>>, vector<1x32x32xf32>
    %1083 = vector.shape_cast %1082 : vector<1x32x32xf32> to vector<32x32xf32>
    %cst_822 = arith.constant dense<0.000000e+00> : vector<2x32xf32>
    %1084 = tpu.matmul %1023, %1083, %cst_822 {dimension_numbers = #tpu.dot_dimension_numbers<[1], [0], [0], [1], [0, 0, 1, 1], [], []>} : vector<2x32xf32>, vector<32x32xf32>, vector<2x32xf32> -> vector<2x32xf32>
    %1085 = arith.addf %1081, %1084 : vector<2x32xf32>
    %1086 = arith.negf %1085 : vector<2x32xf32>
    %1087 = math.exp %1086 : vector<2x32xf32>
    %cst_823 = arith.constant 1.000000e+00 : f32
    %1088 = vector.broadcast %cst_823 : f32 to vector<2x32xf32>
    %1089 = arith.addf %1088, %1087 : vector<2x32xf32>
    %1090 = arith.divf %1088, %1089 : vector<2x32xf32>
    %c6_824 = arith.constant 6 : index
    %c12_825 = arith.constant 12 : index
    %c0_826 = arith.constant 0 : index
    %1091 = vector.load %arg12[%c6_824, %c12_825, %c0_826] : memref<8x16x32xf32, #tpu.memory_space<vmem>>, vector<1x2x32xf32>
    %1092 = vector.shape_cast %1091 : vector<1x2x32xf32> to vector<2x32xf32>
    %c14_827 = arith.constant 14 : index
    %c0_828 = arith.constant 0 : index
    %c0_829 = arith.constant 0 : index
    %1093 = vector.load %arg4[%c14_827, %c0_828, %c0_829] : memref<16x32x32xf32, #tpu.memory_space<vmem>>, vector<1x32x32xf32>
    %1094 = vector.shape_cast %1093 : vector<1x32x32xf32> to vector<32x32xf32>
    %cst_830 = arith.constant dense<0.000000e+00> : vector<2x32xf32>
    %1095 = tpu.matmul %1023, %1094, %cst_830 {dimension_numbers = #tpu.dot_dimension_numbers<[1], [0], [0], [1], [0, 0, 1, 1], [], []>} : vector<2x32xf32>, vector<32x32xf32>, vector<2x32xf32> -> vector<2x32xf32>
    %1096 = arith.addf %1092, %1095 : vector<2x32xf32>
    %1097 = math.tanh %1096 : vector<2x32xf32>
    %c7_831 = arith.constant 7 : index
    %c12_832 = arith.constant 12 : index
    %c0_833 = arith.constant 0 : index
    %1098 = vector.load %arg12[%c7_831, %c12_832, %c0_833] : memref<8x16x32xf32, #tpu.memory_space<vmem>>, vector<1x2x32xf32>
    %1099 = vector.shape_cast %1098 : vector<1x2x32xf32> to vector<2x32xf32>
    %c15_834 = arith.constant 15 : index
    %c0_835 = arith.constant 0 : index
    %c0_836 = arith.constant 0 : index
    %1100 = vector.load %arg4[%c15_834, %c0_835, %c0_836] : memref<16x32x32xf32, #tpu.memory_space<vmem>>, vector<1x32x32xf32>
    %1101 = vector.shape_cast %1100 : vector<1x32x32xf32> to vector<32x32xf32>
    %cst_837 = arith.constant dense<0.000000e+00> : vector<2x32xf32>
    %1102 = tpu.matmul %1023, %1101, %cst_837 {dimension_numbers = #tpu.dot_dimension_numbers<[1], [0], [0], [1], [0, 0, 1, 1], [], []>} : vector<2x32xf32>, vector<32x32xf32>, vector<2x32xf32> -> vector<2x32xf32>
    %1103 = arith.addf %1099, %1102 : vector<2x32xf32>
    %1104 = arith.negf %1103 : vector<2x32xf32>
    %1105 = math.exp %1104 : vector<2x32xf32>
    %cst_838 = arith.constant 1.000000e+00 : f32
    %1106 = vector.broadcast %cst_838 : f32 to vector<2x32xf32>
    %1107 = arith.addf %1106, %1105 : vector<2x32xf32>
    %1108 = arith.divf %1106, %1107 : vector<2x32xf32>
    %1109 = arith.mulf %1090, %1021 : vector<2x32xf32>
    %1110 = arith.mulf %1079, %1097 : vector<2x32xf32>
    %1111 = arith.addf %1109, %1110 : vector<2x32xf32>
    %1112 = math.tanh %1111 : vector<2x32xf32>
    %1113 = arith.mulf %1108, %1112 : vector<2x32xf32>
    %c0_839 = arith.constant 0 : index
    %c4_840 = arith.constant 4 : index
    %c0_841 = arith.constant 0 : index
    %1114 = vector.load %arg12[%c0_839, %c4_840, %c0_841] : memref<8x16x32xf32, #tpu.memory_space<vmem>>, vector<1x2x32xf32>
    %1115 = vector.shape_cast %1114 : vector<1x2x32xf32> to vector<2x32xf32>
    %c8_842 = arith.constant 8 : index
    %c0_843 = arith.constant 0 : index
    %c0_844 = arith.constant 0 : index
    %1116 = vector.load %arg4[%c8_842, %c0_843, %c0_844] : memref<16x32x32xf32, #tpu.memory_space<vmem>>, vector<1x32x32xf32>
    %1117 = vector.shape_cast %1116 : vector<1x32x32xf32> to vector<32x32xf32>
    %cst_845 = arith.constant dense<0.000000e+00> : vector<2x32xf32>
    %1118 = tpu.matmul %1068, %1117, %cst_845 {dimension_numbers = #tpu.dot_dimension_numbers<[1], [0], [0], [1], [0, 0, 1, 1], [], []>} : vector<2x32xf32>, vector<32x32xf32>, vector<2x32xf32> -> vector<2x32xf32>
    %1119 = arith.addf %1115, %1118 : vector<2x32xf32>
    %1120 = arith.negf %1119 : vector<2x32xf32>
    %1121 = math.exp %1120 : vector<2x32xf32>
    %cst_846 = arith.constant 1.000000e+00 : f32
    %1122 = vector.broadcast %cst_846 : f32 to vector<2x32xf32>
    %1123 = arith.addf %1122, %1121 : vector<2x32xf32>
    %1124 = arith.divf %1122, %1123 : vector<2x32xf32>
    %c1_847 = arith.constant 1 : index
    %c4_848 = arith.constant 4 : index
    %c0_849 = arith.constant 0 : index
    %1125 = vector.load %arg12[%c1_847, %c4_848, %c0_849] : memref<8x16x32xf32, #tpu.memory_space<vmem>>, vector<1x2x32xf32>
    %1126 = vector.shape_cast %1125 : vector<1x2x32xf32> to vector<2x32xf32>
    %c9_850 = arith.constant 9 : index
    %c0_851 = arith.constant 0 : index
    %c0_852 = arith.constant 0 : index
    %1127 = vector.load %arg4[%c9_850, %c0_851, %c0_852] : memref<16x32x32xf32, #tpu.memory_space<vmem>>, vector<1x32x32xf32>
    %1128 = vector.shape_cast %1127 : vector<1x32x32xf32> to vector<32x32xf32>
    %cst_853 = arith.constant dense<0.000000e+00> : vector<2x32xf32>
    %1129 = tpu.matmul %1068, %1128, %cst_853 {dimension_numbers = #tpu.dot_dimension_numbers<[1], [0], [0], [1], [0, 0, 1, 1], [], []>} : vector<2x32xf32>, vector<32x32xf32>, vector<2x32xf32> -> vector<2x32xf32>
    %1130 = arith.addf %1126, %1129 : vector<2x32xf32>
    %1131 = arith.negf %1130 : vector<2x32xf32>
    %1132 = math.exp %1131 : vector<2x32xf32>
    %cst_854 = arith.constant 1.000000e+00 : f32
    %1133 = vector.broadcast %cst_854 : f32 to vector<2x32xf32>
    %1134 = arith.addf %1133, %1132 : vector<2x32xf32>
    %1135 = arith.divf %1133, %1134 : vector<2x32xf32>
    %c2_855 = arith.constant 2 : index
    %c4_856 = arith.constant 4 : index
    %c0_857 = arith.constant 0 : index
    %1136 = vector.load %arg12[%c2_855, %c4_856, %c0_857] : memref<8x16x32xf32, #tpu.memory_space<vmem>>, vector<1x2x32xf32>
    %1137 = vector.shape_cast %1136 : vector<1x2x32xf32> to vector<2x32xf32>
    %c10_858 = arith.constant 10 : index
    %c0_859 = arith.constant 0 : index
    %c0_860 = arith.constant 0 : index
    %1138 = vector.load %arg4[%c10_858, %c0_859, %c0_860] : memref<16x32x32xf32, #tpu.memory_space<vmem>>, vector<1x32x32xf32>
    %1139 = vector.shape_cast %1138 : vector<1x32x32xf32> to vector<32x32xf32>
    %cst_861 = arith.constant dense<0.000000e+00> : vector<2x32xf32>
    %1140 = tpu.matmul %1068, %1139, %cst_861 {dimension_numbers = #tpu.dot_dimension_numbers<[1], [0], [0], [1], [0, 0, 1, 1], [], []>} : vector<2x32xf32>, vector<32x32xf32>, vector<2x32xf32> -> vector<2x32xf32>
    %1141 = arith.addf %1137, %1140 : vector<2x32xf32>
    %1142 = math.tanh %1141 : vector<2x32xf32>
    %c3_862 = arith.constant 3 : index
    %c4_863 = arith.constant 4 : index
    %c0_864 = arith.constant 0 : index
    %1143 = vector.load %arg12[%c3_862, %c4_863, %c0_864] : memref<8x16x32xf32, #tpu.memory_space<vmem>>, vector<1x2x32xf32>
    %1144 = vector.shape_cast %1143 : vector<1x2x32xf32> to vector<2x32xf32>
    %c11_865 = arith.constant 11 : index
    %c0_866 = arith.constant 0 : index
    %c0_867 = arith.constant 0 : index
    %1145 = vector.load %arg4[%c11_865, %c0_866, %c0_867] : memref<16x32x32xf32, #tpu.memory_space<vmem>>, vector<1x32x32xf32>
    %1146 = vector.shape_cast %1145 : vector<1x32x32xf32> to vector<32x32xf32>
    %cst_868 = arith.constant dense<0.000000e+00> : vector<2x32xf32>
    %1147 = tpu.matmul %1068, %1146, %cst_868 {dimension_numbers = #tpu.dot_dimension_numbers<[1], [0], [0], [1], [0, 0, 1, 1], [], []>} : vector<2x32xf32>, vector<32x32xf32>, vector<2x32xf32> -> vector<2x32xf32>
    %1148 = arith.addf %1144, %1147 : vector<2x32xf32>
    %1149 = arith.negf %1148 : vector<2x32xf32>
    %1150 = math.exp %1149 : vector<2x32xf32>
    %cst_869 = arith.constant 1.000000e+00 : f32
    %1151 = vector.broadcast %cst_869 : f32 to vector<2x32xf32>
    %1152 = arith.addf %1151, %1150 : vector<2x32xf32>
    %1153 = arith.divf %1151, %1152 : vector<2x32xf32>
    %1154 = arith.mulf %1135, %1066 : vector<2x32xf32>
    %1155 = arith.mulf %1124, %1142 : vector<2x32xf32>
    %1156 = arith.addf %1154, %1155 : vector<2x32xf32>
    %1157 = math.tanh %1156 : vector<2x32xf32>
    %1158 = arith.mulf %1153, %1157 : vector<2x32xf32>
    %c4_870 = arith.constant 4 : index
    %c10_871 = arith.constant 10 : index
    %c0_872 = arith.constant 0 : index
    %1159 = vector.load %arg12[%c4_870, %c10_871, %c0_872] : memref<8x16x32xf32, #tpu.memory_space<vmem>>, vector<1x2x32xf32>
    %1160 = vector.shape_cast %1159 : vector<1x2x32xf32> to vector<2x32xf32>
    %c12_873 = arith.constant 12 : index
    %c0_874 = arith.constant 0 : index
    %c0_875 = arith.constant 0 : index
    %1161 = vector.load %arg4[%c12_873, %c0_874, %c0_875] : memref<16x32x32xf32, #tpu.memory_space<vmem>>, vector<1x32x32xf32>
    %1162 = vector.shape_cast %1161 : vector<1x32x32xf32> to vector<32x32xf32>
    %cst_876 = arith.constant dense<0.000000e+00> : vector<2x32xf32>
    %1163 = tpu.matmul %1113, %1162, %cst_876 {dimension_numbers = #tpu.dot_dimension_numbers<[1], [0], [0], [1], [0, 0, 1, 1], [], []>} : vector<2x32xf32>, vector<32x32xf32>, vector<2x32xf32> -> vector<2x32xf32>
    %1164 = arith.addf %1160, %1163 : vector<2x32xf32>
    %1165 = arith.negf %1164 : vector<2x32xf32>
    %1166 = math.exp %1165 : vector<2x32xf32>
    %cst_877 = arith.constant 1.000000e+00 : f32
    %1167 = vector.broadcast %cst_877 : f32 to vector<2x32xf32>
    %1168 = arith.addf %1167, %1166 : vector<2x32xf32>
    %1169 = arith.divf %1167, %1168 : vector<2x32xf32>
    %c5_878 = arith.constant 5 : index
    %c10_879 = arith.constant 10 : index
    %c0_880 = arith.constant 0 : index
    %1170 = vector.load %arg12[%c5_878, %c10_879, %c0_880] : memref<8x16x32xf32, #tpu.memory_space<vmem>>, vector<1x2x32xf32>
    %1171 = vector.shape_cast %1170 : vector<1x2x32xf32> to vector<2x32xf32>
    %c13_881 = arith.constant 13 : index
    %c0_882 = arith.constant 0 : index
    %c0_883 = arith.constant 0 : index
    %1172 = vector.load %arg4[%c13_881, %c0_882, %c0_883] : memref<16x32x32xf32, #tpu.memory_space<vmem>>, vector<1x32x32xf32>
    %1173 = vector.shape_cast %1172 : vector<1x32x32xf32> to vector<32x32xf32>
    %cst_884 = arith.constant dense<0.000000e+00> : vector<2x32xf32>
    %1174 = tpu.matmul %1113, %1173, %cst_884 {dimension_numbers = #tpu.dot_dimension_numbers<[1], [0], [0], [1], [0, 0, 1, 1], [], []>} : vector<2x32xf32>, vector<32x32xf32>, vector<2x32xf32> -> vector<2x32xf32>
    %1175 = arith.addf %1171, %1174 : vector<2x32xf32>
    %1176 = arith.negf %1175 : vector<2x32xf32>
    %1177 = math.exp %1176 : vector<2x32xf32>
    %cst_885 = arith.constant 1.000000e+00 : f32
    %1178 = vector.broadcast %cst_885 : f32 to vector<2x32xf32>
    %1179 = arith.addf %1178, %1177 : vector<2x32xf32>
    %1180 = arith.divf %1178, %1179 : vector<2x32xf32>
    %c6_886 = arith.constant 6 : index
    %c10_887 = arith.constant 10 : index
    %c0_888 = arith.constant 0 : index
    %1181 = vector.load %arg12[%c6_886, %c10_887, %c0_888] : memref<8x16x32xf32, #tpu.memory_space<vmem>>, vector<1x2x32xf32>
    %1182 = vector.shape_cast %1181 : vector<1x2x32xf32> to vector<2x32xf32>
    %c14_889 = arith.constant 14 : index
    %c0_890 = arith.constant 0 : index
    %c0_891 = arith.constant 0 : index
    %1183 = vector.load %arg4[%c14_889, %c0_890, %c0_891] : memref<16x32x32xf32, #tpu.memory_space<vmem>>, vector<1x32x32xf32>
    %1184 = vector.shape_cast %1183 : vector<1x32x32xf32> to vector<32x32xf32>
    %cst_892 = arith.constant dense<0.000000e+00> : vector<2x32xf32>
    %1185 = tpu.matmul %1113, %1184, %cst_892 {dimension_numbers = #tpu.dot_dimension_numbers<[1], [0], [0], [1], [0, 0, 1, 1], [], []>} : vector<2x32xf32>, vector<32x32xf32>, vector<2x32xf32> -> vector<2x32xf32>
    %1186 = arith.addf %1182, %1185 : vector<2x32xf32>
    %1187 = math.tanh %1186 : vector<2x32xf32>
    %c7_893 = arith.constant 7 : index
    %c10_894 = arith.constant 10 : index
    %c0_895 = arith.constant 0 : index
    %1188 = vector.load %arg12[%c7_893, %c10_894, %c0_895] : memref<8x16x32xf32, #tpu.memory_space<vmem>>, vector<1x2x32xf32>
    %1189 = vector.shape_cast %1188 : vector<1x2x32xf32> to vector<2x32xf32>
    %c15_896 = arith.constant 15 : index
    %c0_897 = arith.constant 0 : index
    %c0_898 = arith.constant 0 : index
    %1190 = vector.load %arg4[%c15_896, %c0_897, %c0_898] : memref<16x32x32xf32, #tpu.memory_space<vmem>>, vector<1x32x32xf32>
    %1191 = vector.shape_cast %1190 : vector<1x32x32xf32> to vector<32x32xf32>
    %cst_899 = arith.constant dense<0.000000e+00> : vector<2x32xf32>
    %1192 = tpu.matmul %1113, %1191, %cst_899 {dimension_numbers = #tpu.dot_dimension_numbers<[1], [0], [0], [1], [0, 0, 1, 1], [], []>} : vector<2x32xf32>, vector<32x32xf32>, vector<2x32xf32> -> vector<2x32xf32>
    %1193 = arith.addf %1189, %1192 : vector<2x32xf32>
    %1194 = arith.negf %1193 : vector<2x32xf32>
    %1195 = math.exp %1194 : vector<2x32xf32>
    %cst_900 = arith.constant 1.000000e+00 : f32
    %1196 = vector.broadcast %cst_900 : f32 to vector<2x32xf32>
    %1197 = arith.addf %1196, %1195 : vector<2x32xf32>
    %1198 = arith.divf %1196, %1197 : vector<2x32xf32>
    %1199 = arith.mulf %1180, %1111 : vector<2x32xf32>
    %1200 = arith.mulf %1169, %1187 : vector<2x32xf32>
    %1201 = arith.addf %1199, %1200 : vector<2x32xf32>
    %1202 = math.tanh %1201 : vector<2x32xf32>
    %1203 = arith.mulf %1198, %1202 : vector<2x32xf32>
    %c0_901 = arith.constant 0 : index
    %c6_902 = arith.constant 6 : index
    %c0_903 = arith.constant 0 : index
    %1204 = vector.load %arg12[%c0_901, %c6_902, %c0_903] : memref<8x16x32xf32, #tpu.memory_space<vmem>>, vector<1x2x32xf32>
    %1205 = vector.shape_cast %1204 : vector<1x2x32xf32> to vector<2x32xf32>
    %c8_904 = arith.constant 8 : index
    %c0_905 = arith.constant 0 : index
    %c0_906 = arith.constant 0 : index
    %1206 = vector.load %arg4[%c8_904, %c0_905, %c0_906] : memref<16x32x32xf32, #tpu.memory_space<vmem>>, vector<1x32x32xf32>
    %1207 = vector.shape_cast %1206 : vector<1x32x32xf32> to vector<32x32xf32>
    %cst_907 = arith.constant dense<0.000000e+00> : vector<2x32xf32>
    %1208 = tpu.matmul %1158, %1207, %cst_907 {dimension_numbers = #tpu.dot_dimension_numbers<[1], [0], [0], [1], [0, 0, 1, 1], [], []>} : vector<2x32xf32>, vector<32x32xf32>, vector<2x32xf32> -> vector<2x32xf32>
    %1209 = arith.addf %1205, %1208 : vector<2x32xf32>
    %1210 = arith.negf %1209 : vector<2x32xf32>
    %1211 = math.exp %1210 : vector<2x32xf32>
    %cst_908 = arith.constant 1.000000e+00 : f32
    %1212 = vector.broadcast %cst_908 : f32 to vector<2x32xf32>
    %1213 = arith.addf %1212, %1211 : vector<2x32xf32>
    %1214 = arith.divf %1212, %1213 : vector<2x32xf32>
    %c1_909 = arith.constant 1 : index
    %c6_910 = arith.constant 6 : index
    %c0_911 = arith.constant 0 : index
    %1215 = vector.load %arg12[%c1_909, %c6_910, %c0_911] : memref<8x16x32xf32, #tpu.memory_space<vmem>>, vector<1x2x32xf32>
    %1216 = vector.shape_cast %1215 : vector<1x2x32xf32> to vector<2x32xf32>
    %c9_912 = arith.constant 9 : index
    %c0_913 = arith.constant 0 : index
    %c0_914 = arith.constant 0 : index
    %1217 = vector.load %arg4[%c9_912, %c0_913, %c0_914] : memref<16x32x32xf32, #tpu.memory_space<vmem>>, vector<1x32x32xf32>
    %1218 = vector.shape_cast %1217 : vector<1x32x32xf32> to vector<32x32xf32>
    %cst_915 = arith.constant dense<0.000000e+00> : vector<2x32xf32>
    %1219 = tpu.matmul %1158, %1218, %cst_915 {dimension_numbers = #tpu.dot_dimension_numbers<[1], [0], [0], [1], [0, 0, 1, 1], [], []>} : vector<2x32xf32>, vector<32x32xf32>, vector<2x32xf32> -> vector<2x32xf32>
    %1220 = arith.addf %1216, %1219 : vector<2x32xf32>
    %1221 = arith.negf %1220 : vector<2x32xf32>
    %1222 = math.exp %1221 : vector<2x32xf32>
    %cst_916 = arith.constant 1.000000e+00 : f32
    %1223 = vector.broadcast %cst_916 : f32 to vector<2x32xf32>
    %1224 = arith.addf %1223, %1222 : vector<2x32xf32>
    %1225 = arith.divf %1223, %1224 : vector<2x32xf32>
    %c2_917 = arith.constant 2 : index
    %c6_918 = arith.constant 6 : index
    %c0_919 = arith.constant 0 : index
    %1226 = vector.load %arg12[%c2_917, %c6_918, %c0_919] : memref<8x16x32xf32, #tpu.memory_space<vmem>>, vector<1x2x32xf32>
    %1227 = vector.shape_cast %1226 : vector<1x2x32xf32> to vector<2x32xf32>
    %c10_920 = arith.constant 10 : index
    %c0_921 = arith.constant 0 : index
    %c0_922 = arith.constant 0 : index
    %1228 = vector.load %arg4[%c10_920, %c0_921, %c0_922] : memref<16x32x32xf32, #tpu.memory_space<vmem>>, vector<1x32x32xf32>
    %1229 = vector.shape_cast %1228 : vector<1x32x32xf32> to vector<32x32xf32>
    %cst_923 = arith.constant dense<0.000000e+00> : vector<2x32xf32>
    %1230 = tpu.matmul %1158, %1229, %cst_923 {dimension_numbers = #tpu.dot_dimension_numbers<[1], [0], [0], [1], [0, 0, 1, 1], [], []>} : vector<2x32xf32>, vector<32x32xf32>, vector<2x32xf32> -> vector<2x32xf32>
    %1231 = arith.addf %1227, %1230 : vector<2x32xf32>
    %1232 = math.tanh %1231 : vector<2x32xf32>
    %c3_924 = arith.constant 3 : index
    %c6_925 = arith.constant 6 : index
    %c0_926 = arith.constant 0 : index
    %1233 = vector.load %arg12[%c3_924, %c6_925, %c0_926] : memref<8x16x32xf32, #tpu.memory_space<vmem>>, vector<1x2x32xf32>
    %1234 = vector.shape_cast %1233 : vector<1x2x32xf32> to vector<2x32xf32>
    %c11_927 = arith.constant 11 : index
    %c0_928 = arith.constant 0 : index
    %c0_929 = arith.constant 0 : index
    %1235 = vector.load %arg4[%c11_927, %c0_928, %c0_929] : memref<16x32x32xf32, #tpu.memory_space<vmem>>, vector<1x32x32xf32>
    %1236 = vector.shape_cast %1235 : vector<1x32x32xf32> to vector<32x32xf32>
    %cst_930 = arith.constant dense<0.000000e+00> : vector<2x32xf32>
    %1237 = tpu.matmul %1158, %1236, %cst_930 {dimension_numbers = #tpu.dot_dimension_numbers<[1], [0], [0], [1], [0, 0, 1, 1], [], []>} : vector<2x32xf32>, vector<32x32xf32>, vector<2x32xf32> -> vector<2x32xf32>
    %1238 = arith.addf %1234, %1237 : vector<2x32xf32>
    %1239 = arith.negf %1238 : vector<2x32xf32>
    %1240 = math.exp %1239 : vector<2x32xf32>
    %cst_931 = arith.constant 1.000000e+00 : f32
    %1241 = vector.broadcast %cst_931 : f32 to vector<2x32xf32>
    %1242 = arith.addf %1241, %1240 : vector<2x32xf32>
    %1243 = arith.divf %1241, %1242 : vector<2x32xf32>
    %1244 = arith.mulf %1225, %1156 : vector<2x32xf32>
    %1245 = arith.mulf %1214, %1232 : vector<2x32xf32>
    %1246 = arith.addf %1244, %1245 : vector<2x32xf32>
    %1247 = math.tanh %1246 : vector<2x32xf32>
    %1248 = arith.mulf %1243, %1247 : vector<2x32xf32>
    %c4_932 = arith.constant 4 : index
    %c8_933 = arith.constant 8 : index
    %c0_934 = arith.constant 0 : index
    %1249 = vector.load %arg12[%c4_932, %c8_933, %c0_934] : memref<8x16x32xf32, #tpu.memory_space<vmem>>, vector<1x2x32xf32>
    %1250 = vector.shape_cast %1249 : vector<1x2x32xf32> to vector<2x32xf32>
    %c12_935 = arith.constant 12 : index
    %c0_936 = arith.constant 0 : index
    %c0_937 = arith.constant 0 : index
    %1251 = vector.load %arg4[%c12_935, %c0_936, %c0_937] : memref<16x32x32xf32, #tpu.memory_space<vmem>>, vector<1x32x32xf32>
    %1252 = vector.shape_cast %1251 : vector<1x32x32xf32> to vector<32x32xf32>
    %cst_938 = arith.constant dense<0.000000e+00> : vector<2x32xf32>
    %1253 = tpu.matmul %1203, %1252, %cst_938 {dimension_numbers = #tpu.dot_dimension_numbers<[1], [0], [0], [1], [0, 0, 1, 1], [], []>} : vector<2x32xf32>, vector<32x32xf32>, vector<2x32xf32> -> vector<2x32xf32>
    %1254 = arith.addf %1250, %1253 : vector<2x32xf32>
    %1255 = arith.negf %1254 : vector<2x32xf32>
    %1256 = math.exp %1255 : vector<2x32xf32>
    %cst_939 = arith.constant 1.000000e+00 : f32
    %1257 = vector.broadcast %cst_939 : f32 to vector<2x32xf32>
    %1258 = arith.addf %1257, %1256 : vector<2x32xf32>
    %1259 = arith.divf %1257, %1258 : vector<2x32xf32>
    %c5_940 = arith.constant 5 : index
    %c8_941 = arith.constant 8 : index
    %c0_942 = arith.constant 0 : index
    %1260 = vector.load %arg12[%c5_940, %c8_941, %c0_942] : memref<8x16x32xf32, #tpu.memory_space<vmem>>, vector<1x2x32xf32>
    %1261 = vector.shape_cast %1260 : vector<1x2x32xf32> to vector<2x32xf32>
    %c13_943 = arith.constant 13 : index
    %c0_944 = arith.constant 0 : index
    %c0_945 = arith.constant 0 : index
    %1262 = vector.load %arg4[%c13_943, %c0_944, %c0_945] : memref<16x32x32xf32, #tpu.memory_space<vmem>>, vector<1x32x32xf32>
    %1263 = vector.shape_cast %1262 : vector<1x32x32xf32> to vector<32x32xf32>
    %cst_946 = arith.constant dense<0.000000e+00> : vector<2x32xf32>
    %1264 = tpu.matmul %1203, %1263, %cst_946 {dimension_numbers = #tpu.dot_dimension_numbers<[1], [0], [0], [1], [0, 0, 1, 1], [], []>} : vector<2x32xf32>, vector<32x32xf32>, vector<2x32xf32> -> vector<2x32xf32>
    %1265 = arith.addf %1261, %1264 : vector<2x32xf32>
    %1266 = arith.negf %1265 : vector<2x32xf32>
    %1267 = math.exp %1266 : vector<2x32xf32>
    %cst_947 = arith.constant 1.000000e+00 : f32
    %1268 = vector.broadcast %cst_947 : f32 to vector<2x32xf32>
    %1269 = arith.addf %1268, %1267 : vector<2x32xf32>
    %1270 = arith.divf %1268, %1269 : vector<2x32xf32>
    %c6_948 = arith.constant 6 : index
    %c8_949 = arith.constant 8 : index
    %c0_950 = arith.constant 0 : index
    %1271 = vector.load %arg12[%c6_948, %c8_949, %c0_950] : memref<8x16x32xf32, #tpu.memory_space<vmem>>, vector<1x2x32xf32>
    %1272 = vector.shape_cast %1271 : vector<1x2x32xf32> to vector<2x32xf32>
    %c14_951 = arith.constant 14 : index
    %c0_952 = arith.constant 0 : index
    %c0_953 = arith.constant 0 : index
    %1273 = vector.load %arg4[%c14_951, %c0_952, %c0_953] : memref<16x32x32xf32, #tpu.memory_space<vmem>>, vector<1x32x32xf32>
    %1274 = vector.shape_cast %1273 : vector<1x32x32xf32> to vector<32x32xf32>
    %cst_954 = arith.constant dense<0.000000e+00> : vector<2x32xf32>
    %1275 = tpu.matmul %1203, %1274, %cst_954 {dimension_numbers = #tpu.dot_dimension_numbers<[1], [0], [0], [1], [0, 0, 1, 1], [], []>} : vector<2x32xf32>, vector<32x32xf32>, vector<2x32xf32> -> vector<2x32xf32>
    %1276 = arith.addf %1272, %1275 : vector<2x32xf32>
    %1277 = math.tanh %1276 : vector<2x32xf32>
    %c7_955 = arith.constant 7 : index
    %c8_956 = arith.constant 8 : index
    %c0_957 = arith.constant 0 : index
    %1278 = vector.load %arg12[%c7_955, %c8_956, %c0_957] : memref<8x16x32xf32, #tpu.memory_space<vmem>>, vector<1x2x32xf32>
    %1279 = vector.shape_cast %1278 : vector<1x2x32xf32> to vector<2x32xf32>
    %c15_958 = arith.constant 15 : index
    %c0_959 = arith.constant 0 : index
    %c0_960 = arith.constant 0 : index
    %1280 = vector.load %arg4[%c15_958, %c0_959, %c0_960] : memref<16x32x32xf32, #tpu.memory_space<vmem>>, vector<1x32x32xf32>
    %1281 = vector.shape_cast %1280 : vector<1x32x32xf32> to vector<32x32xf32>
    %cst_961 = arith.constant dense<0.000000e+00> : vector<2x32xf32>
    %1282 = tpu.matmul %1203, %1281, %cst_961 {dimension_numbers = #tpu.dot_dimension_numbers<[1], [0], [0], [1], [0, 0, 1, 1], [], []>} : vector<2x32xf32>, vector<32x32xf32>, vector<2x32xf32> -> vector<2x32xf32>
    %1283 = arith.addf %1279, %1282 : vector<2x32xf32>
    %1284 = arith.negf %1283 : vector<2x32xf32>
    %1285 = math.exp %1284 : vector<2x32xf32>
    %cst_962 = arith.constant 1.000000e+00 : f32
    %1286 = vector.broadcast %cst_962 : f32 to vector<2x32xf32>
    %1287 = arith.addf %1286, %1285 : vector<2x32xf32>
    %1288 = arith.divf %1286, %1287 : vector<2x32xf32>
    %1289 = arith.mulf %1270, %1201 : vector<2x32xf32>
    %1290 = arith.mulf %1259, %1277 : vector<2x32xf32>
    %1291 = arith.addf %1289, %1290 : vector<2x32xf32>
    %1292 = math.tanh %1291 : vector<2x32xf32>
    %1293 = arith.mulf %1288, %1292 : vector<2x32xf32>
    %c0_963 = arith.constant 0 : index
    %c8_964 = arith.constant 8 : index
    %c0_965 = arith.constant 0 : index
    %1294 = vector.load %arg12[%c0_963, %c8_964, %c0_965] : memref<8x16x32xf32, #tpu.memory_space<vmem>>, vector<1x2x32xf32>
    %1295 = vector.shape_cast %1294 : vector<1x2x32xf32> to vector<2x32xf32>
    %c8_966 = arith.constant 8 : index
    %c0_967 = arith.constant 0 : index
    %c0_968 = arith.constant 0 : index
    %1296 = vector.load %arg4[%c8_966, %c0_967, %c0_968] : memref<16x32x32xf32, #tpu.memory_space<vmem>>, vector<1x32x32xf32>
    %1297 = vector.shape_cast %1296 : vector<1x32x32xf32> to vector<32x32xf32>
    %cst_969 = arith.constant dense<0.000000e+00> : vector<2x32xf32>
    %1298 = tpu.matmul %1248, %1297, %cst_969 {dimension_numbers = #tpu.dot_dimension_numbers<[1], [0], [0], [1], [0, 0, 1, 1], [], []>} : vector<2x32xf32>, vector<32x32xf32>, vector<2x32xf32> -> vector<2x32xf32>
    %1299 = arith.addf %1295, %1298 : vector<2x32xf32>
    %1300 = arith.negf %1299 : vector<2x32xf32>
    %1301 = math.exp %1300 : vector<2x32xf32>
    %cst_970 = arith.constant 1.000000e+00 : f32
    %1302 = vector.broadcast %cst_970 : f32 to vector<2x32xf32>
    %1303 = arith.addf %1302, %1301 : vector<2x32xf32>
    %1304 = arith.divf %1302, %1303 : vector<2x32xf32>
    %c1_971 = arith.constant 1 : index
    %c8_972 = arith.constant 8 : index
    %c0_973 = arith.constant 0 : index
    %1305 = vector.load %arg12[%c1_971, %c8_972, %c0_973] : memref<8x16x32xf32, #tpu.memory_space<vmem>>, vector<1x2x32xf32>
    %1306 = vector.shape_cast %1305 : vector<1x2x32xf32> to vector<2x32xf32>
    %c9_974 = arith.constant 9 : index
    %c0_975 = arith.constant 0 : index
    %c0_976 = arith.constant 0 : index
    %1307 = vector.load %arg4[%c9_974, %c0_975, %c0_976] : memref<16x32x32xf32, #tpu.memory_space<vmem>>, vector<1x32x32xf32>
    %1308 = vector.shape_cast %1307 : vector<1x32x32xf32> to vector<32x32xf32>
    %cst_977 = arith.constant dense<0.000000e+00> : vector<2x32xf32>
    %1309 = tpu.matmul %1248, %1308, %cst_977 {dimension_numbers = #tpu.dot_dimension_numbers<[1], [0], [0], [1], [0, 0, 1, 1], [], []>} : vector<2x32xf32>, vector<32x32xf32>, vector<2x32xf32> -> vector<2x32xf32>
    %1310 = arith.addf %1306, %1309 : vector<2x32xf32>
    %1311 = arith.negf %1310 : vector<2x32xf32>
    %1312 = math.exp %1311 : vector<2x32xf32>
    %cst_978 = arith.constant 1.000000e+00 : f32
    %1313 = vector.broadcast %cst_978 : f32 to vector<2x32xf32>
    %1314 = arith.addf %1313, %1312 : vector<2x32xf32>
    %1315 = arith.divf %1313, %1314 : vector<2x32xf32>
    %c2_979 = arith.constant 2 : index
    %c8_980 = arith.constant 8 : index
    %c0_981 = arith.constant 0 : index
    %1316 = vector.load %arg12[%c2_979, %c8_980, %c0_981] : memref<8x16x32xf32, #tpu.memory_space<vmem>>, vector<1x2x32xf32>
    %1317 = vector.shape_cast %1316 : vector<1x2x32xf32> to vector<2x32xf32>
    %c10_982 = arith.constant 10 : index
    %c0_983 = arith.constant 0 : index
    %c0_984 = arith.constant 0 : index
    %1318 = vector.load %arg4[%c10_982, %c0_983, %c0_984] : memref<16x32x32xf32, #tpu.memory_space<vmem>>, vector<1x32x32xf32>
    %1319 = vector.shape_cast %1318 : vector<1x32x32xf32> to vector<32x32xf32>
    %cst_985 = arith.constant dense<0.000000e+00> : vector<2x32xf32>
    %1320 = tpu.matmul %1248, %1319, %cst_985 {dimension_numbers = #tpu.dot_dimension_numbers<[1], [0], [0], [1], [0, 0, 1, 1], [], []>} : vector<2x32xf32>, vector<32x32xf32>, vector<2x32xf32> -> vector<2x32xf32>
    %1321 = arith.addf %1317, %1320 : vector<2x32xf32>
    %1322 = math.tanh %1321 : vector<2x32xf32>
    %c3_986 = arith.constant 3 : index
    %c8_987 = arith.constant 8 : index
    %c0_988 = arith.constant 0 : index
    %1323 = vector.load %arg12[%c3_986, %c8_987, %c0_988] : memref<8x16x32xf32, #tpu.memory_space<vmem>>, vector<1x2x32xf32>
    %1324 = vector.shape_cast %1323 : vector<1x2x32xf32> to vector<2x32xf32>
    %c11_989 = arith.constant 11 : index
    %c0_990 = arith.constant 0 : index
    %c0_991 = arith.constant 0 : index
    %1325 = vector.load %arg4[%c11_989, %c0_990, %c0_991] : memref<16x32x32xf32, #tpu.memory_space<vmem>>, vector<1x32x32xf32>
    %1326 = vector.shape_cast %1325 : vector<1x32x32xf32> to vector<32x32xf32>
    %cst_992 = arith.constant dense<0.000000e+00> : vector<2x32xf32>
    %1327 = tpu.matmul %1248, %1326, %cst_992 {dimension_numbers = #tpu.dot_dimension_numbers<[1], [0], [0], [1], [0, 0, 1, 1], [], []>} : vector<2x32xf32>, vector<32x32xf32>, vector<2x32xf32> -> vector<2x32xf32>
    %1328 = arith.addf %1324, %1327 : vector<2x32xf32>
    %1329 = arith.negf %1328 : vector<2x32xf32>
    %1330 = math.exp %1329 : vector<2x32xf32>
    %cst_993 = arith.constant 1.000000e+00 : f32
    %1331 = vector.broadcast %cst_993 : f32 to vector<2x32xf32>
    %1332 = arith.addf %1331, %1330 : vector<2x32xf32>
    %1333 = arith.divf %1331, %1332 : vector<2x32xf32>
    %1334 = arith.mulf %1315, %1246 : vector<2x32xf32>
    %1335 = arith.mulf %1304, %1322 : vector<2x32xf32>
    %1336 = arith.addf %1334, %1335 : vector<2x32xf32>
    %1337 = math.tanh %1336 : vector<2x32xf32>
    %1338 = arith.mulf %1333, %1337 : vector<2x32xf32>
    %c4_994 = arith.constant 4 : index
    %c6_995 = arith.constant 6 : index
    %c0_996 = arith.constant 0 : index
    %1339 = vector.load %arg12[%c4_994, %c6_995, %c0_996] : memref<8x16x32xf32, #tpu.memory_space<vmem>>, vector<1x2x32xf32>
    %1340 = vector.shape_cast %1339 : vector<1x2x32xf32> to vector<2x32xf32>
    %c12_997 = arith.constant 12 : index
    %c0_998 = arith.constant 0 : index
    %c0_999 = arith.constant 0 : index
    %1341 = vector.load %arg4[%c12_997, %c0_998, %c0_999] : memref<16x32x32xf32, #tpu.memory_space<vmem>>, vector<1x32x32xf32>
    %1342 = vector.shape_cast %1341 : vector<1x32x32xf32> to vector<32x32xf32>
    %cst_1000 = arith.constant dense<0.000000e+00> : vector<2x32xf32>
    %1343 = tpu.matmul %1293, %1342, %cst_1000 {dimension_numbers = #tpu.dot_dimension_numbers<[1], [0], [0], [1], [0, 0, 1, 1], [], []>} : vector<2x32xf32>, vector<32x32xf32>, vector<2x32xf32> -> vector<2x32xf32>
    %1344 = arith.addf %1340, %1343 : vector<2x32xf32>
    %1345 = arith.negf %1344 : vector<2x32xf32>
    %1346 = math.exp %1345 : vector<2x32xf32>
    %cst_1001 = arith.constant 1.000000e+00 : f32
    %1347 = vector.broadcast %cst_1001 : f32 to vector<2x32xf32>
    %1348 = arith.addf %1347, %1346 : vector<2x32xf32>
    %1349 = arith.divf %1347, %1348 : vector<2x32xf32>
    %c5_1002 = arith.constant 5 : index
    %c6_1003 = arith.constant 6 : index
    %c0_1004 = arith.constant 0 : index
    %1350 = vector.load %arg12[%c5_1002, %c6_1003, %c0_1004] : memref<8x16x32xf32, #tpu.memory_space<vmem>>, vector<1x2x32xf32>
    %1351 = vector.shape_cast %1350 : vector<1x2x32xf32> to vector<2x32xf32>
    %c13_1005 = arith.constant 13 : index
    %c0_1006 = arith.constant 0 : index
    %c0_1007 = arith.constant 0 : index
    %1352 = vector.load %arg4[%c13_1005, %c0_1006, %c0_1007] : memref<16x32x32xf32, #tpu.memory_space<vmem>>, vector<1x32x32xf32>
    %1353 = vector.shape_cast %1352 : vector<1x32x32xf32> to vector<32x32xf32>
    %cst_1008 = arith.constant dense<0.000000e+00> : vector<2x32xf32>
    %1354 = tpu.matmul %1293, %1353, %cst_1008 {dimension_numbers = #tpu.dot_dimension_numbers<[1], [0], [0], [1], [0, 0, 1, 1], [], []>} : vector<2x32xf32>, vector<32x32xf32>, vector<2x32xf32> -> vector<2x32xf32>
    %1355 = arith.addf %1351, %1354 : vector<2x32xf32>
    %1356 = arith.negf %1355 : vector<2x32xf32>
    %1357 = math.exp %1356 : vector<2x32xf32>
    %cst_1009 = arith.constant 1.000000e+00 : f32
    %1358 = vector.broadcast %cst_1009 : f32 to vector<2x32xf32>
    %1359 = arith.addf %1358, %1357 : vector<2x32xf32>
    %1360 = arith.divf %1358, %1359 : vector<2x32xf32>
    %c6_1010 = arith.constant 6 : index
    %c6_1011 = arith.constant 6 : index
    %c0_1012 = arith.constant 0 : index
    %1361 = vector.load %arg12[%c6_1010, %c6_1011, %c0_1012] : memref<8x16x32xf32, #tpu.memory_space<vmem>>, vector<1x2x32xf32>
    %1362 = vector.shape_cast %1361 : vector<1x2x32xf32> to vector<2x32xf32>
    %c14_1013 = arith.constant 14 : index
    %c0_1014 = arith.constant 0 : index
    %c0_1015 = arith.constant 0 : index
    %1363 = vector.load %arg4[%c14_1013, %c0_1014, %c0_1015] : memref<16x32x32xf32, #tpu.memory_space<vmem>>, vector<1x32x32xf32>
    %1364 = vector.shape_cast %1363 : vector<1x32x32xf32> to vector<32x32xf32>
    %cst_1016 = arith.constant dense<0.000000e+00> : vector<2x32xf32>
    %1365 = tpu.matmul %1293, %1364, %cst_1016 {dimension_numbers = #tpu.dot_dimension_numbers<[1], [0], [0], [1], [0, 0, 1, 1], [], []>} : vector<2x32xf32>, vector<32x32xf32>, vector<2x32xf32> -> vector<2x32xf32>
    %1366 = arith.addf %1362, %1365 : vector<2x32xf32>
    %1367 = math.tanh %1366 : vector<2x32xf32>
    %c7_1017 = arith.constant 7 : index
    %c6_1018 = arith.constant 6 : index
    %c0_1019 = arith.constant 0 : index
    %1368 = vector.load %arg12[%c7_1017, %c6_1018, %c0_1019] : memref<8x16x32xf32, #tpu.memory_space<vmem>>, vector<1x2x32xf32>
    %1369 = vector.shape_cast %1368 : vector<1x2x32xf32> to vector<2x32xf32>
    %c15_1020 = arith.constant 15 : index
    %c0_1021 = arith.constant 0 : index
    %c0_1022 = arith.constant 0 : index
    %1370 = vector.load %arg4[%c15_1020, %c0_1021, %c0_1022] : memref<16x32x32xf32, #tpu.memory_space<vmem>>, vector<1x32x32xf32>
    %1371 = vector.shape_cast %1370 : vector<1x32x32xf32> to vector<32x32xf32>
    %cst_1023 = arith.constant dense<0.000000e+00> : vector<2x32xf32>
    %1372 = tpu.matmul %1293, %1371, %cst_1023 {dimension_numbers = #tpu.dot_dimension_numbers<[1], [0], [0], [1], [0, 0, 1, 1], [], []>} : vector<2x32xf32>, vector<32x32xf32>, vector<2x32xf32> -> vector<2x32xf32>
    %1373 = arith.addf %1369, %1372 : vector<2x32xf32>
    %1374 = arith.negf %1373 : vector<2x32xf32>
    %1375 = math.exp %1374 : vector<2x32xf32>
    %cst_1024 = arith.constant 1.000000e+00 : f32
    %1376 = vector.broadcast %cst_1024 : f32 to vector<2x32xf32>
    %1377 = arith.addf %1376, %1375 : vector<2x32xf32>
    %1378 = arith.divf %1376, %1377 : vector<2x32xf32>
    %1379 = arith.mulf %1360, %1291 : vector<2x32xf32>
    %1380 = arith.mulf %1349, %1367 : vector<2x32xf32>
    %1381 = arith.addf %1379, %1380 : vector<2x32xf32>
    %1382 = math.tanh %1381 : vector<2x32xf32>
    %1383 = arith.mulf %1378, %1382 : vector<2x32xf32>
    %c0_1025 = arith.constant 0 : index
    %c10_1026 = arith.constant 10 : index
    %c0_1027 = arith.constant 0 : index
    %1384 = vector.load %arg12[%c0_1025, %c10_1026, %c0_1027] : memref<8x16x32xf32, #tpu.memory_space<vmem>>, vector<1x2x32xf32>
    %1385 = vector.shape_cast %1384 : vector<1x2x32xf32> to vector<2x32xf32>
    %c8_1028 = arith.constant 8 : index
    %c0_1029 = arith.constant 0 : index
    %c0_1030 = arith.constant 0 : index
    %1386 = vector.load %arg4[%c8_1028, %c0_1029, %c0_1030] : memref<16x32x32xf32, #tpu.memory_space<vmem>>, vector<1x32x32xf32>
    %1387 = vector.shape_cast %1386 : vector<1x32x32xf32> to vector<32x32xf32>
    %cst_1031 = arith.constant dense<0.000000e+00> : vector<2x32xf32>
    %1388 = tpu.matmul %1338, %1387, %cst_1031 {dimension_numbers = #tpu.dot_dimension_numbers<[1], [0], [0], [1], [0, 0, 1, 1], [], []>} : vector<2x32xf32>, vector<32x32xf32>, vector<2x32xf32> -> vector<2x32xf32>
    %1389 = arith.addf %1385, %1388 : vector<2x32xf32>
    %1390 = arith.negf %1389 : vector<2x32xf32>
    %1391 = math.exp %1390 : vector<2x32xf32>
    %cst_1032 = arith.constant 1.000000e+00 : f32
    %1392 = vector.broadcast %cst_1032 : f32 to vector<2x32xf32>
    %1393 = arith.addf %1392, %1391 : vector<2x32xf32>
    %1394 = arith.divf %1392, %1393 : vector<2x32xf32>
    %c1_1033 = arith.constant 1 : index
    %c10_1034 = arith.constant 10 : index
    %c0_1035 = arith.constant 0 : index
    %1395 = vector.load %arg12[%c1_1033, %c10_1034, %c0_1035] : memref<8x16x32xf32, #tpu.memory_space<vmem>>, vector<1x2x32xf32>
    %1396 = vector.shape_cast %1395 : vector<1x2x32xf32> to vector<2x32xf32>
    %c9_1036 = arith.constant 9 : index
    %c0_1037 = arith.constant 0 : index
    %c0_1038 = arith.constant 0 : index
    %1397 = vector.load %arg4[%c9_1036, %c0_1037, %c0_1038] : memref<16x32x32xf32, #tpu.memory_space<vmem>>, vector<1x32x32xf32>
    %1398 = vector.shape_cast %1397 : vector<1x32x32xf32> to vector<32x32xf32>
    %cst_1039 = arith.constant dense<0.000000e+00> : vector<2x32xf32>
    %1399 = tpu.matmul %1338, %1398, %cst_1039 {dimension_numbers = #tpu.dot_dimension_numbers<[1], [0], [0], [1], [0, 0, 1, 1], [], []>} : vector<2x32xf32>, vector<32x32xf32>, vector<2x32xf32> -> vector<2x32xf32>
    %1400 = arith.addf %1396, %1399 : vector<2x32xf32>
    %1401 = arith.negf %1400 : vector<2x32xf32>
    %1402 = math.exp %1401 : vector<2x32xf32>
    %cst_1040 = arith.constant 1.000000e+00 : f32
    %1403 = vector.broadcast %cst_1040 : f32 to vector<2x32xf32>
    %1404 = arith.addf %1403, %1402 : vector<2x32xf32>
    %1405 = arith.divf %1403, %1404 : vector<2x32xf32>
    %c2_1041 = arith.constant 2 : index
    %c10_1042 = arith.constant 10 : index
    %c0_1043 = arith.constant 0 : index
    %1406 = vector.load %arg12[%c2_1041, %c10_1042, %c0_1043] : memref<8x16x32xf32, #tpu.memory_space<vmem>>, vector<1x2x32xf32>
    %1407 = vector.shape_cast %1406 : vector<1x2x32xf32> to vector<2x32xf32>
    %c10_1044 = arith.constant 10 : index
    %c0_1045 = arith.constant 0 : index
    %c0_1046 = arith.constant 0 : index
    %1408 = vector.load %arg4[%c10_1044, %c0_1045, %c0_1046] : memref<16x32x32xf32, #tpu.memory_space<vmem>>, vector<1x32x32xf32>
    %1409 = vector.shape_cast %1408 : vector<1x32x32xf32> to vector<32x32xf32>
    %cst_1047 = arith.constant dense<0.000000e+00> : vector<2x32xf32>
    %1410 = tpu.matmul %1338, %1409, %cst_1047 {dimension_numbers = #tpu.dot_dimension_numbers<[1], [0], [0], [1], [0, 0, 1, 1], [], []>} : vector<2x32xf32>, vector<32x32xf32>, vector<2x32xf32> -> vector<2x32xf32>
    %1411 = arith.addf %1407, %1410 : vector<2x32xf32>
    %1412 = math.tanh %1411 : vector<2x32xf32>
    %c3_1048 = arith.constant 3 : index
    %c10_1049 = arith.constant 10 : index
    %c0_1050 = arith.constant 0 : index
    %1413 = vector.load %arg12[%c3_1048, %c10_1049, %c0_1050] : memref<8x16x32xf32, #tpu.memory_space<vmem>>, vector<1x2x32xf32>
    %1414 = vector.shape_cast %1413 : vector<1x2x32xf32> to vector<2x32xf32>
    %c11_1051 = arith.constant 11 : index
    %c0_1052 = arith.constant 0 : index
    %c0_1053 = arith.constant 0 : index
    %1415 = vector.load %arg4[%c11_1051, %c0_1052, %c0_1053] : memref<16x32x32xf32, #tpu.memory_space<vmem>>, vector<1x32x32xf32>
    %1416 = vector.shape_cast %1415 : vector<1x32x32xf32> to vector<32x32xf32>
    %cst_1054 = arith.constant dense<0.000000e+00> : vector<2x32xf32>
    %1417 = tpu.matmul %1338, %1416, %cst_1054 {dimension_numbers = #tpu.dot_dimension_numbers<[1], [0], [0], [1], [0, 0, 1, 1], [], []>} : vector<2x32xf32>, vector<32x32xf32>, vector<2x32xf32> -> vector<2x32xf32>
    %1418 = arith.addf %1414, %1417 : vector<2x32xf32>
    %1419 = arith.negf %1418 : vector<2x32xf32>
    %1420 = math.exp %1419 : vector<2x32xf32>
    %cst_1055 = arith.constant 1.000000e+00 : f32
    %1421 = vector.broadcast %cst_1055 : f32 to vector<2x32xf32>
    %1422 = arith.addf %1421, %1420 : vector<2x32xf32>
    %1423 = arith.divf %1421, %1422 : vector<2x32xf32>
    %1424 = arith.mulf %1405, %1336 : vector<2x32xf32>
    %1425 = arith.mulf %1394, %1412 : vector<2x32xf32>
    %1426 = arith.addf %1424, %1425 : vector<2x32xf32>
    %1427 = math.tanh %1426 : vector<2x32xf32>
    %1428 = arith.mulf %1423, %1427 : vector<2x32xf32>
    %c4_1056 = arith.constant 4 : index
    %c4_1057 = arith.constant 4 : index
    %c0_1058 = arith.constant 0 : index
    %1429 = vector.load %arg12[%c4_1056, %c4_1057, %c0_1058] : memref<8x16x32xf32, #tpu.memory_space<vmem>>, vector<1x2x32xf32>
    %1430 = vector.shape_cast %1429 : vector<1x2x32xf32> to vector<2x32xf32>
    %c12_1059 = arith.constant 12 : index
    %c0_1060 = arith.constant 0 : index
    %c0_1061 = arith.constant 0 : index
    %1431 = vector.load %arg4[%c12_1059, %c0_1060, %c0_1061] : memref<16x32x32xf32, #tpu.memory_space<vmem>>, vector<1x32x32xf32>
    %1432 = vector.shape_cast %1431 : vector<1x32x32xf32> to vector<32x32xf32>
    %cst_1062 = arith.constant dense<0.000000e+00> : vector<2x32xf32>
    %1433 = tpu.matmul %1383, %1432, %cst_1062 {dimension_numbers = #tpu.dot_dimension_numbers<[1], [0], [0], [1], [0, 0, 1, 1], [], []>} : vector<2x32xf32>, vector<32x32xf32>, vector<2x32xf32> -> vector<2x32xf32>
    %1434 = arith.addf %1430, %1433 : vector<2x32xf32>
    %1435 = arith.negf %1434 : vector<2x32xf32>
    %1436 = math.exp %1435 : vector<2x32xf32>
    %cst_1063 = arith.constant 1.000000e+00 : f32
    %1437 = vector.broadcast %cst_1063 : f32 to vector<2x32xf32>
    %1438 = arith.addf %1437, %1436 : vector<2x32xf32>
    %1439 = arith.divf %1437, %1438 : vector<2x32xf32>
    %c5_1064 = arith.constant 5 : index
    %c4_1065 = arith.constant 4 : index
    %c0_1066 = arith.constant 0 : index
    %1440 = vector.load %arg12[%c5_1064, %c4_1065, %c0_1066] : memref<8x16x32xf32, #tpu.memory_space<vmem>>, vector<1x2x32xf32>
    %1441 = vector.shape_cast %1440 : vector<1x2x32xf32> to vector<2x32xf32>
    %c13_1067 = arith.constant 13 : index
    %c0_1068 = arith.constant 0 : index
    %c0_1069 = arith.constant 0 : index
    %1442 = vector.load %arg4[%c13_1067, %c0_1068, %c0_1069] : memref<16x32x32xf32, #tpu.memory_space<vmem>>, vector<1x32x32xf32>
    %1443 = vector.shape_cast %1442 : vector<1x32x32xf32> to vector<32x32xf32>
    %cst_1070 = arith.constant dense<0.000000e+00> : vector<2x32xf32>
    %1444 = tpu.matmul %1383, %1443, %cst_1070 {dimension_numbers = #tpu.dot_dimension_numbers<[1], [0], [0], [1], [0, 0, 1, 1], [], []>} : vector<2x32xf32>, vector<32x32xf32>, vector<2x32xf32> -> vector<2x32xf32>
    %1445 = arith.addf %1441, %1444 : vector<2x32xf32>
    %1446 = arith.negf %1445 : vector<2x32xf32>
    %1447 = math.exp %1446 : vector<2x32xf32>
    %cst_1071 = arith.constant 1.000000e+00 : f32
    %1448 = vector.broadcast %cst_1071 : f32 to vector<2x32xf32>
    %1449 = arith.addf %1448, %1447 : vector<2x32xf32>
    %1450 = arith.divf %1448, %1449 : vector<2x32xf32>
    %c6_1072 = arith.constant 6 : index
    %c4_1073 = arith.constant 4 : index
    %c0_1074 = arith.constant 0 : index
    %1451 = vector.load %arg12[%c6_1072, %c4_1073, %c0_1074] : memref<8x16x32xf32, #tpu.memory_space<vmem>>, vector<1x2x32xf32>
    %1452 = vector.shape_cast %1451 : vector<1x2x32xf32> to vector<2x32xf32>
    %c14_1075 = arith.constant 14 : index
    %c0_1076 = arith.constant 0 : index
    %c0_1077 = arith.constant 0 : index
    %1453 = vector.load %arg4[%c14_1075, %c0_1076, %c0_1077] : memref<16x32x32xf32, #tpu.memory_space<vmem>>, vector<1x32x32xf32>
    %1454 = vector.shape_cast %1453 : vector<1x32x32xf32> to vector<32x32xf32>
    %cst_1078 = arith.constant dense<0.000000e+00> : vector<2x32xf32>
    %1455 = tpu.matmul %1383, %1454, %cst_1078 {dimension_numbers = #tpu.dot_dimension_numbers<[1], [0], [0], [1], [0, 0, 1, 1], [], []>} : vector<2x32xf32>, vector<32x32xf32>, vector<2x32xf32> -> vector<2x32xf32>
    %1456 = arith.addf %1452, %1455 : vector<2x32xf32>
    %1457 = math.tanh %1456 : vector<2x32xf32>
    %c7_1079 = arith.constant 7 : index
    %c4_1080 = arith.constant 4 : index
    %c0_1081 = arith.constant 0 : index
    %1458 = vector.load %arg12[%c7_1079, %c4_1080, %c0_1081] : memref<8x16x32xf32, #tpu.memory_space<vmem>>, vector<1x2x32xf32>
    %1459 = vector.shape_cast %1458 : vector<1x2x32xf32> to vector<2x32xf32>
    %c15_1082 = arith.constant 15 : index
    %c0_1083 = arith.constant 0 : index
    %c0_1084 = arith.constant 0 : index
    %1460 = vector.load %arg4[%c15_1082, %c0_1083, %c0_1084] : memref<16x32x32xf32, #tpu.memory_space<vmem>>, vector<1x32x32xf32>
    %1461 = vector.shape_cast %1460 : vector<1x32x32xf32> to vector<32x32xf32>
    %cst_1085 = arith.constant dense<0.000000e+00> : vector<2x32xf32>
    %1462 = tpu.matmul %1383, %1461, %cst_1085 {dimension_numbers = #tpu.dot_dimension_numbers<[1], [0], [0], [1], [0, 0, 1, 1], [], []>} : vector<2x32xf32>, vector<32x32xf32>, vector<2x32xf32> -> vector<2x32xf32>
    %1463 = arith.addf %1459, %1462 : vector<2x32xf32>
    %1464 = arith.negf %1463 : vector<2x32xf32>
    %1465 = math.exp %1464 : vector<2x32xf32>
    %cst_1086 = arith.constant 1.000000e+00 : f32
    %1466 = vector.broadcast %cst_1086 : f32 to vector<2x32xf32>
    %1467 = arith.addf %1466, %1465 : vector<2x32xf32>
    %1468 = arith.divf %1466, %1467 : vector<2x32xf32>
    %1469 = arith.mulf %1450, %1381 : vector<2x32xf32>
    %1470 = arith.mulf %1439, %1457 : vector<2x32xf32>
    %1471 = arith.addf %1469, %1470 : vector<2x32xf32>
    %1472 = math.tanh %1471 : vector<2x32xf32>
    %1473 = arith.mulf %1468, %1472 : vector<2x32xf32>
    %c0_1087 = arith.constant 0 : index
    %c12_1088 = arith.constant 12 : index
    %c0_1089 = arith.constant 0 : index
    %1474 = vector.load %arg12[%c0_1087, %c12_1088, %c0_1089] : memref<8x16x32xf32, #tpu.memory_space<vmem>>, vector<1x2x32xf32>
    %1475 = vector.shape_cast %1474 : vector<1x2x32xf32> to vector<2x32xf32>
    %c8_1090 = arith.constant 8 : index
    %c0_1091 = arith.constant 0 : index
    %c0_1092 = arith.constant 0 : index
    %1476 = vector.load %arg4[%c8_1090, %c0_1091, %c0_1092] : memref<16x32x32xf32, #tpu.memory_space<vmem>>, vector<1x32x32xf32>
    %1477 = vector.shape_cast %1476 : vector<1x32x32xf32> to vector<32x32xf32>
    %cst_1093 = arith.constant dense<0.000000e+00> : vector<2x32xf32>
    %1478 = tpu.matmul %1428, %1477, %cst_1093 {dimension_numbers = #tpu.dot_dimension_numbers<[1], [0], [0], [1], [0, 0, 1, 1], [], []>} : vector<2x32xf32>, vector<32x32xf32>, vector<2x32xf32> -> vector<2x32xf32>
    %1479 = arith.addf %1475, %1478 : vector<2x32xf32>
    %1480 = arith.negf %1479 : vector<2x32xf32>
    %1481 = math.exp %1480 : vector<2x32xf32>
    %cst_1094 = arith.constant 1.000000e+00 : f32
    %1482 = vector.broadcast %cst_1094 : f32 to vector<2x32xf32>
    %1483 = arith.addf %1482, %1481 : vector<2x32xf32>
    %1484 = arith.divf %1482, %1483 : vector<2x32xf32>
    %c1_1095 = arith.constant 1 : index
    %c12_1096 = arith.constant 12 : index
    %c0_1097 = arith.constant 0 : index
    %1485 = vector.load %arg12[%c1_1095, %c12_1096, %c0_1097] : memref<8x16x32xf32, #tpu.memory_space<vmem>>, vector<1x2x32xf32>
    %1486 = vector.shape_cast %1485 : vector<1x2x32xf32> to vector<2x32xf32>
    %c9_1098 = arith.constant 9 : index
    %c0_1099 = arith.constant 0 : index
    %c0_1100 = arith.constant 0 : index
    %1487 = vector.load %arg4[%c9_1098, %c0_1099, %c0_1100] : memref<16x32x32xf32, #tpu.memory_space<vmem>>, vector<1x32x32xf32>
    %1488 = vector.shape_cast %1487 : vector<1x32x32xf32> to vector<32x32xf32>
    %cst_1101 = arith.constant dense<0.000000e+00> : vector<2x32xf32>
    %1489 = tpu.matmul %1428, %1488, %cst_1101 {dimension_numbers = #tpu.dot_dimension_numbers<[1], [0], [0], [1], [0, 0, 1, 1], [], []>} : vector<2x32xf32>, vector<32x32xf32>, vector<2x32xf32> -> vector<2x32xf32>
    %1490 = arith.addf %1486, %1489 : vector<2x32xf32>
    %1491 = arith.negf %1490 : vector<2x32xf32>
    %1492 = math.exp %1491 : vector<2x32xf32>
    %cst_1102 = arith.constant 1.000000e+00 : f32
    %1493 = vector.broadcast %cst_1102 : f32 to vector<2x32xf32>
    %1494 = arith.addf %1493, %1492 : vector<2x32xf32>
    %1495 = arith.divf %1493, %1494 : vector<2x32xf32>
    %c2_1103 = arith.constant 2 : index
    %c12_1104 = arith.constant 12 : index
    %c0_1105 = arith.constant 0 : index
    %1496 = vector.load %arg12[%c2_1103, %c12_1104, %c0_1105] : memref<8x16x32xf32, #tpu.memory_space<vmem>>, vector<1x2x32xf32>
    %1497 = vector.shape_cast %1496 : vector<1x2x32xf32> to vector<2x32xf32>
    %c10_1106 = arith.constant 10 : index
    %c0_1107 = arith.constant 0 : index
    %c0_1108 = arith.constant 0 : index
    %1498 = vector.load %arg4[%c10_1106, %c0_1107, %c0_1108] : memref<16x32x32xf32, #tpu.memory_space<vmem>>, vector<1x32x32xf32>
    %1499 = vector.shape_cast %1498 : vector<1x32x32xf32> to vector<32x32xf32>
    %cst_1109 = arith.constant dense<0.000000e+00> : vector<2x32xf32>
    %1500 = tpu.matmul %1428, %1499, %cst_1109 {dimension_numbers = #tpu.dot_dimension_numbers<[1], [0], [0], [1], [0, 0, 1, 1], [], []>} : vector<2x32xf32>, vector<32x32xf32>, vector<2x32xf32> -> vector<2x32xf32>
    %1501 = arith.addf %1497, %1500 : vector<2x32xf32>
    %1502 = math.tanh %1501 : vector<2x32xf32>
    %c3_1110 = arith.constant 3 : index
    %c12_1111 = arith.constant 12 : index
    %c0_1112 = arith.constant 0 : index
    %1503 = vector.load %arg12[%c3_1110, %c12_1111, %c0_1112] : memref<8x16x32xf32, #tpu.memory_space<vmem>>, vector<1x2x32xf32>
    %1504 = vector.shape_cast %1503 : vector<1x2x32xf32> to vector<2x32xf32>
    %c11_1113 = arith.constant 11 : index
    %c0_1114 = arith.constant 0 : index
    %c0_1115 = arith.constant 0 : index
    %1505 = vector.load %arg4[%c11_1113, %c0_1114, %c0_1115] : memref<16x32x32xf32, #tpu.memory_space<vmem>>, vector<1x32x32xf32>
    %1506 = vector.shape_cast %1505 : vector<1x32x32xf32> to vector<32x32xf32>
    %cst_1116 = arith.constant dense<0.000000e+00> : vector<2x32xf32>
    %1507 = tpu.matmul %1428, %1506, %cst_1116 {dimension_numbers = #tpu.dot_dimension_numbers<[1], [0], [0], [1], [0, 0, 1, 1], [], []>} : vector<2x32xf32>, vector<32x32xf32>, vector<2x32xf32> -> vector<2x32xf32>
    %1508 = arith.addf %1504, %1507 : vector<2x32xf32>
    %1509 = arith.negf %1508 : vector<2x32xf32>
    %1510 = math.exp %1509 : vector<2x32xf32>
    %cst_1117 = arith.constant 1.000000e+00 : f32
    %1511 = vector.broadcast %cst_1117 : f32 to vector<2x32xf32>
    %1512 = arith.addf %1511, %1510 : vector<2x32xf32>
    %1513 = arith.divf %1511, %1512 : vector<2x32xf32>
    %1514 = arith.mulf %1495, %1426 : vector<2x32xf32>
    %1515 = arith.mulf %1484, %1502 : vector<2x32xf32>
    %1516 = arith.addf %1514, %1515 : vector<2x32xf32>
    %1517 = math.tanh %1516 : vector<2x32xf32>
    %1518 = arith.mulf %1513, %1517 : vector<2x32xf32>
    %c4_1118 = arith.constant 4 : index
    %c2_1119 = arith.constant 2 : index
    %c0_1120 = arith.constant 0 : index
    %1519 = vector.load %arg12[%c4_1118, %c2_1119, %c0_1120] : memref<8x16x32xf32, #tpu.memory_space<vmem>>, vector<1x2x32xf32>
    %1520 = vector.shape_cast %1519 : vector<1x2x32xf32> to vector<2x32xf32>
    %c12_1121 = arith.constant 12 : index
    %c0_1122 = arith.constant 0 : index
    %c0_1123 = arith.constant 0 : index
    %1521 = vector.load %arg4[%c12_1121, %c0_1122, %c0_1123] : memref<16x32x32xf32, #tpu.memory_space<vmem>>, vector<1x32x32xf32>
    %1522 = vector.shape_cast %1521 : vector<1x32x32xf32> to vector<32x32xf32>
    %cst_1124 = arith.constant dense<0.000000e+00> : vector<2x32xf32>
    %1523 = tpu.matmul %1473, %1522, %cst_1124 {dimension_numbers = #tpu.dot_dimension_numbers<[1], [0], [0], [1], [0, 0, 1, 1], [], []>} : vector<2x32xf32>, vector<32x32xf32>, vector<2x32xf32> -> vector<2x32xf32>
    %1524 = arith.addf %1520, %1523 : vector<2x32xf32>
    %1525 = arith.negf %1524 : vector<2x32xf32>
    %1526 = math.exp %1525 : vector<2x32xf32>
    %cst_1125 = arith.constant 1.000000e+00 : f32
    %1527 = vector.broadcast %cst_1125 : f32 to vector<2x32xf32>
    %1528 = arith.addf %1527, %1526 : vector<2x32xf32>
    %1529 = arith.divf %1527, %1528 : vector<2x32xf32>
    %c5_1126 = arith.constant 5 : index
    %c2_1127 = arith.constant 2 : index
    %c0_1128 = arith.constant 0 : index
    %1530 = vector.load %arg12[%c5_1126, %c2_1127, %c0_1128] : memref<8x16x32xf32, #tpu.memory_space<vmem>>, vector<1x2x32xf32>
    %1531 = vector.shape_cast %1530 : vector<1x2x32xf32> to vector<2x32xf32>
    %c13_1129 = arith.constant 13 : index
    %c0_1130 = arith.constant 0 : index
    %c0_1131 = arith.constant 0 : index
    %1532 = vector.load %arg4[%c13_1129, %c0_1130, %c0_1131] : memref<16x32x32xf32, #tpu.memory_space<vmem>>, vector<1x32x32xf32>
    %1533 = vector.shape_cast %1532 : vector<1x32x32xf32> to vector<32x32xf32>
    %cst_1132 = arith.constant dense<0.000000e+00> : vector<2x32xf32>
    %1534 = tpu.matmul %1473, %1533, %cst_1132 {dimension_numbers = #tpu.dot_dimension_numbers<[1], [0], [0], [1], [0, 0, 1, 1], [], []>} : vector<2x32xf32>, vector<32x32xf32>, vector<2x32xf32> -> vector<2x32xf32>
    %1535 = arith.addf %1531, %1534 : vector<2x32xf32>
    %1536 = arith.negf %1535 : vector<2x32xf32>
    %1537 = math.exp %1536 : vector<2x32xf32>
    %cst_1133 = arith.constant 1.000000e+00 : f32
    %1538 = vector.broadcast %cst_1133 : f32 to vector<2x32xf32>
    %1539 = arith.addf %1538, %1537 : vector<2x32xf32>
    %1540 = arith.divf %1538, %1539 : vector<2x32xf32>
    %c6_1134 = arith.constant 6 : index
    %c2_1135 = arith.constant 2 : index
    %c0_1136 = arith.constant 0 : index
    %1541 = vector.load %arg12[%c6_1134, %c2_1135, %c0_1136] : memref<8x16x32xf32, #tpu.memory_space<vmem>>, vector<1x2x32xf32>
    %1542 = vector.shape_cast %1541 : vector<1x2x32xf32> to vector<2x32xf32>
    %c14_1137 = arith.constant 14 : index
    %c0_1138 = arith.constant 0 : index
    %c0_1139 = arith.constant 0 : index
    %1543 = vector.load %arg4[%c14_1137, %c0_1138, %c0_1139] : memref<16x32x32xf32, #tpu.memory_space<vmem>>, vector<1x32x32xf32>
    %1544 = vector.shape_cast %1543 : vector<1x32x32xf32> to vector<32x32xf32>
    %cst_1140 = arith.constant dense<0.000000e+00> : vector<2x32xf32>
    %1545 = tpu.matmul %1473, %1544, %cst_1140 {dimension_numbers = #tpu.dot_dimension_numbers<[1], [0], [0], [1], [0, 0, 1, 1], [], []>} : vector<2x32xf32>, vector<32x32xf32>, vector<2x32xf32> -> vector<2x32xf32>
    %1546 = arith.addf %1542, %1545 : vector<2x32xf32>
    %1547 = math.tanh %1546 : vector<2x32xf32>
    %c7_1141 = arith.constant 7 : index
    %c2_1142 = arith.constant 2 : index
    %c0_1143 = arith.constant 0 : index
    %1548 = vector.load %arg12[%c7_1141, %c2_1142, %c0_1143] : memref<8x16x32xf32, #tpu.memory_space<vmem>>, vector<1x2x32xf32>
    %1549 = vector.shape_cast %1548 : vector<1x2x32xf32> to vector<2x32xf32>
    %c15_1144 = arith.constant 15 : index
    %c0_1145 = arith.constant 0 : index
    %c0_1146 = arith.constant 0 : index
    %1550 = vector.load %arg4[%c15_1144, %c0_1145, %c0_1146] : memref<16x32x32xf32, #tpu.memory_space<vmem>>, vector<1x32x32xf32>
    %1551 = vector.shape_cast %1550 : vector<1x32x32xf32> to vector<32x32xf32>
    %cst_1147 = arith.constant dense<0.000000e+00> : vector<2x32xf32>
    %1552 = tpu.matmul %1473, %1551, %cst_1147 {dimension_numbers = #tpu.dot_dimension_numbers<[1], [0], [0], [1], [0, 0, 1, 1], [], []>} : vector<2x32xf32>, vector<32x32xf32>, vector<2x32xf32> -> vector<2x32xf32>
    %1553 = arith.addf %1549, %1552 : vector<2x32xf32>
    %1554 = arith.negf %1553 : vector<2x32xf32>
    %1555 = math.exp %1554 : vector<2x32xf32>
    %cst_1148 = arith.constant 1.000000e+00 : f32
    %1556 = vector.broadcast %cst_1148 : f32 to vector<2x32xf32>
    %1557 = arith.addf %1556, %1555 : vector<2x32xf32>
    %1558 = arith.divf %1556, %1557 : vector<2x32xf32>
    %1559 = arith.mulf %1540, %1471 : vector<2x32xf32>
    %1560 = arith.mulf %1529, %1547 : vector<2x32xf32>
    %1561 = arith.addf %1559, %1560 : vector<2x32xf32>
    %1562 = math.tanh %1561 : vector<2x32xf32>
    %1563 = arith.mulf %1558, %1562 : vector<2x32xf32>
    %c0_1149 = arith.constant 0 : index
    %c14_1150 = arith.constant 14 : index
    %c0_1151 = arith.constant 0 : index
    %1564 = vector.load %arg12[%c0_1149, %c14_1150, %c0_1151] : memref<8x16x32xf32, #tpu.memory_space<vmem>>, vector<1x2x32xf32>
    %1565 = vector.shape_cast %1564 : vector<1x2x32xf32> to vector<2x32xf32>
    %c8_1152 = arith.constant 8 : index
    %c0_1153 = arith.constant 0 : index
    %c0_1154 = arith.constant 0 : index
    %1566 = vector.load %arg4[%c8_1152, %c0_1153, %c0_1154] : memref<16x32x32xf32, #tpu.memory_space<vmem>>, vector<1x32x32xf32>
    %1567 = vector.shape_cast %1566 : vector<1x32x32xf32> to vector<32x32xf32>
    %cst_1155 = arith.constant dense<0.000000e+00> : vector<2x32xf32>
    %1568 = tpu.matmul %1518, %1567, %cst_1155 {dimension_numbers = #tpu.dot_dimension_numbers<[1], [0], [0], [1], [0, 0, 1, 1], [], []>} : vector<2x32xf32>, vector<32x32xf32>, vector<2x32xf32> -> vector<2x32xf32>
    %1569 = arith.addf %1565, %1568 : vector<2x32xf32>
    %1570 = arith.negf %1569 : vector<2x32xf32>
    %1571 = math.exp %1570 : vector<2x32xf32>
    %cst_1156 = arith.constant 1.000000e+00 : f32
    %1572 = vector.broadcast %cst_1156 : f32 to vector<2x32xf32>
    %1573 = arith.addf %1572, %1571 : vector<2x32xf32>
    %1574 = arith.divf %1572, %1573 : vector<2x32xf32>
    %c1_1157 = arith.constant 1 : index
    %c14_1158 = arith.constant 14 : index
    %c0_1159 = arith.constant 0 : index
    %1575 = vector.load %arg12[%c1_1157, %c14_1158, %c0_1159] : memref<8x16x32xf32, #tpu.memory_space<vmem>>, vector<1x2x32xf32>
    %1576 = vector.shape_cast %1575 : vector<1x2x32xf32> to vector<2x32xf32>
    %c9_1160 = arith.constant 9 : index
    %c0_1161 = arith.constant 0 : index
    %c0_1162 = arith.constant 0 : index
    %1577 = vector.load %arg4[%c9_1160, %c0_1161, %c0_1162] : memref<16x32x32xf32, #tpu.memory_space<vmem>>, vector<1x32x32xf32>
    %1578 = vector.shape_cast %1577 : vector<1x32x32xf32> to vector<32x32xf32>
    %cst_1163 = arith.constant dense<0.000000e+00> : vector<2x32xf32>
    %1579 = tpu.matmul %1518, %1578, %cst_1163 {dimension_numbers = #tpu.dot_dimension_numbers<[1], [0], [0], [1], [0, 0, 1, 1], [], []>} : vector<2x32xf32>, vector<32x32xf32>, vector<2x32xf32> -> vector<2x32xf32>
    %1580 = arith.addf %1576, %1579 : vector<2x32xf32>
    %1581 = arith.negf %1580 : vector<2x32xf32>
    %1582 = math.exp %1581 : vector<2x32xf32>
    %cst_1164 = arith.constant 1.000000e+00 : f32
    %1583 = vector.broadcast %cst_1164 : f32 to vector<2x32xf32>
    %1584 = arith.addf %1583, %1582 : vector<2x32xf32>
    %1585 = arith.divf %1583, %1584 : vector<2x32xf32>
    %c2_1165 = arith.constant 2 : index
    %c14_1166 = arith.constant 14 : index
    %c0_1167 = arith.constant 0 : index
    %1586 = vector.load %arg12[%c2_1165, %c14_1166, %c0_1167] : memref<8x16x32xf32, #tpu.memory_space<vmem>>, vector<1x2x32xf32>
    %1587 = vector.shape_cast %1586 : vector<1x2x32xf32> to vector<2x32xf32>
    %c10_1168 = arith.constant 10 : index
    %c0_1169 = arith.constant 0 : index
    %c0_1170 = arith.constant 0 : index
    %1588 = vector.load %arg4[%c10_1168, %c0_1169, %c0_1170] : memref<16x32x32xf32, #tpu.memory_space<vmem>>, vector<1x32x32xf32>
    %1589 = vector.shape_cast %1588 : vector<1x32x32xf32> to vector<32x32xf32>
    %cst_1171 = arith.constant dense<0.000000e+00> : vector<2x32xf32>
    %1590 = tpu.matmul %1518, %1589, %cst_1171 {dimension_numbers = #tpu.dot_dimension_numbers<[1], [0], [0], [1], [0, 0, 1, 1], [], []>} : vector<2x32xf32>, vector<32x32xf32>, vector<2x32xf32> -> vector<2x32xf32>
    %1591 = arith.addf %1587, %1590 : vector<2x32xf32>
    %1592 = math.tanh %1591 : vector<2x32xf32>
    %c3_1172 = arith.constant 3 : index
    %c14_1173 = arith.constant 14 : index
    %c0_1174 = arith.constant 0 : index
    %1593 = vector.load %arg12[%c3_1172, %c14_1173, %c0_1174] : memref<8x16x32xf32, #tpu.memory_space<vmem>>, vector<1x2x32xf32>
    %1594 = vector.shape_cast %1593 : vector<1x2x32xf32> to vector<2x32xf32>
    %c11_1175 = arith.constant 11 : index
    %c0_1176 = arith.constant 0 : index
    %c0_1177 = arith.constant 0 : index
    %1595 = vector.load %arg4[%c11_1175, %c0_1176, %c0_1177] : memref<16x32x32xf32, #tpu.memory_space<vmem>>, vector<1x32x32xf32>
    %1596 = vector.shape_cast %1595 : vector<1x32x32xf32> to vector<32x32xf32>
    %cst_1178 = arith.constant dense<0.000000e+00> : vector<2x32xf32>
    %1597 = tpu.matmul %1518, %1596, %cst_1178 {dimension_numbers = #tpu.dot_dimension_numbers<[1], [0], [0], [1], [0, 0, 1, 1], [], []>} : vector<2x32xf32>, vector<32x32xf32>, vector<2x32xf32> -> vector<2x32xf32>
    %1598 = arith.addf %1594, %1597 : vector<2x32xf32>
    %1599 = arith.negf %1598 : vector<2x32xf32>
    %1600 = math.exp %1599 : vector<2x32xf32>
    %cst_1179 = arith.constant 1.000000e+00 : f32
    %1601 = vector.broadcast %cst_1179 : f32 to vector<2x32xf32>
    %1602 = arith.addf %1601, %1600 : vector<2x32xf32>
    %1603 = arith.divf %1601, %1602 : vector<2x32xf32>
    %1604 = arith.mulf %1585, %1516 : vector<2x32xf32>
    %1605 = arith.mulf %1574, %1592 : vector<2x32xf32>
    %1606 = arith.addf %1604, %1605 : vector<2x32xf32>
    %1607 = math.tanh %1606 : vector<2x32xf32>
    %1608 = arith.mulf %1603, %1607 : vector<2x32xf32>
    %c4_1180 = arith.constant 4 : index
    %c0_1181 = arith.constant 0 : index
    %c0_1182 = arith.constant 0 : index
    %1609 = vector.load %arg12[%c4_1180, %c0_1181, %c0_1182] : memref<8x16x32xf32, #tpu.memory_space<vmem>>, vector<1x2x32xf32>
    %1610 = vector.shape_cast %1609 : vector<1x2x32xf32> to vector<2x32xf32>
    %c12_1183 = arith.constant 12 : index
    %c0_1184 = arith.constant 0 : index
    %c0_1185 = arith.constant 0 : index
    %1611 = vector.load %arg4[%c12_1183, %c0_1184, %c0_1185] : memref<16x32x32xf32, #tpu.memory_space<vmem>>, vector<1x32x32xf32>
    %1612 = vector.shape_cast %1611 : vector<1x32x32xf32> to vector<32x32xf32>
    %cst_1186 = arith.constant dense<0.000000e+00> : vector<2x32xf32>
    %1613 = tpu.matmul %1563, %1612, %cst_1186 {dimension_numbers = #tpu.dot_dimension_numbers<[1], [0], [0], [1], [0, 0, 1, 1], [], []>} : vector<2x32xf32>, vector<32x32xf32>, vector<2x32xf32> -> vector<2x32xf32>
    %1614 = arith.addf %1610, %1613 : vector<2x32xf32>
    %1615 = arith.negf %1614 : vector<2x32xf32>
    %1616 = math.exp %1615 : vector<2x32xf32>
    %cst_1187 = arith.constant 1.000000e+00 : f32
    %1617 = vector.broadcast %cst_1187 : f32 to vector<2x32xf32>
    %1618 = arith.addf %1617, %1616 : vector<2x32xf32>
    %1619 = arith.divf %1617, %1618 : vector<2x32xf32>
    %c5_1188 = arith.constant 5 : index
    %c0_1189 = arith.constant 0 : index
    %c0_1190 = arith.constant 0 : index
    %1620 = vector.load %arg12[%c5_1188, %c0_1189, %c0_1190] : memref<8x16x32xf32, #tpu.memory_space<vmem>>, vector<1x2x32xf32>
    %1621 = vector.shape_cast %1620 : vector<1x2x32xf32> to vector<2x32xf32>
    %c13_1191 = arith.constant 13 : index
    %c0_1192 = arith.constant 0 : index
    %c0_1193 = arith.constant 0 : index
    %1622 = vector.load %arg4[%c13_1191, %c0_1192, %c0_1193] : memref<16x32x32xf32, #tpu.memory_space<vmem>>, vector<1x32x32xf32>
    %1623 = vector.shape_cast %1622 : vector<1x32x32xf32> to vector<32x32xf32>
    %cst_1194 = arith.constant dense<0.000000e+00> : vector<2x32xf32>
    %1624 = tpu.matmul %1563, %1623, %cst_1194 {dimension_numbers = #tpu.dot_dimension_numbers<[1], [0], [0], [1], [0, 0, 1, 1], [], []>} : vector<2x32xf32>, vector<32x32xf32>, vector<2x32xf32> -> vector<2x32xf32>
    %1625 = arith.addf %1621, %1624 : vector<2x32xf32>
    %1626 = arith.negf %1625 : vector<2x32xf32>
    %1627 = math.exp %1626 : vector<2x32xf32>
    %cst_1195 = arith.constant 1.000000e+00 : f32
    %1628 = vector.broadcast %cst_1195 : f32 to vector<2x32xf32>
    %1629 = arith.addf %1628, %1627 : vector<2x32xf32>
    %1630 = arith.divf %1628, %1629 : vector<2x32xf32>
    %c6_1196 = arith.constant 6 : index
    %c0_1197 = arith.constant 0 : index
    %c0_1198 = arith.constant 0 : index
    %1631 = vector.load %arg12[%c6_1196, %c0_1197, %c0_1198] : memref<8x16x32xf32, #tpu.memory_space<vmem>>, vector<1x2x32xf32>
    %1632 = vector.shape_cast %1631 : vector<1x2x32xf32> to vector<2x32xf32>
    %c14_1199 = arith.constant 14 : index
    %c0_1200 = arith.constant 0 : index
    %c0_1201 = arith.constant 0 : index
    %1633 = vector.load %arg4[%c14_1199, %c0_1200, %c0_1201] : memref<16x32x32xf32, #tpu.memory_space<vmem>>, vector<1x32x32xf32>
    %1634 = vector.shape_cast %1633 : vector<1x32x32xf32> to vector<32x32xf32>
    %cst_1202 = arith.constant dense<0.000000e+00> : vector<2x32xf32>
    %1635 = tpu.matmul %1563, %1634, %cst_1202 {dimension_numbers = #tpu.dot_dimension_numbers<[1], [0], [0], [1], [0, 0, 1, 1], [], []>} : vector<2x32xf32>, vector<32x32xf32>, vector<2x32xf32> -> vector<2x32xf32>
    %1636 = arith.addf %1632, %1635 : vector<2x32xf32>
    %1637 = math.tanh %1636 : vector<2x32xf32>
    %c7_1203 = arith.constant 7 : index
    %c0_1204 = arith.constant 0 : index
    %c0_1205 = arith.constant 0 : index
    %1638 = vector.load %arg12[%c7_1203, %c0_1204, %c0_1205] : memref<8x16x32xf32, #tpu.memory_space<vmem>>, vector<1x2x32xf32>
    %1639 = vector.shape_cast %1638 : vector<1x2x32xf32> to vector<2x32xf32>
    %c15_1206 = arith.constant 15 : index
    %c0_1207 = arith.constant 0 : index
    %c0_1208 = arith.constant 0 : index
    %1640 = vector.load %arg4[%c15_1206, %c0_1207, %c0_1208] : memref<16x32x32xf32, #tpu.memory_space<vmem>>, vector<1x32x32xf32>
    %1641 = vector.shape_cast %1640 : vector<1x32x32xf32> to vector<32x32xf32>
    %cst_1209 = arith.constant dense<0.000000e+00> : vector<2x32xf32>
    %1642 = tpu.matmul %1563, %1641, %cst_1209 {dimension_numbers = #tpu.dot_dimension_numbers<[1], [0], [0], [1], [0, 0, 1, 1], [], []>} : vector<2x32xf32>, vector<32x32xf32>, vector<2x32xf32> -> vector<2x32xf32>
    %1643 = arith.addf %1639, %1642 : vector<2x32xf32>
    %1644 = arith.negf %1643 : vector<2x32xf32>
    %1645 = math.exp %1644 : vector<2x32xf32>
    %cst_1210 = arith.constant 1.000000e+00 : f32
    %1646 = vector.broadcast %cst_1210 : f32 to vector<2x32xf32>
    %1647 = arith.addf %1646, %1645 : vector<2x32xf32>
    %1648 = arith.divf %1646, %1647 : vector<2x32xf32>
    %1649 = arith.mulf %1630, %1561 : vector<2x32xf32>
    %1650 = arith.mulf %1619, %1637 : vector<2x32xf32>
    %1651 = arith.addf %1649, %1650 : vector<2x32xf32>
    %1652 = math.tanh %1651 : vector<2x32xf32>
    %1653 = arith.mulf %1648, %1652 : vector<2x32xf32>
    %c2_1211 = arith.constant 2 : index
    %c0_1212 = arith.constant 0 : index
    %c0_1213 = arith.constant 0 : index
    %1654 = vector.load %arg10[%c2_1211, %c0_1212, %c0_1213] : memref<8x2x32xf32, #tpu.memory_space<vmem>>, vector<1x2x32xf32>
    %1655 = vector.shape_cast %1654 : vector<1x2x32xf32> to vector<2x32xf32>
    %1656 = vector.shape_cast %1608 : vector<2x32xf32> to vector<1x2x32xf32>
    tpu.vector_store %arg10[%c2_1211, %c0_1212, %c0_1213], %1656 {strides = array<i32>} : memref<8x2x32xf32, #tpu.memory_space<vmem>>, vector<1x2x32xf32>,
    %c6_1214 = arith.constant 6 : index
    %c0_1215 = arith.constant 0 : index
    %c0_1216 = arith.constant 0 : index
    %1657 = vector.load %arg10[%c6_1214, %c0_1215, %c0_1216] : memref<8x2x32xf32, #tpu.memory_space<vmem>>, vector<1x2x32xf32>
    %1658 = vector.shape_cast %1657 : vector<1x2x32xf32> to vector<2x32xf32>
    %1659 = vector.shape_cast %1606 : vector<2x32xf32> to vector<1x2x32xf32>
    tpu.vector_store %arg10[%c6_1214, %c0_1215, %c0_1216], %1659 {strides = array<i32>} : memref<8x2x32xf32, #tpu.memory_space<vmem>>, vector<1x2x32xf32>,
    %c3_1217 = arith.constant 3 : index
    %c0_1218 = arith.constant 0 : index
    %c0_1219 = arith.constant 0 : index
    %1660 = vector.load %arg10[%c3_1217, %c0_1218, %c0_1219] : memref<8x2x32xf32, #tpu.memory_space<vmem>>, vector<1x2x32xf32>
    %1661 = vector.shape_cast %1660 : vector<1x2x32xf32> to vector<2x32xf32>
    %1662 = vector.shape_cast %1653 : vector<2x32xf32> to vector<1x2x32xf32>
    tpu.vector_store %arg10[%c3_1217, %c0_1218, %c0_1219], %1662 {strides = array<i32>} : memref<8x2x32xf32, #tpu.memory_space<vmem>>, vector<1x2x32xf32>,
    %c7_1220 = arith.constant 7 : index
    %c0_1221 = arith.constant 0 : index
    %c0_1222 = arith.constant 0 : index
    %1663 = vector.load %arg10[%c7_1220, %c0_1221, %c0_1222] : memref<8x2x32xf32, #tpu.memory_space<vmem>>, vector<1x2x32xf32>
    %1664 = vector.shape_cast %1663 : vector<1x2x32xf32> to vector<2x32xf32>
    %1665 = vector.shape_cast %1651 : vector<2x32xf32> to vector<1x2x32xf32>
    tpu.vector_store %arg10[%c7_1220, %c0_1221, %c0_1222], %1665 {strides = array<i32>} : memref<8x2x32xf32, #tpu.memory_space<vmem>>, vector<1x2x32xf32>,
    %c0_1223 = arith.constant 0 : index
    %c0_1224 = arith.constant 0 : index
    %1666 = vector.load %arg7[%c0_1223, %c0_1224] : memref<1x1xf32, #tpu.memory_space<vmem>>, vector<1x1xf32>
    %c0_1225 = arith.constant 0 : index
    %c0_1226 = arith.constant 0 : index
    %1667 = vector.load %arg6[%c0_1225, %c0_1226] : memref<64x1xf32, #tpu.memory_space<vmem>>, vector<32x1xf32>
    %cst_1227 = arith.constant dense<0.000000e+00> : vector<2x1xf32>
    %1668 = tpu.matmul %1608, %1667, %cst_1227 {dimension_numbers = #tpu.dot_dimension_numbers<[1], [0], [0], [1], [0, 0, 1, 1], [], []>} : vector<2x32xf32>, vector<32x1xf32>, vector<2x1xf32> -> vector<2x1xf32>
    %1669 = vector.broadcast %1666 : vector<1x1xf32> to vector<2x1xf32>
    %1670 = arith.addf %1669, %1668 : vector<2x1xf32>
    %c32_1228 = arith.constant 32 : index
    %c0_1229 = arith.constant 0 : index
    %1671 = vector.load %arg6[%c32_1228, %c0_1229] : memref<64x1xf32, #tpu.memory_space<vmem>>, vector<32x1xf32>
    %cst_1230 = arith.constant dense<0.000000e+00> : vector<2x1xf32>
    %1672 = tpu.matmul %1023, %1671, %cst_1230 {dimension_numbers = #tpu.dot_dimension_numbers<[1], [0], [0], [1], [0, 0, 1, 1], [], []>} : vector<2x32xf32>, vector<32x1xf32>, vector<2x1xf32> -> vector<2x1xf32>
    %1673 = arith.addf %1670, %1672 : vector<2x1xf32>
    %1674 = arith.negf %1673 : vector<2x1xf32>
    %1675 = math.exp %1674 : vector<2x1xf32>
    %cst_1231 = arith.constant 1.000000e+00 : f32
    %1676 = vector.broadcast %cst_1231 : f32 to vector<2x1xf32>
    %1677 = arith.addf %1676, %1675 : vector<2x1xf32>
    %1678 = arith.divf %1676, %1677 : vector<2x1xf32>
    %c0_1232 = arith.constant 0 : index
    %c0_1233 = arith.constant 0 : index
    %1679 = vector.load %arg9[%c0_1232, %c0_1233] : memref<2x1xf32, #tpu.memory_space<vmem>>, vector<2x1xf32>
    tpu.vector_store %arg9[%c0_1232, %c0_1233], %1678 {strides = array<i32>} : memref<2x1xf32, #tpu.memory_space<vmem>>, vector<2x1xf32>,
    return
  }
  func.func @transform_0(%arg0: i32) -> (i32, i32) {
    %c0_i32 = arith.constant 0 : i32
    %c0_i32_0 = arith.constant 0 : i32
    %c0_i32_1 = arith.constant 0 : i32
    return %c0_i32, %c0_i32_0 : i32, i32
  }
  func.func @transform_1(%arg0: i32) -> (i32, i32) {
    %c0_i32 = arith.constant 0 : i32
    %c0_i32_0 = arith.constant 0 : i32
    %c0_i32_1 = arith.constant 0 : i32
    return %c0_i32, %c0_i32_0 : i32, i32
  }
  func.func @transform_2(%arg0: i32) -> (i32, i32, i32) {
    %c0_i32 = arith.constant 0 : i32
    %c0_i32_0 = arith.constant 0 : i32
    %c0_i32_1 = arith.constant 0 : i32
    %c0_i32_2 = arith.constant 0 : i32
    return %c0_i32, %c0_i32_0, %c0_i32_1 : i32, i32, i32
  }
  func.func @transform_3(%arg0: i32) -> (i32, i32, i32) {
    %c0_i32 = arith.constant 0 : i32
    %c0_i32_0 = arith.constant 0 : i32
    %c0_i32_1 = arith.constant 0 : i32
    %c0_i32_2 = arith.constant 0 : i32
    return %c0_i32, %c0_i32_0, %c0_i32_1 : i32, i32, i32
  }
  func.func @transform_4(%arg0: i32) -> (i32, i32, i32) {
    %c0_i32 = arith.constant 0 : i32
    %c0_i32_0 = arith.constant 0 : i32
    %c0_i32_1 = arith.constant 0 : i32
    %c0_i32_2 = arith.constant 0 : i32
    return %c0_i32, %c0_i32_0, %c0_i32_1 : i32, i32, i32
  }
  func.func @transform_5(%arg0: i32) -> (i32, i32) {
    %c0_i32 = arith.constant 0 : i32
    %c0_i32_0 = arith.constant 0 : i32
    %c0_i32_1 = arith.constant 0 : i32
    return %c0_i32, %c0_i32_0 : i32, i32
  }
  func.func @transform_6(%arg0: i32) -> (i32, i32) {
    %c0_i32 = arith.constant 0 : i32
    %c0_i32_0 = arith.constant 0 : i32
    %c0_i32_1 = arith.constant 0 : i32
    return %c0_i32, %c0_i32_0 : i32, i32
  }
  func.func @transform_7(%arg0: i32) -> (i32, i32, i32) {
    %c0_i32 = arith.constant 0 : i32
    %c0_i32_0 = arith.constant 0 : i32
    %c0_i32_1 = arith.constant 0 : i32
    %c0_i32_2 = arith.constant 0 : i32
    return %c0_i32, %c0_i32_0, %c0_i32_1 : i32, i32, i32
  }
  func.func @transform_8(%arg0: i32) -> (i32, i32) {
    %c0_i32 = arith.constant 0 : i32
    %c0_i32_0 = arith.constant 0 : i32
    %c0_i32_1 = arith.constant 0 : i32
    return %c0_i32, %c0_i32_0 : i32, i32
  }
  func.func @transform_9(%arg0: i32) -> (i32, i32, i32) {
    %c0_i32 = arith.constant 0 : i32
    %c0_i32_0 = arith.constant 0 : i32
    %c0_i32_1 = arith.constant 0 : i32
    %c0_i32_2 = arith.constant 0 : i32
    return %c0_i32, %c0_i32_0, %c0_i32_1 : i32, i32, i32
  }
}

</mosaic_0001>

<llo_original>
// kernel: refactory_rnn_forward.1
$region0: #{refactory_rnn_forward.1}
  #allocation0 [shape = 'u32[]', space=smem, size = 0x4, offset = 0x4, fixed_abs, tag = 'smem constant byte address 0x4 - core index']
  #allocation1 [shape = 'u32[72,128]{1,0:T(1,128)}', space=vmem, size = 0x9000, scoped, tag = 'internal scratch']
  #allocation2 [shape = 'f32[8,16,32]{2,1,0:T(8,128)}', space=vmem, size = 0x10000, scoped, tag = 'scratch operand']
  #allocation3 [shape = 'f32[8,16,32]{2,1,0:T(8,128)}', space=vmem, size = 0x10000, scoped, tag = 'scratch operand']
  #allocation4 [shape = 'f32[16,64]{1,0:T(8,128)}', space=vmem, size = 0x2000, scoped, tag = 'scratch operand']
  #allocation5 [shape = 'f32[16,64]{1,0:T(8,128)}', space=vmem, size = 0x2000, scoped, tag = 'scratch operand']
  #allocation6 [shape = 'f32[1,1]{1,0:T(1,128)S(1)}', space=vmem, size = 0x200, scoped, tag = 'scoped memory for refactory_rnn_forward.1']
  %s0 = inlined_call_operand.vmem [shape: s32[16,1], index: 0, kind: input, shape index: {}]
  %s1 = inlined_call_operand.vmem [shape: f32[50,16], index: 1, kind: input, shape index: {}]
  %s2 = inlined_call_operand.vmem [shape: f32[16,64,32], index: 2, kind: input, shape index: {}]
  %s3 = inlined_call_operand.vmem [shape: f32[16,32,32], index: 3, kind: input, shape index: {}]
  %s4 = inlined_call_operand.vmem [shape: f32[16,1,32], index: 4, kind: input, shape index: {}]
  %s5 = inlined_call_operand.vmem [shape: f32[64,1], index: 5, kind: input, shape index: {}]
  %s6 = inlined_call_operand.<no memory space> [shape: f32[1,1], index: 6, kind: input, shape index: {}]
  %s7 = inlined_call_operand.vmem [shape: f32[8,2,32], index: 7, kind: input, shape index: {}]
  %s8 = inlined_call_operand.vmem [shape: f32[2,1], index: 8, kind: output, shape index: {0}]
  %s9 = inlined_call_operand.vmem [shape: f32[8,2,32], index: 9, kind: output, shape index: {1}]
  %10 = xla_tuple %s8, %s9
  %s11 = sld [smem:[#allocation0]]
  $region50: #{refactory_rnn_forward.1} parent=0
    _
  %s13 = ssub.s32 1, %s11
  %s14 = scalar_select 0, %s13, %s11
  %v15 = vstv %s6
  %16 = vst [vmem:[#allocation6] sm:$0x1] %v15
  // Predicated region
  $region2: #{refactory_rnn_forward.1} parent=0 // pred_check
    _
  $region3: #{refactory_rnn_forward.1} parent=0 // pred_check_branch
    %18 = sbr.rel (0) target = $region5
  $region4: #{refactory_rnn_forward.1} parent=0 // pred_region
    _
  $region5: #{refactory_rnn_forward.1} parent=0 // pred_fallthru
    _
  // Predicated region
  $region6: #{refactory_rnn_forward.1} parent=0 // pred_check
    _
  $region7: #{refactory_rnn_forward.1} parent=0 // pred_check_branch
    %20 = sbr.rel (0) target = $region9
  $region8: #{refactory_rnn_forward.1} parent=0 // pred_region
    _
  $region9: #{refactory_rnn_forward.1} parent=0 // pred_fallthru
    _
  // Predicated region
  $region10: #{refactory_rnn_forward.1} parent=0 // pred_check
    _
  $region11: #{refactory_rnn_forward.1} parent=0 // pred_check_branch
    %22 = sbr.rel (0) target = $region13
  $region12: #{refactory_rnn_forward.1} parent=0 // pred_region
    _
  $region13: #{refactory_rnn_forward.1} parent=0 // pred_fallthru
    _
  // Predicated region
  $region14: #{refactory_rnn_forward.1} parent=0 // pred_check
    _
  $region15: #{refactory_rnn_forward.1} parent=0 // pred_check_branch
    %24 = sbr.rel (0) target = $region17
  $region16: #{refactory_rnn_forward.1} parent=0 // pred_region
    _
  $region17: #{refactory_rnn_forward.1} parent=0 // pred_fallthru
    _
  // Predicated region
  $region18: #{refactory_rnn_forward.1} parent=0 // pred_check
    _
  $region19: #{refactory_rnn_forward.1} parent=0 // pred_check_branch
    %26 = sbr.rel (0) target = $region21
  $region20: #{refactory_rnn_forward.1} parent=0 // pred_region
    _
  $region21: #{refactory_rnn_forward.1} parent=0 // pred_fallthru
    _
  // Predicated region
  $region22: #{refactory_rnn_forward.1} parent=0 // pred_check
    _
  $region23: #{refactory_rnn_forward.1} parent=0 // pred_check_branch
    %28 = sbr.rel (0) target = $region25
  $region24: #{refactory_rnn_forward.1} parent=0 // pred_region
    _
  $region25: #{refactory_rnn_forward.1} parent=0 // pred_fallthru
    _
  // Predicated region
  $region26: #{refactory_rnn_forward.1} parent=0 // pred_check
    _
  $region27: #{refactory_rnn_forward.1} parent=0 // pred_check_branch
    %30 = sbr.rel (0) target = $region29
  $region28: #{refactory_rnn_forward.1} parent=0 // pred_region
    _
  $region29: #{refactory_rnn_forward.1} parent=0 // pred_fallthru
    _
  // Predicated region
  $region30: #{refactory_rnn_forward.1} parent=0 // pred_check
    _
  $region31: #{refactory_rnn_forward.1} parent=0 // pred_check_branch
    %32 = sbr.rel (0) target = $region33
  $region32: #{refactory_rnn_forward.1} parent=0 // pred_region
    _
  $region33: #{refactory_rnn_forward.1} parent=0 // pred_fallthru
    _
  %v33 = vld [vmem:[%s0] sm:$0xff]
  %v34 = vld [vmem:[%s0 + $0x8] sm:$0xff]
  %v35 = vlaneseq
  %v36 = vand.u32 %v35, 127
  %37 = vset.pattern.permute.xlu0 0
  %38 = vperm.xlu0 %37, %v33
  %v39 = vpop.permute.xlu0 %38
  %40 = vset.pattern.permute.xlu0 0
  %41 = vperm.xlu0 %40, %v34
  %v42 = vpop.permute.xlu0 %41
  %vm43 = vcmp.eq.s32.totalorder %v39, %v36
  %vm44 = vcmp.eq.s32.totalorder %v42, %v36
  %v45 = vsel %vm43, 1.0, 0.0
  %v46 = vsel %vm44, 1.0, 0.0
  %v47 = vld [vmem:[%s1] sm:$0xff]
  %v48 = vld [vmem:[%s1 + $0x8] sm:$0xff]
  %v49 = vld [vmem:[%s1 + $0x10] sm:$0xff]
  %v50 = vld [vmem:[%s1 + $0x18] sm:$0xff]
  %v51 = vld [vmem:[%s1 + $0x20] sm:$0xff]
  %v52 = vld [vmem:[%s1 + $0x28] sm:$0xff]
  %v53 = vld [vmem:[%s1 + $0x30] sm:$0x3]
  %vm54 = vcmask 408576
  %v56 = vsel %vm54, %v45, 0
  %v59 = vsel %vm54, %v46, 0
  %vm61 = vcmask 1041408
  %v63 = vsel %vm61, %v53, 0
  %65 = vmatpush.msra.mxu0 0.0
  %66 = vmatpush.msra.mxu0 0.0
  %67 = vmatpush.msra.mxu0 0.0
  %68 = vmatpush.msra.mxu0 0.0
  %69 = vmatpush.msra.mxu0 0.0
  %70 = vmatpush.msra.mxu0 0.0
  %71 = vmatpush.msra.mxu0 0.0
  %72 = vmatpush.msra.mxu0 0.0
  %73 = vmatpush.msra.mxu0 0.0
  %74 = vmatpush.msra.mxu0 %v63
  %75 = vmatpush.msra.mxu0 %v52
  %76 = vmatpush.msra.mxu0 %v51
  %77 = vmatpush.msra.mxu0 %v50
  %78 = vmatpush.msra.mxu0 %v49
  %79 = vmatpush.msra.mxu0 %v48
  %80 = vmatpush.msra.mxu0 %v47
  %81 = vmatmul.f32.gmra.mxu0 %v56
  %v82 = vpop.f32.mrf.mxu0
  %v83 = vadd.f32 0.0, %v82
  %84 = vmatmul.f32.gmra.mxu0 %v59
  %v85 = vpop.f32.mrf.mxu0
  %v86 = vadd.f32 0.0, %v85
  %87 = vdwg.mxu0
  %v88 = vld [vmem:[%s2] sm:$0xff]
  %v89 = vld [vmem:[%s2 + $0x8] sm:$0xff]
  %v90 = vld [vmem:[%s4] sm:$0x1]
  %v92 = vperm.slane %v90, 0
  %vm94 = vcmask 130048
  %v96 = vsel %vm94, %v83, 0
  %v99 = vsel %vm94, %v86, 0
  %101 = vmatpush.msra.mxu0 0.0
  %102 = vmatpush.msra.mxu0 0.0
  %103 = vmatpush.msra.mxu0 0.0
  %104 = vmatpush.msra.mxu0 0.0
  %105 = vmatpush.msra.mxu0 0.0
  %106 = vmatpush.msra.mxu0 0.0
  %107 = vmatpush.msra.mxu0 0.0
  %108 = vmatpush.msra.mxu0 0.0
  %109 = vmatpush.msra.mxu0 0.0
  %110 = vmatpush.msra.mxu0 0.0
  %111 = vmatpush.msra.mxu0 0.0
  %112 = vmatpush.msra.mxu0 0.0
  %113 = vmatpush.msra.mxu0 0.0
  %114 = vmatpush.msra.mxu0 0.0
  %115 = vmatpush.msra.mxu0 %v89
  %116 = vmatpush.msra.mxu0 %v88
  %117 = vmatmul.f32.gmra.mxu0 %v96
  %v118 = vpop.f32.mrf.mxu0
  %v119 = vadd.f32 %v92, %v118
  %120 = vmatmul.f32.gmra.mxu0 %v99
  %v121 = vpop.f32.mrf.mxu0
  %v122 = vadd.f32 %v92, %v121
  %123 = vdwg.mxu0
  %vm124 = vcmask 261120
  %125 = vst.msk [vmem:[#allocation2] sm:$0xff] %vm124, %v119
  %126 = vst.msk [vmem:[#allocation2 + $0x8] sm:$0xff] %vm124, %v122
  %s127 = scalar_lea.vmem %s2, 64
  %v128 = vld [vmem:[%s127] sm:$0xff]
  %v129 = vld [vmem:[%s127 + $0x8] sm:$0xff]
  %s130 = scalar_lea.vmem %s4, 1
  %v131 = vld [vmem:[%s130] sm:$0x1]
  %v133 = vperm.slane %v131, 0
  %135 = vmatpush.msra.mxu0 0.0
  %136 = vmatpush.msra.mxu0 0.0
  %137 = vmatpush.msra.mxu0 0.0
  %138 = vmatpush.msra.mxu0 0.0
  %139 = vmatpush.msra.mxu0 0.0
  %140 = vmatpush.msra.mxu0 0.0
  %141 = vmatpush.msra.mxu0 0.0
  %142 = vmatpush.msra.mxu0 0.0
  %143 = vmatpush.msra.mxu0 0.0
  %144 = vmatpush.msra.mxu0 0.0
  %145 = vmatpush.msra.mxu0 0.0
  %146 = vmatpush.msra.mxu0 0.0
  %147 = vmatpush.msra.mxu0 0.0
  %148 = vmatpush.msra.mxu0 0.0
  %149 = vmatpush.msra.mxu0 %v129
  %150 = vmatpush.msra.mxu0 %v128
  %151 = vmatmul.f32.gmra.mxu0 %v96
  %v152 = vpop.f32.mrf.mxu0
  %v153 = vadd.f32 %v133, %v152
  %154 = vmatmul.f32.gmra.mxu0 %v99
  %v155 = vpop.f32.mrf.mxu0
  %v156 = vadd.f32 %v133, %v155
  %157 = vdwg.mxu0
  %s158 = scalar_lea.vmem [#allocation2], 16
  %159 = vst.msk [vmem:[%s158] sm:$0xff] %vm124, %v153
  %160 = vst.msk [vmem:[%s158 + $0x8] sm:$0xff] %vm124, %v156
  %s161 = scalar_lea.vmem %s2, 128
  %v162 = vld [vmem:[%s161] sm:$0xff]
  %v163 = vld [vmem:[%s161 + $0x8] sm:$0xff]
  %s164 = scalar_lea.vmem %s4, 2
  %v165 = vld [vmem:[%s164] sm:$0x1]
  %v167 = vperm.slane %v165, 0
  %169 = vmatpush.msra.mxu0 0.0
  %170 = vmatpush.msra.mxu0 0.0
  %171 = vmatpush.msra.mxu0 0.0
  %172 = vmatpush.msra.mxu0 0.0
  %173 = vmatpush.msra.mxu0 0.0
  %174 = vmatpush.msra.mxu0 0.0
  %175 = vmatpush.msra.mxu0 0.0
  %176 = vmatpush.msra.mxu0 0.0
  %177 = vmatpush.msra.mxu0 0.0
  %178 = vmatpush.msra.mxu0 0.0
  %179 = vmatpush.msra.mxu0 0.0
  %180 = vmatpush.msra.mxu0 0.0
  %181 = vmatpush.msra.mxu0 0.0
  %182 = vmatpush.msra.mxu0 0.0
  %183 = vmatpush.msra.mxu0 %v163
  %184 = vmatpush.msra.mxu0 %v162
  %185 = vmatmul.f32.gmra.mxu0 %v96
  %v186 = vpop.f32.mrf.mxu0
  %v187 = vadd.f32 %v167, %v186
  %188 = vmatmul.f32.gmra.mxu0 %v99
  %v189 = vpop.f32.mrf.mxu0
  %v190 = vadd.f32 %v167, %v189
  %191 = vdwg.mxu0
  %s192 = scalar_lea.vmem [#allocation2], 32
  %193 = vst.msk [vmem:[%s192] sm:$0xff] %vm124, %v187
  %194 = vst.msk [vmem:[%s192 + $0x8] sm:$0xff] %vm124, %v190
  %s195 = scalar_lea.vmem %s2, 192
  %v196 = vld [vmem:[%s195] sm:$0xff]
  %v197 = vld [vmem:[%s195 + $0x8] sm:$0xff]
  %s198 = scalar_lea.vmem %s4, 3
  %v199 = vld [vmem:[%s198] sm:$0x1]
  %v201 = vperm.slane %v199, 0
  %203 = vmatpush.msra.mxu0 0.0
  %204 = vmatpush.msra.mxu0 0.0
  %205 = vmatpush.msra.mxu0 0.0
  %206 = vmatpush.msra.mxu0 0.0
  %207 = vmatpush.msra.mxu0 0.0
  %208 = vmatpush.msra.mxu0 0.0
  %209 = vmatpush.msra.mxu0 0.0
  %210 = vmatpush.msra.mxu0 0.0
  %211 = vmatpush.msra.mxu0 0.0
  %212 = vmatpush.msra.mxu0 0.0
  %213 = vmatpush.msra.mxu0 0.0
  %214 = vmatpush.msra.mxu0 0.0
  %215 = vmatpush.msra.mxu0 0.0
  %216 = vmatpush.msra.mxu0 0.0
  %217 = vmatpush.msra.mxu0 %v197
  %218 = vmatpush.msra.mxu0 %v196
  %219 = vmatmul.f32.gmra.mxu0 %v96
  %v220 = vpop.f32.mrf.mxu0
  %v221 = vadd.f32 %v201, %v220
  %222 = vmatmul.f32.gmra.mxu0 %v99
  %v223 = vpop.f32.mrf.mxu0
  %v224 = vadd.f32 %v201, %v223
  %225 = vdwg.mxu0
  %s226 = scalar_lea.vmem [#allocation2], 48
  %227 = vst.msk [vmem:[%s226] sm:$0xff] %vm124, %v221
  %228 = vst.msk [vmem:[%s226 + $0x8] sm:$0xff] %vm124, %v224
  %s229 = scalar_lea.vmem %s2, 256
  %v230 = vld [vmem:[%s229] sm:$0xff]
  %v231 = vld [vmem:[%s229 + $0x8] sm:$0xff]
  %s232 = scalar_lea.vmem %s4, 4
  %v233 = vld [vmem:[%s232] sm:$0x1]
  %v235 = vperm.slane %v233, 0
  %237 = vmatpush.msra.mxu0 0.0
  %238 = vmatpush.msra.mxu0 0.0
  %239 = vmatpush.msra.mxu0 0.0
  %240 = vmatpush.msra.mxu0 0.0
  %241 = vmatpush.msra.mxu0 0.0
  %242 = vmatpush.msra.mxu0 0.0
  %243 = vmatpush.msra.mxu0 0.0
  %244 = vmatpush.msra.mxu0 0.0
  %245 = vmatpush.msra.mxu0 0.0
  %246 = vmatpush.msra.mxu0 0.0
  %247 = vmatpush.msra.mxu0 0.0
  %248 = vmatpush.msra.mxu0 0.0
  %249 = vmatpush.msra.mxu0 0.0
  %250 = vmatpush.msra.mxu0 0.0
  %251 = vmatpush.msra.mxu0 %v231
  %252 = vmatpush.msra.mxu0 %v230
  %253 = vmatmul.f32.gmra.mxu0 %v96
  %v254 = vpop.f32.mrf.mxu0
  %v255 = vadd.f32 %v235, %v254
  %256 = vmatmul.f32.gmra.mxu0 %v99
  %v257 = vpop.f32.mrf.mxu0
  %v258 = vadd.f32 %v235, %v257
  %259 = vdwg.mxu0
  %s260 = scalar_lea.vmem [#allocation2], 64
  %261 = vst.msk [vmem:[%s260] sm:$0xff] %vm124, %v255
  %262 = vst.msk [vmem:[%s260 + $0x8] sm:$0xff] %vm124, %v258
  %s263 = scalar_lea.vmem %s2, 320
  %v264 = vld [vmem:[%s263] sm:$0xff]
  %v265 = vld [vmem:[%s263 + $0x8] sm:$0xff]
  %s266 = scalar_lea.vmem %s4, 5
  %v267 = vld [vmem:[%s266] sm:$0x1]
  %v269 = vperm.slane %v267, 0
  %271 = vmatpush.msra.mxu0 0.0
  %272 = vmatpush.msra.mxu0 0.0
  %273 = vmatpush.msra.mxu0 0.0
  %274 = vmatpush.msra.mxu0 0.0
  %275 = vmatpush.msra.mxu0 0.0
  %276 = vmatpush.msra.mxu0 0.0
  %277 = vmatpush.msra.mxu0 0.0
  %278 = vmatpush.msra.mxu0 0.0
  %279 = vmatpush.msra.mxu0 0.0
  %280 = vmatpush.msra.mxu0 0.0
  %281 = vmatpush.msra.mxu0 0.0
  %282 = vmatpush.msra.mxu0 0.0
  %283 = vmatpush.msra.mxu0 0.0
  %284 = vmatpush.msra.mxu0 0.0
  %285 = vmatpush.msra.mxu0 %v265
  %286 = vmatpush.msra.mxu0 %v264
  %287 = vmatmul.f32.gmra.mxu0 %v96
  %v288 = vpop.f32.mrf.mxu0
  %v289 = vadd.f32 %v269, %v288
  %290 = vmatmul.f32.gmra.mxu0 %v99
  %v291 = vpop.f32.mrf.mxu0
  %v292 = vadd.f32 %v269, %v291
  %293 = vdwg.mxu0
  %s294 = scalar_lea.vmem [#allocation2], 80
  %295 = vst.msk [vmem:[%s294] sm:$0xff] %vm124, %v289
  %296 = vst.msk [vmem:[%s294 + $0x8] sm:$0xff] %vm124, %v292
  %s297 = scalar_lea.vmem %s2, 384
  %v298 = vld [vmem:[%s297] sm:$0xff]
  %v299 = vld [vmem:[%s297 + $0x8] sm:$0xff]
  %s300 = scalar_lea.vmem %s4, 6
  %v301 = vld [vmem:[%s300] sm:$0x1]
  %v303 = vperm.slane %v301, 0
  %305 = vmatpush.msra.mxu0 0.0
  %306 = vmatpush.msra.mxu0 0.0
  %307 = vmatpush.msra.mxu0 0.0
  %308 = vmatpush.msra.mxu0 0.0
  %309 = vmatpush.msra.mxu0 0.0
  %310 = vmatpush.msra.mxu0 0.0
  %311 = vmatpush.msra.mxu0 0.0
  %312 = vmatpush.msra.mxu0 0.0
  %313 = vmatpush.msra.mxu0 0.0
  %314 = vmatpush.msra.mxu0 0.0
  %315 = vmatpush.msra.mxu0 0.0
  %316 = vmatpush.msra.mxu0 0.0
  %317 = vmatpush.msra.mxu0 0.0
  %318 = vmatpush.msra.mxu0 0.0
  %319 = vmatpush.msra.mxu0 %v299
  %320 = vmatpush.msra.mxu0 %v298
  %321 = vmatmul.f32.gmra.mxu0 %v96
  %v322 = vpop.f32.mrf.mxu0
  %v323 = vadd.f32 %v303, %v322
  %324 = vmatmul.f32.gmra.mxu0 %v99
  %v325 = vpop.f32.mrf.mxu0
  %v326 = vadd.f32 %v303, %v325
  %327 = vdwg.mxu0
  %s328 = scalar_lea.vmem [#allocation2], 96
  %329 = vst.msk [vmem:[%s328] sm:$0xff] %vm124, %v323
  %330 = vst.msk [vmem:[%s328 + $0x8] sm:$0xff] %vm124, %v326
  %s331 = scalar_lea.vmem %s2, 448
  %v332 = vld [vmem:[%s331] sm:$0xff]
  %v333 = vld [vmem:[%s331 + $0x8] sm:$0xff]
  %s334 = scalar_lea.vmem %s4, 7
  %v335 = vld [vmem:[%s334] sm:$0x1]
  %v337 = vperm.slane %v335, 0
  %339 = vmatpush.msra.mxu0 0.0
  %340 = vmatpush.msra.mxu0 0.0
  %341 = vmatpush.msra.mxu0 0.0
  %342 = vmatpush.msra.mxu0 0.0
  %343 = vmatpush.msra.mxu0 0.0
  %344 = vmatpush.msra.mxu0 0.0
  %345 = vmatpush.msra.mxu0 0.0
  %346 = vmatpush.msra.mxu0 0.0
  %347 = vmatpush.msra.mxu0 0.0
  %348 = vmatpush.msra.mxu0 0.0
  %349 = vmatpush.msra.mxu0 0.0
  %350 = vmatpush.msra.mxu0 0.0
  %351 = vmatpush.msra.mxu0 0.0
  %352 = vmatpush.msra.mxu0 0.0
  %353 = vmatpush.msra.mxu0 %v333
  %354 = vmatpush.msra.mxu0 %v332
  %355 = vmatmul.f32.gmra.mxu0 %v96
  %v356 = vpop.f32.mrf.mxu0
  %v357 = vadd.f32 %v337, %v356
  %358 = vmatmul.f32.gmra.mxu0 %v99
  %v359 = vpop.f32.mrf.mxu0
  %v360 = vadd.f32 %v337, %v359
  %361 = vdwg.mxu0
  %s362 = scalar_lea.vmem [#allocation2], 112
  %363 = vst.msk [vmem:[%s362] sm:$0xff] %vm124, %v357
  %364 = vst.msk [vmem:[%s362 + $0x8] sm:$0xff] %vm124, %v360
  %v365 = vld [vmem:[%s7] sm:$0x3]
  %s366 = scalar_lea.vmem %s7, 2
  %v367 = vld [vmem:[%s366] sm:$0x3]
  %s368 = scalar_lea.vmem %s7, 8
  %v369 = vld [vmem:[%s368] sm:$0x3]
  %s370 = scalar_lea.vmem %s7, 10
  %v371 = vld [vmem:[%s370] sm:$0x3]
  %v372 = vld [vmem:[#allocation2] sm:$0x3]
  %v373 = vld [vmem:[%s3] sm:$0xff]
  %v374 = vld [vmem:[%s3 + $0x8] sm:$0xff]
  %v375 = vld [vmem:[%s3 + $0x10] sm:$0xff]
  %v376 = vld [vmem:[%s3 + $0x18] sm:$0xff]
  %v378 = vsel %vm124, %v365, 0
  %380 = vmatpush.msra.mxu0 0.0
  %381 = vmatpush.msra.mxu0 0.0
  %382 = vmatpush.msra.mxu0 0.0
  %383 = vmatpush.msra.mxu0 0.0
  %384 = vmatpush.msra.mxu0 0.0
  %385 = vmatpush.msra.mxu0 0.0
  %386 = vmatpush.msra.mxu0 0.0
  %387 = vmatpush.msra.mxu0 0.0
  %388 = vmatpush.msra.mxu0 0.0
  %389 = vmatpush.msra.mxu0 0.0
  %390 = vmatpush.msra.mxu0 0.0
  %391 = vmatpush.msra.mxu0 0.0
  %392 = vmatpush.msra.mxu0 %v376
  %393 = vmatpush.msra.mxu0 %v375
  %394 = vmatpush.msra.mxu0 %v374
  %395 = vmatpush.msra.mxu0 %v373
  %396 = vmatmul.f32.gmra.mxu0 %v378
  %v397 = vpop.f32.mrf.mxu0
  %v398 = vadd.f32 0.0, %v397
  %399 = vdwg.mxu0
  %v400 = vadd.f32 %v372, %v398
  %v401 = vxor.u32 %v400, 2147483648
  %v402 = vmul.f32 %v401, 1.442695
  %v403 = vpow.pop %v402
  %v404 = vadd.f32 %v403, 1.0
  %v405 = vrcp.pop %v404
  %v406 = vmul.f32 %v404, %v405
  %v407 = vsub.f32 1.0, %v406
  %v408 = vmul.f32 %v405, %v407
  %v409 = vadd.f32 %v405, %v408
  %vm410 = vweird.f32 %v404
  %vm411 = vweird.f32 %v405
  %vm412 = vmor %vm410, %vm411
  %v413 = vsel %vm412, %v405, %v409
  %v414 = vand.u32 2147483647, %v404
  %vm415 = vcmp.eq.f32.partialorder %v414, 8.507059e+37
  %v416 = vand.u32 %v404, 2147483648
  %v417 = vor.u32 1.1754944e-38, %v416
  %v418 = vsel %vm415, %v417, %v413
  %v419 = vmul.f32 1.0, %v418
  %v420 = vld [vmem:[%s158] sm:$0x3]
  %s421 = scalar_lea.vmem %s3, 32
  %v422 = vld [vmem:[%s421] sm:$0xff]
  %v423 = vld [vmem:[%s421 + $0x8] sm:$0xff]
  %v424 = vld [vmem:[%s421 + $0x10] sm:$0xff]
  %v425 = vld [vmem:[%s421 + $0x18] sm:$0xff]
  %426 = vmatpush.msra.mxu0 0.0
  %427 = vmatpush.msra.mxu0 0.0
  %428 = vmatpush.msra.mxu0 0.0
  %429 = vmatpush.msra.mxu0 0.0
  %430 = vmatpush.msra.mxu0 0.0
  %431 = vmatpush.msra.mxu0 0.0
  %432 = vmatpush.msra.mxu0 0.0
  %433 = vmatpush.msra.mxu0 0.0
  %434 = vmatpush.msra.mxu0 0.0
  %435 = vmatpush.msra.mxu0 0.0
  %436 = vmatpush.msra.mxu0 0.0
  %437 = vmatpush.msra.mxu0 0.0
  %438 = vmatpush.msra.mxu0 %v425
  %439 = vmatpush.msra.mxu0 %v424
  %440 = vmatpush.msra.mxu0 %v423
  %441 = vmatpush.msra.mxu0 %v422
  %442 = vmatmul.f32.gmra.mxu0 %v378
  %v443 = vpop.f32.mrf.mxu0
  %v444 = vadd.f32 0.0, %v443
  %445 = vdwg.mxu0
  %v446 = vadd.f32 %v420, %v444
  %v447 = vxor.u32 %v446, 2147483648
  %v448 = vmul.f32 %v447, 1.442695
  %v449 = vpow.pop %v448
  %v450 = vadd.f32 %v449, 1.0
  %v451 = vrcp.pop %v450
  %v452 = vmul.f32 %v450, %v451
  %v453 = vsub.f32 1.0, %v452
  %v454 = vmul.f32 %v451, %v453
  %v455 = vadd.f32 %v451, %v454
  %vm456 = vweird.f32 %v450
  %vm457 = vweird.f32 %v451
  %vm458 = vmor %vm456, %vm457
  %v459 = vsel %vm458, %v451, %v455
  %v460 = vand.u32 2147483647, %v450
  %vm461 = vcmp.eq.f32.partialorder %v460, 8.507059e+37
  %v462 = vand.u32 %v450, 2147483648
  %v463 = vor.u32 1.1754944e-38, %v462
  %v464 = vsel %vm461, %v463, %v459
  %v465 = vmul.f32 1.0, %v464
  %v466 = vld [vmem:[%s192] sm:$0x3]
  %s467 = scalar_lea.vmem %s3, 64
  %v468 = vld [vmem:[%s467] sm:$0xff]
  %v469 = vld [vmem:[%s467 + $0x8] sm:$0xff]
  %v470 = vld [vmem:[%s467 + $0x10] sm:$0xff]
  %v471 = vld [vmem:[%s467 + $0x18] sm:$0xff]
  %472 = vmatpush.msra.mxu0 0.0
  %473 = vmatpush.msra.mxu0 0.0
  %474 = vmatpush.msra.mxu0 0.0
  %475 = vmatpush.msra.mxu0 0.0
  %476 = vmatpush.msra.mxu0 0.0
  %477 = vmatpush.msra.mxu0 0.0
  %478 = vmatpush.msra.mxu0 0.0
  %479 = vmatpush.msra.mxu0 0.0
  %480 = vmatpush.msra.mxu0 0.0
  %481 = vmatpush.msra.mxu0 0.0
  %482 = vmatpush.msra.mxu0 0.0
  %483 = vmatpush.msra.mxu0 0.0
  %484 = vmatpush.msra.mxu0 %v471
  %485 = vmatpush.msra.mxu0 %v470
  %486 = vmatpush.msra.mxu0 %v469
  %487 = vmatpush.msra.mxu0 %v468
  %488 = vmatmul.f32.gmra.mxu0 %v378
  %v489 = vpop.f32.mrf.mxu0
  %v490 = vadd.f32 0.0, %v489
  %491 = vdwg.mxu0
  %v492 = vadd.f32 %v466, %v490
  %v493 = vtanh.pop %v492
  %v494 = vld [vmem:[%s226] sm:$0x3]
  %s495 = scalar_lea.vmem %s3, 96
  %v496 = vld [vmem:[%s495] sm:$0xff]
  %v497 = vld [vmem:[%s495 + $0x8] sm:$0xff]
  %v498 = vld [vmem:[%s495 + $0x10] sm:$0xff]
  %v499 = vld [vmem:[%s495 + $0x18] sm:$0xff]
  %500 = vmatpush.msra.mxu0 0.0
  %501 = vmatpush.msra.mxu0 0.0
  %502 = vmatpush.msra.mxu0 0.0
  %503 = vmatpush.msra.mxu0 0.0
  %504 = vmatpush.msra.mxu0 0.0
  %505 = vmatpush.msra.mxu0 0.0
  %506 = vmatpush.msra.mxu0 0.0
  %507 = vmatpush.msra.mxu0 0.0
  %508 = vmatpush.msra.mxu0 0.0
  %509 = vmatpush.msra.mxu0 0.0
  %510 = vmatpush.msra.mxu0 0.0
  %511 = vmatpush.msra.mxu0 0.0
  %512 = vmatpush.msra.mxu0 %v499
  %513 = vmatpush.msra.mxu0 %v498
  %514 = vmatpush.msra.mxu0 %v497
  %515 = vmatpush.msra.mxu0 %v496
  %516 = vmatmul.f32.gmra.mxu0 %v378
  %v517 = vpop.f32.mrf.mxu0
  %v518 = vadd.f32 0.0, %v517
  %519 = vdwg.mxu0
  %v520 = vadd.f32 %v494, %v518
  %v521 = vxor.u32 %v520, 2147483648
  %v522 = vmul.f32 %v521, 1.442695
  %v523 = vpow.pop %v522
  %v524 = vadd.f32 %v523, 1.0
  %v525 = vrcp.pop %v524
  %v526 = vmul.f32 %v524, %v525
  %v527 = vsub.f32 1.0, %v526
  %v528 = vmul.f32 %v525, %v527
  %v529 = vadd.f32 %v525, %v528
  %vm530 = vweird.f32 %v524
  %vm531 = vweird.f32 %v525
  %vm532 = vmor %vm530, %vm531
  %v533 = vsel %vm532, %v525, %v529
  %v534 = vand.u32 2147483647, %v524
  %vm535 = vcmp.eq.f32.partialorder %v534, 8.507059e+37
  %v536 = vand.u32 %v524, 2147483648
  %v537 = vor.u32 1.1754944e-38, %v536
  %v538 = vsel %vm535, %v537, %v533
  %v539 = vmul.f32 1.0, %v538
  %v540 = vmul.f32 %v465, %v369
  %v541 = vmul.f32 %v419, %v493
  %v542 = vadd.f32 %v540, %v541
  %v543 = vtanh.pop %v542
  %v544 = vmul.f32 %v539, %v543
  %vm545 = vcmask 254976
  %546 = vst.msk [vmem:[#allocation4] sm:$0x3] %vm545, %v544
  %v547 = vld [vmem:[%s260 + $0xe] sm:$0x3]
  %s548 = scalar_lea.vmem %s3, 128
  %v549 = vld [vmem:[%s548] sm:$0xff]
  %v550 = vld [vmem:[%s548 + $0x8] sm:$0xff]
  %v551 = vld [vmem:[%s548 + $0x10] sm:$0xff]
  %v552 = vld [vmem:[%s548 + $0x18] sm:$0xff]
  %v554 = vsel %vm124, %v367, 0
  %556 = vmatpush.msra.mxu0 0.0
  %557 = vmatpush.msra.mxu0 0.0
  %558 = vmatpush.msra.mxu0 0.0
  %559 = vmatpush.msra.mxu0 0.0
  %560 = vmatpush.msra.mxu0 0.0
  %561 = vmatpush.msra.mxu0 0.0
  %562 = vmatpush.msra.mxu0 0.0
  %563 = vmatpush.msra.mxu0 0.0
  %564 = vmatpush.msra.mxu0 0.0
  %565 = vmatpush.msra.mxu0 0.0
  %566 = vmatpush.msra.mxu0 0.0
  %567 = vmatpush.msra.mxu0 0.0
  %568 = vmatpush.msra.mxu0 %v552
  %569 = vmatpush.msra.mxu0 %v551
  %570 = vmatpush.msra.mxu0 %v550
  %571 = vmatpush.msra.mxu0 %v549
  %572 = vmatmul.f32.gmra.mxu0 %v554
  %v573 = vpop.f32.mrf.mxu0
  %v574 = vadd.f32 0.0, %v573
  %575 = vdwg.mxu0
  %v576 = vadd.f32 %v547, %v574
  %v577 = vxor.u32 %v576, 2147483648
  %v578 = vmul.f32 %v577, 1.442695
  %v579 = vpow.pop %v578
  %v580 = vadd.f32 %v579, 1.0
  %v581 = vrcp.pop %v580
  %v582 = vmul.f32 %v580, %v581
  %v583 = vsub.f32 1.0, %v582
  %v584 = vmul.f32 %v581, %v583
  %v585 = vadd.f32 %v581, %v584
  %vm586 = vweird.f32 %v580
  %vm587 = vweird.f32 %v581
  %vm588 = vmor %vm586, %vm587
  %v589 = vsel %vm588, %v581, %v585
  %v590 = vand.u32 2147483647, %v580
  %vm591 = vcmp.eq.f32.partialorder %v590, 8.507059e+37
  %v592 = vand.u32 %v580, 2147483648
  %v593 = vor.u32 1.1754944e-38, %v592
  %v594 = vsel %vm591, %v593, %v589
  %v595 = vmul.f32 1.0, %v594
  %v596 = vld [vmem:[%s294 + $0xe] sm:$0x3]
  %s597 = scalar_lea.vmem %s3, 160
  %v598 = vld [vmem:[%s597] sm:$0xff]
  %v599 = vld [vmem:[%s597 + $0x8] sm:$0xff]
  %v600 = vld [vmem:[%s597 + $0x10] sm:$0xff]
  %v601 = vld [vmem:[%s597 + $0x18] sm:$0xff]
  %602 = vmatpush.msra.mxu0 0.0
  %603 = vmatpush.msra.mxu0 0.0
  %604 = vmatpush.msra.mxu0 0.0
  %605 = vmatpush.msra.mxu0 0.0
  %606 = vmatpush.msra.mxu0 0.0
  %607 = vmatpush.msra.mxu0 0.0
  %608 = vmatpush.msra.mxu0 0.0
  %609 = vmatpush.msra.mxu0 0.0
  %610 = vmatpush.msra.mxu0 0.0
  %611 = vmatpush.msra.mxu0 0.0
  %612 = vmatpush.msra.mxu0 0.0
  %613 = vmatpush.msra.mxu0 0.0
  %614 = vmatpush.msra.mxu0 %v601
  %615 = vmatpush.msra.mxu0 %v600
  %616 = vmatpush.msra.mxu0 %v599
  %617 = vmatpush.msra.mxu0 %v598
  %618 = vmatmul.f32.gmra.mxu0 %v554
  %v619 = vpop.f32.mrf.mxu0
  %v620 = vadd.f32 0.0, %v619
  %621 = vdwg.mxu0
  %v622 = vadd.f32 %v596, %v620
  %v623 = vxor.u32 %v622, 2147483648
  %v624 = vmul.f32 %v623, 1.442695
  %v625 = vpow.pop %v624
  %v626 = vadd.f32 %v625, 1.0
  %v627 = vrcp.pop %v626
  %v628 = vmul.f32 %v626, %v627
  %v629 = vsub.f32 1.0, %v628
  %v630 = vmul.f32 %v627, %v629
  %v631 = vadd.f32 %v627, %v630
  %vm632 = vweird.f32 %v626
  %vm633 = vweird.f32 %v627
  %vm634 = vmor %vm632, %vm633
  %v635 = vsel %vm634, %v627, %v631
  %v636 = vand.u32 2147483647, %v626
  %vm637 = vcmp.eq.f32.partialorder %v636, 8.507059e+37
  %v638 = vand.u32 %v626, 2147483648
  %v639 = vor.u32 1.1754944e-38, %v638
  %v640 = vsel %vm637, %v639, %v635
  %v641 = vmul.f32 1.0, %v640
  %v642 = vld [vmem:[%s328 + $0xe] sm:$0x3]
  %s643 = scalar_lea.vmem %s3, 192
  %v644 = vld [vmem:[%s643] sm:$0xff]
  %v645 = vld [vmem:[%s643 + $0x8] sm:$0xff]
  %v646 = vld [vmem:[%s643 + $0x10] sm:$0xff]
  %v647 = vld [vmem:[%s643 + $0x18] sm:$0xff]
  %648 = vmatpush.msra.mxu0 0.0
  %649 = vmatpush.msra.mxu0 0.0
  %650 = vmatpush.msra.mxu0 0.0
  %651 = vmatpush.msra.mxu0 0.0
  %652 = vmatpush.msra.mxu0 0.0
  %653 = vmatpush.msra.mxu0 0.0
  %654 = vmatpush.msra.mxu0 0.0
  %655 = vmatpush.msra.mxu0 0.0
  %656 = vmatpush.msra.mxu0 0.0
  %657 = vmatpush.msra.mxu0 0.0
  %658 = vmatpush.msra.mxu0 0.0
  %659 = vmatpush.msra.mxu0 0.0
  %660 = vmatpush.msra.mxu0 %v647
  %661 = vmatpush.msra.mxu0 %v646
  %662 = vmatpush.msra.mxu0 %v645
  %663 = vmatpush.msra.mxu0 %v644
  %664 = vmatmul.f32.gmra.mxu0 %v554
  %v665 = vpop.f32.mrf.mxu0
  %v666 = vadd.f32 0.0, %v665
  %667 = vdwg.mxu0
  %v668 = vadd.f32 %v642, %v666
  %v669 = vtanh.pop %v668
  %v670 = vld [vmem:[%s362 + $0xe] sm:$0x3]
  %s671 = scalar_lea.vmem %s3, 224
  %v672 = vld [vmem:[%s671] sm:$0xff]
  %v673 = vld [vmem:[%s671 + $0x8] sm:$0xff]
  %v674 = vld [vmem:[%s671 + $0x10] sm:$0xff]
  %v675 = vld [vmem:[%s671 + $0x18] sm:$0xff]
  %676 = vmatpush.msra.mxu0 0.0
  %677 = vmatpush.msra.mxu0 0.0
  %678 = vmatpush.msra.mxu0 0.0
  %679 = vmatpush.msra.mxu0 0.0
  %680 = vmatpush.msra.mxu0 0.0
  %681 = vmatpush.msra.mxu0 0.0
  %682 = vmatpush.msra.mxu0 0.0
  %683 = vmatpush.msra.mxu0 0.0
  %684 = vmatpush.msra.mxu0 0.0
  %685 = vmatpush.msra.mxu0 0.0
  %686 = vmatpush.msra.mxu0 0.0
  %687 = vmatpush.msra.mxu0 0.0
  %688 = vmatpush.msra.mxu0 %v675
  %689 = vmatpush.msra.mxu0 %v674
  %690 = vmatpush.msra.mxu0 %v673
  %691 = vmatpush.msra.mxu0 %v672
  %692 = vmatmul.f32.gmra.mxu0 %v554
  %v693 = vpop.f32.mrf.mxu0
  %v694 = vadd.f32 0.0, %v693
  %695 = vdwg.mxu0
  %v696 = vadd.f32 %v670, %v694
  %v697 = vxor.u32 %v696, 2147483648
  %v698 = vmul.f32 %v697, 1.442695
  %v699 = vpow.pop %v698
  %v700 = vadd.f32 %v699, 1.0
  %v701 = vrcp.pop %v700
  %v702 = vmul.f32 %v700, %v701
  %v703 = vsub.f32 1.0, %v702
  %v704 = vmul.f32 %v701, %v703
  %v705 = vadd.f32 %v701, %v704
  %vm706 = vweird.f32 %v700
  %vm707 = vweird.f32 %v701
  %vm708 = vmor %vm706, %vm707
  %v709 = vsel %vm708, %v701, %v705
  %v710 = vand.u32 2147483647, %v700
  %vm711 = vcmp.eq.f32.partialorder %v710, 8.507059e+37
  %v712 = vand.u32 %v700, 2147483648
  %v713 = vor.u32 1.1754944e-38, %v712
  %v714 = vsel %vm711, %v713, %v709
  %v715 = vmul.f32 1.0, %v714
  %v716 = vmul.f32 %v641, %v371
  %v717 = vmul.f32 %v595, %v669
  %v718 = vadd.f32 %v716, %v717
  %v719 = vtanh.pop %v718
  %v720 = vmul.f32 %v715, %v719
  %722 = vrot.lane.b32.xlu0 %v720, 32
  %v723 = vpop.permute.xlu0 %722
  %vm725 = vcmask 517376
  %726 = vst.msk [vmem:[#allocation4 + $0xe] sm:$0x3] %vm725, %v723
  %v727 = vld [vmem:[#allocation2 + $0x2] sm:$0x3]
  %v728 = vld [vmem:[%s3] sm:$0xff]
  %v729 = vld [vmem:[%s3 + $0x8] sm:$0xff]
  %v730 = vld [vmem:[%s3 + $0x10] sm:$0xff]
  %v731 = vld [vmem:[%s3 + $0x18] sm:$0xff]
  %v733 = vsel %vm124, %v544, 0
  %735 = vmatpush.msra.mxu0 0.0
  %736 = vmatpush.msra.mxu0 0.0
  %737 = vmatpush.msra.mxu0 0.0
  %738 = vmatpush.msra.mxu0 0.0
  %739 = vmatpush.msra.mxu0 0.0
  %740 = vmatpush.msra.mxu0 0.0
  %741 = vmatpush.msra.mxu0 0.0
  %742 = vmatpush.msra.mxu0 0.0
  %743 = vmatpush.msra.mxu0 0.0
  %744 = vmatpush.msra.mxu0 0.0
  %745 = vmatpush.msra.mxu0 0.0
  %746 = vmatpush.msra.mxu0 0.0
  %747 = vmatpush.msra.mxu0 %v731
  %748 = vmatpush.msra.mxu0 %v730
  %749 = vmatpush.msra.mxu0 %v729
  %750 = vmatpush.msra.mxu0 %v728
  %751 = vmatmul.f32.gmra.mxu0 %v733
  %v752 = vpop.f32.mrf.mxu0
  %v753 = vadd.f32 0.0, %v752
  %754 = vdwg.mxu0
  %v755 = vadd.f32 %v727, %v753
  %v756 = vxor.u32 %v755, 2147483648
  %v757 = vmul.f32 %v756, 1.442695
  %v758 = vpow.pop %v757
  %v759 = vadd.f32 %v758, 1.0
  %v760 = vrcp.pop %v759
  %v761 = vmul.f32 %v759, %v760
  %v762 = vsub.f32 1.0, %v761
  %v763 = vmul.f32 %v760, %v762
  %v764 = vadd.f32 %v760, %v763
  %vm765 = vweird.f32 %v759
  %vm766 = vweird.f32 %v760
  %vm767 = vmor %vm765, %vm766
  %v768 = vsel %vm767, %v760, %v764
  %v769 = vand.u32 2147483647, %v759
  %vm770 = vcmp.eq.f32.partialorder %v769, 8.507059e+37
  %v771 = vand.u32 %v759, 2147483648
  %v772 = vor.u32 1.1754944e-38, %v771
  %v773 = vsel %vm770, %v772, %v768
  %v774 = vmul.f32 1.0, %v773
  %v775 = vld [vmem:[%s158 + $0x2] sm:$0x3]
  %v776 = vld [vmem:[%s421] sm:$0xff]
  %v777 = vld [vmem:[%s421 + $0x8] sm:$0xff]
  %v778 = vld [vmem:[%s421 + $0x10] sm:$0xff]
  %v779 = vld [vmem:[%s421 + $0x18] sm:$0xff]
  %780 = vmatpush.msra.mxu0 0.0
  %781 = vmatpush.msra.mxu0 0.0
  %782 = vmatpush.msra.mxu0 0.0
  %783 = vmatpush.msra.mxu0 0.0
  %784 = vmatpush.msra.mxu0 0.0
  %785 = vmatpush.msra.mxu0 0.0
  %786 = vmatpush.msra.mxu0 0.0
  %787 = vmatpush.msra.mxu0 0.0
  %788 = vmatpush.msra.mxu0 0.0
  %789 = vmatpush.msra.mxu0 0.0
  %790 = vmatpush.msra.mxu0 0.0
  %791 = vmatpush.msra.mxu0 0.0
  %792 = vmatpush.msra.mxu0 %v779
  %793 = vmatpush.msra.mxu0 %v778
  %794 = vmatpush.msra.mxu0 %v777
  %795 = vmatpush.msra.mxu0 %v776
  %796 = vmatmul.f32.gmra.mxu0 %v733
  %v797 = vpop.f32.mrf.mxu0
  %v798 = vadd.f32 0.0, %v797
  %799 = vdwg.mxu0
  %v800 = vadd.f32 %v775, %v798
  %v801 = vxor.u32 %v800, 2147483648
  %v802 = vmul.f32 %v801, 1.442695
  %v803 = vpow.pop %v802
  %v804 = vadd.f32 %v803, 1.0
  %v805 = vrcp.pop %v804
  %v806 = vmul.f32 %v804, %v805
  %v807 = vsub.f32 1.0, %v806
  %v808 = vmul.f32 %v805, %v807
  %v809 = vadd.f32 %v805, %v808
  %vm810 = vweird.f32 %v804
  %vm811 = vweird.f32 %v805
  %vm812 = vmor %vm810, %vm811
  %v813 = vsel %vm812, %v805, %v809
  %v814 = vand.u32 2147483647, %v804
  %vm815 = vcmp.eq.f32.partialorder %v814, 8.507059e+37
  %v816 = vand.u32 %v804, 2147483648
  %v817 = vor.u32 1.1754944e-38, %v816
  %v818 = vsel %vm815, %v817, %v813
  %v819 = vmul.f32 1.0, %v818
  %v820 = vld [vmem:[%s192 + $0x2] sm:$0x3]
  %v821 = vld [vmem:[%s467] sm:$0xff]
  %v822 = vld [vmem:[%s467 + $0x8] sm:$0xff]
  %v823 = vld [vmem:[%s467 + $0x10] sm:$0xff]
  %v824 = vld [vmem:[%s467 + $0x18] sm:$0xff]
  %825 = vmatpush.msra.mxu0 0.0
  %826 = vmatpush.msra.mxu0 0.0
  %827 = vmatpush.msra.mxu0 0.0
  %828 = vmatpush.msra.mxu0 0.0
  %829 = vmatpush.msra.mxu0 0.0
  %830 = vmatpush.msra.mxu0 0.0
  %831 = vmatpush.msra.mxu0 0.0
  %832 = vmatpush.msra.mxu0 0.0
  %833 = vmatpush.msra.mxu0 0.0
  %834 = vmatpush.msra.mxu0 0.0
  %835 = vmatpush.msra.mxu0 0.0
  %836 = vmatpush.msra.mxu0 0.0
  %837 = vmatpush.msra.mxu0 %v824
  %838 = vmatpush.msra.mxu0 %v823
  %839 = vmatpush.msra.mxu0 %v822
  %840 = vmatpush.msra.mxu0 %v821
  %841 = vmatmul.f32.gmra.mxu0 %v733
  %v842 = vpop.f32.mrf.mxu0
  %v843 = vadd.f32 0.0, %v842
  %844 = vdwg.mxu0
  %v845 = vadd.f32 %v820, %v843
  %v846 = vtanh.pop %v845
  %v847 = vld [vmem:[%s226 + $0x2] sm:$0x3]
  %v848 = vld [vmem:[%s495] sm:$0xff]
  %v849 = vld [vmem:[%s495 + $0x8] sm:$0xff]
  %v850 = vld [vmem:[%s495 + $0x10] sm:$0xff]
  %v851 = vld [vmem:[%s495 + $0x18] sm:$0xff]
  %852 = vmatpush.msra.mxu0 0.0
  %853 = vmatpush.msra.mxu0 0.0
  %854 = vmatpush.msra.mxu0 0.0
  %855 = vmatpush.msra.mxu0 0.0
  %856 = vmatpush.msra.mxu0 0.0
  %857 = vmatpush.msra.mxu0 0.0
  %858 = vmatpush.msra.mxu0 0.0
  %859 = vmatpush.msra.mxu0 0.0
  %860 = vmatpush.msra.mxu0 0.0
  %861 = vmatpush.msra.mxu0 0.0
  %862 = vmatpush.msra.mxu0 0.0
  %863 = vmatpush.msra.mxu0 0.0
  %864 = vmatpush.msra.mxu0 %v851
  %865 = vmatpush.msra.mxu0 %v850
  %866 = vmatpush.msra.mxu0 %v849
  %867 = vmatpush.msra.mxu0 %v848
  %868 = vmatmul.f32.gmra.mxu0 %v733
  %v869 = vpop.f32.mrf.mxu0
  %v870 = vadd.f32 0.0, %v869
  %871 = vdwg.mxu0
  %v872 = vadd.f32 %v847, %v870
  %v873 = vxor.u32 %v872, 2147483648
  %v874 = vmul.f32 %v873, 1.442695
  %v875 = vpow.pop %v874
  %v876 = vadd.f32 %v875, 1.0
  %v877 = vrcp.pop %v876
  %v878 = vmul.f32 %v876, %v877
  %v879 = vsub.f32 1.0, %v878
  %v880 = vmul.f32 %v877, %v879
  %v881 = vadd.f32 %v877, %v880
  %vm882 = vweird.f32 %v876
  %vm883 = vweird.f32 %v877
  %vm884 = vmor %vm882, %vm883
  %v885 = vsel %vm884, %v877, %v881
  %v886 = vand.u32 2147483647, %v876
  %vm887 = vcmp.eq.f32.partialorder %v886, 8.507059e+37
  %v888 = vand.u32 %v876, 2147483648
  %v889 = vor.u32 1.1754944e-38, %v888
  %v890 = vsel %vm887, %v889, %v885
  %v891 = vmul.f32 1.0, %v890
  %v892 = vmul.f32 %v819, %v542
  %v893 = vmul.f32 %v774, %v846
  %v894 = vadd.f32 %v892, %v893
  %v895 = vtanh.pop %v894
  %v896 = vmul.f32 %v891, %v895
  %897 = vst.msk [vmem:[#allocation4 + $0x2] sm:$0x3] %vm545, %v896
  %v898 = vld [vmem:[%s260 + $0xc] sm:$0x3]
  %v899 = vld [vmem:[%s548] sm:$0xff]
  %v900 = vld [vmem:[%s548 + $0x8] sm:$0xff]
  %v901 = vld [vmem:[%s548 + $0x10] sm:$0xff]
  %v902 = vld [vmem:[%s548 + $0x18] sm:$0xff]
  %v903 = vsel %vm124, %v720, 0
  %905 = vmatpush.msra.mxu0 0.0
  %906 = vmatpush.msra.mxu0 0.0
  %907 = vmatpush.msra.mxu0 0.0
  %908 = vmatpush.msra.mxu0 0.0
  %909 = vmatpush.msra.mxu0 0.0
  %910 = vmatpush.msra.mxu0 0.0
  %911 = vmatpush.msra.mxu0 0.0
  %912 = vmatpush.msra.mxu0 0.0
  %913 = vmatpush.msra.mxu0 0.0
  %914 = vmatpush.msra.mxu0 0.0
  %915 = vmatpush.msra.mxu0 0.0
  %916 = vmatpush.msra.mxu0 0.0
  %917 = vmatpush.msra.mxu0 %v902
  %918 = vmatpush.msra.mxu0 %v901
  %919 = vmatpush.msra.mxu0 %v900
  %920 = vmatpush.msra.mxu0 %v899
  %921 = vmatmul.f32.gmra.mxu0 %v903
  %v922 = vpop.f32.mrf.mxu0
  %v923 = vadd.f32 0.0, %v922
  %924 = vdwg.mxu0
  %v925 = vadd.f32 %v898, %v923
  %v926 = vxor.u32 %v925, 2147483648
  %v927 = vmul.f32 %v926, 1.442695
  %v928 = vpow.pop %v927
  %v929 = vadd.f32 %v928, 1.0
  %v930 = vrcp.pop %v929
  %v931 = vmul.f32 %v929, %v930
  %v932 = vsub.f32 1.0, %v931
  %v933 = vmul.f32 %v930, %v932
  %v934 = vadd.f32 %v930, %v933
  %vm935 = vweird.f32 %v929
  %vm936 = vweird.f32 %v930
  %vm937 = vmor %vm935, %vm936
  %v938 = vsel %vm937, %v930, %v934
  %v939 = vand.u32 2147483647, %v929
  %vm940 = vcmp.eq.f32.partialorder %v939, 8.507059e+37
  %v941 = vand.u32 %v929, 2147483648
  %v942 = vor.u32 1.1754944e-38, %v941
  %v943 = vsel %vm940, %v942, %v938
  %v944 = vmul.f32 1.0, %v943
  %v945 = vld [vmem:[%s294 + $0xc] sm:$0x3]
  %v946 = vld [vmem:[%s597] sm:$0xff]
  %v947 = vld [vmem:[%s597 + $0x8] sm:$0xff]
  %v948 = vld [vmem:[%s597 + $0x10] sm:$0xff]
  %v949 = vld [vmem:[%s597 + $0x18] sm:$0xff]
  %950 = vmatpush.msra.mxu0 0.0
  %951 = vmatpush.msra.mxu0 0.0
  %952 = vmatpush.msra.mxu0 0.0
  %953 = vmatpush.msra.mxu0 0.0
  %954 = vmatpush.msra.mxu0 0.0
  %955 = vmatpush.msra.mxu0 0.0
  %956 = vmatpush.msra.mxu0 0.0
  %957 = vmatpush.msra.mxu0 0.0
  %958 = vmatpush.msra.mxu0 0.0
  %959 = vmatpush.msra.mxu0 0.0
  %960 = vmatpush.msra.mxu0 0.0
  %961 = vmatpush.msra.mxu0 0.0
  %962 = vmatpush.msra.mxu0 %v949
  %963 = vmatpush.msra.mxu0 %v948
  %964 = vmatpush.msra.mxu0 %v947
  %965 = vmatpush.msra.mxu0 %v946
  %966 = vmatmul.f32.gmra.mxu0 %v903
  %v967 = vpop.f32.mrf.mxu0
  %v968 = vadd.f32 0.0, %v967
  %969 = vdwg.mxu0
  %v970 = vadd.f32 %v945, %v968
  %v971 = vxor.u32 %v970, 2147483648
  %v972 = vmul.f32 %v971, 1.442695
  %v973 = vpow.pop %v972
  %v974 = vadd.f32 %v973, 1.0
  %v975 = vrcp.pop %v974
  %v976 = vmul.f32 %v974, %v975
  %v977 = vsub.f32 1.0, %v976
  %v978 = vmul.f32 %v975, %v977
  %v979 = vadd.f32 %v975, %v978
  %vm980 = vweird.f32 %v974
  %vm981 = vweird.f32 %v975
  %vm982 = vmor %vm980, %vm981
  %v983 = vsel %vm982, %v975, %v979
  %v984 = vand.u32 2147483647, %v974
  %vm985 = vcmp.eq.f32.partialorder %v984, 8.507059e+37
  %v986 = vand.u32 %v974, 2147483648
  %v987 = vor.u32 1.1754944e-38, %v986
  %v988 = vsel %vm985, %v987, %v983
  %v989 = vmul.f32 1.0, %v988
  %v990 = vld [vmem:[%s328 + $0xc] sm:$0x3]
  %v991 = vld [vmem:[%s643] sm:$0xff]
  %v992 = vld [vmem:[%s643 + $0x8] sm:$0xff]
  %v993 = vld [vmem:[%s643 + $0x10] sm:$0xff]
  %v994 = vld [vmem:[%s643 + $0x18] sm:$0xff]
  %995 = vmatpush.msra.mxu0 0.0
  %996 = vmatpush.msra.mxu0 0.0
  %997 = vmatpush.msra.mxu0 0.0
  %998 = vmatpush.msra.mxu0 0.0
  %999 = vmatpush.msra.mxu0 0.0
  %1000 = vmatpush.msra.mxu0 0.0
  %1001 = vmatpush.msra.mxu0 0.0
  %1002 = vmatpush.msra.mxu0 0.0
  %1003 = vmatpush.msra.mxu0 0.0
  %1004 = vmatpush.msra.mxu0 0.0
  %1005 = vmatpush.msra.mxu0 0.0
  %1006 = vmatpush.msra.mxu0 0.0
  %1007 = vmatpush.msra.mxu0 %v994
  %1008 = vmatpush.msra.mxu0 %v993
  %1009 = vmatpush.msra.mxu0 %v992
  %1010 = vmatpush.msra.mxu0 %v991
  %1011 = vmatmul.f32.gmra.mxu0 %v903
  %v1012 = vpop.f32.mrf.mxu0
  %v1013 = vadd.f32 0.0, %v1012
  %1014 = vdwg.mxu0
  %v1015 = vadd.f32 %v990, %v1013
  %v1016 = vtanh.pop %v1015
  %v1017 = vld [vmem:[%s362 + $0xc] sm:$0x3]
  %v1018 = vld [vmem:[%s671] sm:$0xff]
  %v1019 = vld [vmem:[%s671 + $0x8] sm:$0xff]
  %v1020 = vld [vmem:[%s671 + $0x10] sm:$0xff]
  %v1021 = vld [vmem:[%s671 + $0x18] sm:$0xff]
  %1022 = vmatpush.msra.mxu0 0.0
  %1023 = vmatpush.msra.mxu0 0.0
  %1024 = vmatpush.msra.mxu0 0.0
  %1025 = vmatpush.msra.mxu0 0.0
  %1026 = vmatpush.msra.mxu0 0.0
  %1027 = vmatpush.msra.mxu0 0.0
  %1028 = vmatpush.msra.mxu0 0.0
  %1029 = vmatpush.msra.mxu0 0.0
  %1030 = vmatpush.msra.mxu0 0.0
  %1031 = vmatpush.msra.mxu0 0.0
  %1032 = vmatpush.msra.mxu0 0.0
  %1033 = vmatpush.msra.mxu0 0.0
  %1034 = vmatpush.msra.mxu0 %v1021
  %1035 = vmatpush.msra.mxu0 %v1020
  %1036 = vmatpush.msra.mxu0 %v1019
  %1037 = vmatpush.msra.mxu0 %v1018
  %1038 = vmatmul.f32.gmra.mxu0 %v903
  %v1039 = vpop.f32.mrf.mxu0
  %v1040 = vadd.f32 0.0, %v1039
  %1041 = vdwg.mxu0
  %v1042 = vadd.f32 %v1017, %v1040
  %v1043 = vxor.u32 %v1042, 2147483648
  %v1044 = vmul.f32 %v1043, 1.442695
  %v1045 = vpow.pop %v1044
  %v1046 = vadd.f32 %v1045, 1.0
  %v1047 = vrcp.pop %v1046
  %v1048 = vmul.f32 %v1046, %v1047
  %v1049 = vsub.f32 1.0, %v1048
  %v1050 = vmul.f32 %v1047, %v1049
  %v1051 = vadd.f32 %v1047, %v1050
  %vm1052 = vweird.f32 %v1046
  %vm1053 = vweird.f32 %v1047
  %vm1054 = vmor %vm1052, %vm1053
  %v1055 = vsel %vm1054, %v1047, %v1051
  %v1056 = vand.u32 2147483647, %v1046
  %vm1057 = vcmp.eq.f32.partialorder %v1056, 8.507059e+37
  %v1058 = vand.u32 %v1046, 2147483648
  %v1059 = vor.u32 1.1754944e-38, %v1058
  %v1060 = vsel %vm1057, %v1059, %v1055
  %v1061 = vmul.f32 1.0, %v1060
  %v1062 = vmul.f32 %v989, %v718
  %v1063 = vmul.f32 %v944, %v1016
  %v1064 = vadd.f32 %v1062, %v1063
  %v1065 = vtanh.pop %v1064
  %v1066 = vmul.f32 %v1061, %v1065
  %1068 = vrot.lane.b32.xlu0 %v1066, 32
  %v1069 = vpop.permute.xlu0 %1068
  %1071 = vst.msk [vmem:[#allocation4 + $0xc] sm:$0x3] %vm725, %v1069
  %v1072 = vld [vmem:[#allocation2 + $0x4] sm:$0x3]
  %v1073 = vld [vmem:[%s3] sm:$0xff]
  %v1074 = vld [vmem:[%s3 + $0x8] sm:$0xff]
  %v1075 = vld [vmem:[%s3 + $0x10] sm:$0xff]
  %v1076 = vld [vmem:[%s3 + $0x18] sm:$0xff]
  %v1078 = vsel %vm124, %v896, 0
  %1080 = vmatpush.msra.mxu0 0.0
  %1081 = vmatpush.msra.mxu0 0.0
  %1082 = vmatpush.msra.mxu0 0.0
  %1083 = vmatpush.msra.mxu0 0.0
  %1084 = vmatpush.msra.mxu0 0.0
  %1085 = vmatpush.msra.mxu0 0.0
  %1086 = vmatpush.msra.mxu0 0.0
  %1087 = vmatpush.msra.mxu0 0.0
  %1088 = vmatpush.msra.mxu0 0.0
  %1089 = vmatpush.msra.mxu0 0.0
  %1090 = vmatpush.msra.mxu0 0.0
  %1091 = vmatpush.msra.mxu0 0.0
  %1092 = vmatpush.msra.mxu0 %v1076
  %1093 = vmatpush.msra.mxu0 %v1075
  %1094 = vmatpush.msra.mxu0 %v1074
  %1095 = vmatpush.msra.mxu0 %v1073
  %1096 = vmatmul.f32.gmra.mxu0 %v1078
  %v1097 = vpop.f32.mrf.mxu0
  %v1098 = vadd.f32 0.0, %v1097
  %1099 = vdwg.mxu0
  %v1100 = vadd.f32 %v1072, %v1098
  %v1101 = vxor.u32 %v1100, 2147483648
  %v1102 = vmul.f32 %v1101, 1.442695
  %v1103 = vpow.pop %v1102
  %v1104 = vadd.f32 %v1103, 1.0
  %v1105 = vrcp.pop %v1104
  %v1106 = vmul.f32 %v1104, %v1105
  %v1107 = vsub.f32 1.0, %v1106
  %v1108 = vmul.f32 %v1105, %v1107
  %v1109 = vadd.f32 %v1105, %v1108
  %vm1110 = vweird.f32 %v1104
  %vm1111 = vweird.f32 %v1105
  %vm1112 = vmor %vm1110, %vm1111
  %v1113 = vsel %vm1112, %v1105, %v1109
  %v1114 = vand.u32 2147483647, %v1104
  %vm1115 = vcmp.eq.f32.partialorder %v1114, 8.507059e+37
  %v1116 = vand.u32 %v1104, 2147483648
  %v1117 = vor.u32 1.1754944e-38, %v1116
  %v1118 = vsel %vm1115, %v1117, %v1113
  %v1119 = vmul.f32 1.0, %v1118
  %v1120 = vld [vmem:[%s158 + $0x4] sm:$0x3]
  %v1121 = vld [vmem:[%s421] sm:$0xff]
  %v1122 = vld [vmem:[%s421 + $0x8] sm:$0xff]
  %v1123 = vld [vmem:[%s421 + $0x10] sm:$0xff]
  %v1124 = vld [vmem:[%s421 + $0x18] sm:$0xff]
  %1125 = vmatpush.msra.mxu0 0.0
  %1126 = vmatpush.msra.mxu0 0.0
  %1127 = vmatpush.msra.mxu0 0.0
  %1128 = vmatpush.msra.mxu0 0.0
  %1129 = vmatpush.msra.mxu0 0.0
  %1130 = vmatpush.msra.mxu0 0.0
  %1131 = vmatpush.msra.mxu0 0.0
  %1132 = vmatpush.msra.mxu0 0.0
  %1133 = vmatpush.msra.mxu0 0.0
  %1134 = vmatpush.msra.mxu0 0.0
  %1135 = vmatpush.msra.mxu0 0.0
  %1136 = vmatpush.msra.mxu0 0.0
  %1137 = vmatpush.msra.mxu0 %v1124
  %1138 = vmatpush.msra.mxu0 %v1123
  %1139 = vmatpush.msra.mxu0 %v1122
  %1140 = vmatpush.msra.mxu0 %v1121
  %1141 = vmatmul.f32.gmra.mxu0 %v1078
  %v1142 = vpop.f32.mrf.mxu0
  %v1143 = vadd.f32 0.0, %v1142
  %1144 = vdwg.mxu0
  %v1145 = vadd.f32 %v1120, %v1143
  %v1146 = vxor.u32 %v1145, 2147483648
  %v1147 = vmul.f32 %v1146, 1.442695
  %v1148 = vpow.pop %v1147
  %v1149 = vadd.f32 %v1148, 1.0
  %v1150 = vrcp.pop %v1149
  %v1151 = vmul.f32 %v1149, %v1150
  %v1152 = vsub.f32 1.0, %v1151
  %v1153 = vmul.f32 %v1150, %v1152
  %v1154 = vadd.f32 %v1150, %v1153
  %vm1155 = vweird.f32 %v1149
  %vm1156 = vweird.f32 %v1150
  %vm1157 = vmor %vm1155, %vm1156
  %v1158 = vsel %vm1157, %v1150, %v1154
  %v1159 = vand.u32 2147483647, %v1149
  %vm1160 = vcmp.eq.f32.partialorder %v1159, 8.507059e+37
  %v1161 = vand.u32 %v1149, 2147483648
  %v1162 = vor.u32 1.1754944e-38, %v1161
  %v1163 = vsel %vm1160, %v1162, %v1158
  %v1164 = vmul.f32 1.0, %v1163
  %v1165 = vld [vmem:[%s192 + $0x4] sm:$0x3]
  %v1166 = vld [vmem:[%s467] sm:$0xff]
  %v1167 = vld [vmem:[%s467 + $0x8] sm:$0xff]
  %v1168 = vld [vmem:[%s467 + $0x10] sm:$0xff]
  %v1169 = vld [vmem:[%s467 + $0x18] sm:$0xff]
  %1170 = vmatpush.msra.mxu0 0.0
  %1171 = vmatpush.msra.mxu0 0.0
  %1172 = vmatpush.msra.mxu0 0.0
  %1173 = vmatpush.msra.mxu0 0.0
  %1174 = vmatpush.msra.mxu0 0.0
  %1175 = vmatpush.msra.mxu0 0.0
  %1176 = vmatpush.msra.mxu0 0.0
  %1177 = vmatpush.msra.mxu0 0.0
  %1178 = vmatpush.msra.mxu0 0.0
  %1179 = vmatpush.msra.mxu0 0.0
  %1180 = vmatpush.msra.mxu0 0.0
  %1181 = vmatpush.msra.mxu0 0.0
  %1182 = vmatpush.msra.mxu0 %v1169
  %1183 = vmatpush.msra.mxu0 %v1168
  %1184 = vmatpush.msra.mxu0 %v1167
  %1185 = vmatpush.msra.mxu0 %v1166
  %1186 = vmatmul.f32.gmra.mxu0 %v1078
  %v1187 = vpop.f32.mrf.mxu0
  %v1188 = vadd.f32 0.0, %v1187
  %1189 = vdwg.mxu0
  %v1190 = vadd.f32 %v1165, %v1188
  %v1191 = vtanh.pop %v1190
  %v1192 = vld [vmem:[%s226 + $0x4] sm:$0x3]
  %v1193 = vld [vmem:[%s495] sm:$0xff]
  %v1194 = vld [vmem:[%s495 + $0x8] sm:$0xff]
  %v1195 = vld [vmem:[%s495 + $0x10] sm:$0xff]
  %v1196 = vld [vmem:[%s495 + $0x18] sm:$0xff]
  %1197 = vmatpush.msra.mxu0 0.0
  %1198 = vmatpush.msra.mxu0 0.0
  %1199 = vmatpush.msra.mxu0 0.0
  %1200 = vmatpush.msra.mxu0 0.0
  %1201 = vmatpush.msra.mxu0 0.0
  %1202 = vmatpush.msra.mxu0 0.0
  %1203 = vmatpush.msra.mxu0 0.0
  %1204 = vmatpush.msra.mxu0 0.0
  %1205 = vmatpush.msra.mxu0 0.0
  %1206 = vmatpush.msra.mxu0 0.0
  %1207 = vmatpush.msra.mxu0 0.0
  %1208 = vmatpush.msra.mxu0 0.0
  %1209 = vmatpush.msra.mxu0 %v1196
  %1210 = vmatpush.msra.mxu0 %v1195
  %1211 = vmatpush.msra.mxu0 %v1194
  %1212 = vmatpush.msra.mxu0 %v1193
  %1213 = vmatmul.f32.gmra.mxu0 %v1078
  %v1214 = vpop.f32.mrf.mxu0
  %v1215 = vadd.f32 0.0, %v1214
  %1216 = vdwg.mxu0
  %v1217 = vadd.f32 %v1192, %v1215
  %v1218 = vxor.u32 %v1217, 2147483648
  %v1219 = vmul.f32 %v1218, 1.442695
  %v1220 = vpow.pop %v1219
  %v1221 = vadd.f32 %v1220, 1.0
  %v1222 = vrcp.pop %v1221
  %v1223 = vmul.f32 %v1221, %v1222
  %v1224 = vsub.f32 1.0, %v1223
  %v1225 = vmul.f32 %v1222, %v1224
  %v1226 = vadd.f32 %v1222, %v1225
  %vm1227 = vweird.f32 %v1221
  %vm1228 = vweird.f32 %v1222
  %vm1229 = vmor %vm1227, %vm1228
  %v1230 = vsel %vm1229, %v1222, %v1226
  %v1231 = vand.u32 2147483647, %v1221
  %vm1232 = vcmp.eq.f32.partialorder %v1231, 8.507059e+37
  %v1233 = vand.u32 %v1221, 2147483648
  %v1234 = vor.u32 1.1754944e-38, %v1233
  %v1235 = vsel %vm1232, %v1234, %v1230
  %v1236 = vmul.f32 1.0, %v1235
  %v1237 = vmul.f32 %v1164, %v894
  %v1238 = vmul.f32 %v1119, %v1191
  %v1239 = vadd.f32 %v1237, %v1238
  %v1240 = vtanh.pop %v1239
  %v1241 = vmul.f32 %v1236, %v1240
  %1242 = vst.msk [vmem:[#allocation4 + $0x4] sm:$0x3] %vm545, %v1241
  %v1243 = vld [vmem:[%s260 + $0xa] sm:$0x3]
  %v1244 = vld [vmem:[%s548] sm:$0xff]
  %v1245 = vld [vmem:[%s548 + $0x8] sm:$0xff]
  %v1246 = vld [vmem:[%s548 + $0x10] sm:$0xff]
  %v1247 = vld [vmem:[%s548 + $0x18] sm:$0xff]
  %v1248 = vsel %vm124, %v1066, 0
  %1250 = vmatpush.msra.mxu0 0.0
  %1251 = vmatpush.msra.mxu0 0.0
  %1252 = vmatpush.msra.mxu0 0.0
  %1253 = vmatpush.msra.mxu0 0.0
  %1254 = vmatpush.msra.mxu0 0.0
  %1255 = vmatpush.msra.mxu0 0.0
  %1256 = vmatpush.msra.mxu0 0.0
  %1257 = vmatpush.msra.mxu0 0.0
  %1258 = vmatpush.msra.mxu0 0.0
  %1259 = vmatpush.msra.mxu0 0.0
  %1260 = vmatpush.msra.mxu0 0.0
  %1261 = vmatpush.msra.mxu0 0.0
  %1262 = vmatpush.msra.mxu0 %v1247
  %1263 = vmatpush.msra.mxu0 %v1246
  %1264 = vmatpush.msra.mxu0 %v1245
  %1265 = vmatpush.msra.mxu0 %v1244
  %1266 = vmatmul.f32.gmra.mxu0 %v1248
  %v1267 = vpop.f32.mrf.mxu0
  %v1268 = vadd.f32 0.0, %v1267
  %1269 = vdwg.mxu0
  %v1270 = vadd.f32 %v1243, %v1268
  %v1271 = vxor.u32 %v1270, 2147483648
  %v1272 = vmul.f32 %v1271, 1.442695
  %v1273 = vpow.pop %v1272
  %v1274 = vadd.f32 %v1273, 1.0
  %v1275 = vrcp.pop %v1274
  %v1276 = vmul.f32 %v1274, %v1275
  %v1277 = vsub.f32 1.0, %v1276
  %v1278 = vmul.f32 %v1275, %v1277
  %v1279 = vadd.f32 %v1275, %v1278
  %vm1280 = vweird.f32 %v1274
  %vm1281 = vweird.f32 %v1275
  %vm1282 = vmor %vm1280, %vm1281
  %v1283 = vsel %vm1282, %v1275, %v1279
  %v1284 = vand.u32 2147483647, %v1274
  %vm1285 = vcmp.eq.f32.partialorder %v1284, 8.507059e+37
  %v1286 = vand.u32 %v1274, 2147483648
  %v1287 = vor.u32 1.1754944e-38, %v1286
  %v1288 = vsel %vm1285, %v1287, %v1283
  %v1289 = vmul.f32 1.0, %v1288
  %v1290 = vld [vmem:[%s294 + $0xa] sm:$0x3]
  %v1291 = vld [vmem:[%s597] sm:$0xff]
  %v1292 = vld [vmem:[%s597 + $0x8] sm:$0xff]
  %v1293 = vld [vmem:[%s597 + $0x10] sm:$0xff]
  %v1294 = vld [vmem:[%s597 + $0x18] sm:$0xff]
  %1295 = vmatpush.msra.mxu0 0.0
  %1296 = vmatpush.msra.mxu0 0.0
  %1297 = vmatpush.msra.mxu0 0.0
  %1298 = vmatpush.msra.mxu0 0.0
  %1299 = vmatpush.msra.mxu0 0.0
  %1300 = vmatpush.msra.mxu0 0.0
  %1301 = vmatpush.msra.mxu0 0.0
  %1302 = vmatpush.msra.mxu0 0.0
  %1303 = vmatpush.msra.mxu0 0.0
  %1304 = vmatpush.msra.mxu0 0.0
  %1305 = vmatpush.msra.mxu0 0.0
  %1306 = vmatpush.msra.mxu0 0.0
  %1307 = vmatpush.msra.mxu0 %v1294
  %1308 = vmatpush.msra.mxu0 %v1293
  %1309 = vmatpush.msra.mxu0 %v1292
  %1310 = vmatpush.msra.mxu0 %v1291
  %1311 = vmatmul.f32.gmra.mxu0 %v1248
  %v1312 = vpop.f32.mrf.mxu0
  %v1313 = vadd.f32 0.0, %v1312
  %1314 = vdwg.mxu0
  %v1315 = vadd.f32 %v1290, %v1313
  %v1316 = vxor.u32 %v1315, 2147483648
  %v1317 = vmul.f32 %v1316, 1.442695
  %v1318 = vpow.pop %v1317
  %v1319 = vadd.f32 %v1318, 1.0
  %v1320 = vrcp.pop %v1319
  %v1321 = vmul.f32 %v1319, %v1320
  %v1322 = vsub.f32 1.0, %v1321
  %v1323 = vmul.f32 %v1320, %v1322
  %v1324 = vadd.f32 %v1320, %v1323
  %vm1325 = vweird.f32 %v1319
  %vm1326 = vweird.f32 %v1320
  %vm1327 = vmor %vm1325, %vm1326
  %v1328 = vsel %vm1327, %v1320, %v1324
  %v1329 = vand.u32 2147483647, %v1319
  %vm1330 = vcmp.eq.f32.partialorder %v1329, 8.507059e+37
  %v1331 = vand.u32 %v1319, 2147483648
  %v1332 = vor.u32 1.1754944e-38, %v1331
  %v1333 = vsel %vm1330, %v1332, %v1328
  %v1334 = vmul.f32 1.0, %v1333
  %v1335 = vld [vmem:[%s328 + $0xa] sm:$0x3]
  %v1336 = vld [vmem:[%s643] sm:$0xff]
  %v1337 = vld [vmem:[%s643 + $0x8] sm:$0xff]
  %v1338 = vld [vmem:[%s643 + $0x10] sm:$0xff]
  %v1339 = vld [vmem:[%s643 + $0x18] sm:$0xff]
  %1340 = vmatpush.msra.mxu0 0.0
  %1341 = vmatpush.msra.mxu0 0.0
  %1342 = vmatpush.msra.mxu0 0.0
  %1343 = vmatpush.msra.mxu0 0.0
  %1344 = vmatpush.msra.mxu0 0.0
  %1345 = vmatpush.msra.mxu0 0.0
  %1346 = vmatpush.msra.mxu0 0.0
  %1347 = vmatpush.msra.mxu0 0.0
  %1348 = vmatpush.msra.mxu0 0.0
  %1349 = vmatpush.msra.mxu0 0.0
  %1350 = vmatpush.msra.mxu0 0.0
  %1351 = vmatpush.msra.mxu0 0.0
  %1352 = vmatpush.msra.mxu0 %v1339
  %1353 = vmatpush.msra.mxu0 %v1338
  %1354 = vmatpush.msra.mxu0 %v1337
  %1355 = vmatpush.msra.mxu0 %v1336
  %1356 = vmatmul.f32.gmra.mxu0 %v1248
  %v1357 = vpop.f32.mrf.mxu0
  %v1358 = vadd.f32 0.0, %v1357
  %1359 = vdwg.mxu0
  %v1360 = vadd.f32 %v1335, %v1358
  %v1361 = vtanh.pop %v1360
  %v1362 = vld [vmem:[%s362 + $0xa] sm:$0x3]
  %v1363 = vld [vmem:[%s671] sm:$0xff]
  %v1364 = vld [vmem:[%s671 + $0x8] sm:$0xff]
  %v1365 = vld [vmem:[%s671 + $0x10] sm:$0xff]
  %v1366 = vld [vmem:[%s671 + $0x18] sm:$0xff]
  %1367 = vmatpush.msra.mxu0 0.0
  %1368 = vmatpush.msra.mxu0 0.0
  %1369 = vmatpush.msra.mxu0 0.0
  %1370 = vmatpush.msra.mxu0 0.0
  %1371 = vmatpush.msra.mxu0 0.0
  %1372 = vmatpush.msra.mxu0 0.0
  %1373 = vmatpush.msra.mxu0 0.0
  %1374 = vmatpush.msra.mxu0 0.0
  %1375 = vmatpush.msra.mxu0 0.0
  %1376 = vmatpush.msra.mxu0 0.0
  %1377 = vmatpush.msra.mxu0 0.0
  %1378 = vmatpush.msra.mxu0 0.0
  %1379 = vmatpush.msra.mxu0 %v1366
  %1380 = vmatpush.msra.mxu0 %v1365
  %1381 = vmatpush.msra.mxu0 %v1364
  %1382 = vmatpush.msra.mxu0 %v1363
  %1383 = vmatmul.f32.gmra.mxu0 %v1248
  %v1384 = vpop.f32.mrf.mxu0
  %v1385 = vadd.f32 0.0, %v1384
  %1386 = vdwg.mxu0
  %v1387 = vadd.f32 %v1362, %v1385
  %v1388 = vxor.u32 %v1387, 2147483648
  %v1389 = vmul.f32 %v1388, 1.442695
  %v1390 = vpow.pop %v1389
  %v1391 = vadd.f32 %v1390, 1.0
  %v1392 = vrcp.pop %v1391
  %v1393 = vmul.f32 %v1391, %v1392
  %v1394 = vsub.f32 1.0, %v1393
  %v1395 = vmul.f32 %v1392, %v1394
  %v1396 = vadd.f32 %v1392, %v1395
  %vm1397 = vweird.f32 %v1391
  %vm1398 = vweird.f32 %v1392
  %vm1399 = vmor %vm1397, %vm1398
  %v1400 = vsel %vm1399, %v1392, %v1396
  %v1401 = vand.u32 2147483647, %v1391
  %vm1402 = vcmp.eq.f32.partialorder %v1401, 8.507059e+37
  %v1403 = vand.u32 %v1391, 2147483648
  %v1404 = vor.u32 1.1754944e-38, %v1403
  %v1405 = vsel %vm1402, %v1404, %v1400
  %v1406 = vmul.f32 1.0, %v1405
  %v1407 = vmul.f32 %v1334, %v1064
  %v1408 = vmul.f32 %v1289, %v1361
  %v1409 = vadd.f32 %v1407, %v1408
  %v1410 = vtanh.pop %v1409
  %v1411 = vmul.f32 %v1406, %v1410
  %1413 = vrot.lane.b32.xlu0 %v1411, 32
  %v1414 = vpop.permute.xlu0 %1413
  %1416 = vst.msk [vmem:[#allocation4 + $0xa] sm:$0x3] %vm725, %v1414
  %v1417 = vld [vmem:[#allocation2 + $0x6] sm:$0x3]
  %v1418 = vld [vmem:[%s3] sm:$0xff]
  %v1419 = vld [vmem:[%s3 + $0x8] sm:$0xff]
  %v1420 = vld [vmem:[%s3 + $0x10] sm:$0xff]
  %v1421 = vld [vmem:[%s3 + $0x18] sm:$0xff]
  %v1423 = vsel %vm124, %v1241, 0
  %1425 = vmatpush.msra.mxu0 0.0
  %1426 = vmatpush.msra.mxu0 0.0
  %1427 = vmatpush.msra.mxu0 0.0
  %1428 = vmatpush.msra.mxu0 0.0
  %1429 = vmatpush.msra.mxu0 0.0
  %1430 = vmatpush.msra.mxu0 0.0
  %1431 = vmatpush.msra.mxu0 0.0
  %1432 = vmatpush.msra.mxu0 0.0
  %1433 = vmatpush.msra.mxu0 0.0
  %1434 = vmatpush.msra.mxu0 0.0
  %1435 = vmatpush.msra.mxu0 0.0
  %1436 = vmatpush.msra.mxu0 0.0
  %1437 = vmatpush.msra.mxu0 %v1421
  %1438 = vmatpush.msra.mxu0 %v1420
  %1439 = vmatpush.msra.mxu0 %v1419
  %1440 = vmatpush.msra.mxu0 %v1418
  %1441 = vmatmul.f32.gmra.mxu0 %v1423
  %v1442 = vpop.f32.mrf.mxu0
  %v1443 = vadd.f32 0.0, %v1442
  %1444 = vdwg.mxu0
  %v1445 = vadd.f32 %v1417, %v1443
  %v1446 = vxor.u32 %v1445, 2147483648
  %v1447 = vmul.f32 %v1446, 1.442695
  %v1448 = vpow.pop %v1447
  %v1449 = vadd.f32 %v1448, 1.0
  %v1450 = vrcp.pop %v1449
  %v1451 = vmul.f32 %v1449, %v1450
  %v1452 = vsub.f32 1.0, %v1451
  %v1453 = vmul.f32 %v1450, %v1452
  %v1454 = vadd.f32 %v1450, %v1453
  %vm1455 = vweird.f32 %v1449
  %vm1456 = vweird.f32 %v1450
  %vm1457 = vmor %vm1455, %vm1456
  %v1458 = vsel %vm1457, %v1450, %v1454
  %v1459 = vand.u32 2147483647, %v1449
  %vm1460 = vcmp.eq.f32.partialorder %v1459, 8.507059e+37
  %v1461 = vand.u32 %v1449, 2147483648
  %v1462 = vor.u32 1.1754944e-38, %v1461
  %v1463 = vsel %vm1460, %v1462, %v1458
  %v1464 = vmul.f32 1.0, %v1463
  %v1465 = vld [vmem:[%s158 + $0x6] sm:$0x3]
  %v1466 = vld [vmem:[%s421] sm:$0xff]
  %v1467 = vld [vmem:[%s421 + $0x8] sm:$0xff]
  %v1468 = vld [vmem:[%s421 + $0x10] sm:$0xff]
  %v1469 = vld [vmem:[%s421 + $0x18] sm:$0xff]
  %1470 = vmatpush.msra.mxu0 0.0
  %1471 = vmatpush.msra.mxu0 0.0
  %1472 = vmatpush.msra.mxu0 0.0
  %1473 = vmatpush.msra.mxu0 0.0
  %1474 = vmatpush.msra.mxu0 0.0
  %1475 = vmatpush.msra.mxu0 0.0
  %1476 = vmatpush.msra.mxu0 0.0
  %1477 = vmatpush.msra.mxu0 0.0
  %1478 = vmatpush.msra.mxu0 0.0
  %1479 = vmatpush.msra.mxu0 0.0
  %1480 = vmatpush.msra.mxu0 0.0
  %1481 = vmatpush.msra.mxu0 0.0
  %1482 = vmatpush.msra.mxu0 %v1469
  %1483 = vmatpush.msra.mxu0 %v1468
  %1484 = vmatpush.msra.mxu0 %v1467
  %1485 = vmatpush.msra.mxu0 %v1466
  %1486 = vmatmul.f32.gmra.mxu0 %v1423
  %v1487 = vpop.f32.mrf.mxu0
  %v1488 = vadd.f32 0.0, %v1487
  %1489 = vdwg.mxu0
  %v1490 = vadd.f32 %v1465, %v1488
  %v1491 = vxor.u32 %v1490, 2147483648
  %v1492 = vmul.f32 %v1491, 1.442695
  %v1493 = vpow.pop %v1492
  %v1494 = vadd.f32 %v1493, 1.0
  %v1495 = vrcp.pop %v1494
  %v1496 = vmul.f32 %v1494, %v1495
  %v1497 = vsub.f32 1.0, %v1496
  %v1498 = vmul.f32 %v1495, %v1497
  %v1499 = vadd.f32 %v1495, %v1498
  %vm1500 = vweird.f32 %v1494
  %vm1501 = vweird.f32 %v1495
  %vm1502 = vmor %vm1500, %vm1501
  %v1503 = vsel %vm1502, %v1495, %v1499
  %v1504 = vand.u32 2147483647, %v1494
  %vm1505 = vcmp.eq.f32.partialorder %v1504, 8.507059e+37
  %v1506 = vand.u32 %v1494, 2147483648
  %v1507 = vor.u32 1.1754944e-38, %v1506
  %v1508 = vsel %vm1505, %v1507, %v1503
  %v1509 = vmul.f32 1.0, %v1508
  %v1510 = vld [vmem:[%s192 + $0x6] sm:$0x3]
  %v1511 = vld [vmem:[%s467] sm:$0xff]
  %v1512 = vld [vmem:[%s467 + $0x8] sm:$0xff]
  %v1513 = vld [vmem:[%s467 + $0x10] sm:$0xff]
  %v1514 = vld [vmem:[%s467 + $0x18] sm:$0xff]
  %1515 = vmatpush.msra.mxu0 0.0
  %1516 = vmatpush.msra.mxu0 0.0
  %1517 = vmatpush.msra.mxu0 0.0
  %1518 = vmatpush.msra.mxu0 0.0
  %1519 = vmatpush.msra.mxu0 0.0
  %1520 = vmatpush.msra.mxu0 0.0
  %1521 = vmatpush.msra.mxu0 0.0
  %1522 = vmatpush.msra.mxu0 0.0
  %1523 = vmatpush.msra.mxu0 0.0
  %1524 = vmatpush.msra.mxu0 0.0
  %1525 = vmatpush.msra.mxu0 0.0
  %1526 = vmatpush.msra.mxu0 0.0
  %1527 = vmatpush.msra.mxu0 %v1514
  %1528 = vmatpush.msra.mxu0 %v1513
  %1529 = vmatpush.msra.mxu0 %v1512
  %1530 = vmatpush.msra.mxu0 %v1511
  %1531 = vmatmul.f32.gmra.mxu0 %v1423
  %v1532 = vpop.f32.mrf.mxu0
  %v1533 = vadd.f32 0.0, %v1532
  %1534 = vdwg.mxu0
  %v1535 = vadd.f32 %v1510, %v1533
  %v1536 = vtanh.pop %v1535
  %v1537 = vld [vmem:[%s226 + $0x6] sm:$0x3]
  %v1538 = vld [vmem:[%s495] sm:$0xff]
  %v1539 = vld [vmem:[%s495 + $0x8] sm:$0xff]
  %v1540 = vld [vmem:[%s495 + $0x10] sm:$0xff]
  %v1541 = vld [vmem:[%s495 + $0x18] sm:$0xff]
  %1542 = vmatpush.msra.mxu0 0.0
  %1543 = vmatpush.msra.mxu0 0.0
  %1544 = vmatpush.msra.mxu0 0.0
  %1545 = vmatpush.msra.mxu0 0.0
  %1546 = vmatpush.msra.mxu0 0.0
  %1547 = vmatpush.msra.mxu0 0.0
  %1548 = vmatpush.msra.mxu0 0.0
  %1549 = vmatpush.msra.mxu0 0.0
  %1550 = vmatpush.msra.mxu0 0.0
  %1551 = vmatpush.msra.mxu0 0.0
  %1552 = vmatpush.msra.mxu0 0.0
  %1553 = vmatpush.msra.mxu0 0.0
  %1554 = vmatpush.msra.mxu0 %v1541
  %1555 = vmatpush.msra.mxu0 %v1540
  %1556 = vmatpush.msra.mxu0 %v1539
  %1557 = vmatpush.msra.mxu0 %v1538
  %1558 = vmatmul.f32.gmra.mxu0 %v1423
  %v1559 = vpop.f32.mrf.mxu0
  %v1560 = vadd.f32 0.0, %v1559
  %1561 = vdwg.mxu0
  %v1562 = vadd.f32 %v1537, %v1560
  %v1563 = vxor.u32 %v1562, 2147483648
  %v1564 = vmul.f32 %v1563, 1.442695
  %v1565 = vpow.pop %v1564
  %v1566 = vadd.f32 %v1565, 1.0
  %v1567 = vrcp.pop %v1566
  %v1568 = vmul.f32 %v1566, %v1567
  %v1569 = vsub.f32 1.0, %v1568
  %v1570 = vmul.f32 %v1567, %v1569
  %v1571 = vadd.f32 %v1567, %v1570
  %vm1572 = vweird.f32 %v1566
  %vm1573 = vweird.f32 %v1567
  %vm1574 = vmor %vm1572, %vm1573
  %v1575 = vsel %vm1574, %v1567, %v1571
  %v1576 = vand.u32 2147483647, %v1566
  %vm1577 = vcmp.eq.f32.partialorder %v1576, 8.507059e+37
  %v1578 = vand.u32 %v1566, 2147483648
  %v1579 = vor.u32 1.1754944e-38, %v1578
  %v1580 = vsel %vm1577, %v1579, %v1575
  %v1581 = vmul.f32 1.0, %v1580
  %v1582 = vmul.f32 %v1509, %v1239
  %v1583 = vmul.f32 %v1464, %v1536
  %v1584 = vadd.f32 %v1582, %v1583
  %v1585 = vtanh.pop %v1584
  %v1586 = vmul.f32 %v1581, %v1585
  %1587 = vst.msk [vmem:[#allocation4 + $0x6] sm:$0x3] %vm545, %v1586
  %v1588 = vld [vmem:[%s260 + $0x8] sm:$0x3]
  %v1589 = vld [vmem:[%s548] sm:$0xff]
  %v1590 = vld [vmem:[%s548 + $0x8] sm:$0xff]
  %v1591 = vld [vmem:[%s548 + $0x10] sm:$0xff]
  %v1592 = vld [vmem:[%s548 + $0x18] sm:$0xff]
  %v1593 = vsel %vm124, %v1411, 0
  %1595 = vmatpush.msra.mxu0 0.0
  %1596 = vmatpush.msra.mxu0 0.0
  %1597 = vmatpush.msra.mxu0 0.0
  %1598 = vmatpush.msra.mxu0 0.0
  %1599 = vmatpush.msra.mxu0 0.0
  %1600 = vmatpush.msra.mxu0 0.0
  %1601 = vmatpush.msra.mxu0 0.0
  %1602 = vmatpush.msra.mxu0 0.0
  %1603 = vmatpush.msra.mxu0 0.0
  %1604 = vmatpush.msra.mxu0 0.0
  %1605 = vmatpush.msra.mxu0 0.0
  %1606 = vmatpush.msra.mxu0 0.0
  %1607 = vmatpush.msra.mxu0 %v1592
  %1608 = vmatpush.msra.mxu0 %v1591
  %1609 = vmatpush.msra.mxu0 %v1590
  %1610 = vmatpush.msra.mxu0 %v1589
  %1611 = vmatmul.f32.gmra.mxu0 %v1593
  %v1612 = vpop.f32.mrf.mxu0
  %v1613 = vadd.f32 0.0, %v1612
  %1614 = vdwg.mxu0
  %v1615 = vadd.f32 %v1588, %v1613
  %v1616 = vxor.u32 %v1615, 2147483648
  %v1617 = vmul.f32 %v1616, 1.442695
  %v1618 = vpow.pop %v1617
  %v1619 = vadd.f32 %v1618, 1.0
  %v1620 = vrcp.pop %v1619
  %v1621 = vmul.f32 %v1619, %v1620
  %v1622 = vsub.f32 1.0, %v1621
  %v1623 = vmul.f32 %v1620, %v1622
  %v1624 = vadd.f32 %v1620, %v1623
  %vm1625 = vweird.f32 %v1619
  %vm1626 = vweird.f32 %v1620
  %vm1627 = vmor %vm1625, %vm1626
  %v1628 = vsel %vm1627, %v1620, %v1624
  %v1629 = vand.u32 2147483647, %v1619
  %vm1630 = vcmp.eq.f32.partialorder %v1629, 8.507059e+37
  %v1631 = vand.u32 %v1619, 2147483648
  %v1632 = vor.u32 1.1754944e-38, %v1631
  %v1633 = vsel %vm1630, %v1632, %v1628
  %v1634 = vmul.f32 1.0, %v1633
  %v1635 = vld [vmem:[%s294 + $0x8] sm:$0x3]
  %v1636 = vld [vmem:[%s597] sm:$0xff]
  %v1637 = vld [vmem:[%s597 + $0x8] sm:$0xff]
  %v1638 = vld [vmem:[%s597 + $0x10] sm:$0xff]
  %v1639 = vld [vmem:[%s597 + $0x18] sm:$0xff]
  %1640 = vmatpush.msra.mxu0 0.0
  %1641 = vmatpush.msra.mxu0 0.0
  %1642 = vmatpush.msra.mxu0 0.0
  %1643 = vmatpush.msra.mxu0 0.0
  %1644 = vmatpush.msra.mxu0 0.0
  %1645 = vmatpush.msra.mxu0 0.0
  %1646 = vmatpush.msra.mxu0 0.0
  %1647 = vmatpush.msra.mxu0 0.0
  %1648 = vmatpush.msra.mxu0 0.0
  %1649 = vmatpush.msra.mxu0 0.0
  %1650 = vmatpush.msra.mxu0 0.0
  %1651 = vmatpush.msra.mxu0 0.0
  %1652 = vmatpush.msra.mxu0 %v1639
  %1653 = vmatpush.msra.mxu0 %v1638
  %1654 = vmatpush.msra.mxu0 %v1637
  %1655 = vmatpush.msra.mxu0 %v1636
  %1656 = vmatmul.f32.gmra.mxu0 %v1593
  %v1657 = vpop.f32.mrf.mxu0
  %v1658 = vadd.f32 0.0, %v1657
  %1659 = vdwg.mxu0
  %v1660 = vadd.f32 %v1635, %v1658
  %v1661 = vxor.u32 %v1660, 2147483648
  %v1662 = vmul.f32 %v1661, 1.442695
  %v1663 = vpow.pop %v1662
  %v1664 = vadd.f32 %v1663, 1.0
  %v1665 = vrcp.pop %v1664
  %v1666 = vmul.f32 %v1664, %v1665
  %v1667 = vsub.f32 1.0, %v1666
  %v1668 = vmul.f32 %v1665, %v1667
  %v1669 = vadd.f32 %v1665, %v1668
  %vm1670 = vweird.f32 %v1664
  %vm1671 = vweird.f32 %v1665
  %vm1672 = vmor %vm1670, %vm1671
  %v1673 = vsel %vm1672, %v1665, %v1669
  %v1674 = vand.u32 2147483647, %v1664
  %vm1675 = vcmp.eq.f32.partialorder %v1674, 8.507059e+37
  %v1676 = vand.u32 %v1664, 2147483648
  %v1677 = vor.u32 1.1754944e-38, %v1676
  %v1678 = vsel %vm1675, %v1677, %v1673
  %v1679 = vmul.f32 1.0, %v1678
  %v1680 = vld [vmem:[%s328 + $0x8] sm:$0x3]
  %v1681 = vld [vmem:[%s643] sm:$0xff]
  %v1682 = vld [vmem:[%s643 + $0x8] sm:$0xff]
  %v1683 = vld [vmem:[%s643 + $0x10] sm:$0xff]
  %v1684 = vld [vmem:[%s643 + $0x18] sm:$0xff]
  %1685 = vmatpush.msra.mxu0 0.0
  %1686 = vmatpush.msra.mxu0 0.0
  %1687 = vmatpush.msra.mxu0 0.0
  %1688 = vmatpush.msra.mxu0 0.0
  %1689 = vmatpush.msra.mxu0 0.0
  %1690 = vmatpush.msra.mxu0 0.0
  %1691 = vmatpush.msra.mxu0 0.0
  %1692 = vmatpush.msra.mxu0 0.0
  %1693 = vmatpush.msra.mxu0 0.0
  %1694 = vmatpush.msra.mxu0 0.0
  %1695 = vmatpush.msra.mxu0 0.0
  %1696 = vmatpush.msra.mxu0 0.0
  %1697 = vmatpush.msra.mxu0 %v1684
  %1698 = vmatpush.msra.mxu0 %v1683
  %1699 = vmatpush.msra.mxu0 %v1682
  %1700 = vmatpush.msra.mxu0 %v1681
  %1701 = vmatmul.f32.gmra.mxu0 %v1593
  %v1702 = vpop.f32.mrf.mxu0
  %v1703 = vadd.f32 0.0, %v1702
  %1704 = vdwg.mxu0
  %v1705 = vadd.f32 %v1680, %v1703
  %v1706 = vtanh.pop %v1705
  %v1707 = vld [vmem:[%s362 + $0x8] sm:$0x3]
  %v1708 = vld [vmem:[%s671] sm:$0xff]
  %v1709 = vld [vmem:[%s671 + $0x8] sm:$0xff]
  %v1710 = vld [vmem:[%s671 + $0x10] sm:$0xff]
  %v1711 = vld [vmem:[%s671 + $0x18] sm:$0xff]
  %1712 = vmatpush.msra.mxu0 0.0
  %1713 = vmatpush.msra.mxu0 0.0
  %1714 = vmatpush.msra.mxu0 0.0
  %1715 = vmatpush.msra.mxu0 0.0
  %1716 = vmatpush.msra.mxu0 0.0
  %1717 = vmatpush.msra.mxu0 0.0
  %1718 = vmatpush.msra.mxu0 0.0
  %1719 = vmatpush.msra.mxu0 0.0
  %1720 = vmatpush.msra.mxu0 0.0
  %1721 = vmatpush.msra.mxu0 0.0
  %1722 = vmatpush.msra.mxu0 0.0
  %1723 = vmatpush.msra.mxu0 0.0
  %1724 = vmatpush.msra.mxu0 %v1711
  %1725 = vmatpush.msra.mxu0 %v1710
  %1726 = vmatpush.msra.mxu0 %v1709
  %1727 = vmatpush.msra.mxu0 %v1708
  %1728 = vmatmul.f32.gmra.mxu0 %v1593
  %v1729 = vpop.f32.mrf.mxu0
  %v1730 = vadd.f32 0.0, %v1729
  %1731 = vdwg.mxu0
  %v1732 = vadd.f32 %v1707, %v1730
  %v1733 = vxor.u32 %v1732, 2147483648
  %v1734 = vmul.f32 %v1733, 1.442695
  %v1735 = vpow.pop %v1734
  %v1736 = vadd.f32 %v1735, 1.0
  %v1737 = vrcp.pop %v1736
  %v1738 = vmul.f32 %v1736, %v1737
  %v1739 = vsub.f32 1.0, %v1738
  %v1740 = vmul.f32 %v1737, %v1739
  %v1741 = vadd.f32 %v1737, %v1740
  %vm1742 = vweird.f32 %v1736
  %vm1743 = vweird.f32 %v1737
  %vm1744 = vmor %vm1742, %vm1743
  %v1745 = vsel %vm1744, %v1737, %v1741
  %v1746 = vand.u32 2147483647, %v1736
  %vm1747 = vcmp.eq.f32.partialorder %v1746, 8.507059e+37
  %v1748 = vand.u32 %v1736, 2147483648
  %v1749 = vor.u32 1.1754944e-38, %v1748
  %v1750 = vsel %vm1747, %v1749, %v1745
  %v1751 = vmul.f32 1.0, %v1750
  %v1752 = vmul.f32 %v1679, %v1409
  %v1753 = vmul.f32 %v1634, %v1706
  %v1754 = vadd.f32 %v1752, %v1753
  %v1755 = vtanh.pop %v1754
  %v1756 = vmul.f32 %v1751, %v1755
  %1758 = vrot.lane.b32.xlu0 %v1756, 32
  %v1759 = vpop.permute.xlu0 %1758
  %1761 = vst.msk [vmem:[#allocation4 + $0x8] sm:$0x3] %vm725, %v1759
  %v1762 = vld [vmem:[#allocation2 + $0x8] sm:$0x3]
  %v1763 = vld [vmem:[%s3] sm:$0xff]
  %v1764 = vld [vmem:[%s3 + $0x8] sm:$0xff]
  %v1765 = vld [vmem:[%s3 + $0x10] sm:$0xff]
  %v1766 = vld [vmem:[%s3 + $0x18] sm:$0xff]
  %v1768 = vsel %vm124, %v1586, 0
  %1770 = vmatpush.msra.mxu0 0.0
  %1771 = vmatpush.msra.mxu0 0.0
  %1772 = vmatpush.msra.mxu0 0.0
  %1773 = vmatpush.msra.mxu0 0.0
  %1774 = vmatpush.msra.mxu0 0.0
  %1775 = vmatpush.msra.mxu0 0.0
  %1776 = vmatpush.msra.mxu0 0.0
  %1777 = vmatpush.msra.mxu0 0.0
  %1778 = vmatpush.msra.mxu0 0.0
  %1779 = vmatpush.msra.mxu0 0.0
  %1780 = vmatpush.msra.mxu0 0.0
  %1781 = vmatpush.msra.mxu0 0.0
  %1782 = vmatpush.msra.mxu0 %v1766
  %1783 = vmatpush.msra.mxu0 %v1765
  %1784 = vmatpush.msra.mxu0 %v1764
  %1785 = vmatpush.msra.mxu0 %v1763
  %1786 = vmatmul.f32.gmra.mxu0 %v1768
  %v1787 = vpop.f32.mrf.mxu0
  %v1788 = vadd.f32 0.0, %v1787
  %1789 = vdwg.mxu0
  %v1790 = vadd.f32 %v1762, %v1788
  %v1791 = vxor.u32 %v1790, 2147483648
  %v1792 = vmul.f32 %v1791, 1.442695
  %v1793 = vpow.pop %v1792
  %v1794 = vadd.f32 %v1793, 1.0
  %v1795 = vrcp.pop %v1794
  %v1796 = vmul.f32 %v1794, %v1795
  %v1797 = vsub.f32 1.0, %v1796
  %v1798 = vmul.f32 %v1795, %v1797
  %v1799 = vadd.f32 %v1795, %v1798
  %vm1800 = vweird.f32 %v1794
  %vm1801 = vweird.f32 %v1795
  %vm1802 = vmor %vm1800, %vm1801
  %v1803 = vsel %vm1802, %v1795, %v1799
  %v1804 = vand.u32 2147483647, %v1794
  %vm1805 = vcmp.eq.f32.partialorder %v1804, 8.507059e+37
  %v1806 = vand.u32 %v1794, 2147483648
  %v1807 = vor.u32 1.1754944e-38, %v1806
  %v1808 = vsel %vm1805, %v1807, %v1803
  %v1809 = vmul.f32 1.0, %v1808
  %v1810 = vld [vmem:[%s158 + $0x8] sm:$0x3]
  %v1811 = vld [vmem:[%s421] sm:$0xff]
  %v1812 = vld [vmem:[%s421 + $0x8] sm:$0xff]
  %v1813 = vld [vmem:[%s421 + $0x10] sm:$0xff]
  %v1814 = vld [vmem:[%s421 + $0x18] sm:$0xff]
  %1815 = vmatpush.msra.mxu0 0.0
  %1816 = vmatpush.msra.mxu0 0.0
  %1817 = vmatpush.msra.mxu0 0.0
  %1818 = vmatpush.msra.mxu0 0.0
  %1819 = vmatpush.msra.mxu0 0.0
  %1820 = vmatpush.msra.mxu0 0.0
  %1821 = vmatpush.msra.mxu0 0.0
  %1822 = vmatpush.msra.mxu0 0.0
  %1823 = vmatpush.msra.mxu0 0.0
  %1824 = vmatpush.msra.mxu0 0.0
  %1825 = vmatpush.msra.mxu0 0.0
  %1826 = vmatpush.msra.mxu0 0.0
  %1827 = vmatpush.msra.mxu0 %v1814
  %1828 = vmatpush.msra.mxu0 %v1813
  %1829 = vmatpush.msra.mxu0 %v1812
  %1830 = vmatpush.msra.mxu0 %v1811
  %1831 = vmatmul.f32.gmra.mxu0 %v1768
  %v1832 = vpop.f32.mrf.mxu0
  %v1833 = vadd.f32 0.0, %v1832
  %1834 = vdwg.mxu0
  %v1835 = vadd.f32 %v1810, %v1833
  %v1836 = vxor.u32 %v1835, 2147483648
  %v1837 = vmul.f32 %v1836, 1.442695
  %v1838 = vpow.pop %v1837
  %v1839 = vadd.f32 %v1838, 1.0
  %v1840 = vrcp.pop %v1839
  %v1841 = vmul.f32 %v1839, %v1840
  %v1842 = vsub.f32 1.0, %v1841
  %v1843 = vmul.f32 %v1840, %v1842
  %v1844 = vadd.f32 %v1840, %v1843
  %vm1845 = vweird.f32 %v1839
  %vm1846 = vweird.f32 %v1840
  %vm1847 = vmor %vm1845, %vm1846
  %v1848 = vsel %vm1847, %v1840, %v1844
  %v1849 = vand.u32 2147483647, %v1839
  %vm1850 = vcmp.eq.f32.partialorder %v1849, 8.507059e+37
  %v1851 = vand.u32 %v1839, 2147483648
  %v1852 = vor.u32 1.1754944e-38, %v1851
  %v1853 = vsel %vm1850, %v1852, %v1848
  %v1854 = vmul.f32 1.0, %v1853
  %v1855 = vld [vmem:[%s192 + $0x8] sm:$0x3]
  %v1856 = vld [vmem:[%s467] sm:$0xff]
  %v1857 = vld [vmem:[%s467 + $0x8] sm:$0xff]
  %v1858 = vld [vmem:[%s467 + $0x10] sm:$0xff]
  %v1859 = vld [vmem:[%s467 + $0x18] sm:$0xff]
  %1860 = vmatpush.msra.mxu0 0.0
  %1861 = vmatpush.msra.mxu0 0.0
  %1862 = vmatpush.msra.mxu0 0.0
  %1863 = vmatpush.msra.mxu0 0.0
  %1864 = vmatpush.msra.mxu0 0.0
  %1865 = vmatpush.msra.mxu0 0.0
  %1866 = vmatpush.msra.mxu0 0.0
  %1867 = vmatpush.msra.mxu0 0.0
  %1868 = vmatpush.msra.mxu0 0.0
  %1869 = vmatpush.msra.mxu0 0.0
  %1870 = vmatpush.msra.mxu0 0.0
  %1871 = vmatpush.msra.mxu0 0.0
  %1872 = vmatpush.msra.mxu0 %v1859
  %1873 = vmatpush.msra.mxu0 %v1858
  %1874 = vmatpush.msra.mxu0 %v1857
  %1875 = vmatpush.msra.mxu0 %v1856
  %1876 = vmatmul.f32.gmra.mxu0 %v1768
  %v1877 = vpop.f32.mrf.mxu0
  %v1878 = vadd.f32 0.0, %v1877
  %1879 = vdwg.mxu0
  %v1880 = vadd.f32 %v1855, %v1878
  %v1881 = vtanh.pop %v1880
  %v1882 = vld [vmem:[%s226 + $0x8] sm:$0x3]
  %v1883 = vld [vmem:[%s495] sm:$0xff]
  %v1884 = vld [vmem:[%s495 + $0x8] sm:$0xff]
  %v1885 = vld [vmem:[%s495 + $0x10] sm:$0xff]
  %v1886 = vld [vmem:[%s495 + $0x18] sm:$0xff]
  %1887 = vmatpush.msra.mxu0 0.0
  %1888 = vmatpush.msra.mxu0 0.0
  %1889 = vmatpush.msra.mxu0 0.0
  %1890 = vmatpush.msra.mxu0 0.0
  %1891 = vmatpush.msra.mxu0 0.0
  %1892 = vmatpush.msra.mxu0 0.0
  %1893 = vmatpush.msra.mxu0 0.0
  %1894 = vmatpush.msra.mxu0 0.0
  %1895 = vmatpush.msra.mxu0 0.0
  %1896 = vmatpush.msra.mxu0 0.0
  %1897 = vmatpush.msra.mxu0 0.0
  %1898 = vmatpush.msra.mxu0 0.0
  %1899 = vmatpush.msra.mxu0 %v1886
  %1900 = vmatpush.msra.mxu0 %v1885
  %1901 = vmatpush.msra.mxu0 %v1884
  %1902 = vmatpush.msra.mxu0 %v1883
  %1903 = vmatmul.f32.gmra.mxu0 %v1768
  %v1904 = vpop.f32.mrf.mxu0
  %v1905 = vadd.f32 0.0, %v1904
  %1906 = vdwg.mxu0
  %v1907 = vadd.f32 %v1882, %v1905
  %v1908 = vxor.u32 %v1907, 2147483648
  %v1909 = vmul.f32 %v1908, 1.442695
  %v1910 = vpow.pop %v1909
  %v1911 = vadd.f32 %v1910, 1.0
  %v1912 = vrcp.pop %v1911
  %v1913 = vmul.f32 %v1911, %v1912
  %v1914 = vsub.f32 1.0, %v1913
  %v1915 = vmul.f32 %v1912, %v1914
  %v1916 = vadd.f32 %v1912, %v1915
  %vm1917 = vweird.f32 %v1911
  %vm1918 = vweird.f32 %v1912
  %vm1919 = vmor %vm1917, %vm1918
  %v1920 = vsel %vm1919, %v1912, %v1916
  %v1921 = vand.u32 2147483647, %v1911
  %vm1922 = vcmp.eq.f32.partialorder %v1921, 8.507059e+37
  %v1923 = vand.u32 %v1911, 2147483648
  %v1924 = vor.u32 1.1754944e-38, %v1923
  %v1925 = vsel %vm1922, %v1924, %v1920
  %v1926 = vmul.f32 1.0, %v1925
  %v1927 = vmul.f32 %v1854, %v1584
  %v1928 = vmul.f32 %v1809, %v1881
  %v1929 = vadd.f32 %v1927, %v1928
  %v1930 = vtanh.pop %v1929
  %v1931 = vmul.f32 %v1926, %v1930
  %1932 = vst.msk [vmem:[#allocation4 + $0x8] sm:$0x3] %vm545, %v1931
  %v1933 = vld [vmem:[%s260 + $0x6] sm:$0x3]
  %v1934 = vld [vmem:[%s548] sm:$0xff]
  %v1935 = vld [vmem:[%s548 + $0x8] sm:$0xff]
  %v1936 = vld [vmem:[%s548 + $0x10] sm:$0xff]
  %v1937 = vld [vmem:[%s548 + $0x18] sm:$0xff]
  %v1938 = vsel %vm124, %v1756, 0
  %1940 = vmatpush.msra.mxu0 0.0
  %1941 = vmatpush.msra.mxu0 0.0
  %1942 = vmatpush.msra.mxu0 0.0
  %1943 = vmatpush.msra.mxu0 0.0
  %1944 = vmatpush.msra.mxu0 0.0
  %1945 = vmatpush.msra.mxu0 0.0
  %1946 = vmatpush.msra.mxu0 0.0
  %1947 = vmatpush.msra.mxu0 0.0
  %1948 = vmatpush.msra.mxu0 0.0
  %1949 = vmatpush.msra.mxu0 0.0
  %1950 = vmatpush.msra.mxu0 0.0
  %1951 = vmatpush.msra.mxu0 0.0
  %1952 = vmatpush.msra.mxu0 %v1937
  %1953 = vmatpush.msra.mxu0 %v1936
  %1954 = vmatpush.msra.mxu0 %v1935
  %1955 = vmatpush.msra.mxu0 %v1934
  %1956 = vmatmul.f32.gmra.mxu0 %v1938
  %v1957 = vpop.f32.mrf.mxu0
  %v1958 = vadd.f32 0.0, %v1957
  %1959 = vdwg.mxu0
  %v1960 = vadd.f32 %v1933, %v1958
  %v1961 = vxor.u32 %v1960, 2147483648
  %v1962 = vmul.f32 %v1961, 1.442695
  %v1963 = vpow.pop %v1962
  %v1964 = vadd.f32 %v1963, 1.0
  %v1965 = vrcp.pop %v1964
  %v1966 = vmul.f32 %v1964, %v1965
  %v1967 = vsub.f32 1.0, %v1966
  %v1968 = vmul.f32 %v1965, %v1967
  %v1969 = vadd.f32 %v1965, %v1968
  %vm1970 = vweird.f32 %v1964
  %vm1971 = vweird.f32 %v1965
  %vm1972 = vmor %vm1970, %vm1971
  %v1973 = vsel %vm1972, %v1965, %v1969
  %v1974 = vand.u32 2147483647, %v1964
  %vm1975 = vcmp.eq.f32.partialorder %v1974, 8.507059e+37
  %v1976 = vand.u32 %v1964, 2147483648
  %v1977 = vor.u32 1.1754944e-38, %v1976
  %v1978 = vsel %vm1975, %v1977, %v1973
  %v1979 = vmul.f32 1.0, %v1978
  %v1980 = vld [vmem:[%s294 + $0x6] sm:$0x3]
  %v1981 = vld [vmem:[%s597] sm:$0xff]
  %v1982 = vld [vmem:[%s597 + $0x8] sm:$0xff]
  %v1983 = vld [vmem:[%s597 + $0x10] sm:$0xff]
  %v1984 = vld [vmem:[%s597 + $0x18] sm:$0xff]
  %1985 = vmatpush.msra.mxu0 0.0
  %1986 = vmatpush.msra.mxu0 0.0
  %1987 = vmatpush.msra.mxu0 0.0
  %1988 = vmatpush.msra.mxu0 0.0
  %1989 = vmatpush.msra.mxu0 0.0
  %1990 = vmatpush.msra.mxu0 0.0
  %1991 = vmatpush.msra.mxu0 0.0
  %1992 = vmatpush.msra.mxu0 0.0
  %1993 = vmatpush.msra.mxu0 0.0
  %1994 = vmatpush.msra.mxu0 0.0
  %1995 = vmatpush.msra.mxu0 0.0
  %1996 = vmatpush.msra.mxu0 0.0
  %1997 = vmatpush.msra.mxu0 %v1984
  %1998 = vmatpush.msra.mxu0 %v1983
  %1999 = vmatpush.msra.mxu0 %v1982
  %2000 = vmatpush.msra.mxu0 %v1981
  %2001 = vmatmul.f32.gmra.mxu0 %v1938
  %v2002 = vpop.f32.mrf.mxu0
  %v2003 = vadd.f32 0.0, %v2002
  %2004 = vdwg.mxu0
  %v2005 = vadd.f32 %v1980, %v2003
  %v2006 = vxor.u32 %v2005, 2147483648
  %v2007 = vmul.f32 %v2006, 1.442695
  %v2008 = vpow.pop %v2007
  %v2009 = vadd.f32 %v2008, 1.0
  %v2010 = vrcp.pop %v2009
  %v2011 = vmul.f32 %v2009, %v2010
  %v2012 = vsub.f32 1.0, %v2011
  %v2013 = vmul.f32 %v2010, %v2012
  %v2014 = vadd.f32 %v2010, %v2013
  %vm2015 = vweird.f32 %v2009
  %vm2016 = vweird.f32 %v2010
  %vm2017 = vmor %vm2015, %vm2016
  %v2018 = vsel %vm2017, %v2010, %v2014
  %v2019 = vand.u32 2147483647, %v2009
  %vm2020 = vcmp.eq.f32.partialorder %v2019, 8.507059e+37
  %v2021 = vand.u32 %v2009, 2147483648
  %v2022 = vor.u32 1.1754944e-38, %v2021
  %v2023 = vsel %vm2020, %v2022, %v2018
  %v2024 = vmul.f32 1.0, %v2023
  %v2025 = vld [vmem:[%s328 + $0x6] sm:$0x3]
  %v2026 = vld [vmem:[%s643] sm:$0xff]
  %v2027 = vld [vmem:[%s643 + $0x8] sm:$0xff]
  %v2028 = vld [vmem:[%s643 + $0x10] sm:$0xff]
  %v2029 = vld [vmem:[%s643 + $0x18] sm:$0xff]
  %2030 = vmatpush.msra.mxu0 0.0
  %2031 = vmatpush.msra.mxu0 0.0
  %2032 = vmatpush.msra.mxu0 0.0
  %2033 = vmatpush.msra.mxu0 0.0
  %2034 = vmatpush.msra.mxu0 0.0
  %2035 = vmatpush.msra.mxu0 0.0
  %2036 = vmatpush.msra.mxu0 0.0
  %2037 = vmatpush.msra.mxu0 0.0
  %2038 = vmatpush.msra.mxu0 0.0
  %2039 = vmatpush.msra.mxu0 0.0
  %2040 = vmatpush.msra.mxu0 0.0
  %2041 = vmatpush.msra.mxu0 0.0
  %2042 = vmatpush.msra.mxu0 %v2029
  %2043 = vmatpush.msra.mxu0 %v2028
  %2044 = vmatpush.msra.mxu0 %v2027
  %2045 = vmatpush.msra.mxu0 %v2026
  %2046 = vmatmul.f32.gmra.mxu0 %v1938
  %v2047 = vpop.f32.mrf.mxu0
  %v2048 = vadd.f32 0.0, %v2047
  %2049 = vdwg.mxu0
  %v2050 = vadd.f32 %v2025, %v2048
  %v2051 = vtanh.pop %v2050
  %v2052 = vld [vmem:[%s362 + $0x6] sm:$0x3]
  %v2053 = vld [vmem:[%s671] sm:$0xff]
  %v2054 = vld [vmem:[%s671 + $0x8] sm:$0xff]
  %v2055 = vld [vmem:[%s671 + $0x10] sm:$0xff]
  %v2056 = vld [vmem:[%s671 + $0x18] sm:$0xff]
  %2057 = vmatpush.msra.mxu0 0.0
  %2058 = vmatpush.msra.mxu0 0.0
  %2059 = vmatpush.msra.mxu0 0.0
  %2060 = vmatpush.msra.mxu0 0.0
  %2061 = vmatpush.msra.mxu0 0.0
  %2062 = vmatpush.msra.mxu0 0.0
  %2063 = vmatpush.msra.mxu0 0.0
  %2064 = vmatpush.msra.mxu0 0.0
  %2065 = vmatpush.msra.mxu0 0.0
  %2066 = vmatpush.msra.mxu0 0.0
  %2067 = vmatpush.msra.mxu0 0.0
  %2068 = vmatpush.msra.mxu0 0.0
  %2069 = vmatpush.msra.mxu0 %v2056
  %2070 = vmatpush.msra.mxu0 %v2055
  %2071 = vmatpush.msra.mxu0 %v2054
  %2072 = vmatpush.msra.mxu0 %v2053
  %2073 = vmatmul.f32.gmra.mxu0 %v1938
  %v2074 = vpop.f32.mrf.mxu0
  %v2075 = vadd.f32 0.0, %v2074
  %2076 = vdwg.mxu0
  %v2077 = vadd.f32 %v2052, %v2075
  %v2078 = vxor.u32 %v2077, 2147483648
  %v2079 = vmul.f32 %v2078, 1.442695
  %v2080 = vpow.pop %v2079
  %v2081 = vadd.f32 %v2080, 1.0
  %v2082 = vrcp.pop %v2081
  %v2083 = vmul.f32 %v2081, %v2082
  %v2084 = vsub.f32 1.0, %v2083
  %v2085 = vmul.f32 %v2082, %v2084
  %v2086 = vadd.f32 %v2082, %v2085
  %vm2087 = vweird.f32 %v2081
  %vm2088 = vweird.f32 %v2082
  %vm2089 = vmor %vm2087, %vm2088
  %v2090 = vsel %vm2089, %v2082, %v2086
  %v2091 = vand.u32 2147483647, %v2081
  %vm2092 = vcmp.eq.f32.partialorder %v2091, 8.507059e+37
  %v2093 = vand.u32 %v2081, 2147483648
  %v2094 = vor.u32 1.1754944e-38, %v2093
  %v2095 = vsel %vm2092, %v2094, %v2090
  %v2096 = vmul.f32 1.0, %v2095
  %v2097 = vmul.f32 %v2024, %v1754
  %v2098 = vmul.f32 %v1979, %v2051
  %v2099 = vadd.f32 %v2097, %v2098
  %v2100 = vtanh.pop %v2099
  %v2101 = vmul.f32 %v2096, %v2100
  %2103 = vrot.lane.b32.xlu0 %v2101, 32
  %v2104 = vpop.permute.xlu0 %2103
  %2106 = vst.msk [vmem:[#allocation4 + $0x6] sm:$0x3] %vm725, %v2104
  %v2107 = vld [vmem:[#allocation2 + $0xa] sm:$0x3]
  %v2108 = vld [vmem:[%s3] sm:$0xff]
  %v2109 = vld [vmem:[%s3 + $0x8] sm:$0xff]
  %v2110 = vld [vmem:[%s3 + $0x10] sm:$0xff]
  %v2111 = vld [vmem:[%s3 + $0x18] sm:$0xff]
  %v2113 = vsel %vm124, %v1931, 0
  %2115 = vmatpush.msra.mxu0 0.0
  %2116 = vmatpush.msra.mxu0 0.0
  %2117 = vmatpush.msra.mxu0 0.0
  %2118 = vmatpush.msra.mxu0 0.0
  %2119 = vmatpush.msra.mxu0 0.0
  %2120 = vmatpush.msra.mxu0 0.0
  %2121 = vmatpush.msra.mxu0 0.0
  %2122 = vmatpush.msra.mxu0 0.0
  %2123 = vmatpush.msra.mxu0 0.0
  %2124 = vmatpush.msra.mxu0 0.0
  %2125 = vmatpush.msra.mxu0 0.0
  %2126 = vmatpush.msra.mxu0 0.0
  %2127 = vmatpush.msra.mxu0 %v2111
  %2128 = vmatpush.msra.mxu0 %v2110
  %2129 = vmatpush.msra.mxu0 %v2109
  %2130 = vmatpush.msra.mxu0 %v2108
  %2131 = vmatmul.f32.gmra.mxu0 %v2113
  %v2132 = vpop.f32.mrf.mxu0
  %v2133 = vadd.f32 0.0, %v2132
  %2134 = vdwg.mxu0
  %v2135 = vadd.f32 %v2107, %v2133
  %v2136 = vxor.u32 %v2135, 2147483648
  %v2137 = vmul.f32 %v2136, 1.442695
  %v2138 = vpow.pop %v2137
  %v2139 = vadd.f32 %v2138, 1.0
  %v2140 = vrcp.pop %v2139
  %v2141 = vmul.f32 %v2139, %v2140
  %v2142 = vsub.f32 1.0, %v2141
  %v2143 = vmul.f32 %v2140, %v2142
  %v2144 = vadd.f32 %v2140, %v2143
  %vm2145 = vweird.f32 %v2139
  %vm2146 = vweird.f32 %v2140
  %vm2147 = vmor %vm2145, %vm2146
  %v2148 = vsel %vm2147, %v2140, %v2144
  %v2149 = vand.u32 2147483647, %v2139
  %vm2150 = vcmp.eq.f32.partialorder %v2149, 8.507059e+37
  %v2151 = vand.u32 %v2139, 2147483648
  %v2152 = vor.u32 1.1754944e-38, %v2151
  %v2153 = vsel %vm2150, %v2152, %v2148
  %v2154 = vmul.f32 1.0, %v2153
  %v2155 = vld [vmem:[%s158 + $0xa] sm:$0x3]
  %v2156 = vld [vmem:[%s421] sm:$0xff]
  %v2157 = vld [vmem:[%s421 + $0x8] sm:$0xff]
  %v2158 = vld [vmem:[%s421 + $0x10] sm:$0xff]
  %v2159 = vld [vmem:[%s421 + $0x18] sm:$0xff]
  %2160 = vmatpush.msra.mxu0 0.0
  %2161 = vmatpush.msra.mxu0 0.0
  %2162 = vmatpush.msra.mxu0 0.0
  %2163 = vmatpush.msra.mxu0 0.0
  %2164 = vmatpush.msra.mxu0 0.0
  %2165 = vmatpush.msra.mxu0 0.0
  %2166 = vmatpush.msra.mxu0 0.0
  %2167 = vmatpush.msra.mxu0 0.0
  %2168 = vmatpush.msra.mxu0 0.0
  %2169 = vmatpush.msra.mxu0 0.0
  %2170 = vmatpush.msra.mxu0 0.0
  %2171 = vmatpush.msra.mxu0 0.0
  %2172 = vmatpush.msra.mxu0 %v2159
  %2173 = vmatpush.msra.mxu0 %v2158
  %2174 = vmatpush.msra.mxu0 %v2157
  %2175 = vmatpush.msra.mxu0 %v2156
  %2176 = vmatmul.f32.gmra.mxu0 %v2113
  %v2177 = vpop.f32.mrf.mxu0
  %v2178 = vadd.f32 0.0, %v2177
  %2179 = vdwg.mxu0
  %v2180 = vadd.f32 %v2155, %v2178
  %v2181 = vxor.u32 %v2180, 2147483648
  %v2182 = vmul.f32 %v2181, 1.442695
  %v2183 = vpow.pop %v2182
  %v2184 = vadd.f32 %v2183, 1.0
  %v2185 = vrcp.pop %v2184
  %v2186 = vmul.f32 %v2184, %v2185
  %v2187 = vsub.f32 1.0, %v2186
  %v2188 = vmul.f32 %v2185, %v2187
  %v2189 = vadd.f32 %v2185, %v2188
  %vm2190 = vweird.f32 %v2184
  %vm2191 = vweird.f32 %v2185
  %vm2192 = vmor %vm2190, %vm2191
  %v2193 = vsel %vm2192, %v2185, %v2189
  %v2194 = vand.u32 2147483647, %v2184
  %vm2195 = vcmp.eq.f32.partialorder %v2194, 8.507059e+37
  %v2196 = vand.u32 %v2184, 2147483648
  %v2197 = vor.u32 1.1754944e-38, %v2196
  %v2198 = vsel %vm2195, %v2197, %v2193
  %v2199 = vmul.f32 1.0, %v2198
  %v2200 = vld [vmem:[%s192 + $0xa] sm:$0x3]
  %v2201 = vld [vmem:[%s467] sm:$0xff]
  %v2202 = vld [vmem:[%s467 + $0x8] sm:$0xff]
  %v2203 = vld [vmem:[%s467 + $0x10] sm:$0xff]
  %v2204 = vld [vmem:[%s467 + $0x18] sm:$0xff]
  %2205 = vmatpush.msra.mxu0 0.0
  %2206 = vmatpush.msra.mxu0 0.0
  %2207 = vmatpush.msra.mxu0 0.0
  %2208 = vmatpush.msra.mxu0 0.0
  %2209 = vmatpush.msra.mxu0 0.0
  %2210 = vmatpush.msra.mxu0 0.0
  %2211 = vmatpush.msra.mxu0 0.0
  %2212 = vmatpush.msra.mxu0 0.0
  %2213 = vmatpush.msra.mxu0 0.0
  %2214 = vmatpush.msra.mxu0 0.0
  %2215 = vmatpush.msra.mxu0 0.0
  %2216 = vmatpush.msra.mxu0 0.0
  %2217 = vmatpush.msra.mxu0 %v2204
  %2218 = vmatpush.msra.mxu0 %v2203
  %2219 = vmatpush.msra.mxu0 %v2202
  %2220 = vmatpush.msra.mxu0 %v2201
  %2221 = vmatmul.f32.gmra.mxu0 %v2113
  %v2222 = vpop.f32.mrf.mxu0
  %v2223 = vadd.f32 0.0, %v2222
  %2224 = vdwg.mxu0
  %v2225 = vadd.f32 %v2200, %v2223
  %v2226 = vtanh.pop %v2225
  %v2227 = vld [vmem:[%s226 + $0xa] sm:$0x3]
  %v2228 = vld [vmem:[%s495] sm:$0xff]
  %v2229 = vld [vmem:[%s495 + $0x8] sm:$0xff]
  %v2230 = vld [vmem:[%s495 + $0x10] sm:$0xff]
  %v2231 = vld [vmem:[%s495 + $0x18] sm:$0xff]
  %2232 = vmatpush.msra.mxu0 0.0
  %2233 = vmatpush.msra.mxu0 0.0
  %2234 = vmatpush.msra.mxu0 0.0
  %2235 = vmatpush.msra.mxu0 0.0
  %2236 = vmatpush.msra.mxu0 0.0
  %2237 = vmatpush.msra.mxu0 0.0
  %2238 = vmatpush.msra.mxu0 0.0
  %2239 = vmatpush.msra.mxu0 0.0
  %2240 = vmatpush.msra.mxu0 0.0
  %2241 = vmatpush.msra.mxu0 0.0
  %2242 = vmatpush.msra.mxu0 0.0
  %2243 = vmatpush.msra.mxu0 0.0
  %2244 = vmatpush.msra.mxu0 %v2231
  %2245 = vmatpush.msra.mxu0 %v2230
  %2246 = vmatpush.msra.mxu0 %v2229
  %2247 = vmatpush.msra.mxu0 %v2228
  %2248 = vmatmul.f32.gmra.mxu0 %v2113
  %v2249 = vpop.f32.mrf.mxu0
  %v2250 = vadd.f32 0.0, %v2249
  %2251 = vdwg.mxu0
  %v2252 = vadd.f32 %v2227, %v2250
  %v2253 = vxor.u32 %v2252, 2147483648
  %v2254 = vmul.f32 %v2253, 1.442695
  %v2255 = vpow.pop %v2254
  %v2256 = vadd.f32 %v2255, 1.0
  %v2257 = vrcp.pop %v2256
  %v2258 = vmul.f32 %v2256, %v2257
  %v2259 = vsub.f32 1.0, %v2258
  %v2260 = vmul.f32 %v2257, %v2259
  %v2261 = vadd.f32 %v2257, %v2260
  %vm2262 = vweird.f32 %v2256
  %vm2263 = vweird.f32 %v2257
  %vm2264 = vmor %vm2262, %vm2263
  %v2265 = vsel %vm2264, %v2257, %v2261
  %v2266 = vand.u32 2147483647, %v2256
  %vm2267 = vcmp.eq.f32.partialorder %v2266, 8.507059e+37
  %v2268 = vand.u32 %v2256, 2147483648
  %v2269 = vor.u32 1.1754944e-38, %v2268
  %v2270 = vsel %vm2267, %v2269, %v2265
  %v2271 = vmul.f32 1.0, %v2270
  %v2272 = vmul.f32 %v2199, %v1929
  %v2273 = vmul.f32 %v2154, %v2226
  %v2274 = vadd.f32 %v2272, %v2273
  %v2275 = vtanh.pop %v2274
  %v2276 = vmul.f32 %v2271, %v2275
  %2277 = vst.msk [vmem:[#allocation4 + $0xa] sm:$0x3] %vm545, %v2276
  %v2278 = vld [vmem:[%s260 + $0x4] sm:$0x3]
  %v2279 = vld [vmem:[%s548] sm:$0xff]
  %v2280 = vld [vmem:[%s548 + $0x8] sm:$0xff]
  %v2281 = vld [vmem:[%s548 + $0x10] sm:$0xff]
  %v2282 = vld [vmem:[%s548 + $0x18] sm:$0xff]
  %v2283 = vsel %vm124, %v2101, 0
  %2285 = vmatpush.msra.mxu0 0.0
  %2286 = vmatpush.msra.mxu0 0.0
  %2287 = vmatpush.msra.mxu0 0.0
  %2288 = vmatpush.msra.mxu0 0.0
  %2289 = vmatpush.msra.mxu0 0.0
  %2290 = vmatpush.msra.mxu0 0.0
  %2291 = vmatpush.msra.mxu0 0.0
  %2292 = vmatpush.msra.mxu0 0.0
  %2293 = vmatpush.msra.mxu0 0.0
  %2294 = vmatpush.msra.mxu0 0.0
  %2295 = vmatpush.msra.mxu0 0.0
  %2296 = vmatpush.msra.mxu0 0.0
  %2297 = vmatpush.msra.mxu0 %v2282
  %2298 = vmatpush.msra.mxu0 %v2281
  %2299 = vmatpush.msra.mxu0 %v2280
  %2300 = vmatpush.msra.mxu0 %v2279
  %2301 = vmatmul.f32.gmra.mxu0 %v2283
  %v2302 = vpop.f32.mrf.mxu0
  %v2303 = vadd.f32 0.0, %v2302
  %2304 = vdwg.mxu0
  %v2305 = vadd.f32 %v2278, %v2303
  %v2306 = vxor.u32 %v2305, 2147483648
  %v2307 = vmul.f32 %v2306, 1.442695
  %v2308 = vpow.pop %v2307
  %v2309 = vadd.f32 %v2308, 1.0
  %v2310 = vrcp.pop %v2309
  %v2311 = vmul.f32 %v2309, %v2310
  %v2312 = vsub.f32 1.0, %v2311
  %v2313 = vmul.f32 %v2310, %v2312
  %v2314 = vadd.f32 %v2310, %v2313
  %vm2315 = vweird.f32 %v2309
  %vm2316 = vweird.f32 %v2310
  %vm2317 = vmor %vm2315, %vm2316
  %v2318 = vsel %vm2317, %v2310, %v2314
  %v2319 = vand.u32 2147483647, %v2309
  %vm2320 = vcmp.eq.f32.partialorder %v2319, 8.507059e+37
  %v2321 = vand.u32 %v2309, 2147483648
  %v2322 = vor.u32 1.1754944e-38, %v2321
  %v2323 = vsel %vm2320, %v2322, %v2318
  %v2324 = vmul.f32 1.0, %v2323
  %v2325 = vld [vmem:[%s294 + $0x4] sm:$0x3]
  %v2326 = vld [vmem:[%s597] sm:$0xff]
  %v2327 = vld [vmem:[%s597 + $0x8] sm:$0xff]
  %v2328 = vld [vmem:[%s597 + $0x10] sm:$0xff]
  %v2329 = vld [vmem:[%s597 + $0x18] sm:$0xff]
  %2330 = vmatpush.msra.mxu0 0.0
  %2331 = vmatpush.msra.mxu0 0.0
  %2332 = vmatpush.msra.mxu0 0.0
  %2333 = vmatpush.msra.mxu0 0.0
  %2334 = vmatpush.msra.mxu0 0.0
  %2335 = vmatpush.msra.mxu0 0.0
  %2336 = vmatpush.msra.mxu0 0.0
  %2337 = vmatpush.msra.mxu0 0.0
  %2338 = vmatpush.msra.mxu0 0.0
  %2339 = vmatpush.msra.mxu0 0.0
  %2340 = vmatpush.msra.mxu0 0.0
  %2341 = vmatpush.msra.mxu0 0.0
  %2342 = vmatpush.msra.mxu0 %v2329
  %2343 = vmatpush.msra.mxu0 %v2328
  %2344 = vmatpush.msra.mxu0 %v2327
  %2345 = vmatpush.msra.mxu0 %v2326
  %2346 = vmatmul.f32.gmra.mxu0 %v2283
  %v2347 = vpop.f32.mrf.mxu0
  %v2348 = vadd.f32 0.0, %v2347
  %2349 = vdwg.mxu0
  %v2350 = vadd.f32 %v2325, %v2348
  %v2351 = vxor.u32 %v2350, 2147483648
  %v2352 = vmul.f32 %v2351, 1.442695
  %v2353 = vpow.pop %v2352
  %v2354 = vadd.f32 %v2353, 1.0
  %v2355 = vrcp.pop %v2354
  %v2356 = vmul.f32 %v2354, %v2355
  %v2357 = vsub.f32 1.0, %v2356
  %v2358 = vmul.f32 %v2355, %v2357
  %v2359 = vadd.f32 %v2355, %v2358
  %vm2360 = vweird.f32 %v2354
  %vm2361 = vweird.f32 %v2355
  %vm2362 = vmor %vm2360, %vm2361
  %v2363 = vsel %vm2362, %v2355, %v2359
  %v2364 = vand.u32 2147483647, %v2354
  %vm2365 = vcmp.eq.f32.partialorder %v2364, 8.507059e+37
  %v2366 = vand.u32 %v2354, 2147483648
  %v2367 = vor.u32 1.1754944e-38, %v2366
  %v2368 = vsel %vm2365, %v2367, %v2363
  %v2369 = vmul.f32 1.0, %v2368
  %v2370 = vld [vmem:[%s328 + $0x4] sm:$0x3]
  %v2371 = vld [vmem:[%s643] sm:$0xff]
  %v2372 = vld [vmem:[%s643 + $0x8] sm:$0xff]
  %v2373 = vld [vmem:[%s643 + $0x10] sm:$0xff]
  %v2374 = vld [vmem:[%s643 + $0x18] sm:$0xff]
  %2375 = vmatpush.msra.mxu0 0.0
  %2376 = vmatpush.msra.mxu0 0.0
  %2377 = vmatpush.msra.mxu0 0.0
  %2378 = vmatpush.msra.mxu0 0.0
  %2379 = vmatpush.msra.mxu0 0.0
  %2380 = vmatpush.msra.mxu0 0.0
  %2381 = vmatpush.msra.mxu0 0.0
  %2382 = vmatpush.msra.mxu0 0.0
  %2383 = vmatpush.msra.mxu0 0.0
  %2384 = vmatpush.msra.mxu0 0.0
  %2385 = vmatpush.msra.mxu0 0.0
  %2386 = vmatpush.msra.mxu0 0.0
  %2387 = vmatpush.msra.mxu0 %v2374
  %2388 = vmatpush.msra.mxu0 %v2373
  %2389 = vmatpush.msra.mxu0 %v2372
  %2390 = vmatpush.msra.mxu0 %v2371
  %2391 = vmatmul.f32.gmra.mxu0 %v2283
  %v2392 = vpop.f32.mrf.mxu0
  %v2393 = vadd.f32 0.0, %v2392
  %2394 = vdwg.mxu0
  %v2395 = vadd.f32 %v2370, %v2393
  %v2396 = vtanh.pop %v2395
  %v2397 = vld [vmem:[%s362 + $0x4] sm:$0x3]
  %v2398 = vld [vmem:[%s671] sm:$0xff]
  %v2399 = vld [vmem:[%s671 + $0x8] sm:$0xff]
  %v2400 = vld [vmem:[%s671 + $0x10] sm:$0xff]
  %v2401 = vld [vmem:[%s671 + $0x18] sm:$0xff]
  %2402 = vmatpush.msra.mxu0 0.0
  %2403 = vmatpush.msra.mxu0 0.0
  %2404 = vmatpush.msra.mxu0 0.0
  %2405 = vmatpush.msra.mxu0 0.0
  %2406 = vmatpush.msra.mxu0 0.0
  %2407 = vmatpush.msra.mxu0 0.0
  %2408 = vmatpush.msra.mxu0 0.0
  %2409 = vmatpush.msra.mxu0 0.0
  %2410 = vmatpush.msra.mxu0 0.0
  %2411 = vmatpush.msra.mxu0 0.0
  %2412 = vmatpush.msra.mxu0 0.0
  %2413 = vmatpush.msra.mxu0 0.0
  %2414 = vmatpush.msra.mxu0 %v2401
  %2415 = vmatpush.msra.mxu0 %v2400
  %2416 = vmatpush.msra.mxu0 %v2399
  %2417 = vmatpush.msra.mxu0 %v2398
  %2418 = vmatmul.f32.gmra.mxu0 %v2283
  %v2419 = vpop.f32.mrf.mxu0
  %v2420 = vadd.f32 0.0, %v2419
  %2421 = vdwg.mxu0
  %v2422 = vadd.f32 %v2397, %v2420
  %v2423 = vxor.u32 %v2422, 2147483648
  %v2424 = vmul.f32 %v2423, 1.442695
  %v2425 = vpow.pop %v2424
  %v2426 = vadd.f32 %v2425, 1.0
  %v2427 = vrcp.pop %v2426
  %v2428 = vmul.f32 %v2426, %v2427
  %v2429 = vsub.f32 1.0, %v2428
  %v2430 = vmul.f32 %v2427, %v2429
  %v2431 = vadd.f32 %v2427, %v2430
  %vm2432 = vweird.f32 %v2426
  %vm2433 = vweird.f32 %v2427
  %vm2434 = vmor %vm2432, %vm2433
  %v2435 = vsel %vm2434, %v2427, %v2431
  %v2436 = vand.u32 2147483647, %v2426
  %vm2437 = vcmp.eq.f32.partialorder %v2436, 8.507059e+37
  %v2438 = vand.u32 %v2426, 2147483648
  %v2439 = vor.u32 1.1754944e-38, %v2438
  %v2440 = vsel %vm2437, %v2439, %v2435
  %v2441 = vmul.f32 1.0, %v2440
  %v2442 = vmul.f32 %v2369, %v2099
  %v2443 = vmul.f32 %v2324, %v2396
  %v2444 = vadd.f32 %v2442, %v2443
  %v2445 = vtanh.pop %v2444
  %v2446 = vmul.f32 %v2441, %v2445
  %2448 = vrot.lane.b32.xlu0 %v2446, 32
  %v2449 = vpop.permute.xlu0 %2448
  %2451 = vst.msk [vmem:[#allocation4 + $0x4] sm:$0x3] %vm725, %v2449
  %v2452 = vld [vmem:[#allocation2 + $0xc] sm:$0x3]
  %v2453 = vld [vmem:[%s3] sm:$0xff]
  %v2454 = vld [vmem:[%s3 + $0x8] sm:$0xff]
  %v2455 = vld [vmem:[%s3 + $0x10] sm:$0xff]
  %v2456 = vld [vmem:[%s3 + $0x18] sm:$0xff]
  %v2458 = vsel %vm124, %v2276, 0
  %2460 = vmatpush.msra.mxu0 0.0
  %2461 = vmatpush.msra.mxu0 0.0
  %2462 = vmatpush.msra.mxu0 0.0
  %2463 = vmatpush.msra.mxu0 0.0
  %2464 = vmatpush.msra.mxu0 0.0
  %2465 = vmatpush.msra.mxu0 0.0
  %2466 = vmatpush.msra.mxu0 0.0
  %2467 = vmatpush.msra.mxu0 0.0
  %2468 = vmatpush.msra.mxu0 0.0
  %2469 = vmatpush.msra.mxu0 0.0
  %2470 = vmatpush.msra.mxu0 0.0
  %2471 = vmatpush.msra.mxu0 0.0
  %2472 = vmatpush.msra.mxu0 %v2456
  %2473 = vmatpush.msra.mxu0 %v2455
  %2474 = vmatpush.msra.mxu0 %v2454
  %2475 = vmatpush.msra.mxu0 %v2453
  %2476 = vmatmul.f32.gmra.mxu0 %v2458
  %v2477 = vpop.f32.mrf.mxu0
  %v2478 = vadd.f32 0.0, %v2477
  %2479 = vdwg.mxu0
  %v2480 = vadd.f32 %v2452, %v2478
  %v2481 = vxor.u32 %v2480, 2147483648
  %v2482 = vmul.f32 %v2481, 1.442695
  %v2483 = vpow.pop %v2482
  %v2484 = vadd.f32 %v2483, 1.0
  %v2485 = vrcp.pop %v2484
  %v2486 = vmul.f32 %v2484, %v2485
  %v2487 = vsub.f32 1.0, %v2486
  %v2488 = vmul.f32 %v2485, %v2487
  %v2489 = vadd.f32 %v2485, %v2488
  %vm2490 = vweird.f32 %v2484
  %vm2491 = vweird.f32 %v2485
  %vm2492 = vmor %vm2490, %vm2491
  %v2493 = vsel %vm2492, %v2485, %v2489
  %v2494 = vand.u32 2147483647, %v2484
  %vm2495 = vcmp.eq.f32.partialorder %v2494, 8.507059e+37
  %v2496 = vand.u32 %v2484, 2147483648
  %v2497 = vor.u32 1.1754944e-38, %v2496
  %v2498 = vsel %vm2495, %v2497, %v2493
  %v2499 = vmul.f32 1.0, %v2498
  %v2500 = vld [vmem:[%s158 + $0xc] sm:$0x3]
  %v2501 = vld [vmem:[%s421] sm:$0xff]
  %v2502 = vld [vmem:[%s421 + $0x8] sm:$0xff]
  %v2503 = vld [vmem:[%s421 + $0x10] sm:$0xff]
  %v2504 = vld [vmem:[%s421 + $0x18] sm:$0xff]
  %2505 = vmatpush.msra.mxu0 0.0
  %2506 = vmatpush.msra.mxu0 0.0
  %2507 = vmatpush.msra.mxu0 0.0
  %2508 = vmatpush.msra.mxu0 0.0
  %2509 = vmatpush.msra.mxu0 0.0
  %2510 = vmatpush.msra.mxu0 0.0
  %2511 = vmatpush.msra.mxu0 0.0
  %2512 = vmatpush.msra.mxu0 0.0
  %2513 = vmatpush.msra.mxu0 0.0
  %2514 = vmatpush.msra.mxu0 0.0
  %2515 = vmatpush.msra.mxu0 0.0
  %2516 = vmatpush.msra.mxu0 0.0
  %2517 = vmatpush.msra.mxu0 %v2504
  %2518 = vmatpush.msra.mxu0 %v2503
  %2519 = vmatpush.msra.mxu0 %v2502
  %2520 = vmatpush.msra.mxu0 %v2501
  %2521 = vmatmul.f32.gmra.mxu0 %v2458
  %v2522 = vpop.f32.mrf.mxu0
  %v2523 = vadd.f32 0.0, %v2522
  %2524 = vdwg.mxu0
  %v2525 = vadd.f32 %v2500, %v2523
  %v2526 = vxor.u32 %v2525, 2147483648
  %v2527 = vmul.f32 %v2526, 1.442695
  %v2528 = vpow.pop %v2527
  %v2529 = vadd.f32 %v2528, 1.0
  %v2530 = vrcp.pop %v2529
  %v2531 = vmul.f32 %v2529, %v2530
  %v2532 = vsub.f32 1.0, %v2531
  %v2533 = vmul.f32 %v2530, %v2532
  %v2534 = vadd.f32 %v2530, %v2533
  %vm2535 = vweird.f32 %v2529
  %vm2536 = vweird.f32 %v2530
  %vm2537 = vmor %vm2535, %vm2536
  %v2538 = vsel %vm2537, %v2530, %v2534
  %v2539 = vand.u32 2147483647, %v2529
  %vm2540 = vcmp.eq.f32.partialorder %v2539, 8.507059e+37
  %v2541 = vand.u32 %v2529, 2147483648
  %v2542 = vor.u32 1.1754944e-38, %v2541
  %v2543 = vsel %vm2540, %v2542, %v2538
  %v2544 = vmul.f32 1.0, %v2543
  %v2545 = vld [vmem:[%s192 + $0xc] sm:$0x3]
  %v2546 = vld [vmem:[%s467] sm:$0xff]
  %v2547 = vld [vmem:[%s467 + $0x8] sm:$0xff]
  %v2548 = vld [vmem:[%s467 + $0x10] sm:$0xff]
  %v2549 = vld [vmem:[%s467 + $0x18] sm:$0xff]
  %2550 = vmatpush.msra.mxu0 0.0
  %2551 = vmatpush.msra.mxu0 0.0
  %2552 = vmatpush.msra.mxu0 0.0
  %2553 = vmatpush.msra.mxu0 0.0
  %2554 = vmatpush.msra.mxu0 0.0
  %2555 = vmatpush.msra.mxu0 0.0
  %2556 = vmatpush.msra.mxu0 0.0
  %2557 = vmatpush.msra.mxu0 0.0
  %2558 = vmatpush.msra.mxu0 0.0
  %2559 = vmatpush.msra.mxu0 0.0
  %2560 = vmatpush.msra.mxu0 0.0
  %2561 = vmatpush.msra.mxu0 0.0
  %2562 = vmatpush.msra.mxu0 %v2549
  %2563 = vmatpush.msra.mxu0 %v2548
  %2564 = vmatpush.msra.mxu0 %v2547
  %2565 = vmatpush.msra.mxu0 %v2546
  %2566 = vmatmul.f32.gmra.mxu0 %v2458
  %v2567 = vpop.f32.mrf.mxu0
  %v2568 = vadd.f32 0.0, %v2567
  %2569 = vdwg.mxu0
  %v2570 = vadd.f32 %v2545, %v2568
  %v2571 = vtanh.pop %v2570
  %v2572 = vld [vmem:[%s226 + $0xc] sm:$0x3]
  %v2573 = vld [vmem:[%s495] sm:$0xff]
  %v2574 = vld [vmem:[%s495 + $0x8] sm:$0xff]
  %v2575 = vld [vmem:[%s495 + $0x10] sm:$0xff]
  %v2576 = vld [vmem:[%s495 + $0x18] sm:$0xff]
  %2577 = vmatpush.msra.mxu0 0.0
  %2578 = vmatpush.msra.mxu0 0.0
  %2579 = vmatpush.msra.mxu0 0.0
  %2580 = vmatpush.msra.mxu0 0.0
  %2581 = vmatpush.msra.mxu0 0.0
  %2582 = vmatpush.msra.mxu0 0.0
  %2583 = vmatpush.msra.mxu0 0.0
  %2584 = vmatpush.msra.mxu0 0.0
  %2585 = vmatpush.msra.mxu0 0.0
  %2586 = vmatpush.msra.mxu0 0.0
  %2587 = vmatpush.msra.mxu0 0.0
  %2588 = vmatpush.msra.mxu0 0.0
  %2589 = vmatpush.msra.mxu0 %v2576
  %2590 = vmatpush.msra.mxu0 %v2575
  %2591 = vmatpush.msra.mxu0 %v2574
  %2592 = vmatpush.msra.mxu0 %v2573
  %2593 = vmatmul.f32.gmra.mxu0 %v2458
  %v2594 = vpop.f32.mrf.mxu0
  %v2595 = vadd.f32 0.0, %v2594
  %2596 = vdwg.mxu0
  %v2597 = vadd.f32 %v2572, %v2595
  %v2598 = vxor.u32 %v2597, 2147483648
  %v2599 = vmul.f32 %v2598, 1.442695
  %v2600 = vpow.pop %v2599
  %v2601 = vadd.f32 %v2600, 1.0
  %v2602 = vrcp.pop %v2601
  %v2603 = vmul.f32 %v2601, %v2602
  %v2604 = vsub.f32 1.0, %v2603
  %v2605 = vmul.f32 %v2602, %v2604
  %v2606 = vadd.f32 %v2602, %v2605
  %vm2607 = vweird.f32 %v2601
  %vm2608 = vweird.f32 %v2602
  %vm2609 = vmor %vm2607, %vm2608
  %v2610 = vsel %vm2609, %v2602, %v2606
  %v2611 = vand.u32 2147483647, %v2601
  %vm2612 = vcmp.eq.f32.partialorder %v2611, 8.507059e+37
  %v2613 = vand.u32 %v2601, 2147483648
  %v2614 = vor.u32 1.1754944e-38, %v2613
  %v2615 = vsel %vm2612, %v2614, %v2610
  %v2616 = vmul.f32 1.0, %v2615
  %v2617 = vmul.f32 %v2544, %v2274
  %v2618 = vmul.f32 %v2499, %v2571
  %v2619 = vadd.f32 %v2617, %v2618
  %v2620 = vtanh.pop %v2619
  %v2621 = vmul.f32 %v2616, %v2620
  %2622 = vst.msk [vmem:[#allocation4 + $0xc] sm:$0x3] %vm545, %v2621
  %v2623 = vld [vmem:[%s260 + $0x2] sm:$0x3]
  %v2624 = vld [vmem:[%s548] sm:$0xff]
  %v2625 = vld [vmem:[%s548 + $0x8] sm:$0xff]
  %v2626 = vld [vmem:[%s548 + $0x10] sm:$0xff]
  %v2627 = vld [vmem:[%s548 + $0x18] sm:$0xff]
  %v2628 = vsel %vm124, %v2446, 0
  %2630 = vmatpush.msra.mxu0 0.0
  %2631 = vmatpush.msra.mxu0 0.0
  %2632 = vmatpush.msra.mxu0 0.0
  %2633 = vmatpush.msra.mxu0 0.0
  %2634 = vmatpush.msra.mxu0 0.0
  %2635 = vmatpush.msra.mxu0 0.0
  %2636 = vmatpush.msra.mxu0 0.0
  %2637 = vmatpush.msra.mxu0 0.0
  %2638 = vmatpush.msra.mxu0 0.0
  %2639 = vmatpush.msra.mxu0 0.0
  %2640 = vmatpush.msra.mxu0 0.0
  %2641 = vmatpush.msra.mxu0 0.0
  %2642 = vmatpush.msra.mxu0 %v2627
  %2643 = vmatpush.msra.mxu0 %v2626
  %2644 = vmatpush.msra.mxu0 %v2625
  %2645 = vmatpush.msra.mxu0 %v2624
  %2646 = vmatmul.f32.gmra.mxu0 %v2628
  %v2647 = vpop.f32.mrf.mxu0
  %v2648 = vadd.f32 0.0, %v2647
  %2649 = vdwg.mxu0
  %v2650 = vadd.f32 %v2623, %v2648
  %v2651 = vxor.u32 %v2650, 2147483648
  %v2652 = vmul.f32 %v2651, 1.442695
  %v2653 = vpow.pop %v2652
  %v2654 = vadd.f32 %v2653, 1.0
  %v2655 = vrcp.pop %v2654
  %v2656 = vmul.f32 %v2654, %v2655
  %v2657 = vsub.f32 1.0, %v2656
  %v2658 = vmul.f32 %v2655, %v2657
  %v2659 = vadd.f32 %v2655, %v2658
  %vm2660 = vweird.f32 %v2654
  %vm2661 = vweird.f32 %v2655
  %vm2662 = vmor %vm2660, %vm2661
  %v2663 = vsel %vm2662, %v2655, %v2659
  %v2664 = vand.u32 2147483647, %v2654
  %vm2665 = vcmp.eq.f32.partialorder %v2664, 8.507059e+37
  %v2666 = vand.u32 %v2654, 2147483648
  %v2667 = vor.u32 1.1754944e-38, %v2666
  %v2668 = vsel %vm2665, %v2667, %v2663
  %v2669 = vmul.f32 1.0, %v2668
  %v2670 = vld [vmem:[%s294 + $0x2] sm:$0x3]
  %v2671 = vld [vmem:[%s597] sm:$0xff]
  %v2672 = vld [vmem:[%s597 + $0x8] sm:$0xff]
  %v2673 = vld [vmem:[%s597 + $0x10] sm:$0xff]
  %v2674 = vld [vmem:[%s597 + $0x18] sm:$0xff]
  %2675 = vmatpush.msra.mxu0 0.0
  %2676 = vmatpush.msra.mxu0 0.0
  %2677 = vmatpush.msra.mxu0 0.0
  %2678 = vmatpush.msra.mxu0 0.0
  %2679 = vmatpush.msra.mxu0 0.0
  %2680 = vmatpush.msra.mxu0 0.0
  %2681 = vmatpush.msra.mxu0 0.0
  %2682 = vmatpush.msra.mxu0 0.0
  %2683 = vmatpush.msra.mxu0 0.0
  %2684 = vmatpush.msra.mxu0 0.0
  %2685 = vmatpush.msra.mxu0 0.0
  %2686 = vmatpush.msra.mxu0 0.0
  %2687 = vmatpush.msra.mxu0 %v2674
  %2688 = vmatpush.msra.mxu0 %v2673
  %2689 = vmatpush.msra.mxu0 %v2672
  %2690 = vmatpush.msra.mxu0 %v2671
  %2691 = vmatmul.f32.gmra.mxu0 %v2628
  %v2692 = vpop.f32.mrf.mxu0
  %v2693 = vadd.f32 0.0, %v2692
  %2694 = vdwg.mxu0
  %v2695 = vadd.f32 %v2670, %v2693
  %v2696 = vxor.u32 %v2695, 2147483648
  %v2697 = vmul.f32 %v2696, 1.442695
  %v2698 = vpow.pop %v2697
  %v2699 = vadd.f32 %v2698, 1.0
  %v2700 = vrcp.pop %v2699
  %v2701 = vmul.f32 %v2699, %v2700
  %v2702 = vsub.f32 1.0, %v2701
  %v2703 = vmul.f32 %v2700, %v2702
  %v2704 = vadd.f32 %v2700, %v2703
  %vm2705 = vweird.f32 %v2699
  %vm2706 = vweird.f32 %v2700
  %vm2707 = vmor %vm2705, %vm2706
  %v2708 = vsel %vm2707, %v2700, %v2704
  %v2709 = vand.u32 2147483647, %v2699
  %vm2710 = vcmp.eq.f32.partialorder %v2709, 8.507059e+37
  %v2711 = vand.u32 %v2699, 2147483648
  %v2712 = vor.u32 1.1754944e-38, %v2711
  %v2713 = vsel %vm2710, %v2712, %v2708
  %v2714 = vmul.f32 1.0, %v2713
  %v2715 = vld [vmem:[%s328 + $0x2] sm:$0x3]
  %v2716 = vld [vmem:[%s643] sm:$0xff]
  %v2717 = vld [vmem:[%s643 + $0x8] sm:$0xff]
  %v2718 = vld [vmem:[%s643 + $0x10] sm:$0xff]
  %v2719 = vld [vmem:[%s643 + $0x18] sm:$0xff]
  %2720 = vmatpush.msra.mxu0 0.0
  %2721 = vmatpush.msra.mxu0 0.0
  %2722 = vmatpush.msra.mxu0 0.0
  %2723 = vmatpush.msra.mxu0 0.0
  %2724 = vmatpush.msra.mxu0 0.0
  %2725 = vmatpush.msra.mxu0 0.0
  %2726 = vmatpush.msra.mxu0 0.0
  %2727 = vmatpush.msra.mxu0 0.0
  %2728 = vmatpush.msra.mxu0 0.0
  %2729 = vmatpush.msra.mxu0 0.0
  %2730 = vmatpush.msra.mxu0 0.0
  %2731 = vmatpush.msra.mxu0 0.0
  %2732 = vmatpush.msra.mxu0 %v2719
  %2733 = vmatpush.msra.mxu0 %v2718
  %2734 = vmatpush.msra.mxu0 %v2717
  %2735 = vmatpush.msra.mxu0 %v2716
  %2736 = vmatmul.f32.gmra.mxu0 %v2628
  %v2737 = vpop.f32.mrf.mxu0
  %v2738 = vadd.f32 0.0, %v2737
  %2739 = vdwg.mxu0
  %v2740 = vadd.f32 %v2715, %v2738
  %v2741 = vtanh.pop %v2740
  %v2742 = vld [vmem:[%s362 + $0x2] sm:$0x3]
  %v2743 = vld [vmem:[%s671] sm:$0xff]
  %v2744 = vld [vmem:[%s671 + $0x8] sm:$0xff]
  %v2745 = vld [vmem:[%s671 + $0x10] sm:$0xff]
  %v2746 = vld [vmem:[%s671 + $0x18] sm:$0xff]
  %2747 = vmatpush.msra.mxu0 0.0
  %2748 = vmatpush.msra.mxu0 0.0
  %2749 = vmatpush.msra.mxu0 0.0
  %2750 = vmatpush.msra.mxu0 0.0
  %2751 = vmatpush.msra.mxu0 0.0
  %2752 = vmatpush.msra.mxu0 0.0
  %2753 = vmatpush.msra.mxu0 0.0
  %2754 = vmatpush.msra.mxu0 0.0
  %2755 = vmatpush.msra.mxu0 0.0
  %2756 = vmatpush.msra.mxu0 0.0
  %2757 = vmatpush.msra.mxu0 0.0
  %2758 = vmatpush.msra.mxu0 0.0
  %2759 = vmatpush.msra.mxu0 %v2746
  %2760 = vmatpush.msra.mxu0 %v2745
  %2761 = vmatpush.msra.mxu0 %v2744
  %2762 = vmatpush.msra.mxu0 %v2743
  %2763 = vmatmul.f32.gmra.mxu0 %v2628
  %v2764 = vpop.f32.mrf.mxu0
  %v2765 = vadd.f32 0.0, %v2764
  %2766 = vdwg.mxu0
  %v2767 = vadd.f32 %v2742, %v2765
  %v2768 = vxor.u32 %v2767, 2147483648
  %v2769 = vmul.f32 %v2768, 1.442695
  %v2770 = vpow.pop %v2769
  %v2771 = vadd.f32 %v2770, 1.0
  %v2772 = vrcp.pop %v2771
  %v2773 = vmul.f32 %v2771, %v2772
  %v2774 = vsub.f32 1.0, %v2773
  %v2775 = vmul.f32 %v2772, %v2774
  %v2776 = vadd.f32 %v2772, %v2775
  %vm2777 = vweird.f32 %v2771
  %vm2778 = vweird.f32 %v2772
  %vm2779 = vmor %vm2777, %vm2778
  %v2780 = vsel %vm2779, %v2772, %v2776
  %v2781 = vand.u32 2147483647, %v2771
  %vm2782 = vcmp.eq.f32.partialorder %v2781, 8.507059e+37
  %v2783 = vand.u32 %v2771, 2147483648
  %v2784 = vor.u32 1.1754944e-38, %v2783
  %v2785 = vsel %vm2782, %v2784, %v2780
  %v2786 = vmul.f32 1.0, %v2785
  %v2787 = vmul.f32 %v2714, %v2444
  %v2788 = vmul.f32 %v2669, %v2741
  %v2789 = vadd.f32 %v2787, %v2788
  %v2790 = vtanh.pop %v2789
  %v2791 = vmul.f32 %v2786, %v2790
  %2793 = vrot.lane.b32.xlu0 %v2791, 32
  %v2794 = vpop.permute.xlu0 %2793
  %2796 = vst.msk [vmem:[#allocation4 + $0x2] sm:$0x3] %vm725, %v2794
  %v2797 = vld [vmem:[#allocation2 + $0xe] sm:$0x3]
  %v2798 = vld [vmem:[%s3] sm:$0xff]
  %v2799 = vld [vmem:[%s3 + $0x8] sm:$0xff]
  %v2800 = vld [vmem:[%s3 + $0x10] sm:$0xff]
  %v2801 = vld [vmem:[%s3 + $0x18] sm:$0xff]
  %v2803 = vsel %vm124, %v2621, 0
  %2805 = vmatpush.msra.mxu0 0.0
  %2806 = vmatpush.msra.mxu0 0.0
  %2807 = vmatpush.msra.mxu0 0.0
  %2808 = vmatpush.msra.mxu0 0.0
  %2809 = vmatpush.msra.mxu0 0.0
  %2810 = vmatpush.msra.mxu0 0.0
  %2811 = vmatpush.msra.mxu0 0.0
  %2812 = vmatpush.msra.mxu0 0.0
  %2813 = vmatpush.msra.mxu0 0.0
  %2814 = vmatpush.msra.mxu0 0.0
  %2815 = vmatpush.msra.mxu0 0.0
  %2816 = vmatpush.msra.mxu0 0.0
  %2817 = vmatpush.msra.mxu0 %v2801
  %2818 = vmatpush.msra.mxu0 %v2800
  %2819 = vmatpush.msra.mxu0 %v2799
  %2820 = vmatpush.msra.mxu0 %v2798
  %2821 = vmatmul.f32.gmra.mxu0 %v2803
  %v2822 = vpop.f32.mrf.mxu0
  %v2823 = vadd.f32 0.0, %v2822
  %2824 = vdwg.mxu0
  %v2825 = vadd.f32 %v2797, %v2823
  %v2826 = vxor.u32 %v2825, 2147483648
  %v2827 = vmul.f32 %v2826, 1.442695
  %v2828 = vpow.pop %v2827
  %v2829 = vadd.f32 %v2828, 1.0
  %v2830 = vrcp.pop %v2829
  %v2831 = vmul.f32 %v2829, %v2830
  %v2832 = vsub.f32 1.0, %v2831
  %v2833 = vmul.f32 %v2830, %v2832
  %v2834 = vadd.f32 %v2830, %v2833
  %vm2835 = vweird.f32 %v2829
  %vm2836 = vweird.f32 %v2830
  %vm2837 = vmor %vm2835, %vm2836
  %v2838 = vsel %vm2837, %v2830, %v2834
  %v2839 = vand.u32 2147483647, %v2829
  %vm2840 = vcmp.eq.f32.partialorder %v2839, 8.507059e+37
  %v2841 = vand.u32 %v2829, 2147483648
  %v2842 = vor.u32 1.1754944e-38, %v2841
  %v2843 = vsel %vm2840, %v2842, %v2838
  %v2844 = vmul.f32 1.0, %v2843
  %v2845 = vld [vmem:[%s158 + $0xe] sm:$0x3]
  %v2846 = vld [vmem:[%s421] sm:$0xff]
  %v2847 = vld [vmem:[%s421 + $0x8] sm:$0xff]
  %v2848 = vld [vmem:[%s421 + $0x10] sm:$0xff]
  %v2849 = vld [vmem:[%s421 + $0x18] sm:$0xff]
  %2850 = vmatpush.msra.mxu0 0.0
  %2851 = vmatpush.msra.mxu0 0.0
  %2852 = vmatpush.msra.mxu0 0.0
  %2853 = vmatpush.msra.mxu0 0.0
  %2854 = vmatpush.msra.mxu0 0.0
  %2855 = vmatpush.msra.mxu0 0.0
  %2856 = vmatpush.msra.mxu0 0.0
  %2857 = vmatpush.msra.mxu0 0.0
  %2858 = vmatpush.msra.mxu0 0.0
  %2859 = vmatpush.msra.mxu0 0.0
  %2860 = vmatpush.msra.mxu0 0.0
  %2861 = vmatpush.msra.mxu0 0.0
  %2862 = vmatpush.msra.mxu0 %v2849
  %2863 = vmatpush.msra.mxu0 %v2848
  %2864 = vmatpush.msra.mxu0 %v2847
  %2865 = vmatpush.msra.mxu0 %v2846
  %2866 = vmatmul.f32.gmra.mxu0 %v2803
  %v2867 = vpop.f32.mrf.mxu0
  %v2868 = vadd.f32 0.0, %v2867
  %2869 = vdwg.mxu0
  %v2870 = vadd.f32 %v2845, %v2868
  %v2871 = vxor.u32 %v2870, 2147483648
  %v2872 = vmul.f32 %v2871, 1.442695
  %v2873 = vpow.pop %v2872
  %v2874 = vadd.f32 %v2873, 1.0
  %v2875 = vrcp.pop %v2874
  %v2876 = vmul.f32 %v2874, %v2875
  %v2877 = vsub.f32 1.0, %v2876
  %v2878 = vmul.f32 %v2875, %v2877
  %v2879 = vadd.f32 %v2875, %v2878
  %vm2880 = vweird.f32 %v2874
  %vm2881 = vweird.f32 %v2875
  %vm2882 = vmor %vm2880, %vm2881
  %v2883 = vsel %vm2882, %v2875, %v2879
  %v2884 = vand.u32 2147483647, %v2874
  %vm2885 = vcmp.eq.f32.partialorder %v2884, 8.507059e+37
  %v2886 = vand.u32 %v2874, 2147483648
  %v2887 = vor.u32 1.1754944e-38, %v2886
  %v2888 = vsel %vm2885, %v2887, %v2883
  %v2889 = vmul.f32 1.0, %v2888
  %v2890 = vld [vmem:[%s192 + $0xe] sm:$0x3]
  %v2891 = vld [vmem:[%s467] sm:$0xff]
  %v2892 = vld [vmem:[%s467 + $0x8] sm:$0xff]
  %v2893 = vld [vmem:[%s467 + $0x10] sm:$0xff]
  %v2894 = vld [vmem:[%s467 + $0x18] sm:$0xff]
  %2895 = vmatpush.msra.mxu0 0.0
  %2896 = vmatpush.msra.mxu0 0.0
  %2897 = vmatpush.msra.mxu0 0.0
  %2898 = vmatpush.msra.mxu0 0.0
  %2899 = vmatpush.msra.mxu0 0.0
  %2900 = vmatpush.msra.mxu0 0.0
  %2901 = vmatpush.msra.mxu0 0.0
  %2902 = vmatpush.msra.mxu0 0.0
  %2903 = vmatpush.msra.mxu0 0.0
  %2904 = vmatpush.msra.mxu0 0.0
  %2905 = vmatpush.msra.mxu0 0.0
  %2906 = vmatpush.msra.mxu0 0.0
  %2907 = vmatpush.msra.mxu0 %v2894
  %2908 = vmatpush.msra.mxu0 %v2893
  %2909 = vmatpush.msra.mxu0 %v2892
  %2910 = vmatpush.msra.mxu0 %v2891
  %2911 = vmatmul.f32.gmra.mxu0 %v2803
  %v2912 = vpop.f32.mrf.mxu0
  %v2913 = vadd.f32 0.0, %v2912
  %2914 = vdwg.mxu0
  %v2915 = vadd.f32 %v2890, %v2913
  %v2916 = vtanh.pop %v2915
  %v2917 = vld [vmem:[%s226 + $0xe] sm:$0x3]
  %v2918 = vld [vmem:[%s495] sm:$0xff]
  %v2919 = vld [vmem:[%s495 + $0x8] sm:$0xff]
  %v2920 = vld [vmem:[%s495 + $0x10] sm:$0xff]
  %v2921 = vld [vmem:[%s495 + $0x18] sm:$0xff]
  %2922 = vmatpush.msra.mxu0 0.0
  %2923 = vmatpush.msra.mxu0 0.0
  %2924 = vmatpush.msra.mxu0 0.0
  %2925 = vmatpush.msra.mxu0 0.0
  %2926 = vmatpush.msra.mxu0 0.0
  %2927 = vmatpush.msra.mxu0 0.0
  %2928 = vmatpush.msra.mxu0 0.0
  %2929 = vmatpush.msra.mxu0 0.0
  %2930 = vmatpush.msra.mxu0 0.0
  %2931 = vmatpush.msra.mxu0 0.0
  %2932 = vmatpush.msra.mxu0 0.0
  %2933 = vmatpush.msra.mxu0 0.0
  %2934 = vmatpush.msra.mxu0 %v2921
  %2935 = vmatpush.msra.mxu0 %v2920
  %2936 = vmatpush.msra.mxu0 %v2919
  %2937 = vmatpush.msra.mxu0 %v2918
  %2938 = vmatmul.f32.gmra.mxu0 %v2803
  %v2939 = vpop.f32.mrf.mxu0
  %v2940 = vadd.f32 0.0, %v2939
  %2941 = vdwg.mxu0
  %v2942 = vadd.f32 %v2917, %v2940
  %v2943 = vxor.u32 %v2942, 2147483648
  %v2944 = vmul.f32 %v2943, 1.442695
  %v2945 = vpow.pop %v2944
  %v2946 = vadd.f32 %v2945, 1.0
  %v2947 = vrcp.pop %v2946
  %v2948 = vmul.f32 %v2946, %v2947
  %v2949 = vsub.f32 1.0, %v2948
  %v2950 = vmul.f32 %v2947, %v2949
  %v2951 = vadd.f32 %v2947, %v2950
  %vm2952 = vweird.f32 %v2946
  %vm2953 = vweird.f32 %v2947
  %vm2954 = vmor %vm2952, %vm2953
  %v2955 = vsel %vm2954, %v2947, %v2951
  %v2956 = vand.u32 2147483647, %v2946
  %vm2957 = vcmp.eq.f32.partialorder %v2956, 8.507059e+37
  %v2958 = vand.u32 %v2946, 2147483648
  %v2959 = vor.u32 1.1754944e-38, %v2958
  %v2960 = vsel %vm2957, %v2959, %v2955
  %v2961 = vmul.f32 1.0, %v2960
  %v2962 = vmul.f32 %v2889, %v2619
  %v2963 = vmul.f32 %v2844, %v2916
  %v2964 = vadd.f32 %v2962, %v2963
  %v2965 = vtanh.pop %v2964
  %v2966 = vmul.f32 %v2961, %v2965
  %2967 = vst.msk [vmem:[#allocation4 + $0xe] sm:$0x3] %vm545, %v2966
  %v2968 = vld [vmem:[%s260] sm:$0x3]
  %v2969 = vld [vmem:[%s548] sm:$0xff]
  %v2970 = vld [vmem:[%s548 + $0x8] sm:$0xff]
  %v2971 = vld [vmem:[%s548 + $0x10] sm:$0xff]
  %v2972 = vld [vmem:[%s548 + $0x18] sm:$0xff]
  %v2973 = vsel %vm124, %v2791, 0
  %2975 = vmatpush.msra.mxu0 0.0
  %2976 = vmatpush.msra.mxu0 0.0
  %2977 = vmatpush.msra.mxu0 0.0
  %2978 = vmatpush.msra.mxu0 0.0
  %2979 = vmatpush.msra.mxu0 0.0
  %2980 = vmatpush.msra.mxu0 0.0
  %2981 = vmatpush.msra.mxu0 0.0
  %2982 = vmatpush.msra.mxu0 0.0
  %2983 = vmatpush.msra.mxu0 0.0
  %2984 = vmatpush.msra.mxu0 0.0
  %2985 = vmatpush.msra.mxu0 0.0
  %2986 = vmatpush.msra.mxu0 0.0
  %2987 = vmatpush.msra.mxu0 %v2972
  %2988 = vmatpush.msra.mxu0 %v2971
  %2989 = vmatpush.msra.mxu0 %v2970
  %2990 = vmatpush.msra.mxu0 %v2969
  %2991 = vmatmul.f32.gmra.mxu0 %v2973
  %v2992 = vpop.f32.mrf.mxu0
  %v2993 = vadd.f32 0.0, %v2992
  %2994 = vdwg.mxu0
  %v2995 = vadd.f32 %v2968, %v2993
  %v2996 = vxor.u32 %v2995, 2147483648
  %v2997 = vmul.f32 %v2996, 1.442695
  %v2998 = vpow.pop %v2997
  %v2999 = vadd.f32 %v2998, 1.0
  %v3000 = vrcp.pop %v2999
  %v3001 = vmul.f32 %v2999, %v3000
  %v3002 = vsub.f32 1.0, %v3001
  %v3003 = vmul.f32 %v3000, %v3002
  %v3004 = vadd.f32 %v3000, %v3003
  %vm3005 = vweird.f32 %v2999
  %vm3006 = vweird.f32 %v3000
  %vm3007 = vmor %vm3005, %vm3006
  %v3008 = vsel %vm3007, %v3000, %v3004
  %v3009 = vand.u32 2147483647, %v2999
  %vm3010 = vcmp.eq.f32.partialorder %v3009, 8.507059e+37
  %v3011 = vand.u32 %v2999, 2147483648
  %v3012 = vor.u32 1.1754944e-38, %v3011
  %v3013 = vsel %vm3010, %v3012, %v3008
  %v3014 = vmul.f32 1.0, %v3013
  %v3015 = vld [vmem:[%s294] sm:$0x3]
  %v3016 = vld [vmem:[%s597] sm:$0xff]
  %v3017 = vld [vmem:[%s597 + $0x8] sm:$0xff]
  %v3018 = vld [vmem:[%s597 + $0x10] sm:$0xff]
  %v3019 = vld [vmem:[%s597 + $0x18] sm:$0xff]
  %3020 = vmatpush.msra.mxu0 0.0
  %3021 = vmatpush.msra.mxu0 0.0
  %3022 = vmatpush.msra.mxu0 0.0
  %3023 = vmatpush.msra.mxu0 0.0
  %3024 = vmatpush.msra.mxu0 0.0
  %3025 = vmatpush.msra.mxu0 0.0
  %3026 = vmatpush.msra.mxu0 0.0
  %3027 = vmatpush.msra.mxu0 0.0
  %3028 = vmatpush.msra.mxu0 0.0
  %3029 = vmatpush.msra.mxu0 0.0
  %3030 = vmatpush.msra.mxu0 0.0
  %3031 = vmatpush.msra.mxu0 0.0
  %3032 = vmatpush.msra.mxu0 %v3019
  %3033 = vmatpush.msra.mxu0 %v3018
  %3034 = vmatpush.msra.mxu0 %v3017
  %3035 = vmatpush.msra.mxu0 %v3016
  %3036 = vmatmul.f32.gmra.mxu0 %v2973
  %v3037 = vpop.f32.mrf.mxu0
  %v3038 = vadd.f32 0.0, %v3037
  %3039 = vdwg.mxu0
  %v3040 = vadd.f32 %v3015, %v3038
  %v3041 = vxor.u32 %v3040, 2147483648
  %v3042 = vmul.f32 %v3041, 1.442695
  %v3043 = vpow.pop %v3042
  %v3044 = vadd.f32 %v3043, 1.0
  %v3045 = vrcp.pop %v3044
  %v3046 = vmul.f32 %v3044, %v3045
  %v3047 = vsub.f32 1.0, %v3046
  %v3048 = vmul.f32 %v3045, %v3047
  %v3049 = vadd.f32 %v3045, %v3048
  %vm3050 = vweird.f32 %v3044
  %vm3051 = vweird.f32 %v3045
  %vm3052 = vmor %vm3050, %vm3051
  %v3053 = vsel %vm3052, %v3045, %v3049
  %v3054 = vand.u32 2147483647, %v3044
  %vm3055 = vcmp.eq.f32.partialorder %v3054, 8.507059e+37
  %v3056 = vand.u32 %v3044, 2147483648
  %v3057 = vor.u32 1.1754944e-38, %v3056
  %v3058 = vsel %vm3055, %v3057, %v3053
  %v3059 = vmul.f32 1.0, %v3058
  %v3060 = vld [vmem:[%s328] sm:$0x3]
  %v3061 = vld [vmem:[%s643] sm:$0xff]
  %v3062 = vld [vmem:[%s643 + $0x8] sm:$0xff]
  %v3063 = vld [vmem:[%s643 + $0x10] sm:$0xff]
  %v3064 = vld [vmem:[%s643 + $0x18] sm:$0xff]
  %3065 = vmatpush.msra.mxu0 0.0
  %3066 = vmatpush.msra.mxu0 0.0
  %3067 = vmatpush.msra.mxu0 0.0
  %3068 = vmatpush.msra.mxu0 0.0
  %3069 = vmatpush.msra.mxu0 0.0
  %3070 = vmatpush.msra.mxu0 0.0
  %3071 = vmatpush.msra.mxu0 0.0
  %3072 = vmatpush.msra.mxu0 0.0
  %3073 = vmatpush.msra.mxu0 0.0
  %3074 = vmatpush.msra.mxu0 0.0
  %3075 = vmatpush.msra.mxu0 0.0
  %3076 = vmatpush.msra.mxu0 0.0
  %3077 = vmatpush.msra.mxu0 %v3064
  %3078 = vmatpush.msra.mxu0 %v3063
  %3079 = vmatpush.msra.mxu0 %v3062
  %3080 = vmatpush.msra.mxu0 %v3061
  %3081 = vmatmul.f32.gmra.mxu0 %v2973
  %v3082 = vpop.f32.mrf.mxu0
  %v3083 = vadd.f32 0.0, %v3082
  %3084 = vdwg.mxu0
  %v3085 = vadd.f32 %v3060, %v3083
  %v3086 = vtanh.pop %v3085
  %v3087 = vld [vmem:[%s362] sm:$0x3]
  %v3088 = vld [vmem:[%s671] sm:$0xff]
  %v3089 = vld [vmem:[%s671 + $0x8] sm:$0xff]
  %v3090 = vld [vmem:[%s671 + $0x10] sm:$0xff]
  %v3091 = vld [vmem:[%s671 + $0x18] sm:$0xff]
  %3092 = vmatpush.msra.mxu0 0.0
  %3093 = vmatpush.msra.mxu0 0.0
  %3094 = vmatpush.msra.mxu0 0.0
  %3095 = vmatpush.msra.mxu0 0.0
  %3096 = vmatpush.msra.mxu0 0.0
  %3097 = vmatpush.msra.mxu0 0.0
  %3098 = vmatpush.msra.mxu0 0.0
  %3099 = vmatpush.msra.mxu0 0.0
  %3100 = vmatpush.msra.mxu0 0.0
  %3101 = vmatpush.msra.mxu0 0.0
  %3102 = vmatpush.msra.mxu0 0.0
  %3103 = vmatpush.msra.mxu0 0.0
  %3104 = vmatpush.msra.mxu0 %v3091
  %3105 = vmatpush.msra.mxu0 %v3090
  %3106 = vmatpush.msra.mxu0 %v3089
  %3107 = vmatpush.msra.mxu0 %v3088
  %3108 = vmatmul.f32.gmra.mxu0 %v2973
  %v3109 = vpop.f32.mrf.mxu0
  %v3110 = vadd.f32 0.0, %v3109
  %3111 = vdwg.mxu0
  %v3112 = vadd.f32 %v3087, %v3110
  %v3113 = vxor.u32 %v3112, 2147483648
  %v3114 = vmul.f32 %v3113, 1.442695
  %v3115 = vpow.pop %v3114
  %v3116 = vadd.f32 %v3115, 1.0
  %v3117 = vrcp.pop %v3116
  %v3118 = vmul.f32 %v3116, %v3117
  %v3119 = vsub.f32 1.0, %v3118
  %v3120 = vmul.f32 %v3117, %v3119
  %v3121 = vadd.f32 %v3117, %v3120
  %vm3122 = vweird.f32 %v3116
  %vm3123 = vweird.f32 %v3117
  %vm3124 = vmor %vm3122, %vm3123
  %v3125 = vsel %vm3124, %v3117, %v3121
  %v3126 = vand.u32 2147483647, %v3116
  %vm3127 = vcmp.eq.f32.partialorder %v3126, 8.507059e+37
  %v3128 = vand.u32 %v3116, 2147483648
  %v3129 = vor.u32 1.1754944e-38, %v3128
  %v3130 = vsel %vm3127, %v3129, %v3125
  %v3131 = vmul.f32 1.0, %v3130
  %v3132 = vmul.f32 %v3059, %v2789
  %v3133 = vmul.f32 %v3014, %v3086
  %v3134 = vadd.f32 %v3132, %v3133
  %v3135 = vtanh.pop %v3134
  %v3136 = vmul.f32 %v3131, %v3135
  %3138 = vrot.lane.b32.xlu0 %v3136, 32
  %v3139 = vpop.permute.xlu0 %3138
  %3141 = vst.msk [vmem:[#allocation4] sm:$0x3] %vm725, %v3139
  %3142 = vst.msk [vmem:[%s9] sm:$0x3] %vm545, %v2966
  %s3143 = scalar_lea.vmem %s9, 8
  %3144 = vst.msk [vmem:[%s3143] sm:$0x3] %vm545, %v2964
  %s3145 = scalar_lea.vmem %s9, 2
  %3146 = vst.msk [vmem:[%s3145] sm:$0x3] %vm545, %v3136
  %s3147 = scalar_lea.vmem %s9, 10
  %3148 = vst.msk [vmem:[%s3147] sm:$0x3] %vm545, %v3134
  %v3149 = vld [vmem:[#allocation4] sm:$0xff]
  %v3150 = vld [vmem:[#allocation4 + $0x8] sm:$0xff]
  %s3151 = scalar_lea.vmem %s2, 512
  %v3152 = vld [vmem:[%s3151] sm:$0xff]
  %v3153 = vld [vmem:[%s3151 + $0x8] sm:$0xff]
  %v3154 = vld [vmem:[%s3151 + $0x10] sm:$0xff]
  %v3155 = vld [vmem:[%s3151 + $0x18] sm:$0xff]
  %v3156 = vld [vmem:[%s3151 + $0x20] sm:$0xff]
  %v3157 = vld [vmem:[%s3151 + $0x28] sm:$0xff]
  %v3158 = vld [vmem:[%s3151 + $0x30] sm:$0xff]
  %v3159 = vld [vmem:[%s3151 + $0x38] sm:$0xff]
  %s3160 = scalar_lea.vmem %s4, 8
  %v3161 = vld [vmem:[%s3160] sm:$0x1]
  %v3163 = vperm.slane %v3161, 0
  %vm3165 = vcmask 523264
  %v3167 = vsel %vm3165, %v3149, 0
  %v3170 = vsel %vm3165, %v3150, 0
  %3172 = vmatpush.msra.mxu0 0.0
  %3173 = vmatpush.msra.mxu0 0.0
  %3174 = vmatpush.msra.mxu0 0.0
  %3175 = vmatpush.msra.mxu0 0.0
  %3176 = vmatpush.msra.mxu0 0.0
  %3177 = vmatpush.msra.mxu0 0.0
  %3178 = vmatpush.msra.mxu0 0.0
  %3179 = vmatpush.msra.mxu0 0.0
  %3180 = vmatpush.msra.mxu0 %v3159
  %3181 = vmatpush.msra.mxu0 %v3158
  %3182 = vmatpush.msra.mxu0 %v3157
  %3183 = vmatpush.msra.mxu0 %v3156
  %3184 = vmatpush.msra.mxu0 %v3155
  %3185 = vmatpush.msra.mxu0 %v3154
  %3186 = vmatpush.msra.mxu0 %v3153
  %3187 = vmatpush.msra.mxu0 %v3152
  %3188 = vmatmul.f32.gmra.mxu0 %v3167
  %v3189 = vpop.f32.mrf.mxu0
  %v3190 = vadd.f32 %v3163, %v3189
  %3191 = vmatmul.f32.gmra.mxu0 %v3170
  %v3192 = vpop.f32.mrf.mxu0
  %v3193 = vadd.f32 %v3163, %v3192
  %3194 = vdwg.mxu0
  %3195 = vst.msk [vmem:[#allocation3] sm:$0xff] %vm124, %v3190
  %3196 = vst.msk [vmem:[#allocation3 + $0x8] sm:$0xff] %vm124, %v3193
  %s3197 = scalar_lea.vmem %s2, 576
  %v3198 = vld [vmem:[%s3197] sm:$0xff]
  %v3199 = vld [vmem:[%s3197 + $0x8] sm:$0xff]
  %v3200 = vld [vmem:[%s3197 + $0x10] sm:$0xff]
  %v3201 = vld [vmem:[%s3197 + $0x18] sm:$0xff]
  %v3202 = vld [vmem:[%s3197 + $0x20] sm:$0xff]
  %v3203 = vld [vmem:[%s3197 + $0x28] sm:$0xff]
  %v3204 = vld [vmem:[%s3197 + $0x30] sm:$0xff]
  %v3205 = vld [vmem:[%s3197 + $0x38] sm:$0xff]
  %s3206 = scalar_lea.vmem %s4, 9
  %v3207 = vld [vmem:[%s3206] sm:$0x1]
  %v3209 = vperm.slane %v3207, 0
  %3211 = vmatpush.msra.mxu0 0.0
  %3212 = vmatpush.msra.mxu0 0.0
  %3213 = vmatpush.msra.mxu0 0.0
  %3214 = vmatpush.msra.mxu0 0.0
  %3215 = vmatpush.msra.mxu0 0.0
  %3216 = vmatpush.msra.mxu0 0.0
  %3217 = vmatpush.msra.mxu0 0.0
  %3218 = vmatpush.msra.mxu0 0.0
  %3219 = vmatpush.msra.mxu0 %v3205
  %3220 = vmatpush.msra.mxu0 %v3204
  %3221 = vmatpush.msra.mxu0 %v3203
  %3222 = vmatpush.msra.mxu0 %v3202
  %3223 = vmatpush.msra.mxu0 %v3201
  %3224 = vmatpush.msra.mxu0 %v3200
  %3225 = vmatpush.msra.mxu0 %v3199
  %3226 = vmatpush.msra.mxu0 %v3198
  %3227 = vmatmul.f32.gmra.mxu0 %v3167
  %v3228 = vpop.f32.mrf.mxu0
  %v3229 = vadd.f32 %v3209, %v3228
  %3230 = vmatmul.f32.gmra.mxu0 %v3170
  %v3231 = vpop.f32.mrf.mxu0
  %v3232 = vadd.f32 %v3209, %v3231
  %3233 = vdwg.mxu0
  %s3234 = scalar_lea.vmem [#allocation3], 16
  %3235 = vst.msk [vmem:[%s3234] sm:$0xff] %vm124, %v3229
  %3236 = vst.msk [vmem:[%s3234 + $0x8] sm:$0xff] %vm124, %v3232
  %s3237 = scalar_lea.vmem %s2, 640
  %v3238 = vld [vmem:[%s3237] sm:$0xff]
  %v3239 = vld [vmem:[%s3237 + $0x8] sm:$0xff]
  %v3240 = vld [vmem:[%s3237 + $0x10] sm:$0xff]
  %v3241 = vld [vmem:[%s3237 + $0x18] sm:$0xff]
  %v3242 = vld [vmem:[%s3237 + $0x20] sm:$0xff]
  %v3243 = vld [vmem:[%s3237 + $0x28] sm:$0xff]
  %v3244 = vld [vmem:[%s3237 + $0x30] sm:$0xff]
  %v3245 = vld [vmem:[%s3237 + $0x38] sm:$0xff]
  %s3246 = scalar_lea.vmem %s4, 10
  %v3247 = vld [vmem:[%s3246] sm:$0x1]
  %v3249 = vperm.slane %v3247, 0
  %3251 = vmatpush.msra.mxu0 0.0
  %3252 = vmatpush.msra.mxu0 0.0
  %3253 = vmatpush.msra.mxu0 0.0
  %3254 = vmatpush.msra.mxu0 0.0
  %3255 = vmatpush.msra.mxu0 0.0
  %3256 = vmatpush.msra.mxu0 0.0
  %3257 = vmatpush.msra.mxu0 0.0
  %3258 = vmatpush.msra.mxu0 0.0
  %3259 = vmatpush.msra.mxu0 %v3245
  %3260 = vmatpush.msra.mxu0 %v3244
  %3261 = vmatpush.msra.mxu0 %v3243
  %3262 = vmatpush.msra.mxu0 %v3242
  %3263 = vmatpush.msra.mxu0 %v3241
  %3264 = vmatpush.msra.mxu0 %v3240
  %3265 = vmatpush.msra.mxu0 %v3239
  %3266 = vmatpush.msra.mxu0 %v3238
  %3267 = vmatmul.f32.gmra.mxu0 %v3167
  %v3268 = vpop.f32.mrf.mxu0
  %v3269 = vadd.f32 %v3249, %v3268
  %3270 = vmatmul.f32.gmra.mxu0 %v3170
  %v3271 = vpop.f32.mrf.mxu0
  %v3272 = vadd.f32 %v3249, %v3271
  %3273 = vdwg.mxu0
  %s3274 = scalar_lea.vmem [#allocation3], 32
  %3275 = vst.msk [vmem:[%s3274] sm:$0xff] %vm124, %v3269
  %3276 = vst.msk [vmem:[%s3274 + $0x8] sm:$0xff] %vm124, %v3272
  %s3277 = scalar_lea.vmem %s2, 704
  %v3278 = vld [vmem:[%s3277] sm:$0xff]
  %v3279 = vld [vmem:[%s3277 + $0x8] sm:$0xff]
  %v3280 = vld [vmem:[%s3277 + $0x10] sm:$0xff]
  %v3281 = vld [vmem:[%s3277 + $0x18] sm:$0xff]
  %v3282 = vld [vmem:[%s3277 + $0x20] sm:$0xff]
  %v3283 = vld [vmem:[%s3277 + $0x28] sm:$0xff]
  %v3284 = vld [vmem:[%s3277 + $0x30] sm:$0xff]
  %v3285 = vld [vmem:[%s3277 + $0x38] sm:$0xff]
  %s3286 = scalar_lea.vmem %s4, 11
  %v3287 = vld [vmem:[%s3286] sm:$0x1]
  %v3289 = vperm.slane %v3287, 0
  %3291 = vmatpush.msra.mxu0 0.0
  %3292 = vmatpush.msra.mxu0 0.0
  %3293 = vmatpush.msra.mxu0 0.0
  %3294 = vmatpush.msra.mxu0 0.0
  %3295 = vmatpush.msra.mxu0 0.0
  %3296 = vmatpush.msra.mxu0 0.0
  %3297 = vmatpush.msra.mxu0 0.0
  %3298 = vmatpush.msra.mxu0 0.0
  %3299 = vmatpush.msra.mxu0 %v3285
  %3300 = vmatpush.msra.mxu0 %v3284
  %3301 = vmatpush.msra.mxu0 %v3283
  %3302 = vmatpush.msra.mxu0 %v3282
  %3303 = vmatpush.msra.mxu0 %v3281
  %3304 = vmatpush.msra.mxu0 %v3280
  %3305 = vmatpush.msra.mxu0 %v3279
  %3306 = vmatpush.msra.mxu0 %v3278
  %3307 = vmatmul.f32.gmra.mxu0 %v3167
  %v3308 = vpop.f32.mrf.mxu0
  %v3309 = vadd.f32 %v3289, %v3308
  %3310 = vmatmul.f32.gmra.mxu0 %v3170
  %v3311 = vpop.f32.mrf.mxu0
  %v3312 = vadd.f32 %v3289, %v3311
  %3313 = vdwg.mxu0
  %s3314 = scalar_lea.vmem [#allocation3], 48
  %3315 = vst.msk [vmem:[%s3314] sm:$0xff] %vm124, %v3309
  %3316 = vst.msk [vmem:[%s3314 + $0x8] sm:$0xff] %vm124, %v3312
  %s3317 = scalar_lea.vmem %s2, 768
  %v3318 = vld [vmem:[%s3317] sm:$0xff]
  %v3319 = vld [vmem:[%s3317 + $0x8] sm:$0xff]
  %v3320 = vld [vmem:[%s3317 + $0x10] sm:$0xff]
  %v3321 = vld [vmem:[%s3317 + $0x18] sm:$0xff]
  %v3322 = vld [vmem:[%s3317 + $0x20] sm:$0xff]
  %v3323 = vld [vmem:[%s3317 + $0x28] sm:$0xff]
  %v3324 = vld [vmem:[%s3317 + $0x30] sm:$0xff]
  %v3325 = vld [vmem:[%s3317 + $0x38] sm:$0xff]
  %s3326 = scalar_lea.vmem %s4, 12
  %v3327 = vld [vmem:[%s3326] sm:$0x1]
  %v3329 = vperm.slane %v3327, 0
  %3331 = vmatpush.msra.mxu0 0.0
  %3332 = vmatpush.msra.mxu0 0.0
  %3333 = vmatpush.msra.mxu0 0.0
  %3334 = vmatpush.msra.mxu0 0.0
  %3335 = vmatpush.msra.mxu0 0.0
  %3336 = vmatpush.msra.mxu0 0.0
  %3337 = vmatpush.msra.mxu0 0.0
  %3338 = vmatpush.msra.mxu0 0.0
  %3339 = vmatpush.msra.mxu0 %v3325
  %3340 = vmatpush.msra.mxu0 %v3324
  %3341 = vmatpush.msra.mxu0 %v3323
  %3342 = vmatpush.msra.mxu0 %v3322
  %3343 = vmatpush.msra.mxu0 %v3321
  %3344 = vmatpush.msra.mxu0 %v3320
  %3345 = vmatpush.msra.mxu0 %v3319
  %3346 = vmatpush.msra.mxu0 %v3318
  %3347 = vmatmul.f32.gmra.mxu0 %v3167
  %v3348 = vpop.f32.mrf.mxu0
  %v3349 = vadd.f32 %v3329, %v3348
  %3350 = vmatmul.f32.gmra.mxu0 %v3170
  %v3351 = vpop.f32.mrf.mxu0
  %v3352 = vadd.f32 %v3329, %v3351
  %3353 = vdwg.mxu0
  %s3354 = scalar_lea.vmem [#allocation3], 64
  %3355 = vst.msk [vmem:[%s3354] sm:$0xff] %vm124, %v3349
  %3356 = vst.msk [vmem:[%s3354 + $0x8] sm:$0xff] %vm124, %v3352
  %s3357 = scalar_lea.vmem %s2, 832
  %v3358 = vld [vmem:[%s3357] sm:$0xff]
  %v3359 = vld [vmem:[%s3357 + $0x8] sm:$0xff]
  %v3360 = vld [vmem:[%s3357 + $0x10] sm:$0xff]
  %v3361 = vld [vmem:[%s3357 + $0x18] sm:$0xff]
  %v3362 = vld [vmem:[%s3357 + $0x20] sm:$0xff]
  %v3363 = vld [vmem:[%s3357 + $0x28] sm:$0xff]
  %v3364 = vld [vmem:[%s3357 + $0x30] sm:$0xff]
  %v3365 = vld [vmem:[%s3357 + $0x38] sm:$0xff]
  %s3366 = scalar_lea.vmem %s4, 13
  %v3367 = vld [vmem:[%s3366] sm:$0x1]
  %v3369 = vperm.slane %v3367, 0
  %3371 = vmatpush.msra.mxu0 0.0
  %3372 = vmatpush.msra.mxu0 0.0
  %3373 = vmatpush.msra.mxu0 0.0
  %3374 = vmatpush.msra.mxu0 0.0
  %3375 = vmatpush.msra.mxu0 0.0
  %3376 = vmatpush.msra.mxu0 0.0
  %3377 = vmatpush.msra.mxu0 0.0
  %3378 = vmatpush.msra.mxu0 0.0
  %3379 = vmatpush.msra.mxu0 %v3365
  %3380 = vmatpush.msra.mxu0 %v3364
  %3381 = vmatpush.msra.mxu0 %v3363
  %3382 = vmatpush.msra.mxu0 %v3362
  %3383 = vmatpush.msra.mxu0 %v3361
  %3384 = vmatpush.msra.mxu0 %v3360
  %3385 = vmatpush.msra.mxu0 %v3359
  %3386 = vmatpush.msra.mxu0 %v3358
  %3387 = vmatmul.f32.gmra.mxu0 %v3167
  %v3388 = vpop.f32.mrf.mxu0
  %v3389 = vadd.f32 %v3369, %v3388
  %3390 = vmatmul.f32.gmra.mxu0 %v3170
  %v3391 = vpop.f32.mrf.mxu0
  %v3392 = vadd.f32 %v3369, %v3391
  %3393 = vdwg.mxu0
  %s3394 = scalar_lea.vmem [#allocation3], 80
  %3395 = vst.msk [vmem:[%s3394] sm:$0xff] %vm124, %v3389
  %3396 = vst.msk [vmem:[%s3394 + $0x8] sm:$0xff] %vm124, %v3392
  %s3397 = scalar_lea.vmem %s2, 896
  %v3398 = vld [vmem:[%s3397] sm:$0xff]
  %v3399 = vld [vmem:[%s3397 + $0x8] sm:$0xff]
  %v3400 = vld [vmem:[%s3397 + $0x10] sm:$0xff]
  %v3401 = vld [vmem:[%s3397 + $0x18] sm:$0xff]
  %v3402 = vld [vmem:[%s3397 + $0x20] sm:$0xff]
  %v3403 = vld [vmem:[%s3397 + $0x28] sm:$0xff]
  %v3404 = vld [vmem:[%s3397 + $0x30] sm:$0xff]
  %v3405 = vld [vmem:[%s3397 + $0x38] sm:$0xff]
  %s3406 = scalar_lea.vmem %s4, 14
  %v3407 = vld [vmem:[%s3406] sm:$0x1]
  %v3409 = vperm.slane %v3407, 0
  %3411 = vmatpush.msra.mxu0 0.0
  %3412 = vmatpush.msra.mxu0 0.0
  %3413 = vmatpush.msra.mxu0 0.0
  %3414 = vmatpush.msra.mxu0 0.0
  %3415 = vmatpush.msra.mxu0 0.0
  %3416 = vmatpush.msra.mxu0 0.0
  %3417 = vmatpush.msra.mxu0 0.0
  %3418 = vmatpush.msra.mxu0 0.0
  %3419 = vmatpush.msra.mxu0 %v3405
  %3420 = vmatpush.msra.mxu0 %v3404
  %3421 = vmatpush.msra.mxu0 %v3403
  %3422 = vmatpush.msra.mxu0 %v3402
  %3423 = vmatpush.msra.mxu0 %v3401
  %3424 = vmatpush.msra.mxu0 %v3400
  %3425 = vmatpush.msra.mxu0 %v3399
  %3426 = vmatpush.msra.mxu0 %v3398
  %3427 = vmatmul.f32.gmra.mxu0 %v3167
  %v3428 = vpop.f32.mrf.mxu0
  %v3429 = vadd.f32 %v3409, %v3428
  %3430 = vmatmul.f32.gmra.mxu0 %v3170
  %v3431 = vpop.f32.mrf.mxu0
  %v3432 = vadd.f32 %v3409, %v3431
  %3433 = vdwg.mxu0
  %s3434 = scalar_lea.vmem [#allocation3], 96
  %3435 = vst.msk [vmem:[%s3434] sm:$0xff] %vm124, %v3429
  %3436 = vst.msk [vmem:[%s3434 + $0x8] sm:$0xff] %vm124, %v3432
  %s3437 = scalar_lea.vmem %s2, 960
  %v3438 = vld [vmem:[%s3437] sm:$0xff]
  %v3439 = vld [vmem:[%s3437 + $0x8] sm:$0xff]
  %v3440 = vld [vmem:[%s3437 + $0x10] sm:$0xff]
  %v3441 = vld [vmem:[%s3437 + $0x18] sm:$0xff]
  %v3442 = vld [vmem:[%s3437 + $0x20] sm:$0xff]
  %v3443 = vld [vmem:[%s3437 + $0x28] sm:$0xff]
  %v3444 = vld [vmem:[%s3437 + $0x30] sm:$0xff]
  %v3445 = vld [vmem:[%s3437 + $0x38] sm:$0xff]
  %s3446 = scalar_lea.vmem %s4, 15
  %v3447 = vld [vmem:[%s3446] sm:$0x1]
  %v3449 = vperm.slane %v3447, 0
  %3451 = vmatpush.msra.mxu0 0.0
  %3452 = vmatpush.msra.mxu0 0.0
  %3453 = vmatpush.msra.mxu0 0.0
  %3454 = vmatpush.msra.mxu0 0.0
  %3455 = vmatpush.msra.mxu0 0.0
  %3456 = vmatpush.msra.mxu0 0.0
  %3457 = vmatpush.msra.mxu0 0.0
  %3458 = vmatpush.msra.mxu0 0.0
  %3459 = vmatpush.msra.mxu0 %v3445
  %3460 = vmatpush.msra.mxu0 %v3444
  %3461 = vmatpush.msra.mxu0 %v3443
  %3462 = vmatpush.msra.mxu0 %v3442
  %3463 = vmatpush.msra.mxu0 %v3441
  %3464 = vmatpush.msra.mxu0 %v3440
  %3465 = vmatpush.msra.mxu0 %v3439
  %3466 = vmatpush.msra.mxu0 %v3438
  %3467 = vmatmul.f32.gmra.mxu0 %v3167
  %v3468 = vpop.f32.mrf.mxu0
  %v3469 = vadd.f32 %v3449, %v3468
  %3470 = vmatmul.f32.gmra.mxu0 %v3170
  %v3471 = vpop.f32.mrf.mxu0
  %v3472 = vadd.f32 %v3449, %v3471
  %3473 = vdwg.mxu0
  %s3474 = scalar_lea.vmem [#allocation3], 112
  %3475 = vst.msk [vmem:[%s3474] sm:$0xff] %vm124, %v3469
  %3476 = vst.msk [vmem:[%s3474 + $0x8] sm:$0xff] %vm124, %v3472
  %s3477 = scalar_lea.vmem %s7, 4
  %v3478 = vld [vmem:[%s3477] sm:$0x3]
  %s3479 = scalar_lea.vmem %s7, 6
  %v3480 = vld [vmem:[%s3479] sm:$0x3]
  %s3481 = scalar_lea.vmem %s7, 12
  %v3482 = vld [vmem:[%s3481] sm:$0x3]
  %s3483 = scalar_lea.vmem %s7, 14
  %v3484 = vld [vmem:[%s3483] sm:$0x3]
  %v3485 = vld [vmem:[#allocation3] sm:$0x3]
  %s3486 = scalar_lea.vmem %s3, 256
  %v3487 = vld [vmem:[%s3486] sm:$0xff]
  %v3488 = vld [vmem:[%s3486 + $0x8] sm:$0xff]
  %v3489 = vld [vmem:[%s3486 + $0x10] sm:$0xff]
  %v3490 = vld [vmem:[%s3486 + $0x18] sm:$0xff]
  %v3492 = vsel %vm124, %v3478, 0
  %3494 = vmatpush.msra.mxu0 0.0
  %3495 = vmatpush.msra.mxu0 0.0
  %3496 = vmatpush.msra.mxu0 0.0
  %3497 = vmatpush.msra.mxu0 0.0
  %3498 = vmatpush.msra.mxu0 0.0
  %3499 = vmatpush.msra.mxu0 0.0
  %3500 = vmatpush.msra.mxu0 0.0
  %3501 = vmatpush.msra.mxu0 0.0
  %3502 = vmatpush.msra.mxu0 0.0
  %3503 = vmatpush.msra.mxu0 0.0
  %3504 = vmatpush.msra.mxu0 0.0
  %3505 = vmatpush.msra.mxu0 0.0
  %3506 = vmatpush.msra.mxu0 %v3490
  %3507 = vmatpush.msra.mxu0 %v3489
  %3508 = vmatpush.msra.mxu0 %v3488
  %3509 = vmatpush.msra.mxu0 %v3487
  %3510 = vmatmul.f32.gmra.mxu0 %v3492
  %v3511 = vpop.f32.mrf.mxu0
  %v3512 = vadd.f32 0.0, %v3511
  %3513 = vdwg.mxu0
  %v3514 = vadd.f32 %v3485, %v3512
  %v3515 = vxor.u32 %v3514, 2147483648
  %v3516 = vmul.f32 %v3515, 1.442695
  %v3517 = vpow.pop %v3516
  %v3518 = vadd.f32 %v3517, 1.0
  %v3519 = vrcp.pop %v3518
  %v3520 = vmul.f32 %v3518, %v3519
  %v3521 = vsub.f32 1.0, %v3520
  %v3522 = vmul.f32 %v3519, %v3521
  %v3523 = vadd.f32 %v3519, %v3522
  %vm3524 = vweird.f32 %v3518
  %vm3525 = vweird.f32 %v3519
  %vm3526 = vmor %vm3524, %vm3525
  %v3527 = vsel %vm3526, %v3519, %v3523
  %v3528 = vand.u32 2147483647, %v3518
  %vm3529 = vcmp.eq.f32.partialorder %v3528, 8.507059e+37
  %v3530 = vand.u32 %v3518, 2147483648
  %v3531 = vor.u32 1.1754944e-38, %v3530
  %v3532 = vsel %vm3529, %v3531, %v3527
  %v3533 = vmul.f32 1.0, %v3532
  %v3534 = vld [vmem:[%s3234] sm:$0x3]
  %s3535 = scalar_lea.vmem %s3, 288
  %v3536 = vld [vmem:[%s3535] sm:$0xff]
  %v3537 = vld [vmem:[%s3535 + $0x8] sm:$0xff]
  %v3538 = vld [vmem:[%s3535 + $0x10] sm:$0xff]
  %v3539 = vld [vmem:[%s3535 + $0x18] sm:$0xff]
  %3540 = vmatpush.msra.mxu0 0.0
  %3541 = vmatpush.msra.mxu0 0.0
  %3542 = vmatpush.msra.mxu0 0.0
  %3543 = vmatpush.msra.mxu0 0.0
  %3544 = vmatpush.msra.mxu0 0.0
  %3545 = vmatpush.msra.mxu0 0.0
  %3546 = vmatpush.msra.mxu0 0.0
  %3547 = vmatpush.msra.mxu0 0.0
  %3548 = vmatpush.msra.mxu0 0.0
  %3549 = vmatpush.msra.mxu0 0.0
  %3550 = vmatpush.msra.mxu0 0.0
  %3551 = vmatpush.msra.mxu0 0.0
  %3552 = vmatpush.msra.mxu0 %v3539
  %3553 = vmatpush.msra.mxu0 %v3538
  %3554 = vmatpush.msra.mxu0 %v3537
  %3555 = vmatpush.msra.mxu0 %v3536
  %3556 = vmatmul.f32.gmra.mxu0 %v3492
  %v3557 = vpop.f32.mrf.mxu0
  %v3558 = vadd.f32 0.0, %v3557
  %3559 = vdwg.mxu0
  %v3560 = vadd.f32 %v3534, %v3558
  %v3561 = vxor.u32 %v3560, 2147483648
  %v3562 = vmul.f32 %v3561, 1.442695
  %v3563 = vpow.pop %v3562
  %v3564 = vadd.f32 %v3563, 1.0
  %v3565 = vrcp.pop %v3564
  %v3566 = vmul.f32 %v3564, %v3565
  %v3567 = vsub.f32 1.0, %v3566
  %v3568 = vmul.f32 %v3565, %v3567
  %v3569 = vadd.f32 %v3565, %v3568
  %vm3570 = vweird.f32 %v3564
  %vm3571 = vweird.f32 %v3565
  %vm3572 = vmor %vm3570, %vm3571
  %v3573 = vsel %vm3572, %v3565, %v3569
  %v3574 = vand.u32 2147483647, %v3564
  %vm3575 = vcmp.eq.f32.partialorder %v3574, 8.507059e+37
  %v3576 = vand.u32 %v3564, 2147483648
  %v3577 = vor.u32 1.1754944e-38, %v3576
  %v3578 = vsel %vm3575, %v3577, %v3573
  %v3579 = vmul.f32 1.0, %v3578
  %v3580 = vld [vmem:[%s3274] sm:$0x3]
  %s3581 = scalar_lea.vmem %s3, 320
  %v3582 = vld [vmem:[%s3581] sm:$0xff]
  %v3583 = vld [vmem:[%s3581 + $0x8] sm:$0xff]
  %v3584 = vld [vmem:[%s3581 + $0x10] sm:$0xff]
  %v3585 = vld [vmem:[%s3581 + $0x18] sm:$0xff]
  %3586 = vmatpush.msra.mxu0 0.0
  %3587 = vmatpush.msra.mxu0 0.0
  %3588 = vmatpush.msra.mxu0 0.0
  %3589 = vmatpush.msra.mxu0 0.0
  %3590 = vmatpush.msra.mxu0 0.0
  %3591 = vmatpush.msra.mxu0 0.0
  %3592 = vmatpush.msra.mxu0 0.0
  %3593 = vmatpush.msra.mxu0 0.0
  %3594 = vmatpush.msra.mxu0 0.0
  %3595 = vmatpush.msra.mxu0 0.0
  %3596 = vmatpush.msra.mxu0 0.0
  %3597 = vmatpush.msra.mxu0 0.0
  %3598 = vmatpush.msra.mxu0 %v3585
  %3599 = vmatpush.msra.mxu0 %v3584
  %3600 = vmatpush.msra.mxu0 %v3583
  %3601 = vmatpush.msra.mxu0 %v3582
  %3602 = vmatmul.f32.gmra.mxu0 %v3492
  %v3603 = vpop.f32.mrf.mxu0
  %v3604 = vadd.f32 0.0, %v3603
  %3605 = vdwg.mxu0
  %v3606 = vadd.f32 %v3580, %v3604
  %v3607 = vtanh.pop %v3606
  %v3608 = vld [vmem:[%s3314] sm:$0x3]
  %s3609 = scalar_lea.vmem %s3, 352
  %v3610 = vld [vmem:[%s3609] sm:$0xff]
  %v3611 = vld [vmem:[%s3609 + $0x8] sm:$0xff]
  %v3612 = vld [vmem:[%s3609 + $0x10] sm:$0xff]
  %v3613 = vld [vmem:[%s3609 + $0x18] sm:$0xff]
  %3614 = vmatpush.msra.mxu0 0.0
  %3615 = vmatpush.msra.mxu0 0.0
  %3616 = vmatpush.msra.mxu0 0.0
  %3617 = vmatpush.msra.mxu0 0.0
  %3618 = vmatpush.msra.mxu0 0.0
  %3619 = vmatpush.msra.mxu0 0.0
  %3620 = vmatpush.msra.mxu0 0.0
  %3621 = vmatpush.msra.mxu0 0.0
  %3622 = vmatpush.msra.mxu0 0.0
  %3623 = vmatpush.msra.mxu0 0.0
  %3624 = vmatpush.msra.mxu0 0.0
  %3625 = vmatpush.msra.mxu0 0.0
  %3626 = vmatpush.msra.mxu0 %v3613
  %3627 = vmatpush.msra.mxu0 %v3612
  %3628 = vmatpush.msra.mxu0 %v3611
  %3629 = vmatpush.msra.mxu0 %v3610
  %3630 = vmatmul.f32.gmra.mxu0 %v3492
  %v3631 = vpop.f32.mrf.mxu0
  %v3632 = vadd.f32 0.0, %v3631
  %3633 = vdwg.mxu0
  %v3634 = vadd.f32 %v3608, %v3632
  %v3635 = vxor.u32 %v3634, 2147483648
  %v3636 = vmul.f32 %v3635, 1.442695
  %v3637 = vpow.pop %v3636
  %v3638 = vadd.f32 %v3637, 1.0
  %v3639 = vrcp.pop %v3638
  %v3640 = vmul.f32 %v3638, %v3639
  %v3641 = vsub.f32 1.0, %v3640
  %v3642 = vmul.f32 %v3639, %v3641
  %v3643 = vadd.f32 %v3639, %v3642
  %vm3644 = vweird.f32 %v3638
  %vm3645 = vweird.f32 %v3639
  %vm3646 = vmor %vm3644, %vm3645
  %v3647 = vsel %vm3646, %v3639, %v3643
  %v3648 = vand.u32 2147483647, %v3638
  %vm3649 = vcmp.eq.f32.partialorder %v3648, 8.507059e+37
  %v3650 = vand.u32 %v3638, 2147483648
  %v3651 = vor.u32 1.1754944e-38, %v3650
  %v3652 = vsel %vm3649, %v3651, %v3647
  %v3653 = vmul.f32 1.0, %v3652
  %v3654 = vmul.f32 %v3579, %v3482
  %v3655 = vmul.f32 %v3533, %v3607
  %v3656 = vadd.f32 %v3654, %v3655
  %v3657 = vtanh.pop %v3656
  %v3658 = vmul.f32 %v3653, %v3657
  %v3659 = vld [vmem:[%s3354 + $0xe] sm:$0x3]
  %s3660 = scalar_lea.vmem %s3, 384
  %v3661 = vld [vmem:[%s3660] sm:$0xff]
  %v3662 = vld [vmem:[%s3660 + $0x8] sm:$0xff]
  %v3663 = vld [vmem:[%s3660 + $0x10] sm:$0xff]
  %v3664 = vld [vmem:[%s3660 + $0x18] sm:$0xff]
  %v3666 = vsel %vm124, %v3480, 0
  %3668 = vmatpush.msra.mxu0 0.0
  %3669 = vmatpush.msra.mxu0 0.0
  %3670 = vmatpush.msra.mxu0 0.0
  %3671 = vmatpush.msra.mxu0 0.0
  %3672 = vmatpush.msra.mxu0 0.0
  %3673 = vmatpush.msra.mxu0 0.0
  %3674 = vmatpush.msra.mxu0 0.0
  %3675 = vmatpush.msra.mxu0 0.0
  %3676 = vmatpush.msra.mxu0 0.0
  %3677 = vmatpush.msra.mxu0 0.0
  %3678 = vmatpush.msra.mxu0 0.0
  %3679 = vmatpush.msra.mxu0 0.0
  %3680 = vmatpush.msra.mxu0 %v3664
  %3681 = vmatpush.msra.mxu0 %v3663
  %3682 = vmatpush.msra.mxu0 %v3662
  %3683 = vmatpush.msra.mxu0 %v3661
  %3684 = vmatmul.f32.gmra.mxu0 %v3666
  %v3685 = vpop.f32.mrf.mxu0
  %v3686 = vadd.f32 0.0, %v3685
  %3687 = vdwg.mxu0
  %v3688 = vadd.f32 %v3659, %v3686
  %v3689 = vxor.u32 %v3688, 2147483648
  %v3690 = vmul.f32 %v3689, 1.442695
  %v3691 = vpow.pop %v3690
  %v3692 = vadd.f32 %v3691, 1.0
  %v3693 = vrcp.pop %v3692
  %v3694 = vmul.f32 %v3692, %v3693
  %v3695 = vsub.f32 1.0, %v3694
  %v3696 = vmul.f32 %v3693, %v3695
  %v3697 = vadd.f32 %v3693, %v3696
  %vm3698 = vweird.f32 %v3692
  %vm3699 = vweird.f32 %v3693
  %vm3700 = vmor %vm3698, %vm3699
  %v3701 = vsel %vm3700, %v3693, %v3697
  %v3702 = vand.u32 2147483647, %v3692
  %vm3703 = vcmp.eq.f32.partialorder %v3702, 8.507059e+37
  %v3704 = vand.u32 %v3692, 2147483648
  %v3705 = vor.u32 1.1754944e-38, %v3704
  %v3706 = vsel %vm3703, %v3705, %v3701
  %v3707 = vmul.f32 1.0, %v3706
  %v3708 = vld [vmem:[%s3394 + $0xe] sm:$0x3]
  %s3709 = scalar_lea.vmem %s3, 416
  %v3710 = vld [vmem:[%s3709] sm:$0xff]
  %v3711 = vld [vmem:[%s3709 + $0x8] sm:$0xff]
  %v3712 = vld [vmem:[%s3709 + $0x10] sm:$0xff]
  %v3713 = vld [vmem:[%s3709 + $0x18] sm:$0xff]
  %3714 = vmatpush.msra.mxu0 0.0
  %3715 = vmatpush.msra.mxu0 0.0
  %3716 = vmatpush.msra.mxu0 0.0
  %3717 = vmatpush.msra.mxu0 0.0
  %3718 = vmatpush.msra.mxu0 0.0
  %3719 = vmatpush.msra.mxu0 0.0
  %3720 = vmatpush.msra.mxu0 0.0
  %3721 = vmatpush.msra.mxu0 0.0
  %3722 = vmatpush.msra.mxu0 0.0
  %3723 = vmatpush.msra.mxu0 0.0
  %3724 = vmatpush.msra.mxu0 0.0
  %3725 = vmatpush.msra.mxu0 0.0
  %3726 = vmatpush.msra.mxu0 %v3713
  %3727 = vmatpush.msra.mxu0 %v3712
  %3728 = vmatpush.msra.mxu0 %v3711
  %3729 = vmatpush.msra.mxu0 %v3710
  %3730 = vmatmul.f32.gmra.mxu0 %v3666
  %v3731 = vpop.f32.mrf.mxu0
  %v3732 = vadd.f32 0.0, %v3731
  %3733 = vdwg.mxu0
  %v3734 = vadd.f32 %v3708, %v3732
  %v3735 = vxor.u32 %v3734, 2147483648
  %v3736 = vmul.f32 %v3735, 1.442695
  %v3737 = vpow.pop %v3736
  %v3738 = vadd.f32 %v3737, 1.0
  %v3739 = vrcp.pop %v3738
  %v3740 = vmul.f32 %v3738, %v3739
  %v3741 = vsub.f32 1.0, %v3740
  %v3742 = vmul.f32 %v3739, %v3741
  %v3743 = vadd.f32 %v3739, %v3742
  %vm3744 = vweird.f32 %v3738
  %vm3745 = vweird.f32 %v3739
  %vm3746 = vmor %vm3744, %vm3745
  %v3747 = vsel %vm3746, %v3739, %v3743
  %v3748 = vand.u32 2147483647, %v3738
  %vm3749 = vcmp.eq.f32.partialorder %v3748, 8.507059e+37
  %v3750 = vand.u32 %v3738, 2147483648
  %v3751 = vor.u32 1.1754944e-38, %v3750
  %v3752 = vsel %vm3749, %v3751, %v3747
  %v3753 = vmul.f32 1.0, %v3752
  %v3754 = vld [vmem:[%s3434 + $0xe] sm:$0x3]
  %s3755 = scalar_lea.vmem %s3, 448
  %v3756 = vld [vmem:[%s3755] sm:$0xff]
  %v3757 = vld [vmem:[%s3755 + $0x8] sm:$0xff]
  %v3758 = vld [vmem:[%s3755 + $0x10] sm:$0xff]
  %v3759 = vld [vmem:[%s3755 + $0x18] sm:$0xff]
  %3760 = vmatpush.msra.mxu0 0.0
  %3761 = vmatpush.msra.mxu0 0.0
  %3762 = vmatpush.msra.mxu0 0.0
  %3763 = vmatpush.msra.mxu0 0.0
  %3764 = vmatpush.msra.mxu0 0.0
  %3765 = vmatpush.msra.mxu0 0.0
  %3766 = vmatpush.msra.mxu0 0.0
  %3767 = vmatpush.msra.mxu0 0.0
  %3768 = vmatpush.msra.mxu0 0.0
  %3769 = vmatpush.msra.mxu0 0.0
  %3770 = vmatpush.msra.mxu0 0.0
  %3771 = vmatpush.msra.mxu0 0.0
  %3772 = vmatpush.msra.mxu0 %v3759
  %3773 = vmatpush.msra.mxu0 %v3758
  %3774 = vmatpush.msra.mxu0 %v3757
  %3775 = vmatpush.msra.mxu0 %v3756
  %3776 = vmatmul.f32.gmra.mxu0 %v3666
  %v3777 = vpop.f32.mrf.mxu0
  %v3778 = vadd.f32 0.0, %v3777
  %3779 = vdwg.mxu0
  %v3780 = vadd.f32 %v3754, %v3778
  %v3781 = vtanh.pop %v3780
  %v3782 = vld [vmem:[%s3474 + $0xe] sm:$0x3]
  %s3783 = scalar_lea.vmem %s3, 480
  %v3784 = vld [vmem:[%s3783] sm:$0xff]
  %v3785 = vld [vmem:[%s3783 + $0x8] sm:$0xff]
  %v3786 = vld [vmem:[%s3783 + $0x10] sm:$0xff]
  %v3787 = vld [vmem:[%s3783 + $0x18] sm:$0xff]
  %3788 = vmatpush.msra.mxu0 0.0
  %3789 = vmatpush.msra.mxu0 0.0
  %3790 = vmatpush.msra.mxu0 0.0
  %3791 = vmatpush.msra.mxu0 0.0
  %3792 = vmatpush.msra.mxu0 0.0
  %3793 = vmatpush.msra.mxu0 0.0
  %3794 = vmatpush.msra.mxu0 0.0
  %3795 = vmatpush.msra.mxu0 0.0
  %3796 = vmatpush.msra.mxu0 0.0
  %3797 = vmatpush.msra.mxu0 0.0
  %3798 = vmatpush.msra.mxu0 0.0
  %3799 = vmatpush.msra.mxu0 0.0
  %3800 = vmatpush.msra.mxu0 %v3787
  %3801 = vmatpush.msra.mxu0 %v3786
  %3802 = vmatpush.msra.mxu0 %v3785
  %3803 = vmatpush.msra.mxu0 %v3784
  %3804 = vmatmul.f32.gmra.mxu0 %v3666
  %v3805 = vpop.f32.mrf.mxu0
  %v3806 = vadd.f32 0.0, %v3805
  %3807 = vdwg.mxu0
  %v3808 = vadd.f32 %v3782, %v3806
  %v3809 = vxor.u32 %v3808, 2147483648
  %v3810 = vmul.f32 %v3809, 1.442695
  %v3811 = vpow.pop %v3810
  %v3812 = vadd.f32 %v3811, 1.0
  %v3813 = vrcp.pop %v3812
  %v3814 = vmul.f32 %v3812, %v3813
  %v3815 = vsub.f32 1.0, %v3814
  %v3816 = vmul.f32 %v3813, %v3815
  %v3817 = vadd.f32 %v3813, %v3816
  %vm3818 = vweird.f32 %v3812
  %vm3819 = vweird.f32 %v3813
  %vm3820 = vmor %vm3818, %vm3819
  %v3821 = vsel %vm3820, %v3813, %v3817
  %v3822 = vand.u32 2147483647, %v3812
  %vm3823 = vcmp.eq.f32.partialorder %v3822, 8.507059e+37
  %v3824 = vand.u32 %v3812, 2147483648
  %v3825 = vor.u32 1.1754944e-38, %v3824
  %v3826 = vsel %vm3823, %v3825, %v3821
  %v3827 = vmul.f32 1.0, %v3826
  %v3828 = vmul.f32 %v3753, %v3484
  %v3829 = vmul.f32 %v3707, %v3781
  %v3830 = vadd.f32 %v3828, %v3829
  %v3831 = vtanh.pop %v3830
  %v3832 = vmul.f32 %v3827, %v3831
  %v3833 = vld [vmem:[#allocation3 + $0x2] sm:$0x3]
  %v3835 = vsel %vm124, %v3658, 0
  %3837 = vmatpush.msra.mxu0 0.0
  %3838 = vmatpush.msra.mxu0 0.0
  %3839 = vmatpush.msra.mxu0 0.0
  %3840 = vmatpush.msra.mxu0 0.0
  %3841 = vmatpush.msra.mxu0 0.0
  %3842 = vmatpush.msra.mxu0 0.0
  %3843 = vmatpush.msra.mxu0 0.0
  %3844 = vmatpush.msra.mxu0 0.0
  %3845 = vmatpush.msra.mxu0 0.0
  %3846 = vmatpush.msra.mxu0 0.0
  %3847 = vmatpush.msra.mxu0 0.0
  %3848 = vmatpush.msra.mxu0 0.0
  %3849 = vmatpush.msra.mxu0 %v3490
  %3850 = vmatpush.msra.mxu0 %v3489
  %3851 = vmatpush.msra.mxu0 %v3488
  %3852 = vmatpush.msra.mxu0 %v3487
  %3853 = vmatmul.f32.gmra.mxu0 %v3835
  %v3854 = vpop.f32.mrf.mxu0
  %v3855 = vadd.f32 0.0, %v3854
  %3856 = vdwg.mxu0
  %v3857 = vadd.f32 %v3833, %v3855
  %v3858 = vxor.u32 %v3857, 2147483648
  %v3859 = vmul.f32 %v3858, 1.442695
  %v3860 = vpow.pop %v3859
  %v3861 = vadd.f32 %v3860, 1.0
  %v3862 = vrcp.pop %v3861
  %v3863 = vmul.f32 %v3861, %v3862
  %v3864 = vsub.f32 1.0, %v3863
  %v3865 = vmul.f32 %v3862, %v3864
  %v3866 = vadd.f32 %v3862, %v3865
  %vm3867 = vweird.f32 %v3861
  %vm3868 = vweird.f32 %v3862
  %vm3869 = vmor %vm3867, %vm3868
  %v3870 = vsel %vm3869, %v3862, %v3866
  %v3871 = vand.u32 2147483647, %v3861
  %vm3872 = vcmp.eq.f32.partialorder %v3871, 8.507059e+37
  %v3873 = vand.u32 %v3861, 2147483648
  %v3874 = vor.u32 1.1754944e-38, %v3873
  %v3875 = vsel %vm3872, %v3874, %v3870
  %v3876 = vmul.f32 1.0, %v3875
  %v3877 = vld [vmem:[%s3234 + $0x2] sm:$0x3]
  %3878 = vmatpush.msra.mxu0 0.0
  %3879 = vmatpush.msra.mxu0 0.0
  %3880 = vmatpush.msra.mxu0 0.0
  %3881 = vmatpush.msra.mxu0 0.0
  %3882 = vmatpush.msra.mxu0 0.0
  %3883 = vmatpush.msra.mxu0 0.0
  %3884 = vmatpush.msra.mxu0 0.0
  %3885 = vmatpush.msra.mxu0 0.0
  %3886 = vmatpush.msra.mxu0 0.0
  %3887 = vmatpush.msra.mxu0 0.0
  %3888 = vmatpush.msra.mxu0 0.0
  %3889 = vmatpush.msra.mxu0 0.0
  %3890 = vmatpush.msra.mxu0 %v3539
  %3891 = vmatpush.msra.mxu0 %v3538
  %3892 = vmatpush.msra.mxu0 %v3537
  %3893 = vmatpush.msra.mxu0 %v3536
  %3894 = vmatmul.f32.gmra.mxu0 %v3835
  %v3895 = vpop.f32.mrf.mxu0
  %v3896 = vadd.f32 0.0, %v3895
  %3897 = vdwg.mxu0
  %v3898 = vadd.f32 %v3877, %v3896
  %v3899 = vxor.u32 %v3898, 2147483648
  %v3900 = vmul.f32 %v3899, 1.442695
  %v3901 = vpow.pop %v3900
  %v3902 = vadd.f32 %v3901, 1.0
  %v3903 = vrcp.pop %v3902
  %v3904 = vmul.f32 %v3902, %v3903
  %v3905 = vsub.f32 1.0, %v3904
  %v3906 = vmul.f32 %v3903, %v3905
  %v3907 = vadd.f32 %v3903, %v3906
  %vm3908 = vweird.f32 %v3902
  %vm3909 = vweird.f32 %v3903
  %vm3910 = vmor %vm3908, %vm3909
  %v3911 = vsel %vm3910, %v3903, %v3907
  %v3912 = vand.u32 2147483647, %v3902
  %vm3913 = vcmp.eq.f32.partialorder %v3912, 8.507059e+37
  %v3914 = vand.u32 %v3902, 2147483648
  %v3915 = vor.u32 1.1754944e-38, %v3914
  %v3916 = vsel %vm3913, %v3915, %v3911
  %v3917 = vmul.f32 1.0, %v3916
  %v3918 = vld [vmem:[%s3274 + $0x2] sm:$0x3]
  %3919 = vmatpush.msra.mxu0 0.0
  %3920 = vmatpush.msra.mxu0 0.0
  %3921 = vmatpush.msra.mxu0 0.0
  %3922 = vmatpush.msra.mxu0 0.0
  %3923 = vmatpush.msra.mxu0 0.0
  %3924 = vmatpush.msra.mxu0 0.0
  %3925 = vmatpush.msra.mxu0 0.0
  %3926 = vmatpush.msra.mxu0 0.0
  %3927 = vmatpush.msra.mxu0 0.0
  %3928 = vmatpush.msra.mxu0 0.0
  %3929 = vmatpush.msra.mxu0 0.0
  %3930 = vmatpush.msra.mxu0 0.0
  %3931 = vmatpush.msra.mxu0 %v3585
  %3932 = vmatpush.msra.mxu0 %v3584
  %3933 = vmatpush.msra.mxu0 %v3583
  %3934 = vmatpush.msra.mxu0 %v3582
  %3935 = vmatmul.f32.gmra.mxu0 %v3835
  %v3936 = vpop.f32.mrf.mxu0
  %v3937 = vadd.f32 0.0, %v3936
  %3938 = vdwg.mxu0
  %v3939 = vadd.f32 %v3918, %v3937
  %v3940 = vtanh.pop %v3939
  %v3941 = vld [vmem:[%s3314 + $0x2] sm:$0x3]
  %3942 = vmatpush.msra.mxu0 0.0
  %3943 = vmatpush.msra.mxu0 0.0
  %3944 = vmatpush.msra.mxu0 0.0
  %3945 = vmatpush.msra.mxu0 0.0
  %3946 = vmatpush.msra.mxu0 0.0
  %3947 = vmatpush.msra.mxu0 0.0
  %3948 = vmatpush.msra.mxu0 0.0
  %3949 = vmatpush.msra.mxu0 0.0
  %3950 = vmatpush.msra.mxu0 0.0
  %3951 = vmatpush.msra.mxu0 0.0
  %3952 = vmatpush.msra.mxu0 0.0
  %3953 = vmatpush.msra.mxu0 0.0
  %3954 = vmatpush.msra.mxu0 %v3613
  %3955 = vmatpush.msra.mxu0 %v3612
  %3956 = vmatpush.msra.mxu0 %v3611
  %3957 = vmatpush.msra.mxu0 %v3610
  %3958 = vmatmul.f32.gmra.mxu0 %v3835
  %v3959 = vpop.f32.mrf.mxu0
  %v3960 = vadd.f32 0.0, %v3959
  %3961 = vdwg.mxu0
  %v3962 = vadd.f32 %v3941, %v3960
  %v3963 = vxor.u32 %v3962, 2147483648
  %v3964 = vmul.f32 %v3963, 1.442695
  %v3965 = vpow.pop %v3964
  %v3966 = vadd.f32 %v3965, 1.0
  %v3967 = vrcp.pop %v3966
  %v3968 = vmul.f32 %v3966, %v3967
  %v3969 = vsub.f32 1.0, %v3968
  %v3970 = vmul.f32 %v3967, %v3969
  %v3971 = vadd.f32 %v3967, %v3970
  %vm3972 = vweird.f32 %v3966
  %vm3973 = vweird.f32 %v3967
  %vm3974 = vmor %vm3972, %vm3973
  %v3975 = vsel %vm3974, %v3967, %v3971
  %v3976 = vand.u32 2147483647, %v3966
  %vm3977 = vcmp.eq.f32.partialorder %v3976, 8.507059e+37
  %v3978 = vand.u32 %v3966, 2147483648
  %v3979 = vor.u32 1.1754944e-38, %v3978
  %v3980 = vsel %vm3977, %v3979, %v3975
  %v3981 = vmul.f32 1.0, %v3980
  %v3982 = vmul.f32 %v3917, %v3656
  %v3983 = vmul.f32 %v3876, %v3940
  %v3984 = vadd.f32 %v3982, %v3983
  %v3985 = vtanh.pop %v3984
  %v3986 = vmul.f32 %v3981, %v3985
  %v3987 = vld [vmem:[%s3354 + $0xc] sm:$0x3]
  %v3989 = vsel %vm124, %v3832, 0
  %3991 = vmatpush.msra.mxu0 0.0
  %3992 = vmatpush.msra.mxu0 0.0
  %3993 = vmatpush.msra.mxu0 0.0
  %3994 = vmatpush.msra.mxu0 0.0
  %3995 = vmatpush.msra.mxu0 0.0
  %3996 = vmatpush.msra.mxu0 0.0
  %3997 = vmatpush.msra.mxu0 0.0
  %3998 = vmatpush.msra.mxu0 0.0
  %3999 = vmatpush.msra.mxu0 0.0
  %4000 = vmatpush.msra.mxu0 0.0
  %4001 = vmatpush.msra.mxu0 0.0
  %4002 = vmatpush.msra.mxu0 0.0
  %4003 = vmatpush.msra.mxu0 %v3664
  %4004 = vmatpush.msra.mxu0 %v3663
  %4005 = vmatpush.msra.mxu0 %v3662
  %4006 = vmatpush.msra.mxu0 %v3661
  %4007 = vmatmul.f32.gmra.mxu0 %v3989
  %v4008 = vpop.f32.mrf.mxu0
  %v4009 = vadd.f32 0.0, %v4008
  %4010 = vdwg.mxu0
  %v4011 = vadd.f32 %v3987, %v4009
  %v4012 = vxor.u32 %v4011, 2147483648
  %v4013 = vmul.f32 %v4012, 1.442695
  %v4014 = vpow.pop %v4013
  %v4015 = vadd.f32 %v4014, 1.0
  %v4016 = vrcp.pop %v4015
  %v4017 = vmul.f32 %v4015, %v4016
  %v4018 = vsub.f32 1.0, %v4017
  %v4019 = vmul.f32 %v4016, %v4018
  %v4020 = vadd.f32 %v4016, %v4019
  %vm4021 = vweird.f32 %v4015
  %vm4022 = vweird.f32 %v4016
  %vm4023 = vmor %vm4021, %vm4022
  %v4024 = vsel %vm4023, %v4016, %v4020
  %v4025 = vand.u32 2147483647, %v4015
  %vm4026 = vcmp.eq.f32.partialorder %v4025, 8.507059e+37
  %v4027 = vand.u32 %v4015, 2147483648
  %v4028 = vor.u32 1.1754944e-38, %v4027
  %v4029 = vsel %vm4026, %v4028, %v4024
  %v4030 = vmul.f32 1.0, %v4029
  %v4031 = vld [vmem:[%s3394 + $0xc] sm:$0x3]
  %4032 = vmatpush.msra.mxu0 0.0
  %4033 = vmatpush.msra.mxu0 0.0
  %4034 = vmatpush.msra.mxu0 0.0
  %4035 = vmatpush.msra.mxu0 0.0
  %4036 = vmatpush.msra.mxu0 0.0
  %4037 = vmatpush.msra.mxu0 0.0
  %4038 = vmatpush.msra.mxu0 0.0
  %4039 = vmatpush.msra.mxu0 0.0
  %4040 = vmatpush.msra.mxu0 0.0
  %4041 = vmatpush.msra.mxu0 0.0
  %4042 = vmatpush.msra.mxu0 0.0
  %4043 = vmatpush.msra.mxu0 0.0
  %4044 = vmatpush.msra.mxu0 %v3713
  %4045 = vmatpush.msra.mxu0 %v3712
  %4046 = vmatpush.msra.mxu0 %v3711
  %4047 = vmatpush.msra.mxu0 %v3710
  %4048 = vmatmul.f32.gmra.mxu0 %v3989
  %v4049 = vpop.f32.mrf.mxu0
  %v4050 = vadd.f32 0.0, %v4049
  %4051 = vdwg.mxu0
  %v4052 = vadd.f32 %v4031, %v4050
  %v4053 = vxor.u32 %v4052, 2147483648
  %v4054 = vmul.f32 %v4053, 1.442695
  %v4055 = vpow.pop %v4054
  %v4056 = vadd.f32 %v4055, 1.0
  %v4057 = vrcp.pop %v4056
  %v4058 = vmul.f32 %v4056, %v4057
  %v4059 = vsub.f32 1.0, %v4058
  %v4060 = vmul.f32 %v4057, %v4059
  %v4061 = vadd.f32 %v4057, %v4060
  %vm4062 = vweird.f32 %v4056
  %vm4063 = vweird.f32 %v4057
  %vm4064 = vmor %vm4062, %vm4063
  %v4065 = vsel %vm4064, %v4057, %v4061
  %v4066 = vand.u32 2147483647, %v4056
  %vm4067 = vcmp.eq.f32.partialorder %v4066, 8.507059e+37
  %v4068 = vand.u32 %v4056, 2147483648
  %v4069 = vor.u32 1.1754944e-38, %v4068
  %v4070 = vsel %vm4067, %v4069, %v4065
  %v4071 = vmul.f32 1.0, %v4070
  %v4072 = vld [vmem:[%s3434 + $0xc] sm:$0x3]
  %4073 = vmatpush.msra.mxu0 0.0
  %4074 = vmatpush.msra.mxu0 0.0
  %4075 = vmatpush.msra.mxu0 0.0
  %4076 = vmatpush.msra.mxu0 0.0
  %4077 = vmatpush.msra.mxu0 0.0
  %4078 = vmatpush.msra.mxu0 0.0
  %4079 = vmatpush.msra.mxu0 0.0
  %4080 = vmatpush.msra.mxu0 0.0
  %4081 = vmatpush.msra.mxu0 0.0
  %4082 = vmatpush.msra.mxu0 0.0
  %4083 = vmatpush.msra.mxu0 0.0
  %4084 = vmatpush.msra.mxu0 0.0
  %4085 = vmatpush.msra.mxu0 %v3759
  %4086 = vmatpush.msra.mxu0 %v3758
  %4087 = vmatpush.msra.mxu0 %v3757
  %4088 = vmatpush.msra.mxu0 %v3756
  %4089 = vmatmul.f32.gmra.mxu0 %v3989
  %v4090 = vpop.f32.mrf.mxu0
  %v4091 = vadd.f32 0.0, %v4090
  %4092 = vdwg.mxu0
  %v4093 = vadd.f32 %v4072, %v4091
  %v4094 = vtanh.pop %v4093
  %v4095 = vld [vmem:[%s3474 + $0xc] sm:$0x3]
  %4096 = vmatpush.msra.mxu0 0.0
  %4097 = vmatpush.msra.mxu0 0.0
  %4098 = vmatpush.msra.mxu0 0.0
  %4099 = vmatpush.msra.mxu0 0.0
  %4100 = vmatpush.msra.mxu0 0.0
  %4101 = vmatpush.msra.mxu0 0.0
  %4102 = vmatpush.msra.mxu0 0.0
  %4103 = vmatpush.msra.mxu0 0.0
  %4104 = vmatpush.msra.mxu0 0.0
  %4105 = vmatpush.msra.mxu0 0.0
  %4106 = vmatpush.msra.mxu0 0.0
  %4107 = vmatpush.msra.mxu0 0.0
  %4108 = vmatpush.msra.mxu0 %v3787
  %4109 = vmatpush.msra.mxu0 %v3786
  %4110 = vmatpush.msra.mxu0 %v3785
  %4111 = vmatpush.msra.mxu0 %v3784
  %4112 = vmatmul.f32.gmra.mxu0 %v3989
  %v4113 = vpop.f32.mrf.mxu0
  %v4114 = vadd.f32 0.0, %v4113
  %4115 = vdwg.mxu0
  %v4116 = vadd.f32 %v4095, %v4114
  %v4117 = vxor.u32 %v4116, 2147483648
  %v4118 = vmul.f32 %v4117, 1.442695
  %v4119 = vpow.pop %v4118
  %v4120 = vadd.f32 %v4119, 1.0
  %v4121 = vrcp.pop %v4120
  %v4122 = vmul.f32 %v4120, %v4121
  %v4123 = vsub.f32 1.0, %v4122
  %v4124 = vmul.f32 %v4121, %v4123
  %v4125 = vadd.f32 %v4121, %v4124
  %vm4126 = vweird.f32 %v4120
  %vm4127 = vweird.f32 %v4121
  %vm4128 = vmor %vm4126, %vm4127
  %v4129 = vsel %vm4128, %v4121, %v4125
  %v4130 = vand.u32 2147483647, %v4120
  %vm4131 = vcmp.eq.f32.partialorder %v4130, 8.507059e+37
  %v4132 = vand.u32 %v4120, 2147483648
  %v4133 = vor.u32 1.1754944e-38, %v4132
  %v4134 = vsel %vm4131, %v4133, %v4129
  %v4135 = vmul.f32 1.0, %v4134
  %v4136 = vmul.f32 %v4071, %v3830
  %v4137 = vmul.f32 %v4030, %v4094
  %v4138 = vadd.f32 %v4136, %v4137
  %v4139 = vtanh.pop %v4138
  %v4140 = vmul.f32 %v4135, %v4139
  %v4141 = vld [vmem:[#allocation3 + $0x4] sm:$0x3]
  %v4143 = vsel %vm124, %v3986, 0
  %4145 = vmatpush.msra.mxu0 0.0
  %4146 = vmatpush.msra.mxu0 0.0
  %4147 = vmatpush.msra.mxu0 0.0
  %4148 = vmatpush.msra.mxu0 0.0
  %4149 = vmatpush.msra.mxu0 0.0
  %4150 = vmatpush.msra.mxu0 0.0
  %4151 = vmatpush.msra.mxu0 0.0
  %4152 = vmatpush.msra.mxu0 0.0
  %4153 = vmatpush.msra.mxu0 0.0
  %4154 = vmatpush.msra.mxu0 0.0
  %4155 = vmatpush.msra.mxu0 0.0
  %4156 = vmatpush.msra.mxu0 0.0
  %4157 = vmatpush.msra.mxu0 %v3490
  %4158 = vmatpush.msra.mxu0 %v3489
  %4159 = vmatpush.msra.mxu0 %v3488
  %4160 = vmatpush.msra.mxu0 %v3487
  %4161 = vmatmul.f32.gmra.mxu0 %v4143
  %v4162 = vpop.f32.mrf.mxu0
  %v4163 = vadd.f32 0.0, %v4162
  %4164 = vdwg.mxu0
  %v4165 = vadd.f32 %v4141, %v4163
  %v4166 = vxor.u32 %v4165, 2147483648
  %v4167 = vmul.f32 %v4166, 1.442695
  %v4168 = vpow.pop %v4167
  %v4169 = vadd.f32 %v4168, 1.0
  %v4170 = vrcp.pop %v4169
  %v4171 = vmul.f32 %v4169, %v4170
  %v4172 = vsub.f32 1.0, %v4171
  %v4173 = vmul.f32 %v4170, %v4172
  %v4174 = vadd.f32 %v4170, %v4173
  %vm4175 = vweird.f32 %v4169
  %vm4176 = vweird.f32 %v4170
  %vm4177 = vmor %vm4175, %vm4176
  %v4178 = vsel %vm4177, %v4170, %v4174
  %v4179 = vand.u32 2147483647, %v4169
  %vm4180 = vcmp.eq.f32.partialorder %v4179, 8.507059e+37
  %v4181 = vand.u32 %v4169, 2147483648
  %v4182 = vor.u32 1.1754944e-38, %v4181
  %v4183 = vsel %vm4180, %v4182, %v4178
  %v4184 = vmul.f32 1.0, %v4183
  %v4185 = vld [vmem:[%s3234 + $0x4] sm:$0x3]
  %4186 = vmatpush.msra.mxu0 0.0
  %4187 = vmatpush.msra.mxu0 0.0
  %4188 = vmatpush.msra.mxu0 0.0
  %4189 = vmatpush.msra.mxu0 0.0
  %4190 = vmatpush.msra.mxu0 0.0
  %4191 = vmatpush.msra.mxu0 0.0
  %4192 = vmatpush.msra.mxu0 0.0
  %4193 = vmatpush.msra.mxu0 0.0
  %4194 = vmatpush.msra.mxu0 0.0
  %4195 = vmatpush.msra.mxu0 0.0
  %4196 = vmatpush.msra.mxu0 0.0
  %4197 = vmatpush.msra.mxu0 0.0
  %4198 = vmatpush.msra.mxu0 %v3539
  %4199 = vmatpush.msra.mxu0 %v3538
  %4200 = vmatpush.msra.mxu0 %v3537
  %4201 = vmatpush.msra.mxu0 %v3536
  %4202 = vmatmul.f32.gmra.mxu0 %v4143
  %v4203 = vpop.f32.mrf.mxu0
  %v4204 = vadd.f32 0.0, %v4203
  %4205 = vdwg.mxu0
  %v4206 = vadd.f32 %v4185, %v4204
  %v4207 = vxor.u32 %v4206, 2147483648
  %v4208 = vmul.f32 %v4207, 1.442695
  %v4209 = vpow.pop %v4208
  %v4210 = vadd.f32 %v4209, 1.0
  %v4211 = vrcp.pop %v4210
  %v4212 = vmul.f32 %v4210, %v4211
  %v4213 = vsub.f32 1.0, %v4212
  %v4214 = vmul.f32 %v4211, %v4213
  %v4215 = vadd.f32 %v4211, %v4214
  %vm4216 = vweird.f32 %v4210
  %vm4217 = vweird.f32 %v4211
  %vm4218 = vmor %vm4216, %vm4217
  %v4219 = vsel %vm4218, %v4211, %v4215
  %v4220 = vand.u32 2147483647, %v4210
  %vm4221 = vcmp.eq.f32.partialorder %v4220, 8.507059e+37
  %v4222 = vand.u32 %v4210, 2147483648
  %v4223 = vor.u32 1.1754944e-38, %v4222
  %v4224 = vsel %vm4221, %v4223, %v4219
  %v4225 = vmul.f32 1.0, %v4224
  %v4226 = vld [vmem:[%s3274 + $0x4] sm:$0x3]
  %4227 = vmatpush.msra.mxu0 0.0
  %4228 = vmatpush.msra.mxu0 0.0
  %4229 = vmatpush.msra.mxu0 0.0
  %4230 = vmatpush.msra.mxu0 0.0
  %4231 = vmatpush.msra.mxu0 0.0
  %4232 = vmatpush.msra.mxu0 0.0
  %4233 = vmatpush.msra.mxu0 0.0
  %4234 = vmatpush.msra.mxu0 0.0
  %4235 = vmatpush.msra.mxu0 0.0
  %4236 = vmatpush.msra.mxu0 0.0
  %4237 = vmatpush.msra.mxu0 0.0
  %4238 = vmatpush.msra.mxu0 0.0
  %4239 = vmatpush.msra.mxu0 %v3585
  %4240 = vmatpush.msra.mxu0 %v3584
  %4241 = vmatpush.msra.mxu0 %v3583
  %4242 = vmatpush.msra.mxu0 %v3582
  %4243 = vmatmul.f32.gmra.mxu0 %v4143
  %v4244 = vpop.f32.mrf.mxu0
  %v4245 = vadd.f32 0.0, %v4244
  %4246 = vdwg.mxu0
  %v4247 = vadd.f32 %v4226, %v4245
  %v4248 = vtanh.pop %v4247
  %v4249 = vld [vmem:[%s3314 + $0x4] sm:$0x3]
  %4250 = vmatpush.msra.mxu0 0.0
  %4251 = vmatpush.msra.mxu0 0.0
  %4252 = vmatpush.msra.mxu0 0.0
  %4253 = vmatpush.msra.mxu0 0.0
  %4254 = vmatpush.msra.mxu0 0.0
  %4255 = vmatpush.msra.mxu0 0.0
  %4256 = vmatpush.msra.mxu0 0.0
  %4257 = vmatpush.msra.mxu0 0.0
  %4258 = vmatpush.msra.mxu0 0.0
  %4259 = vmatpush.msra.mxu0 0.0
  %4260 = vmatpush.msra.mxu0 0.0
  %4261 = vmatpush.msra.mxu0 0.0
  %4262 = vmatpush.msra.mxu0 %v3613
  %4263 = vmatpush.msra.mxu0 %v3612
  %4264 = vmatpush.msra.mxu0 %v3611
  %4265 = vmatpush.msra.mxu0 %v3610
  %4266 = vmatmul.f32.gmra.mxu0 %v4143
  %v4267 = vpop.f32.mrf.mxu0
  %v4268 = vadd.f32 0.0, %v4267
  %4269 = vdwg.mxu0
  %v4270 = vadd.f32 %v4249, %v4268
  %v4271 = vxor.u32 %v4270, 2147483648
  %v4272 = vmul.f32 %v4271, 1.442695
  %v4273 = vpow.pop %v4272
  %v4274 = vadd.f32 %v4273, 1.0
  %v4275 = vrcp.pop %v4274
  %v4276 = vmul.f32 %v4274, %v4275
  %v4277 = vsub.f32 1.0, %v4276
  %v4278 = vmul.f32 %v4275, %v4277
  %v4279 = vadd.f32 %v4275, %v4278
  %vm4280 = vweird.f32 %v4274
  %vm4281 = vweird.f32 %v4275
  %vm4282 = vmor %vm4280, %vm4281
  %v4283 = vsel %vm4282, %v4275, %v4279
  %v4284 = vand.u32 2147483647, %v4274
  %vm4285 = vcmp.eq.f32.partialorder %v4284, 8.507059e+37
  %v4286 = vand.u32 %v4274, 2147483648
  %v4287 = vor.u32 1.1754944e-38, %v4286
  %v4288 = vsel %vm4285, %v4287, %v4283
  %v4289 = vmul.f32 1.0, %v4288
  %v4290 = vmul.f32 %v4225, %v3984
  %v4291 = vmul.f32 %v4184, %v4248
  %v4292 = vadd.f32 %v4290, %v4291
  %v4293 = vtanh.pop %v4292
  %v4294 = vmul.f32 %v4289, %v4293
  %v4295 = vld [vmem:[%s3354 + $0xa] sm:$0x3]
  %v4297 = vsel %vm124, %v4140, 0
  %4299 = vmatpush.msra.mxu0 0.0
  %4300 = vmatpush.msra.mxu0 0.0
  %4301 = vmatpush.msra.mxu0 0.0
  %4302 = vmatpush.msra.mxu0 0.0
  %4303 = vmatpush.msra.mxu0 0.0
  %4304 = vmatpush.msra.mxu0 0.0
  %4305 = vmatpush.msra.mxu0 0.0
  %4306 = vmatpush.msra.mxu0 0.0
  %4307 = vmatpush.msra.mxu0 0.0
  %4308 = vmatpush.msra.mxu0 0.0
  %4309 = vmatpush.msra.mxu0 0.0
  %4310 = vmatpush.msra.mxu0 0.0
  %4311 = vmatpush.msra.mxu0 %v3664
  %4312 = vmatpush.msra.mxu0 %v3663
  %4313 = vmatpush.msra.mxu0 %v3662
  %4314 = vmatpush.msra.mxu0 %v3661
  %4315 = vmatmul.f32.gmra.mxu0 %v4297
  %v4316 = vpop.f32.mrf.mxu0
  %v4317 = vadd.f32 0.0, %v4316
  %4318 = vdwg.mxu0
  %v4319 = vadd.f32 %v4295, %v4317
  %v4320 = vxor.u32 %v4319, 2147483648
  %v4321 = vmul.f32 %v4320, 1.442695
  %v4322 = vpow.pop %v4321
  %v4323 = vadd.f32 %v4322, 1.0
  %v4324 = vrcp.pop %v4323
  %v4325 = vmul.f32 %v4323, %v4324
  %v4326 = vsub.f32 1.0, %v4325
  %v4327 = vmul.f32 %v4324, %v4326
  %v4328 = vadd.f32 %v4324, %v4327
  %vm4329 = vweird.f32 %v4323
  %vm4330 = vweird.f32 %v4324
  %vm4331 = vmor %vm4329, %vm4330
  %v4332 = vsel %vm4331, %v4324, %v4328
  %v4333 = vand.u32 2147483647, %v4323
  %vm4334 = vcmp.eq.f32.partialorder %v4333, 8.507059e+37
  %v4335 = vand.u32 %v4323, 2147483648
  %v4336 = vor.u32 1.1754944e-38, %v4335
  %v4337 = vsel %vm4334, %v4336, %v4332
  %v4338 = vmul.f32 1.0, %v4337
  %v4339 = vld [vmem:[%s3394 + $0xa] sm:$0x3]
  %4340 = vmatpush.msra.mxu0 0.0
  %4341 = vmatpush.msra.mxu0 0.0
  %4342 = vmatpush.msra.mxu0 0.0
  %4343 = vmatpush.msra.mxu0 0.0
  %4344 = vmatpush.msra.mxu0 0.0
  %4345 = vmatpush.msra.mxu0 0.0
  %4346 = vmatpush.msra.mxu0 0.0
  %4347 = vmatpush.msra.mxu0 0.0
  %4348 = vmatpush.msra.mxu0 0.0
  %4349 = vmatpush.msra.mxu0 0.0
  %4350 = vmatpush.msra.mxu0 0.0
  %4351 = vmatpush.msra.mxu0 0.0
  %4352 = vmatpush.msra.mxu0 %v3713
  %4353 = vmatpush.msra.mxu0 %v3712
  %4354 = vmatpush.msra.mxu0 %v3711
  %4355 = vmatpush.msra.mxu0 %v3710
  %4356 = vmatmul.f32.gmra.mxu0 %v4297
  %v4357 = vpop.f32.mrf.mxu0
  %v4358 = vadd.f32 0.0, %v4357
  %4359 = vdwg.mxu0
  %v4360 = vadd.f32 %v4339, %v4358
  %v4361 = vxor.u32 %v4360, 2147483648
  %v4362 = vmul.f32 %v4361, 1.442695
  %v4363 = vpow.pop %v4362
  %v4364 = vadd.f32 %v4363, 1.0
  %v4365 = vrcp.pop %v4364
  %v4366 = vmul.f32 %v4364, %v4365
  %v4367 = vsub.f32 1.0, %v4366
  %v4368 = vmul.f32 %v4365, %v4367
  %v4369 = vadd.f32 %v4365, %v4368
  %vm4370 = vweird.f32 %v4364
  %vm4371 = vweird.f32 %v4365
  %vm4372 = vmor %vm4370, %vm4371
  %v4373 = vsel %vm4372, %v4365, %v4369
  %v4374 = vand.u32 2147483647, %v4364
  %vm4375 = vcmp.eq.f32.partialorder %v4374, 8.507059e+37
  %v4376 = vand.u32 %v4364, 2147483648
  %v4377 = vor.u32 1.1754944e-38, %v4376
  %v4378 = vsel %vm4375, %v4377, %v4373
  %v4379 = vmul.f32 1.0, %v4378
  %v4380 = vld [vmem:[%s3434 + $0xa] sm:$0x3]
  %4381 = vmatpush.msra.mxu0 0.0
  %4382 = vmatpush.msra.mxu0 0.0
  %4383 = vmatpush.msra.mxu0 0.0
  %4384 = vmatpush.msra.mxu0 0.0
  %4385 = vmatpush.msra.mxu0 0.0
  %4386 = vmatpush.msra.mxu0 0.0
  %4387 = vmatpush.msra.mxu0 0.0
  %4388 = vmatpush.msra.mxu0 0.0
  %4389 = vmatpush.msra.mxu0 0.0
  %4390 = vmatpush.msra.mxu0 0.0
  %4391 = vmatpush.msra.mxu0 0.0
  %4392 = vmatpush.msra.mxu0 0.0
  %4393 = vmatpush.msra.mxu0 %v3759
  %4394 = vmatpush.msra.mxu0 %v3758
  %4395 = vmatpush.msra.mxu0 %v3757
  %4396 = vmatpush.msra.mxu0 %v3756
  %4397 = vmatmul.f32.gmra.mxu0 %v4297
  %v4398 = vpop.f32.mrf.mxu0
  %v4399 = vadd.f32 0.0, %v4398
  %4400 = vdwg.mxu0
  %v4401 = vadd.f32 %v4380, %v4399
  %v4402 = vtanh.pop %v4401
  %v4403 = vld [vmem:[%s3474 + $0xa] sm:$0x3]
  %4404 = vmatpush.msra.mxu0 0.0
  %4405 = vmatpush.msra.mxu0 0.0
  %4406 = vmatpush.msra.mxu0 0.0
  %4407 = vmatpush.msra.mxu0 0.0
  %4408 = vmatpush.msra.mxu0 0.0
  %4409 = vmatpush.msra.mxu0 0.0
  %4410 = vmatpush.msra.mxu0 0.0
  %4411 = vmatpush.msra.mxu0 0.0
  %4412 = vmatpush.msra.mxu0 0.0
  %4413 = vmatpush.msra.mxu0 0.0
  %4414 = vmatpush.msra.mxu0 0.0
  %4415 = vmatpush.msra.mxu0 0.0
  %4416 = vmatpush.msra.mxu0 %v3787
  %4417 = vmatpush.msra.mxu0 %v3786
  %4418 = vmatpush.msra.mxu0 %v3785
  %4419 = vmatpush.msra.mxu0 %v3784
  %4420 = vmatmul.f32.gmra.mxu0 %v4297
  %v4421 = vpop.f32.mrf.mxu0
  %v4422 = vadd.f32 0.0, %v4421
  %4423 = vdwg.mxu0
  %v4424 = vadd.f32 %v4403, %v4422
  %v4425 = vxor.u32 %v4424, 2147483648
  %v4426 = vmul.f32 %v4425, 1.442695
  %v4427 = vpow.pop %v4426
  %v4428 = vadd.f32 %v4427, 1.0
  %v4429 = vrcp.pop %v4428
  %v4430 = vmul.f32 %v4428, %v4429
  %v4431 = vsub.f32 1.0, %v4430
  %v4432 = vmul.f32 %v4429, %v4431
  %v4433 = vadd.f32 %v4429, %v4432
  %vm4434 = vweird.f32 %v4428
  %vm4435 = vweird.f32 %v4429
  %vm4436 = vmor %vm4434, %vm4435
  %v4437 = vsel %vm4436, %v4429, %v4433
  %v4438 = vand.u32 2147483647, %v4428
  %vm4439 = vcmp.eq.f32.partialorder %v4438, 8.507059e+37
  %v4440 = vand.u32 %v4428, 2147483648
  %v4441 = vor.u32 1.1754944e-38, %v4440
  %v4442 = vsel %vm4439, %v4441, %v4437
  %v4443 = vmul.f32 1.0, %v4442
  %v4444 = vmul.f32 %v4379, %v4138
  %v4445 = vmul.f32 %v4338, %v4402
  %v4446 = vadd.f32 %v4444, %v4445
  %v4447 = vtanh.pop %v4446
  %v4448 = vmul.f32 %v4443, %v4447
  %v4449 = vld [vmem:[#allocation3 + $0x6] sm:$0x3]
  %v4451 = vsel %vm124, %v4294, 0
  %4453 = vmatpush.msra.mxu0 0.0
  %4454 = vmatpush.msra.mxu0 0.0
  %4455 = vmatpush.msra.mxu0 0.0
  %4456 = vmatpush.msra.mxu0 0.0
  %4457 = vmatpush.msra.mxu0 0.0
  %4458 = vmatpush.msra.mxu0 0.0
  %4459 = vmatpush.msra.mxu0 0.0
  %4460 = vmatpush.msra.mxu0 0.0
  %4461 = vmatpush.msra.mxu0 0.0
  %4462 = vmatpush.msra.mxu0 0.0
  %4463 = vmatpush.msra.mxu0 0.0
  %4464 = vmatpush.msra.mxu0 0.0
  %4465 = vmatpush.msra.mxu0 %v3490
  %4466 = vmatpush.msra.mxu0 %v3489
  %4467 = vmatpush.msra.mxu0 %v3488
  %4468 = vmatpush.msra.mxu0 %v3487
  %4469 = vmatmul.f32.gmra.mxu0 %v4451
  %v4470 = vpop.f32.mrf.mxu0
  %v4471 = vadd.f32 0.0, %v4470
  %4472 = vdwg.mxu0
  %v4473 = vadd.f32 %v4449, %v4471
  %v4474 = vxor.u32 %v4473, 2147483648
  %v4475 = vmul.f32 %v4474, 1.442695
  %v4476 = vpow.pop %v4475
  %v4477 = vadd.f32 %v4476, 1.0
  %v4478 = vrcp.pop %v4477
  %v4479 = vmul.f32 %v4477, %v4478
  %v4480 = vsub.f32 1.0, %v4479
  %v4481 = vmul.f32 %v4478, %v4480
  %v4482 = vadd.f32 %v4478, %v4481
  %vm4483 = vweird.f32 %v4477
  %vm4484 = vweird.f32 %v4478
  %vm4485 = vmor %vm4483, %vm4484
  %v4486 = vsel %vm4485, %v4478, %v4482
  %v4487 = vand.u32 2147483647, %v4477
  %vm4488 = vcmp.eq.f32.partialorder %v4487, 8.507059e+37
  %v4489 = vand.u32 %v4477, 2147483648
  %v4490 = vor.u32 1.1754944e-38, %v4489
  %v4491 = vsel %vm4488, %v4490, %v4486
  %v4492 = vmul.f32 1.0, %v4491
  %v4493 = vld [vmem:[%s3234 + $0x6] sm:$0x3]
  %4494 = vmatpush.msra.mxu0 0.0
  %4495 = vmatpush.msra.mxu0 0.0
  %4496 = vmatpush.msra.mxu0 0.0
  %4497 = vmatpush.msra.mxu0 0.0
  %4498 = vmatpush.msra.mxu0 0.0
  %4499 = vmatpush.msra.mxu0 0.0
  %4500 = vmatpush.msra.mxu0 0.0
  %4501 = vmatpush.msra.mxu0 0.0
  %4502 = vmatpush.msra.mxu0 0.0
  %4503 = vmatpush.msra.mxu0 0.0
  %4504 = vmatpush.msra.mxu0 0.0
  %4505 = vmatpush.msra.mxu0 0.0
  %4506 = vmatpush.msra.mxu0 %v3539
  %4507 = vmatpush.msra.mxu0 %v3538
  %4508 = vmatpush.msra.mxu0 %v3537
  %4509 = vmatpush.msra.mxu0 %v3536
  %4510 = vmatmul.f32.gmra.mxu0 %v4451
  %v4511 = vpop.f32.mrf.mxu0
  %v4512 = vadd.f32 0.0, %v4511
  %4513 = vdwg.mxu0
  %v4514 = vadd.f32 %v4493, %v4512
  %v4515 = vxor.u32 %v4514, 2147483648
  %v4516 = vmul.f32 %v4515, 1.442695
  %v4517 = vpow.pop %v4516
  %v4518 = vadd.f32 %v4517, 1.0
  %v4519 = vrcp.pop %v4518
  %v4520 = vmul.f32 %v4518, %v4519
  %v4521 = vsub.f32 1.0, %v4520
  %v4522 = vmul.f32 %v4519, %v4521
  %v4523 = vadd.f32 %v4519, %v4522
  %vm4524 = vweird.f32 %v4518
  %vm4525 = vweird.f32 %v4519
  %vm4526 = vmor %vm4524, %vm4525
  %v4527 = vsel %vm4526, %v4519, %v4523
  %v4528 = vand.u32 2147483647, %v4518
  %vm4529 = vcmp.eq.f32.partialorder %v4528, 8.507059e+37
  %v4530 = vand.u32 %v4518, 2147483648
  %v4531 = vor.u32 1.1754944e-38, %v4530
  %v4532 = vsel %vm4529, %v4531, %v4527
  %v4533 = vmul.f32 1.0, %v4532
  %v4534 = vld [vmem:[%s3274 + $0x6] sm:$0x3]
  %4535 = vmatpush.msra.mxu0 0.0
  %4536 = vmatpush.msra.mxu0 0.0
  %4537 = vmatpush.msra.mxu0 0.0
  %4538 = vmatpush.msra.mxu0 0.0
  %4539 = vmatpush.msra.mxu0 0.0
  %4540 = vmatpush.msra.mxu0 0.0
  %4541 = vmatpush.msra.mxu0 0.0
  %4542 = vmatpush.msra.mxu0 0.0
  %4543 = vmatpush.msra.mxu0 0.0
  %4544 = vmatpush.msra.mxu0 0.0
  %4545 = vmatpush.msra.mxu0 0.0
  %4546 = vmatpush.msra.mxu0 0.0
  %4547 = vmatpush.msra.mxu0 %v3585
  %4548 = vmatpush.msra.mxu0 %v3584
  %4549 = vmatpush.msra.mxu0 %v3583
  %4550 = vmatpush.msra.mxu0 %v3582
  %4551 = vmatmul.f32.gmra.mxu0 %v4451
  %v4552 = vpop.f32.mrf.mxu0
  %v4553 = vadd.f32 0.0, %v4552
  %4554 = vdwg.mxu0
  %v4555 = vadd.f32 %v4534, %v4553
  %v4556 = vtanh.pop %v4555
  %v4557 = vld [vmem:[%s3314 + $0x6] sm:$0x3]
  %4558 = vmatpush.msra.mxu0 0.0
  %4559 = vmatpush.msra.mxu0 0.0
  %4560 = vmatpush.msra.mxu0 0.0
  %4561 = vmatpush.msra.mxu0 0.0
  %4562 = vmatpush.msra.mxu0 0.0
  %4563 = vmatpush.msra.mxu0 0.0
  %4564 = vmatpush.msra.mxu0 0.0
  %4565 = vmatpush.msra.mxu0 0.0
  %4566 = vmatpush.msra.mxu0 0.0
  %4567 = vmatpush.msra.mxu0 0.0
  %4568 = vmatpush.msra.mxu0 0.0
  %4569 = vmatpush.msra.mxu0 0.0
  %4570 = vmatpush.msra.mxu0 %v3613
  %4571 = vmatpush.msra.mxu0 %v3612
  %4572 = vmatpush.msra.mxu0 %v3611
  %4573 = vmatpush.msra.mxu0 %v3610
  %4574 = vmatmul.f32.gmra.mxu0 %v4451
  %v4575 = vpop.f32.mrf.mxu0
  %v4576 = vadd.f32 0.0, %v4575
  %4577 = vdwg.mxu0
  %v4578 = vadd.f32 %v4557, %v4576
  %v4579 = vxor.u32 %v4578, 2147483648
  %v4580 = vmul.f32 %v4579, 1.442695
  %v4581 = vpow.pop %v4580
  %v4582 = vadd.f32 %v4581, 1.0
  %v4583 = vrcp.pop %v4582
  %v4584 = vmul.f32 %v4582, %v4583
  %v4585 = vsub.f32 1.0, %v4584
  %v4586 = vmul.f32 %v4583, %v4585
  %v4587 = vadd.f32 %v4583, %v4586
  %vm4588 = vweird.f32 %v4582
  %vm4589 = vweird.f32 %v4583
  %vm4590 = vmor %vm4588, %vm4589
  %v4591 = vsel %vm4590, %v4583, %v4587
  %v4592 = vand.u32 2147483647, %v4582
  %vm4593 = vcmp.eq.f32.partialorder %v4592, 8.507059e+37
  %v4594 = vand.u32 %v4582, 2147483648
  %v4595 = vor.u32 1.1754944e-38, %v4594
  %v4596 = vsel %vm4593, %v4595, %v4591
  %v4597 = vmul.f32 1.0, %v4596
  %v4598 = vmul.f32 %v4533, %v4292
  %v4599 = vmul.f32 %v4492, %v4556
  %v4600 = vadd.f32 %v4598, %v4599
  %v4601 = vtanh.pop %v4600
  %v4602 = vmul.f32 %v4597, %v4601
  %v4603 = vld [vmem:[%s3354 + $0x8] sm:$0x3]
  %v4605 = vsel %vm124, %v4448, 0
  %4607 = vmatpush.msra.mxu0 0.0
  %4608 = vmatpush.msra.mxu0 0.0
  %4609 = vmatpush.msra.mxu0 0.0
  %4610 = vmatpush.msra.mxu0 0.0
  %4611 = vmatpush.msra.mxu0 0.0
  %4612 = vmatpush.msra.mxu0 0.0
  %4613 = vmatpush.msra.mxu0 0.0
  %4614 = vmatpush.msra.mxu0 0.0
  %4615 = vmatpush.msra.mxu0 0.0
  %4616 = vmatpush.msra.mxu0 0.0
  %4617 = vmatpush.msra.mxu0 0.0
  %4618 = vmatpush.msra.mxu0 0.0
  %4619 = vmatpush.msra.mxu0 %v3664
  %4620 = vmatpush.msra.mxu0 %v3663
  %4621 = vmatpush.msra.mxu0 %v3662
  %4622 = vmatpush.msra.mxu0 %v3661
  %4623 = vmatmul.f32.gmra.mxu0 %v4605
  %v4624 = vpop.f32.mrf.mxu0
  %v4625 = vadd.f32 0.0, %v4624
  %4626 = vdwg.mxu0
  %v4627 = vadd.f32 %v4603, %v4625
  %v4628 = vxor.u32 %v4627, 2147483648
  %v4629 = vmul.f32 %v4628, 1.442695
  %v4630 = vpow.pop %v4629
  %v4631 = vadd.f32 %v4630, 1.0
  %v4632 = vrcp.pop %v4631
  %v4633 = vmul.f32 %v4631, %v4632
  %v4634 = vsub.f32 1.0, %v4633
  %v4635 = vmul.f32 %v4632, %v4634
  %v4636 = vadd.f32 %v4632, %v4635
  %vm4637 = vweird.f32 %v4631
  %vm4638 = vweird.f32 %v4632
  %vm4639 = vmor %vm4637, %vm4638
  %v4640 = vsel %vm4639, %v4632, %v4636
  %v4641 = vand.u32 2147483647, %v4631
  %vm4642 = vcmp.eq.f32.partialorder %v4641, 8.507059e+37
  %v4643 = vand.u32 %v4631, 2147483648
  %v4644 = vor.u32 1.1754944e-38, %v4643
  %v4645 = vsel %vm4642, %v4644, %v4640
  %v4646 = vmul.f32 1.0, %v4645
  %v4647 = vld [vmem:[%s3394 + $0x8] sm:$0x3]
  %4648 = vmatpush.msra.mxu0 0.0
  %4649 = vmatpush.msra.mxu0 0.0
  %4650 = vmatpush.msra.mxu0 0.0
  %4651 = vmatpush.msra.mxu0 0.0
  %4652 = vmatpush.msra.mxu0 0.0
  %4653 = vmatpush.msra.mxu0 0.0
  %4654 = vmatpush.msra.mxu0 0.0
  %4655 = vmatpush.msra.mxu0 0.0
  %4656 = vmatpush.msra.mxu0 0.0
  %4657 = vmatpush.msra.mxu0 0.0
  %4658 = vmatpush.msra.mxu0 0.0
  %4659 = vmatpush.msra.mxu0 0.0
  %4660 = vmatpush.msra.mxu0 %v3713
  %4661 = vmatpush.msra.mxu0 %v3712
  %4662 = vmatpush.msra.mxu0 %v3711
  %4663 = vmatpush.msra.mxu0 %v3710
  %4664 = vmatmul.f32.gmra.mxu0 %v4605
  %v4665 = vpop.f32.mrf.mxu0
  %v4666 = vadd.f32 0.0, %v4665
  %4667 = vdwg.mxu0
  %v4668 = vadd.f32 %v4647, %v4666
  %v4669 = vxor.u32 %v4668, 2147483648
  %v4670 = vmul.f32 %v4669, 1.442695
  %v4671 = vpow.pop %v4670
  %v4672 = vadd.f32 %v4671, 1.0
  %v4673 = vrcp.pop %v4672
  %v4674 = vmul.f32 %v4672, %v4673
  %v4675 = vsub.f32 1.0, %v4674
  %v4676 = vmul.f32 %v4673, %v4675
  %v4677 = vadd.f32 %v4673, %v4676
  %vm4678 = vweird.f32 %v4672
  %vm4679 = vweird.f32 %v4673
  %vm4680 = vmor %vm4678, %vm4679
  %v4681 = vsel %vm4680, %v4673, %v4677
  %v4682 = vand.u32 2147483647, %v4672
  %vm4683 = vcmp.eq.f32.partialorder %v4682, 8.507059e+37
  %v4684 = vand.u32 %v4672, 2147483648
  %v4685 = vor.u32 1.1754944e-38, %v4684
  %v4686 = vsel %vm4683, %v4685, %v4681
  %v4687 = vmul.f32 1.0, %v4686
  %v4688 = vld [vmem:[%s3434 + $0x8] sm:$0x3]
  %4689 = vmatpush.msra.mxu0 0.0
  %4690 = vmatpush.msra.mxu0 0.0
  %4691 = vmatpush.msra.mxu0 0.0
  %4692 = vmatpush.msra.mxu0 0.0
  %4693 = vmatpush.msra.mxu0 0.0
  %4694 = vmatpush.msra.mxu0 0.0
  %4695 = vmatpush.msra.mxu0 0.0
  %4696 = vmatpush.msra.mxu0 0.0
  %4697 = vmatpush.msra.mxu0 0.0
  %4698 = vmatpush.msra.mxu0 0.0
  %4699 = vmatpush.msra.mxu0 0.0
  %4700 = vmatpush.msra.mxu0 0.0
  %4701 = vmatpush.msra.mxu0 %v3759
  %4702 = vmatpush.msra.mxu0 %v3758
  %4703 = vmatpush.msra.mxu0 %v3757
  %4704 = vmatpush.msra.mxu0 %v3756
  %4705 = vmatmul.f32.gmra.mxu0 %v4605
  %v4706 = vpop.f32.mrf.mxu0
  %v4707 = vadd.f32 0.0, %v4706
  %4708 = vdwg.mxu0
  %v4709 = vadd.f32 %v4688, %v4707
  %v4710 = vtanh.pop %v4709
  %v4711 = vld [vmem:[%s3474 + $0x8] sm:$0x3]
  %4712 = vmatpush.msra.mxu0 0.0
  %4713 = vmatpush.msra.mxu0 0.0
  %4714 = vmatpush.msra.mxu0 0.0
  %4715 = vmatpush.msra.mxu0 0.0
  %4716 = vmatpush.msra.mxu0 0.0
  %4717 = vmatpush.msra.mxu0 0.0
  %4718 = vmatpush.msra.mxu0 0.0
  %4719 = vmatpush.msra.mxu0 0.0
  %4720 = vmatpush.msra.mxu0 0.0
  %4721 = vmatpush.msra.mxu0 0.0
  %4722 = vmatpush.msra.mxu0 0.0
  %4723 = vmatpush.msra.mxu0 0.0
  %4724 = vmatpush.msra.mxu0 %v3787
  %4725 = vmatpush.msra.mxu0 %v3786
  %4726 = vmatpush.msra.mxu0 %v3785
  %4727 = vmatpush.msra.mxu0 %v3784
  %4728 = vmatmul.f32.gmra.mxu0 %v4605
  %v4729 = vpop.f32.mrf.mxu0
  %v4730 = vadd.f32 0.0, %v4729
  %4731 = vdwg.mxu0
  %v4732 = vadd.f32 %v4711, %v4730
  %v4733 = vxor.u32 %v4732, 2147483648
  %v4734 = vmul.f32 %v4733, 1.442695
  %v4735 = vpow.pop %v4734
  %v4736 = vadd.f32 %v4735, 1.0
  %v4737 = vrcp.pop %v4736
  %v4738 = vmul.f32 %v4736, %v4737
  %v4739 = vsub.f32 1.0, %v4738
  %v4740 = vmul.f32 %v4737, %v4739
  %v4741 = vadd.f32 %v4737, %v4740
  %vm4742 = vweird.f32 %v4736
  %vm4743 = vweird.f32 %v4737
  %vm4744 = vmor %vm4742, %vm4743
  %v4745 = vsel %vm4744, %v4737, %v4741
  %v4746 = vand.u32 2147483647, %v4736
  %vm4747 = vcmp.eq.f32.partialorder %v4746, 8.507059e+37
  %v4748 = vand.u32 %v4736, 2147483648
  %v4749 = vor.u32 1.1754944e-38, %v4748
  %v4750 = vsel %vm4747, %v4749, %v4745
  %v4751 = vmul.f32 1.0, %v4750
  %v4752 = vmul.f32 %v4687, %v4446
  %v4753 = vmul.f32 %v4646, %v4710
  %v4754 = vadd.f32 %v4752, %v4753
  %v4755 = vtanh.pop %v4754
  %v4756 = vmul.f32 %v4751, %v4755
  %v4757 = vld [vmem:[#allocation3 + $0x8] sm:$0x3]
  %v4759 = vsel %vm124, %v4602, 0
  %4761 = vmatpush.msra.mxu0 0.0
  %4762 = vmatpush.msra.mxu0 0.0
  %4763 = vmatpush.msra.mxu0 0.0
  %4764 = vmatpush.msra.mxu0 0.0
  %4765 = vmatpush.msra.mxu0 0.0
  %4766 = vmatpush.msra.mxu0 0.0
  %4767 = vmatpush.msra.mxu0 0.0
  %4768 = vmatpush.msra.mxu0 0.0
  %4769 = vmatpush.msra.mxu0 0.0
  %4770 = vmatpush.msra.mxu0 0.0
  %4771 = vmatpush.msra.mxu0 0.0
  %4772 = vmatpush.msra.mxu0 0.0
  %4773 = vmatpush.msra.mxu0 %v3490
  %4774 = vmatpush.msra.mxu0 %v3489
  %4775 = vmatpush.msra.mxu0 %v3488
  %4776 = vmatpush.msra.mxu0 %v3487
  %4777 = vmatmul.f32.gmra.mxu0 %v4759
  %v4778 = vpop.f32.mrf.mxu0
  %v4779 = vadd.f32 0.0, %v4778
  %4780 = vdwg.mxu0
  %v4781 = vadd.f32 %v4757, %v4779
  %v4782 = vxor.u32 %v4781, 2147483648
  %v4783 = vmul.f32 %v4782, 1.442695
  %v4784 = vpow.pop %v4783
  %v4785 = vadd.f32 %v4784, 1.0
  %v4786 = vrcp.pop %v4785
  %v4787 = vmul.f32 %v4785, %v4786
  %v4788 = vsub.f32 1.0, %v4787
  %v4789 = vmul.f32 %v4786, %v4788
  %v4790 = vadd.f32 %v4786, %v4789
  %vm4791 = vweird.f32 %v4785
  %vm4792 = vweird.f32 %v4786
  %vm4793 = vmor %vm4791, %vm4792
  %v4794 = vsel %vm4793, %v4786, %v4790
  %v4795 = vand.u32 2147483647, %v4785
  %vm4796 = vcmp.eq.f32.partialorder %v4795, 8.507059e+37
  %v4797 = vand.u32 %v4785, 2147483648
  %v4798 = vor.u32 1.1754944e-38, %v4797
  %v4799 = vsel %vm4796, %v4798, %v4794
  %v4800 = vmul.f32 1.0, %v4799
  %v4801 = vld [vmem:[%s3234 + $0x8] sm:$0x3]
  %4802 = vmatpush.msra.mxu0 0.0
  %4803 = vmatpush.msra.mxu0 0.0
  %4804 = vmatpush.msra.mxu0 0.0
  %4805 = vmatpush.msra.mxu0 0.0
  %4806 = vmatpush.msra.mxu0 0.0
  %4807 = vmatpush.msra.mxu0 0.0
  %4808 = vmatpush.msra.mxu0 0.0
  %4809 = vmatpush.msra.mxu0 0.0
  %4810 = vmatpush.msra.mxu0 0.0
  %4811 = vmatpush.msra.mxu0 0.0
  %4812 = vmatpush.msra.mxu0 0.0
  %4813 = vmatpush.msra.mxu0 0.0
  %4814 = vmatpush.msra.mxu0 %v3539
  %4815 = vmatpush.msra.mxu0 %v3538
  %4816 = vmatpush.msra.mxu0 %v3537
  %4817 = vmatpush.msra.mxu0 %v3536
  %4818 = vmatmul.f32.gmra.mxu0 %v4759
  %v4819 = vpop.f32.mrf.mxu0
  %v4820 = vadd.f32 0.0, %v4819
  %4821 = vdwg.mxu0
  %v4822 = vadd.f32 %v4801, %v4820
  %v4823 = vxor.u32 %v4822, 2147483648
  %v4824 = vmul.f32 %v4823, 1.442695
  %v4825 = vpow.pop %v4824
  %v4826 = vadd.f32 %v4825, 1.0
  %v4827 = vrcp.pop %v4826
  %v4828 = vmul.f32 %v4826, %v4827
  %v4829 = vsub.f32 1.0, %v4828
  %v4830 = vmul.f32 %v4827, %v4829
  %v4831 = vadd.f32 %v4827, %v4830
  %vm4832 = vweird.f32 %v4826
  %vm4833 = vweird.f32 %v4827
  %vm4834 = vmor %vm4832, %vm4833
  %v4835 = vsel %vm4834, %v4827, %v4831
  %v4836 = vand.u32 2147483647, %v4826
  %vm4837 = vcmp.eq.f32.partialorder %v4836, 8.507059e+37
  %v4838 = vand.u32 %v4826, 2147483648
  %v4839 = vor.u32 1.1754944e-38, %v4838
  %v4840 = vsel %vm4837, %v4839, %v4835
  %v4841 = vmul.f32 1.0, %v4840
  %v4842 = vld [vmem:[%s3274 + $0x8] sm:$0x3]
  %4843 = vmatpush.msra.mxu0 0.0
  %4844 = vmatpush.msra.mxu0 0.0
  %4845 = vmatpush.msra.mxu0 0.0
  %4846 = vmatpush.msra.mxu0 0.0
  %4847 = vmatpush.msra.mxu0 0.0
  %4848 = vmatpush.msra.mxu0 0.0
  %4849 = vmatpush.msra.mxu0 0.0
  %4850 = vmatpush.msra.mxu0 0.0
  %4851 = vmatpush.msra.mxu0 0.0
  %4852 = vmatpush.msra.mxu0 0.0
  %4853 = vmatpush.msra.mxu0 0.0
  %4854 = vmatpush.msra.mxu0 0.0
  %4855 = vmatpush.msra.mxu0 %v3585
  %4856 = vmatpush.msra.mxu0 %v3584
  %4857 = vmatpush.msra.mxu0 %v3583
  %4858 = vmatpush.msra.mxu0 %v3582
  %4859 = vmatmul.f32.gmra.mxu0 %v4759
  %v4860 = vpop.f32.mrf.mxu0
  %v4861 = vadd.f32 0.0, %v4860
  %4862 = vdwg.mxu0
  %v4863 = vadd.f32 %v4842, %v4861
  %v4864 = vtanh.pop %v4863
  %v4865 = vld [vmem:[%s3314 + $0x8] sm:$0x3]
  %4866 = vmatpush.msra.mxu0 0.0
  %4867 = vmatpush.msra.mxu0 0.0
  %4868 = vmatpush.msra.mxu0 0.0
  %4869 = vmatpush.msra.mxu0 0.0
  %4870 = vmatpush.msra.mxu0 0.0
  %4871 = vmatpush.msra.mxu0 0.0
  %4872 = vmatpush.msra.mxu0 0.0
  %4873 = vmatpush.msra.mxu0 0.0
  %4874 = vmatpush.msra.mxu0 0.0
  %4875 = vmatpush.msra.mxu0 0.0
  %4876 = vmatpush.msra.mxu0 0.0
  %4877 = vmatpush.msra.mxu0 0.0
  %4878 = vmatpush.msra.mxu0 %v3613
  %4879 = vmatpush.msra.mxu0 %v3612
  %4880 = vmatpush.msra.mxu0 %v3611
  %4881 = vmatpush.msra.mxu0 %v3610
  %4882 = vmatmul.f32.gmra.mxu0 %v4759
  %v4883 = vpop.f32.mrf.mxu0
  %v4884 = vadd.f32 0.0, %v4883
  %4885 = vdwg.mxu0
  %v4886 = vadd.f32 %v4865, %v4884
  %v4887 = vxor.u32 %v4886, 2147483648
  %v4888 = vmul.f32 %v4887, 1.442695
  %v4889 = vpow.pop %v4888
  %v4890 = vadd.f32 %v4889, 1.0
  %v4891 = vrcp.pop %v4890
  %v4892 = vmul.f32 %v4890, %v4891
  %v4893 = vsub.f32 1.0, %v4892
  %v4894 = vmul.f32 %v4891, %v4893
  %v4895 = vadd.f32 %v4891, %v4894
  %vm4896 = vweird.f32 %v4890
  %vm4897 = vweird.f32 %v4891
  %vm4898 = vmor %vm4896, %vm4897
  %v4899 = vsel %vm4898, %v4891, %v4895
  %v4900 = vand.u32 2147483647, %v4890
  %vm4901 = vcmp.eq.f32.partialorder %v4900, 8.507059e+37
  %v4902 = vand.u32 %v4890, 2147483648
  %v4903 = vor.u32 1.1754944e-38, %v4902
  %v4904 = vsel %vm4901, %v4903, %v4899
  %v4905 = vmul.f32 1.0, %v4904
  %v4906 = vmul.f32 %v4841, %v4600
  %v4907 = vmul.f32 %v4800, %v4864
  %v4908 = vadd.f32 %v4906, %v4907
  %v4909 = vtanh.pop %v4908
  %v4910 = vmul.f32 %v4905, %v4909
  %v4911 = vld [vmem:[%s3354 + $0x6] sm:$0x3]
  %v4913 = vsel %vm124, %v4756, 0
  %4915 = vmatpush.msra.mxu0 0.0
  %4916 = vmatpush.msra.mxu0 0.0
  %4917 = vmatpush.msra.mxu0 0.0
  %4918 = vmatpush.msra.mxu0 0.0
  %4919 = vmatpush.msra.mxu0 0.0
  %4920 = vmatpush.msra.mxu0 0.0
  %4921 = vmatpush.msra.mxu0 0.0
  %4922 = vmatpush.msra.mxu0 0.0
  %4923 = vmatpush.msra.mxu0 0.0
  %4924 = vmatpush.msra.mxu0 0.0
  %4925 = vmatpush.msra.mxu0 0.0
  %4926 = vmatpush.msra.mxu0 0.0
  %4927 = vmatpush.msra.mxu0 %v3664
  %4928 = vmatpush.msra.mxu0 %v3663
  %4929 = vmatpush.msra.mxu0 %v3662
  %4930 = vmatpush.msra.mxu0 %v3661
  %4931 = vmatmul.f32.gmra.mxu0 %v4913
  %v4932 = vpop.f32.mrf.mxu0
  %v4933 = vadd.f32 0.0, %v4932
  %4934 = vdwg.mxu0
  %v4935 = vadd.f32 %v4911, %v4933
  %v4936 = vxor.u32 %v4935, 2147483648
  %v4937 = vmul.f32 %v4936, 1.442695
  %v4938 = vpow.pop %v4937
  %v4939 = vadd.f32 %v4938, 1.0
  %v4940 = vrcp.pop %v4939
  %v4941 = vmul.f32 %v4939, %v4940
  %v4942 = vsub.f32 1.0, %v4941
  %v4943 = vmul.f32 %v4940, %v4942
  %v4944 = vadd.f32 %v4940, %v4943
  %vm4945 = vweird.f32 %v4939
  %vm4946 = vweird.f32 %v4940
  %vm4947 = vmor %vm4945, %vm4946
  %v4948 = vsel %vm4947, %v4940, %v4944
  %v4949 = vand.u32 2147483647, %v4939
  %vm4950 = vcmp.eq.f32.partialorder %v4949, 8.507059e+37
  %v4951 = vand.u32 %v4939, 2147483648
  %v4952 = vor.u32 1.1754944e-38, %v4951
  %v4953 = vsel %vm4950, %v4952, %v4948
  %v4954 = vmul.f32 1.0, %v4953
  %v4955 = vld [vmem:[%s3394 + $0x6] sm:$0x3]
  %4956 = vmatpush.msra.mxu0 0.0
  %4957 = vmatpush.msra.mxu0 0.0
  %4958 = vmatpush.msra.mxu0 0.0
  %4959 = vmatpush.msra.mxu0 0.0
  %4960 = vmatpush.msra.mxu0 0.0
  %4961 = vmatpush.msra.mxu0 0.0
  %4962 = vmatpush.msra.mxu0 0.0
  %4963 = vmatpush.msra.mxu0 0.0
  %4964 = vmatpush.msra.mxu0 0.0
  %4965 = vmatpush.msra.mxu0 0.0
  %4966 = vmatpush.msra.mxu0 0.0
  %4967 = vmatpush.msra.mxu0 0.0
  %4968 = vmatpush.msra.mxu0 %v3713
  %4969 = vmatpush.msra.mxu0 %v3712
  %4970 = vmatpush.msra.mxu0 %v3711
  %4971 = vmatpush.msra.mxu0 %v3710
  %4972 = vmatmul.f32.gmra.mxu0 %v4913
  %v4973 = vpop.f32.mrf.mxu0
  %v4974 = vadd.f32 0.0, %v4973
  %4975 = vdwg.mxu0
  %v4976 = vadd.f32 %v4955, %v4974
  %v4977 = vxor.u32 %v4976, 2147483648
  %v4978 = vmul.f32 %v4977, 1.442695
  %v4979 = vpow.pop %v4978
  %v4980 = vadd.f32 %v4979, 1.0
  %v4981 = vrcp.pop %v4980
  %v4982 = vmul.f32 %v4980, %v4981
  %v4983 = vsub.f32 1.0, %v4982
  %v4984 = vmul.f32 %v4981, %v4983
  %v4985 = vadd.f32 %v4981, %v4984
  %vm4986 = vweird.f32 %v4980
  %vm4987 = vweird.f32 %v4981
  %vm4988 = vmor %vm4986, %vm4987
  %v4989 = vsel %vm4988, %v4981, %v4985
  %v4990 = vand.u32 2147483647, %v4980
  %vm4991 = vcmp.eq.f32.partialorder %v4990, 8.507059e+37
  %v4992 = vand.u32 %v4980, 2147483648
  %v4993 = vor.u32 1.1754944e-38, %v4992
  %v4994 = vsel %vm4991, %v4993, %v4989
  %v4995 = vmul.f32 1.0, %v4994
  %v4996 = vld [vmem:[%s3434 + $0x6] sm:$0x3]
  %4997 = vmatpush.msra.mxu0 0.0
  %4998 = vmatpush.msra.mxu0 0.0
  %4999 = vmatpush.msra.mxu0 0.0
  %5000 = vmatpush.msra.mxu0 0.0
  %5001 = vmatpush.msra.mxu0 0.0
  %5002 = vmatpush.msra.mxu0 0.0
  %5003 = vmatpush.msra.mxu0 0.0
  %5004 = vmatpush.msra.mxu0 0.0
  %5005 = vmatpush.msra.mxu0 0.0
  %5006 = vmatpush.msra.mxu0 0.0
  %5007 = vmatpush.msra.mxu0 0.0
  %5008 = vmatpush.msra.mxu0 0.0
  %5009 = vmatpush.msra.mxu0 %v3759
  %5010 = vmatpush.msra.mxu0 %v3758
  %5011 = vmatpush.msra.mxu0 %v3757
  %5012 = vmatpush.msra.mxu0 %v3756
  %5013 = vmatmul.f32.gmra.mxu0 %v4913
  %v5014 = vpop.f32.mrf.mxu0
  %v5015 = vadd.f32 0.0, %v5014
  %5016 = vdwg.mxu0
  %v5017 = vadd.f32 %v4996, %v5015
  %v5018 = vtanh.pop %v5017
  %v5019 = vld [vmem:[%s3474 + $0x6] sm:$0x3]
  %5020 = vmatpush.msra.mxu0 0.0
  %5021 = vmatpush.msra.mxu0 0.0
  %5022 = vmatpush.msra.mxu0 0.0
  %5023 = vmatpush.msra.mxu0 0.0
  %5024 = vmatpush.msra.mxu0 0.0
  %5025 = vmatpush.msra.mxu0 0.0
  %5026 = vmatpush.msra.mxu0 0.0
  %5027 = vmatpush.msra.mxu0 0.0
  %5028 = vmatpush.msra.mxu0 0.0
  %5029 = vmatpush.msra.mxu0 0.0
  %5030 = vmatpush.msra.mxu0 0.0
  %5031 = vmatpush.msra.mxu0 0.0
  %5032 = vmatpush.msra.mxu0 %v3787
  %5033 = vmatpush.msra.mxu0 %v3786
  %5034 = vmatpush.msra.mxu0 %v3785
  %5035 = vmatpush.msra.mxu0 %v3784
  %5036 = vmatmul.f32.gmra.mxu0 %v4913
  %v5037 = vpop.f32.mrf.mxu0
  %v5038 = vadd.f32 0.0, %v5037
  %5039 = vdwg.mxu0
  %v5040 = vadd.f32 %v5019, %v5038
  %v5041 = vxor.u32 %v5040, 2147483648
  %v5042 = vmul.f32 %v5041, 1.442695
  %v5043 = vpow.pop %v5042
  %v5044 = vadd.f32 %v5043, 1.0
  %v5045 = vrcp.pop %v5044
  %v5046 = vmul.f32 %v5044, %v5045
  %v5047 = vsub.f32 1.0, %v5046
  %v5048 = vmul.f32 %v5045, %v5047
  %v5049 = vadd.f32 %v5045, %v5048
  %vm5050 = vweird.f32 %v5044
  %vm5051 = vweird.f32 %v5045
  %vm5052 = vmor %vm5050, %vm5051
  %v5053 = vsel %vm5052, %v5045, %v5049
  %v5054 = vand.u32 2147483647, %v5044
  %vm5055 = vcmp.eq.f32.partialorder %v5054, 8.507059e+37
  %v5056 = vand.u32 %v5044, 2147483648
  %v5057 = vor.u32 1.1754944e-38, %v5056
  %v5058 = vsel %vm5055, %v5057, %v5053
  %v5059 = vmul.f32 1.0, %v5058
  %v5060 = vmul.f32 %v4995, %v4754
  %v5061 = vmul.f32 %v4954, %v5018
  %v5062 = vadd.f32 %v5060, %v5061
  %v5063 = vtanh.pop %v5062
  %v5064 = vmul.f32 %v5059, %v5063
  %v5065 = vld [vmem:[#allocation3 + $0xa] sm:$0x3]
  %v5067 = vsel %vm124, %v4910, 0
  %5069 = vmatpush.msra.mxu0 0.0
  %5070 = vmatpush.msra.mxu0 0.0
  %5071 = vmatpush.msra.mxu0 0.0
  %5072 = vmatpush.msra.mxu0 0.0
  %5073 = vmatpush.msra.mxu0 0.0
  %5074 = vmatpush.msra.mxu0 0.0
  %5075 = vmatpush.msra.mxu0 0.0
  %5076 = vmatpush.msra.mxu0 0.0
  %5077 = vmatpush.msra.mxu0 0.0
  %5078 = vmatpush.msra.mxu0 0.0
  %5079 = vmatpush.msra.mxu0 0.0
  %5080 = vmatpush.msra.mxu0 0.0
  %5081 = vmatpush.msra.mxu0 %v3490
  %5082 = vmatpush.msra.mxu0 %v3489
  %5083 = vmatpush.msra.mxu0 %v3488
  %5084 = vmatpush.msra.mxu0 %v3487
  %5085 = vmatmul.f32.gmra.mxu0 %v5067
  %v5086 = vpop.f32.mrf.mxu0
  %v5087 = vadd.f32 0.0, %v5086
  %5088 = vdwg.mxu0
  %v5089 = vadd.f32 %v5065, %v5087
  %v5090 = vxor.u32 %v5089, 2147483648
  %v5091 = vmul.f32 %v5090, 1.442695
  %v5092 = vpow.pop %v5091
  %v5093 = vadd.f32 %v5092, 1.0
  %v5094 = vrcp.pop %v5093
  %v5095 = vmul.f32 %v5093, %v5094
  %v5096 = vsub.f32 1.0, %v5095
  %v5097 = vmul.f32 %v5094, %v5096
  %v5098 = vadd.f32 %v5094, %v5097
  %vm5099 = vweird.f32 %v5093
  %vm5100 = vweird.f32 %v5094
  %vm5101 = vmor %vm5099, %vm5100
  %v5102 = vsel %vm5101, %v5094, %v5098
  %v5103 = vand.u32 2147483647, %v5093
  %vm5104 = vcmp.eq.f32.partialorder %v5103, 8.507059e+37
  %v5105 = vand.u32 %v5093, 2147483648
  %v5106 = vor.u32 1.1754944e-38, %v5105
  %v5107 = vsel %vm5104, %v5106, %v5102
  %v5108 = vmul.f32 1.0, %v5107
  %v5109 = vld [vmem:[%s3234 + $0xa] sm:$0x3]
  %5110 = vmatpush.msra.mxu0 0.0
  %5111 = vmatpush.msra.mxu0 0.0
  %5112 = vmatpush.msra.mxu0 0.0
  %5113 = vmatpush.msra.mxu0 0.0
  %5114 = vmatpush.msra.mxu0 0.0
  %5115 = vmatpush.msra.mxu0 0.0
  %5116 = vmatpush.msra.mxu0 0.0
  %5117 = vmatpush.msra.mxu0 0.0
  %5118 = vmatpush.msra.mxu0 0.0
  %5119 = vmatpush.msra.mxu0 0.0
  %5120 = vmatpush.msra.mxu0 0.0
  %5121 = vmatpush.msra.mxu0 0.0
  %5122 = vmatpush.msra.mxu0 %v3539
  %5123 = vmatpush.msra.mxu0 %v3538
  %5124 = vmatpush.msra.mxu0 %v3537
  %5125 = vmatpush.msra.mxu0 %v3536
  %5126 = vmatmul.f32.gmra.mxu0 %v5067
  %v5127 = vpop.f32.mrf.mxu0
  %v5128 = vadd.f32 0.0, %v5127
  %5129 = vdwg.mxu0
  %v5130 = vadd.f32 %v5109, %v5128
  %v5131 = vxor.u32 %v5130, 2147483648
  %v5132 = vmul.f32 %v5131, 1.442695
  %v5133 = vpow.pop %v5132
  %v5134 = vadd.f32 %v5133, 1.0
  %v5135 = vrcp.pop %v5134
  %v5136 = vmul.f32 %v5134, %v5135
  %v5137 = vsub.f32 1.0, %v5136
  %v5138 = vmul.f32 %v5135, %v5137
  %v5139 = vadd.f32 %v5135, %v5138
  %vm5140 = vweird.f32 %v5134
  %vm5141 = vweird.f32 %v5135
  %vm5142 = vmor %vm5140, %vm5141
  %v5143 = vsel %vm5142, %v5135, %v5139
  %v5144 = vand.u32 2147483647, %v5134
  %vm5145 = vcmp.eq.f32.partialorder %v5144, 8.507059e+37
  %v5146 = vand.u32 %v5134, 2147483648
  %v5147 = vor.u32 1.1754944e-38, %v5146
  %v5148 = vsel %vm5145, %v5147, %v5143
  %v5149 = vmul.f32 1.0, %v5148
  %v5150 = vld [vmem:[%s3274 + $0xa] sm:$0x3]
  %5151 = vmatpush.msra.mxu0 0.0
  %5152 = vmatpush.msra.mxu0 0.0
  %5153 = vmatpush.msra.mxu0 0.0
  %5154 = vmatpush.msra.mxu0 0.0
  %5155 = vmatpush.msra.mxu0 0.0
  %5156 = vmatpush.msra.mxu0 0.0
  %5157 = vmatpush.msra.mxu0 0.0
  %5158 = vmatpush.msra.mxu0 0.0
  %5159 = vmatpush.msra.mxu0 0.0
  %5160 = vmatpush.msra.mxu0 0.0
  %5161 = vmatpush.msra.mxu0 0.0
  %5162 = vmatpush.msra.mxu0 0.0
  %5163 = vmatpush.msra.mxu0 %v3585
  %5164 = vmatpush.msra.mxu0 %v3584
  %5165 = vmatpush.msra.mxu0 %v3583
  %5166 = vmatpush.msra.mxu0 %v3582
  %5167 = vmatmul.f32.gmra.mxu0 %v5067
  %v5168 = vpop.f32.mrf.mxu0
  %v5169 = vadd.f32 0.0, %v5168
  %5170 = vdwg.mxu0
  %v5171 = vadd.f32 %v5150, %v5169
  %v5172 = vtanh.pop %v5171
  %v5173 = vld [vmem:[%s3314 + $0xa] sm:$0x3]
  %5174 = vmatpush.msra.mxu0 0.0
  %5175 = vmatpush.msra.mxu0 0.0
  %5176 = vmatpush.msra.mxu0 0.0
  %5177 = vmatpush.msra.mxu0 0.0
  %5178 = vmatpush.msra.mxu0 0.0
  %5179 = vmatpush.msra.mxu0 0.0
  %5180 = vmatpush.msra.mxu0 0.0
  %5181 = vmatpush.msra.mxu0 0.0
  %5182 = vmatpush.msra.mxu0 0.0
  %5183 = vmatpush.msra.mxu0 0.0
  %5184 = vmatpush.msra.mxu0 0.0
  %5185 = vmatpush.msra.mxu0 0.0
  %5186 = vmatpush.msra.mxu0 %v3613
  %5187 = vmatpush.msra.mxu0 %v3612
  %5188 = vmatpush.msra.mxu0 %v3611
  %5189 = vmatpush.msra.mxu0 %v3610
  %5190 = vmatmul.f32.gmra.mxu0 %v5067
  %v5191 = vpop.f32.mrf.mxu0
  %v5192 = vadd.f32 0.0, %v5191
  %5193 = vdwg.mxu0
  %v5194 = vadd.f32 %v5173, %v5192
  %v5195 = vxor.u32 %v5194, 2147483648
  %v5196 = vmul.f32 %v5195, 1.442695
  %v5197 = vpow.pop %v5196
  %v5198 = vadd.f32 %v5197, 1.0
  %v5199 = vrcp.pop %v5198
  %v5200 = vmul.f32 %v5198, %v5199
  %v5201 = vsub.f32 1.0, %v5200
  %v5202 = vmul.f32 %v5199, %v5201
  %v5203 = vadd.f32 %v5199, %v5202
  %vm5204 = vweird.f32 %v5198
  %vm5205 = vweird.f32 %v5199
  %vm5206 = vmor %vm5204, %vm5205
  %v5207 = vsel %vm5206, %v5199, %v5203
  %v5208 = vand.u32 2147483647, %v5198
  %vm5209 = vcmp.eq.f32.partialorder %v5208, 8.507059e+37
  %v5210 = vand.u32 %v5198, 2147483648
  %v5211 = vor.u32 1.1754944e-38, %v5210
  %v5212 = vsel %vm5209, %v5211, %v5207
  %v5213 = vmul.f32 1.0, %v5212
  %v5214 = vmul.f32 %v5149, %v4908
  %v5215 = vmul.f32 %v5108, %v5172
  %v5216 = vadd.f32 %v5214, %v5215
  %v5217 = vtanh.pop %v5216
  %v5218 = vmul.f32 %v5213, %v5217
  %v5219 = vld [vmem:[%s3354 + $0x4] sm:$0x3]
  %v5221 = vsel %vm124, %v5064, 0
  %5223 = vmatpush.msra.mxu0 0.0
  %5224 = vmatpush.msra.mxu0 0.0
  %5225 = vmatpush.msra.mxu0 0.0
  %5226 = vmatpush.msra.mxu0 0.0
  %5227 = vmatpush.msra.mxu0 0.0
  %5228 = vmatpush.msra.mxu0 0.0
  %5229 = vmatpush.msra.mxu0 0.0
  %5230 = vmatpush.msra.mxu0 0.0
  %5231 = vmatpush.msra.mxu0 0.0
  %5232 = vmatpush.msra.mxu0 0.0
  %5233 = vmatpush.msra.mxu0 0.0
  %5234 = vmatpush.msra.mxu0 0.0
  %5235 = vmatpush.msra.mxu0 %v3664
  %5236 = vmatpush.msra.mxu0 %v3663
  %5237 = vmatpush.msra.mxu0 %v3662
  %5238 = vmatpush.msra.mxu0 %v3661
  %5239 = vmatmul.f32.gmra.mxu0 %v5221
  %v5240 = vpop.f32.mrf.mxu0
  %v5241 = vadd.f32 0.0, %v5240
  %5242 = vdwg.mxu0
  %v5243 = vadd.f32 %v5219, %v5241
  %v5244 = vxor.u32 %v5243, 2147483648
  %v5245 = vmul.f32 %v5244, 1.442695
  %v5246 = vpow.pop %v5245
  %v5247 = vadd.f32 %v5246, 1.0
  %v5248 = vrcp.pop %v5247
  %v5249 = vmul.f32 %v5247, %v5248
  %v5250 = vsub.f32 1.0, %v5249
  %v5251 = vmul.f32 %v5248, %v5250
  %v5252 = vadd.f32 %v5248, %v5251
  %vm5253 = vweird.f32 %v5247
  %vm5254 = vweird.f32 %v5248
  %vm5255 = vmor %vm5253, %vm5254
  %v5256 = vsel %vm5255, %v5248, %v5252
  %v5257 = vand.u32 2147483647, %v5247
  %vm5258 = vcmp.eq.f32.partialorder %v5257, 8.507059e+37
  %v5259 = vand.u32 %v5247, 2147483648
  %v5260 = vor.u32 1.1754944e-38, %v5259
  %v5261 = vsel %vm5258, %v5260, %v5256
  %v5262 = vmul.f32 1.0, %v5261
  %v5263 = vld [vmem:[%s3394 + $0x4] sm:$0x3]
  %5264 = vmatpush.msra.mxu0 0.0
  %5265 = vmatpush.msra.mxu0 0.0
  %5266 = vmatpush.msra.mxu0 0.0
  %5267 = vmatpush.msra.mxu0 0.0
  %5268 = vmatpush.msra.mxu0 0.0
  %5269 = vmatpush.msra.mxu0 0.0
  %5270 = vmatpush.msra.mxu0 0.0
  %5271 = vmatpush.msra.mxu0 0.0
  %5272 = vmatpush.msra.mxu0 0.0
  %5273 = vmatpush.msra.mxu0 0.0
  %5274 = vmatpush.msra.mxu0 0.0
  %5275 = vmatpush.msra.mxu0 0.0
  %5276 = vmatpush.msra.mxu0 %v3713
  %5277 = vmatpush.msra.mxu0 %v3712
  %5278 = vmatpush.msra.mxu0 %v3711
  %5279 = vmatpush.msra.mxu0 %v3710
  %5280 = vmatmul.f32.gmra.mxu0 %v5221
  %v5281 = vpop.f32.mrf.mxu0
  %v5282 = vadd.f32 0.0, %v5281
  %5283 = vdwg.mxu0
  %v5284 = vadd.f32 %v5263, %v5282
  %v5285 = vxor.u32 %v5284, 2147483648
  %v5286 = vmul.f32 %v5285, 1.442695
  %v5287 = vpow.pop %v5286
  %v5288 = vadd.f32 %v5287, 1.0
  %v5289 = vrcp.pop %v5288
  %v5290 = vmul.f32 %v5288, %v5289
  %v5291 = vsub.f32 1.0, %v5290
  %v5292 = vmul.f32 %v5289, %v5291
  %v5293 = vadd.f32 %v5289, %v5292
  %vm5294 = vweird.f32 %v5288
  %vm5295 = vweird.f32 %v5289
  %vm5296 = vmor %vm5294, %vm5295
  %v5297 = vsel %vm5296, %v5289, %v5293
  %v5298 = vand.u32 2147483647, %v5288
  %vm5299 = vcmp.eq.f32.partialorder %v5298, 8.507059e+37
  %v5300 = vand.u32 %v5288, 2147483648
  %v5301 = vor.u32 1.1754944e-38, %v5300
  %v5302 = vsel %vm5299, %v5301, %v5297
  %v5303 = vmul.f32 1.0, %v5302
  %v5304 = vld [vmem:[%s3434 + $0x4] sm:$0x3]
  %5305 = vmatpush.msra.mxu0 0.0
  %5306 = vmatpush.msra.mxu0 0.0
  %5307 = vmatpush.msra.mxu0 0.0
  %5308 = vmatpush.msra.mxu0 0.0
  %5309 = vmatpush.msra.mxu0 0.0
  %5310 = vmatpush.msra.mxu0 0.0
  %5311 = vmatpush.msra.mxu0 0.0
  %5312 = vmatpush.msra.mxu0 0.0
  %5313 = vmatpush.msra.mxu0 0.0
  %5314 = vmatpush.msra.mxu0 0.0
  %5315 = vmatpush.msra.mxu0 0.0
  %5316 = vmatpush.msra.mxu0 0.0
  %5317 = vmatpush.msra.mxu0 %v3759
  %5318 = vmatpush.msra.mxu0 %v3758
  %5319 = vmatpush.msra.mxu0 %v3757
  %5320 = vmatpush.msra.mxu0 %v3756
  %5321 = vmatmul.f32.gmra.mxu0 %v5221
  %v5322 = vpop.f32.mrf.mxu0
  %v5323 = vadd.f32 0.0, %v5322
  %5324 = vdwg.mxu0
  %v5325 = vadd.f32 %v5304, %v5323
  %v5326 = vtanh.pop %v5325
  %v5327 = vld [vmem:[%s3474 + $0x4] sm:$0x3]
  %5328 = vmatpush.msra.mxu0 0.0
  %5329 = vmatpush.msra.mxu0 0.0
  %5330 = vmatpush.msra.mxu0 0.0
  %5331 = vmatpush.msra.mxu0 0.0
  %5332 = vmatpush.msra.mxu0 0.0
  %5333 = vmatpush.msra.mxu0 0.0
  %5334 = vmatpush.msra.mxu0 0.0
  %5335 = vmatpush.msra.mxu0 0.0
  %5336 = vmatpush.msra.mxu0 0.0
  %5337 = vmatpush.msra.mxu0 0.0
  %5338 = vmatpush.msra.mxu0 0.0
  %5339 = vmatpush.msra.mxu0 0.0
  %5340 = vmatpush.msra.mxu0 %v3787
  %5341 = vmatpush.msra.mxu0 %v3786
  %5342 = vmatpush.msra.mxu0 %v3785
  %5343 = vmatpush.msra.mxu0 %v3784
  %5344 = vmatmul.f32.gmra.mxu0 %v5221
  %v5345 = vpop.f32.mrf.mxu0
  %v5346 = vadd.f32 0.0, %v5345
  %5347 = vdwg.mxu0
  %v5348 = vadd.f32 %v5327, %v5346
  %v5349 = vxor.u32 %v5348, 2147483648
  %v5350 = vmul.f32 %v5349, 1.442695
  %v5351 = vpow.pop %v5350
  %v5352 = vadd.f32 %v5351, 1.0
  %v5353 = vrcp.pop %v5352
  %v5354 = vmul.f32 %v5352, %v5353
  %v5355 = vsub.f32 1.0, %v5354
  %v5356 = vmul.f32 %v5353, %v5355
  %v5357 = vadd.f32 %v5353, %v5356
  %vm5358 = vweird.f32 %v5352
  %vm5359 = vweird.f32 %v5353
  %vm5360 = vmor %vm5358, %vm5359
  %v5361 = vsel %vm5360, %v5353, %v5357
  %v5362 = vand.u32 2147483647, %v5352
  %vm5363 = vcmp.eq.f32.partialorder %v5362, 8.507059e+37
  %v5364 = vand.u32 %v5352, 2147483648
  %v5365 = vor.u32 1.1754944e-38, %v5364
  %v5366 = vsel %vm5363, %v5365, %v5361
  %v5367 = vmul.f32 1.0, %v5366
  %v5368 = vmul.f32 %v5303, %v5062
  %v5369 = vmul.f32 %v5262, %v5326
  %v5370 = vadd.f32 %v5368, %v5369
  %v5371 = vtanh.pop %v5370
  %v5372 = vmul.f32 %v5367, %v5371
  %v5373 = vld [vmem:[#allocation3 + $0xc] sm:$0x3]
  %v5375 = vsel %vm124, %v5218, 0
  %5377 = vmatpush.msra.mxu0 0.0
  %5378 = vmatpush.msra.mxu0 0.0
  %5379 = vmatpush.msra.mxu0 0.0
  %5380 = vmatpush.msra.mxu0 0.0
  %5381 = vmatpush.msra.mxu0 0.0
  %5382 = vmatpush.msra.mxu0 0.0
  %5383 = vmatpush.msra.mxu0 0.0
  %5384 = vmatpush.msra.mxu0 0.0
  %5385 = vmatpush.msra.mxu0 0.0
  %5386 = vmatpush.msra.mxu0 0.0
  %5387 = vmatpush.msra.mxu0 0.0
  %5388 = vmatpush.msra.mxu0 0.0
  %5389 = vmatpush.msra.mxu0 %v3490
  %5390 = vmatpush.msra.mxu0 %v3489
  %5391 = vmatpush.msra.mxu0 %v3488
  %5392 = vmatpush.msra.mxu0 %v3487
  %5393 = vmatmul.f32.gmra.mxu0 %v5375
  %v5394 = vpop.f32.mrf.mxu0
  %v5395 = vadd.f32 0.0, %v5394
  %5396 = vdwg.mxu0
  %v5397 = vadd.f32 %v5373, %v5395
  %v5398 = vxor.u32 %v5397, 2147483648
  %v5399 = vmul.f32 %v5398, 1.442695
  %v5400 = vpow.pop %v5399
  %v5401 = vadd.f32 %v5400, 1.0
  %v5402 = vrcp.pop %v5401
  %v5403 = vmul.f32 %v5401, %v5402
  %v5404 = vsub.f32 1.0, %v5403
  %v5405 = vmul.f32 %v5402, %v5404
  %v5406 = vadd.f32 %v5402, %v5405
  %vm5407 = vweird.f32 %v5401
  %vm5408 = vweird.f32 %v5402
  %vm5409 = vmor %vm5407, %vm5408
  %v5410 = vsel %vm5409, %v5402, %v5406
  %v5411 = vand.u32 2147483647, %v5401
  %vm5412 = vcmp.eq.f32.partialorder %v5411, 8.507059e+37
  %v5413 = vand.u32 %v5401, 2147483648
  %v5414 = vor.u32 1.1754944e-38, %v5413
  %v5415 = vsel %vm5412, %v5414, %v5410
  %v5416 = vmul.f32 1.0, %v5415
  %v5417 = vld [vmem:[%s3234 + $0xc] sm:$0x3]
  %5418 = vmatpush.msra.mxu0 0.0
  %5419 = vmatpush.msra.mxu0 0.0
  %5420 = vmatpush.msra.mxu0 0.0
  %5421 = vmatpush.msra.mxu0 0.0
  %5422 = vmatpush.msra.mxu0 0.0
  %5423 = vmatpush.msra.mxu0 0.0
  %5424 = vmatpush.msra.mxu0 0.0
  %5425 = vmatpush.msra.mxu0 0.0
  %5426 = vmatpush.msra.mxu0 0.0
  %5427 = vmatpush.msra.mxu0 0.0
  %5428 = vmatpush.msra.mxu0 0.0
  %5429 = vmatpush.msra.mxu0 0.0
  %5430 = vmatpush.msra.mxu0 %v3539
  %5431 = vmatpush.msra.mxu0 %v3538
  %5432 = vmatpush.msra.mxu0 %v3537
  %5433 = vmatpush.msra.mxu0 %v3536
  %5434 = vmatmul.f32.gmra.mxu0 %v5375
  %v5435 = vpop.f32.mrf.mxu0
  %v5436 = vadd.f32 0.0, %v5435
  %5437 = vdwg.mxu0
  %v5438 = vadd.f32 %v5417, %v5436
  %v5439 = vxor.u32 %v5438, 2147483648
  %v5440 = vmul.f32 %v5439, 1.442695
  %v5441 = vpow.pop %v5440
  %v5442 = vadd.f32 %v5441, 1.0
  %v5443 = vrcp.pop %v5442
  %v5444 = vmul.f32 %v5442, %v5443
  %v5445 = vsub.f32 1.0, %v5444
  %v5446 = vmul.f32 %v5443, %v5445
  %v5447 = vadd.f32 %v5443, %v5446
  %vm5448 = vweird.f32 %v5442
  %vm5449 = vweird.f32 %v5443
  %vm5450 = vmor %vm5448, %vm5449
  %v5451 = vsel %vm5450, %v5443, %v5447
  %v5452 = vand.u32 2147483647, %v5442
  %vm5453 = vcmp.eq.f32.partialorder %v5452, 8.507059e+37
  %v5454 = vand.u32 %v5442, 2147483648
  %v5455 = vor.u32 1.1754944e-38, %v5454
  %v5456 = vsel %vm5453, %v5455, %v5451
  %v5457 = vmul.f32 1.0, %v5456
  %v5458 = vld [vmem:[%s3274 + $0xc] sm:$0x3]
  %5459 = vmatpush.msra.mxu0 0.0
  %5460 = vmatpush.msra.mxu0 0.0
  %5461 = vmatpush.msra.mxu0 0.0
  %5462 = vmatpush.msra.mxu0 0.0
  %5463 = vmatpush.msra.mxu0 0.0
  %5464 = vmatpush.msra.mxu0 0.0
  %5465 = vmatpush.msra.mxu0 0.0
  %5466 = vmatpush.msra.mxu0 0.0
  %5467 = vmatpush.msra.mxu0 0.0
  %5468 = vmatpush.msra.mxu0 0.0
  %5469 = vmatpush.msra.mxu0 0.0
  %5470 = vmatpush.msra.mxu0 0.0
  %5471 = vmatpush.msra.mxu0 %v3585
  %5472 = vmatpush.msra.mxu0 %v3584
  %5473 = vmatpush.msra.mxu0 %v3583
  %5474 = vmatpush.msra.mxu0 %v3582
  %5475 = vmatmul.f32.gmra.mxu0 %v5375
  %v5476 = vpop.f32.mrf.mxu0
  %v5477 = vadd.f32 0.0, %v5476
  %5478 = vdwg.mxu0
  %v5479 = vadd.f32 %v5458, %v5477
  %v5480 = vtanh.pop %v5479
  %v5481 = vld [vmem:[%s3314 + $0xc] sm:$0x3]
  %5482 = vmatpush.msra.mxu0 0.0
  %5483 = vmatpush.msra.mxu0 0.0
  %5484 = vmatpush.msra.mxu0 0.0
  %5485 = vmatpush.msra.mxu0 0.0
  %5486 = vmatpush.msra.mxu0 0.0
  %5487 = vmatpush.msra.mxu0 0.0
  %5488 = vmatpush.msra.mxu0 0.0
  %5489 = vmatpush.msra.mxu0 0.0
  %5490 = vmatpush.msra.mxu0 0.0
  %5491 = vmatpush.msra.mxu0 0.0
  %5492 = vmatpush.msra.mxu0 0.0
  %5493 = vmatpush.msra.mxu0 0.0
  %5494 = vmatpush.msra.mxu0 %v3613
  %5495 = vmatpush.msra.mxu0 %v3612
  %5496 = vmatpush.msra.mxu0 %v3611
  %5497 = vmatpush.msra.mxu0 %v3610
  %5498 = vmatmul.f32.gmra.mxu0 %v5375
  %v5499 = vpop.f32.mrf.mxu0
  %v5500 = vadd.f32 0.0, %v5499
  %5501 = vdwg.mxu0
  %v5502 = vadd.f32 %v5481, %v5500
  %v5503 = vxor.u32 %v5502, 2147483648
  %v5504 = vmul.f32 %v5503, 1.442695
  %v5505 = vpow.pop %v5504
  %v5506 = vadd.f32 %v5505, 1.0
  %v5507 = vrcp.pop %v5506
  %v5508 = vmul.f32 %v5506, %v5507
  %v5509 = vsub.f32 1.0, %v5508
  %v5510 = vmul.f32 %v5507, %v5509
  %v5511 = vadd.f32 %v5507, %v5510
  %vm5512 = vweird.f32 %v5506
  %vm5513 = vweird.f32 %v5507
  %vm5514 = vmor %vm5512, %vm5513
  %v5515 = vsel %vm5514, %v5507, %v5511
  %v5516 = vand.u32 2147483647, %v5506
  %vm5517 = vcmp.eq.f32.partialorder %v5516, 8.507059e+37
  %v5518 = vand.u32 %v5506, 2147483648
  %v5519 = vor.u32 1.1754944e-38, %v5518
  %v5520 = vsel %vm5517, %v5519, %v5515
  %v5521 = vmul.f32 1.0, %v5520
  %v5522 = vmul.f32 %v5457, %v5216
  %v5523 = vmul.f32 %v5416, %v5480
  %v5524 = vadd.f32 %v5522, %v5523
  %v5525 = vtanh.pop %v5524
  %v5526 = vmul.f32 %v5521, %v5525
  %v5527 = vld [vmem:[%s3354 + $0x2] sm:$0x3]
  %v5529 = vsel %vm124, %v5372, 0
  %5531 = vmatpush.msra.mxu0 0.0
  %5532 = vmatpush.msra.mxu0 0.0
  %5533 = vmatpush.msra.mxu0 0.0
  %5534 = vmatpush.msra.mxu0 0.0
  %5535 = vmatpush.msra.mxu0 0.0
  %5536 = vmatpush.msra.mxu0 0.0
  %5537 = vmatpush.msra.mxu0 0.0
  %5538 = vmatpush.msra.mxu0 0.0
  %5539 = vmatpush.msra.mxu0 0.0
  %5540 = vmatpush.msra.mxu0 0.0
  %5541 = vmatpush.msra.mxu0 0.0
  %5542 = vmatpush.msra.mxu0 0.0
  %5543 = vmatpush.msra.mxu0 %v3664
  %5544 = vmatpush.msra.mxu0 %v3663
  %5545 = vmatpush.msra.mxu0 %v3662
  %5546 = vmatpush.msra.mxu0 %v3661
  %5547 = vmatmul.f32.gmra.mxu0 %v5529
  %v5548 = vpop.f32.mrf.mxu0
  %v5549 = vadd.f32 0.0, %v5548
  %5550 = vdwg.mxu0
  %v5551 = vadd.f32 %v5527, %v5549
  %v5552 = vxor.u32 %v5551, 2147483648
  %v5553 = vmul.f32 %v5552, 1.442695
  %v5554 = vpow.pop %v5553
  %v5555 = vadd.f32 %v5554, 1.0
  %v5556 = vrcp.pop %v5555
  %v5557 = vmul.f32 %v5555, %v5556
  %v5558 = vsub.f32 1.0, %v5557
  %v5559 = vmul.f32 %v5556, %v5558
  %v5560 = vadd.f32 %v5556, %v5559
  %vm5561 = vweird.f32 %v5555
  %vm5562 = vweird.f32 %v5556
  %vm5563 = vmor %vm5561, %vm5562
  %v5564 = vsel %vm5563, %v5556, %v5560
  %v5565 = vand.u32 2147483647, %v5555
  %vm5566 = vcmp.eq.f32.partialorder %v5565, 8.507059e+37
  %v5567 = vand.u32 %v5555, 2147483648
  %v5568 = vor.u32 1.1754944e-38, %v5567
  %v5569 = vsel %vm5566, %v5568, %v5564
  %v5570 = vmul.f32 1.0, %v5569
  %v5571 = vld [vmem:[%s3394 + $0x2] sm:$0x3]
  %5572 = vmatpush.msra.mxu0 0.0
  %5573 = vmatpush.msra.mxu0 0.0
  %5574 = vmatpush.msra.mxu0 0.0
  %5575 = vmatpush.msra.mxu0 0.0
  %5576 = vmatpush.msra.mxu0 0.0
  %5577 = vmatpush.msra.mxu0 0.0
  %5578 = vmatpush.msra.mxu0 0.0
  %5579 = vmatpush.msra.mxu0 0.0
  %5580 = vmatpush.msra.mxu0 0.0
  %5581 = vmatpush.msra.mxu0 0.0
  %5582 = vmatpush.msra.mxu0 0.0
  %5583 = vmatpush.msra.mxu0 0.0
  %5584 = vmatpush.msra.mxu0 %v3713
  %5585 = vmatpush.msra.mxu0 %v3712
  %5586 = vmatpush.msra.mxu0 %v3711
  %5587 = vmatpush.msra.mxu0 %v3710
  %5588 = vmatmul.f32.gmra.mxu0 %v5529
  %v5589 = vpop.f32.mrf.mxu0
  %v5590 = vadd.f32 0.0, %v5589
  %5591 = vdwg.mxu0
  %v5592 = vadd.f32 %v5571, %v5590
  %v5593 = vxor.u32 %v5592, 2147483648
  %v5594 = vmul.f32 %v5593, 1.442695
  %v5595 = vpow.pop %v5594
  %v5596 = vadd.f32 %v5595, 1.0
  %v5597 = vrcp.pop %v5596
  %v5598 = vmul.f32 %v5596, %v5597
  %v5599 = vsub.f32 1.0, %v5598
  %v5600 = vmul.f32 %v5597, %v5599
  %v5601 = vadd.f32 %v5597, %v5600
  %vm5602 = vweird.f32 %v5596
  %vm5603 = vweird.f32 %v5597
  %vm5604 = vmor %vm5602, %vm5603
  %v5605 = vsel %vm5604, %v5597, %v5601
  %v5606 = vand.u32 2147483647, %v5596
  %vm5607 = vcmp.eq.f32.partialorder %v5606, 8.507059e+37
  %v5608 = vand.u32 %v5596, 2147483648
  %v5609 = vor.u32 1.1754944e-38, %v5608
  %v5610 = vsel %vm5607, %v5609, %v5605
  %v5611 = vmul.f32 1.0, %v5610
  %v5612 = vld [vmem:[%s3434 + $0x2] sm:$0x3]
  %5613 = vmatpush.msra.mxu0 0.0
  %5614 = vmatpush.msra.mxu0 0.0
  %5615 = vmatpush.msra.mxu0 0.0
  %5616 = vmatpush.msra.mxu0 0.0
  %5617 = vmatpush.msra.mxu0 0.0
  %5618 = vmatpush.msra.mxu0 0.0
  %5619 = vmatpush.msra.mxu0 0.0
  %5620 = vmatpush.msra.mxu0 0.0
  %5621 = vmatpush.msra.mxu0 0.0
  %5622 = vmatpush.msra.mxu0 0.0
  %5623 = vmatpush.msra.mxu0 0.0
  %5624 = vmatpush.msra.mxu0 0.0
  %5625 = vmatpush.msra.mxu0 %v3759
  %5626 = vmatpush.msra.mxu0 %v3758
  %5627 = vmatpush.msra.mxu0 %v3757
  %5628 = vmatpush.msra.mxu0 %v3756
  %5629 = vmatmul.f32.gmra.mxu0 %v5529
  %v5630 = vpop.f32.mrf.mxu0
  %v5631 = vadd.f32 0.0, %v5630
  %5632 = vdwg.mxu0
  %v5633 = vadd.f32 %v5612, %v5631
  %v5634 = vtanh.pop %v5633
  %v5635 = vld [vmem:[%s3474 + $0x2] sm:$0x3]
  %5636 = vmatpush.msra.mxu0 0.0
  %5637 = vmatpush.msra.mxu0 0.0
  %5638 = vmatpush.msra.mxu0 0.0
  %5639 = vmatpush.msra.mxu0 0.0
  %5640 = vmatpush.msra.mxu0 0.0
  %5641 = vmatpush.msra.mxu0 0.0
  %5642 = vmatpush.msra.mxu0 0.0
  %5643 = vmatpush.msra.mxu0 0.0
  %5644 = vmatpush.msra.mxu0 0.0
  %5645 = vmatpush.msra.mxu0 0.0
  %5646 = vmatpush.msra.mxu0 0.0
  %5647 = vmatpush.msra.mxu0 0.0
  %5648 = vmatpush.msra.mxu0 %v3787
  %5649 = vmatpush.msra.mxu0 %v3786
  %5650 = vmatpush.msra.mxu0 %v3785
  %5651 = vmatpush.msra.mxu0 %v3784
  %5652 = vmatmul.f32.gmra.mxu0 %v5529
  %v5653 = vpop.f32.mrf.mxu0
  %v5654 = vadd.f32 0.0, %v5653
  %5655 = vdwg.mxu0
  %v5656 = vadd.f32 %v5635, %v5654
  %v5657 = vxor.u32 %v5656, 2147483648
  %v5658 = vmul.f32 %v5657, 1.442695
  %v5659 = vpow.pop %v5658
  %v5660 = vadd.f32 %v5659, 1.0
  %v5661 = vrcp.pop %v5660
  %v5662 = vmul.f32 %v5660, %v5661
  %v5663 = vsub.f32 1.0, %v5662
  %v5664 = vmul.f32 %v5661, %v5663
  %v5665 = vadd.f32 %v5661, %v5664
  %vm5666 = vweird.f32 %v5660
  %vm5667 = vweird.f32 %v5661
  %vm5668 = vmor %vm5666, %vm5667
  %v5669 = vsel %vm5668, %v5661, %v5665
  %v5670 = vand.u32 2147483647, %v5660
  %vm5671 = vcmp.eq.f32.partialorder %v5670, 8.507059e+37
  %v5672 = vand.u32 %v5660, 2147483648
  %v5673 = vor.u32 1.1754944e-38, %v5672
  %v5674 = vsel %vm5671, %v5673, %v5669
  %v5675 = vmul.f32 1.0, %v5674
  %v5676 = vmul.f32 %v5611, %v5370
  %v5677 = vmul.f32 %v5570, %v5634
  %v5678 = vadd.f32 %v5676, %v5677
  %v5679 = vtanh.pop %v5678
  %v5680 = vmul.f32 %v5675, %v5679
  %v5681 = vld [vmem:[#allocation3 + $0xe] sm:$0x3]
  %v5683 = vsel %vm124, %v5526, 0
  %5685 = vmatpush.msra.mxu0 0.0
  %5686 = vmatpush.msra.mxu0 0.0
  %5687 = vmatpush.msra.mxu0 0.0
  %5688 = vmatpush.msra.mxu0 0.0
  %5689 = vmatpush.msra.mxu0 0.0
  %5690 = vmatpush.msra.mxu0 0.0
  %5691 = vmatpush.msra.mxu0 0.0
  %5692 = vmatpush.msra.mxu0 0.0
  %5693 = vmatpush.msra.mxu0 0.0
  %5694 = vmatpush.msra.mxu0 0.0
  %5695 = vmatpush.msra.mxu0 0.0
  %5696 = vmatpush.msra.mxu0 0.0
  %5697 = vmatpush.msra.mxu0 %v3490
  %5698 = vmatpush.msra.mxu0 %v3489
  %5699 = vmatpush.msra.mxu0 %v3488
  %5700 = vmatpush.msra.mxu0 %v3487
  %5701 = vmatmul.f32.gmra.mxu0 %v5683
  %v5702 = vpop.f32.mrf.mxu0
  %v5703 = vadd.f32 0.0, %v5702
  %5704 = vdwg.mxu0
  %v5705 = vadd.f32 %v5681, %v5703
  %v5706 = vxor.u32 %v5705, 2147483648
  %v5707 = vmul.f32 %v5706, 1.442695
  %v5708 = vpow.pop %v5707
  %v5709 = vadd.f32 %v5708, 1.0
  %v5710 = vrcp.pop %v5709
  %v5711 = vmul.f32 %v5709, %v5710
  %v5712 = vsub.f32 1.0, %v5711
  %v5713 = vmul.f32 %v5710, %v5712
  %v5714 = vadd.f32 %v5710, %v5713
  %vm5715 = vweird.f32 %v5709
  %vm5716 = vweird.f32 %v5710
  %vm5717 = vmor %vm5715, %vm5716
  %v5718 = vsel %vm5717, %v5710, %v5714
  %v5719 = vand.u32 2147483647, %v5709
  %vm5720 = vcmp.eq.f32.partialorder %v5719, 8.507059e+37
  %v5721 = vand.u32 %v5709, 2147483648
  %v5722 = vor.u32 1.1754944e-38, %v5721
  %v5723 = vsel %vm5720, %v5722, %v5718
  %v5724 = vmul.f32 1.0, %v5723
  %v5725 = vld [vmem:[%s3234 + $0xe] sm:$0x3]
  %5726 = vmatpush.msra.mxu0 0.0
  %5727 = vmatpush.msra.mxu0 0.0
  %5728 = vmatpush.msra.mxu0 0.0
  %5729 = vmatpush.msra.mxu0 0.0
  %5730 = vmatpush.msra.mxu0 0.0
  %5731 = vmatpush.msra.mxu0 0.0
  %5732 = vmatpush.msra.mxu0 0.0
  %5733 = vmatpush.msra.mxu0 0.0
  %5734 = vmatpush.msra.mxu0 0.0
  %5735 = vmatpush.msra.mxu0 0.0
  %5736 = vmatpush.msra.mxu0 0.0
  %5737 = vmatpush.msra.mxu0 0.0
  %5738 = vmatpush.msra.mxu0 %v3539
  %5739 = vmatpush.msra.mxu0 %v3538
  %5740 = vmatpush.msra.mxu0 %v3537
  %5741 = vmatpush.msra.mxu0 %v3536
  %5742 = vmatmul.f32.gmra.mxu0 %v5683
  %v5743 = vpop.f32.mrf.mxu0
  %v5744 = vadd.f32 0.0, %v5743
  %5745 = vdwg.mxu0
  %v5746 = vadd.f32 %v5725, %v5744
  %v5747 = vxor.u32 %v5746, 2147483648
  %v5748 = vmul.f32 %v5747, 1.442695
  %v5749 = vpow.pop %v5748
  %v5750 = vadd.f32 %v5749, 1.0
  %v5751 = vrcp.pop %v5750
  %v5752 = vmul.f32 %v5750, %v5751
  %v5753 = vsub.f32 1.0, %v5752
  %v5754 = vmul.f32 %v5751, %v5753
  %v5755 = vadd.f32 %v5751, %v5754
  %vm5756 = vweird.f32 %v5750
  %vm5757 = vweird.f32 %v5751
  %vm5758 = vmor %vm5756, %vm5757
  %v5759 = vsel %vm5758, %v5751, %v5755
  %v5760 = vand.u32 2147483647, %v5750
  %vm5761 = vcmp.eq.f32.partialorder %v5760, 8.507059e+37
  %v5762 = vand.u32 %v5750, 2147483648
  %v5763 = vor.u32 1.1754944e-38, %v5762
  %v5764 = vsel %vm5761, %v5763, %v5759
  %v5765 = vmul.f32 1.0, %v5764
  %v5766 = vld [vmem:[%s3274 + $0xe] sm:$0x3]
  %5767 = vmatpush.msra.mxu0 0.0
  %5768 = vmatpush.msra.mxu0 0.0
  %5769 = vmatpush.msra.mxu0 0.0
  %5770 = vmatpush.msra.mxu0 0.0
  %5771 = vmatpush.msra.mxu0 0.0
  %5772 = vmatpush.msra.mxu0 0.0
  %5773 = vmatpush.msra.mxu0 0.0
  %5774 = vmatpush.msra.mxu0 0.0
  %5775 = vmatpush.msra.mxu0 0.0
  %5776 = vmatpush.msra.mxu0 0.0
  %5777 = vmatpush.msra.mxu0 0.0
  %5778 = vmatpush.msra.mxu0 0.0
  %5779 = vmatpush.msra.mxu0 %v3585
  %5780 = vmatpush.msra.mxu0 %v3584
  %5781 = vmatpush.msra.mxu0 %v3583
  %5782 = vmatpush.msra.mxu0 %v3582
  %5783 = vmatmul.f32.gmra.mxu0 %v5683
  %v5784 = vpop.f32.mrf.mxu0
  %v5785 = vadd.f32 0.0, %v5784
  %5786 = vdwg.mxu0
  %v5787 = vadd.f32 %v5766, %v5785
  %v5788 = vtanh.pop %v5787
  %v5789 = vld [vmem:[%s3314 + $0xe] sm:$0x3]
  %5790 = vmatpush.msra.mxu0 0.0
  %5791 = vmatpush.msra.mxu0 0.0
  %5792 = vmatpush.msra.mxu0 0.0
  %5793 = vmatpush.msra.mxu0 0.0
  %5794 = vmatpush.msra.mxu0 0.0
  %5795 = vmatpush.msra.mxu0 0.0
  %5796 = vmatpush.msra.mxu0 0.0
  %5797 = vmatpush.msra.mxu0 0.0
  %5798 = vmatpush.msra.mxu0 0.0
  %5799 = vmatpush.msra.mxu0 0.0
  %5800 = vmatpush.msra.mxu0 0.0
  %5801 = vmatpush.msra.mxu0 0.0
  %5802 = vmatpush.msra.mxu0 %v3613
  %5803 = vmatpush.msra.mxu0 %v3612
  %5804 = vmatpush.msra.mxu0 %v3611
  %5805 = vmatpush.msra.mxu0 %v3610
  %5806 = vmatmul.f32.gmra.mxu0 %v5683
  %v5807 = vpop.f32.mrf.mxu0
  %v5808 = vadd.f32 0.0, %v5807
  %5809 = vdwg.mxu0
  %v5810 = vadd.f32 %v5789, %v5808
  %v5811 = vxor.u32 %v5810, 2147483648
  %v5812 = vmul.f32 %v5811, 1.442695
  %v5813 = vpow.pop %v5812
  %v5814 = vadd.f32 %v5813, 1.0
  %v5815 = vrcp.pop %v5814
  %v5816 = vmul.f32 %v5814, %v5815
  %v5817 = vsub.f32 1.0, %v5816
  %v5818 = vmul.f32 %v5815, %v5817
  %v5819 = vadd.f32 %v5815, %v5818
  %vm5820 = vweird.f32 %v5814
  %vm5821 = vweird.f32 %v5815
  %vm5822 = vmor %vm5820, %vm5821
  %v5823 = vsel %vm5822, %v5815, %v5819
  %v5824 = vand.u32 2147483647, %v5814
  %vm5825 = vcmp.eq.f32.partialorder %v5824, 8.507059e+37
  %v5826 = vand.u32 %v5814, 2147483648
  %v5827 = vor.u32 1.1754944e-38, %v5826
  %v5828 = vsel %vm5825, %v5827, %v5823
  %v5829 = vmul.f32 1.0, %v5828
  %v5830 = vmul.f32 %v5765, %v5524
  %v5831 = vmul.f32 %v5724, %v5788
  %v5832 = vadd.f32 %v5830, %v5831
  %v5833 = vtanh.pop %v5832
  %v5834 = vmul.f32 %v5829, %v5833
  %v5835 = vld [vmem:[%s3354] sm:$0x3]
  %v5837 = vsel %vm124, %v5680, 0
  %5839 = vmatpush.msra.mxu0 0.0
  %5840 = vmatpush.msra.mxu0 0.0
  %5841 = vmatpush.msra.mxu0 0.0
  %5842 = vmatpush.msra.mxu0 0.0
  %5843 = vmatpush.msra.mxu0 0.0
  %5844 = vmatpush.msra.mxu0 0.0
  %5845 = vmatpush.msra.mxu0 0.0
  %5846 = vmatpush.msra.mxu0 0.0
  %5847 = vmatpush.msra.mxu0 0.0
  %5848 = vmatpush.msra.mxu0 0.0
  %5849 = vmatpush.msra.mxu0 0.0
  %5850 = vmatpush.msra.mxu0 0.0
  %5851 = vmatpush.msra.mxu0 %v3664
  %5852 = vmatpush.msra.mxu0 %v3663
  %5853 = vmatpush.msra.mxu0 %v3662
  %5854 = vmatpush.msra.mxu0 %v3661
  %5855 = vmatmul.f32.gmra.mxu0 %v5837
  %v5856 = vpop.f32.mrf.mxu0
  %v5857 = vadd.f32 0.0, %v5856
  %5858 = vdwg.mxu0
  %v5859 = vadd.f32 %v5835, %v5857
  %v5860 = vxor.u32 %v5859, 2147483648
  %v5861 = vmul.f32 %v5860, 1.442695
  %v5862 = vpow.pop %v5861
  %v5863 = vadd.f32 %v5862, 1.0
  %v5864 = vrcp.pop %v5863
  %v5865 = vmul.f32 %v5863, %v5864
  %v5866 = vsub.f32 1.0, %v5865
  %v5867 = vmul.f32 %v5864, %v5866
  %v5868 = vadd.f32 %v5864, %v5867
  %vm5869 = vweird.f32 %v5863
  %vm5870 = vweird.f32 %v5864
  %vm5871 = vmor %vm5869, %vm5870
  %v5872 = vsel %vm5871, %v5864, %v5868
  %v5873 = vand.u32 2147483647, %v5863
  %vm5874 = vcmp.eq.f32.partialorder %v5873, 8.507059e+37
  %v5875 = vand.u32 %v5863, 2147483648
  %v5876 = vor.u32 1.1754944e-38, %v5875
  %v5877 = vsel %vm5874, %v5876, %v5872
  %v5878 = vmul.f32 1.0, %v5877
  %v5879 = vld [vmem:[%s3394] sm:$0x3]
  %5880 = vmatpush.msra.mxu0 0.0
  %5881 = vmatpush.msra.mxu0 0.0
  %5882 = vmatpush.msra.mxu0 0.0
  %5883 = vmatpush.msra.mxu0 0.0
  %5884 = vmatpush.msra.mxu0 0.0
  %5885 = vmatpush.msra.mxu0 0.0
  %5886 = vmatpush.msra.mxu0 0.0
  %5887 = vmatpush.msra.mxu0 0.0
  %5888 = vmatpush.msra.mxu0 0.0
  %5889 = vmatpush.msra.mxu0 0.0
  %5890 = vmatpush.msra.mxu0 0.0
  %5891 = vmatpush.msra.mxu0 0.0
  %5892 = vmatpush.msra.mxu0 %v3713
  %5893 = vmatpush.msra.mxu0 %v3712
  %5894 = vmatpush.msra.mxu0 %v3711
  %5895 = vmatpush.msra.mxu0 %v3710
  %5896 = vmatmul.f32.gmra.mxu0 %v5837
  %v5897 = vpop.f32.mrf.mxu0
  %v5898 = vadd.f32 0.0, %v5897
  %5899 = vdwg.mxu0
  %v5900 = vadd.f32 %v5879, %v5898
  %v5901 = vxor.u32 %v5900, 2147483648
  %v5902 = vmul.f32 %v5901, 1.442695
  %v5903 = vpow.pop %v5902
  %v5904 = vadd.f32 %v5903, 1.0
  %v5905 = vrcp.pop %v5904
  %v5906 = vmul.f32 %v5904, %v5905
  %v5907 = vsub.f32 1.0, %v5906
  %v5908 = vmul.f32 %v5905, %v5907
  %v5909 = vadd.f32 %v5905, %v5908
  %vm5910 = vweird.f32 %v5904
  %vm5911 = vweird.f32 %v5905
  %vm5912 = vmor %vm5910, %vm5911
  %v5913 = vsel %vm5912, %v5905, %v5909
  %v5914 = vand.u32 2147483647, %v5904
  %vm5915 = vcmp.eq.f32.partialorder %v5914, 8.507059e+37
  %v5916 = vand.u32 %v5904, 2147483648
  %v5917 = vor.u32 1.1754944e-38, %v5916
  %v5918 = vsel %vm5915, %v5917, %v5913
  %v5919 = vmul.f32 1.0, %v5918
  %v5920 = vld [vmem:[%s3434] sm:$0x3]
  %5921 = vmatpush.msra.mxu0 0.0
  %5922 = vmatpush.msra.mxu0 0.0
  %5923 = vmatpush.msra.mxu0 0.0
  %5924 = vmatpush.msra.mxu0 0.0
  %5925 = vmatpush.msra.mxu0 0.0
  %5926 = vmatpush.msra.mxu0 0.0
  %5927 = vmatpush.msra.mxu0 0.0
  %5928 = vmatpush.msra.mxu0 0.0
  %5929 = vmatpush.msra.mxu0 0.0
  %5930 = vmatpush.msra.mxu0 0.0
  %5931 = vmatpush.msra.mxu0 0.0
  %5932 = vmatpush.msra.mxu0 0.0
  %5933 = vmatpush.msra.mxu0 %v3759
  %5934 = vmatpush.msra.mxu0 %v3758
  %5935 = vmatpush.msra.mxu0 %v3757
  %5936 = vmatpush.msra.mxu0 %v3756
  %5937 = vmatmul.f32.gmra.mxu0 %v5837
  %v5938 = vpop.f32.mrf.mxu0
  %v5939 = vadd.f32 0.0, %v5938
  %5940 = vdwg.mxu0
  %v5941 = vadd.f32 %v5920, %v5939
  %v5942 = vtanh.pop %v5941
  %v5943 = vld [vmem:[%s3474] sm:$0x3]
  %5944 = vmatpush.msra.mxu0 0.0
  %5945 = vmatpush.msra.mxu0 0.0
  %5946 = vmatpush.msra.mxu0 0.0
  %5947 = vmatpush.msra.mxu0 0.0
  %5948 = vmatpush.msra.mxu0 0.0
  %5949 = vmatpush.msra.mxu0 0.0
  %5950 = vmatpush.msra.mxu0 0.0
  %5951 = vmatpush.msra.mxu0 0.0
  %5952 = vmatpush.msra.mxu0 0.0
  %5953 = vmatpush.msra.mxu0 0.0
  %5954 = vmatpush.msra.mxu0 0.0
  %5955 = vmatpush.msra.mxu0 0.0
  %5956 = vmatpush.msra.mxu0 %v3787
  %5957 = vmatpush.msra.mxu0 %v3786
  %5958 = vmatpush.msra.mxu0 %v3785
  %5959 = vmatpush.msra.mxu0 %v3784
  %5960 = vmatmul.f32.gmra.mxu0 %v5837
  %v5961 = vpop.f32.mrf.mxu0
  %v5962 = vadd.f32 0.0, %v5961
  %5963 = vdwg.mxu0
  %v5964 = vadd.f32 %v5943, %v5962
  %v5965 = vxor.u32 %v5964, 2147483648
  %v5966 = vmul.f32 %v5965, 1.442695
  %v5967 = vpow.pop %v5966
  %v5968 = vadd.f32 %v5967, 1.0
  %v5969 = vrcp.pop %v5968
  %v5970 = vmul.f32 %v5968, %v5969
  %v5971 = vsub.f32 1.0, %v5970
  %v5972 = vmul.f32 %v5969, %v5971
  %v5973 = vadd.f32 %v5969, %v5972
  %vm5974 = vweird.f32 %v5968
  %vm5975 = vweird.f32 %v5969
  %vm5976 = vmor %vm5974, %vm5975
  %v5977 = vsel %vm5976, %v5969, %v5973
  %v5978 = vand.u32 2147483647, %v5968
  %vm5979 = vcmp.eq.f32.partialorder %v5978, 8.507059e+37
  %v5980 = vand.u32 %v5968, 2147483648
  %v5981 = vor.u32 1.1754944e-38, %v5980
  %v5982 = vsel %vm5979, %v5981, %v5977
  %v5983 = vmul.f32 1.0, %v5982
  %v5984 = vmul.f32 %v5919, %v5678
  %v5985 = vmul.f32 %v5878, %v5942
  %v5986 = vadd.f32 %v5984, %v5985
  %v5987 = vtanh.pop %v5986
  %v5988 = vmul.f32 %v5983, %v5987
  %s5989 = scalar_lea.vmem %s9, 4
  %5990 = vst.msk [vmem:[%s5989] sm:$0x3] %vm545, %v5834
  %s5991 = scalar_lea.vmem %s9, 12
  %5992 = vst.msk [vmem:[%s5991] sm:$0x3] %vm545, %v5832
  %s5993 = scalar_lea.vmem %s9, 6
  %5994 = vst.msk [vmem:[%s5993] sm:$0x3] %vm545, %v5988
  %s5995 = scalar_lea.vmem %s9, 14
  %5996 = vst.msk [vmem:[%s5995] sm:$0x3] %vm545, %v5986
  %v5997 = vld [vmem:[#allocation6] sm:$0x1]
  %v5998 = vld [vmem:[%s5] sm:$0xff]
  %v5999 = vld [vmem:[%s5 + $0x8] sm:$0xff]
  %v6000 = vld [vmem:[%s5 + $0x10] sm:$0xff]
  %v6001 = vld [vmem:[%s5 + $0x18] sm:$0xff]
  %v6003 = vsel %vm124, %v5834, 0
  %6005 = vmatpush.msra.mxu0 0.0
  %6006 = vmatpush.msra.mxu0 0.0
  %6007 = vmatpush.msra.mxu0 0.0
  %6008 = vmatpush.msra.mxu0 0.0
  %6009 = vmatpush.msra.mxu0 0.0
  %6010 = vmatpush.msra.mxu0 0.0
  %6011 = vmatpush.msra.mxu0 0.0
  %6012 = vmatpush.msra.mxu0 0.0
  %6013 = vmatpush.msra.mxu0 0.0
  %6014 = vmatpush.msra.mxu0 0.0
  %6015 = vmatpush.msra.mxu0 0.0
  %6016 = vmatpush.msra.mxu0 0.0
  %6017 = vmatpush.msra.mxu0 %v6001
  %6018 = vmatpush.msra.mxu0 %v6000
  %6019 = vmatpush.msra.mxu0 %v5999
  %6020 = vmatpush.msra.mxu0 %v5998
  %6021 = vmatmul.f32.gmra.mxu0 %v6003
  %v6022 = vpop.f32.mrf.mxu0
  %v6023 = vadd.f32 0.0, %v6022
  %6024 = vdwg.mxu0
  %v6026 = vperm.slane %v5997, 0
  %v6028 = vadd.f32 %v6026, %v6023
  %v6029 = vld [vmem:[%s5 + $0x20] sm:$0xff]
  %v6030 = vld [vmem:[%s5 + $0x28] sm:$0xff]
  %v6031 = vld [vmem:[%s5 + $0x30] sm:$0xff]
  %v6032 = vld [vmem:[%s5 + $0x38] sm:$0xff]
  %6033 = vmatpush.msra.mxu0 0.0
  %6034 = vmatpush.msra.mxu0 0.0
  %6035 = vmatpush.msra.mxu0 0.0
  %6036 = vmatpush.msra.mxu0 0.0
  %6037 = vmatpush.msra.mxu0 0.0
  %6038 = vmatpush.msra.mxu0 0.0
  %6039 = vmatpush.msra.mxu0 0.0
  %6040 = vmatpush.msra.mxu0 0.0
  %6041 = vmatpush.msra.mxu0 0.0
  %6042 = vmatpush.msra.mxu0 0.0
  %6043 = vmatpush.msra.mxu0 0.0
  %6044 = vmatpush.msra.mxu0 0.0
  %6045 = vmatpush.msra.mxu0 %v6032
  %6046 = vmatpush.msra.mxu0 %v6031
  %6047 = vmatpush.msra.mxu0 %v6030
  %6048 = vmatpush.msra.mxu0 %v6029
  %6049 = vmatmul.f32.gmra.mxu0 %v3989
  %v6050 = vpop.f32.mrf.mxu0
  %v6051 = vadd.f32 0.0, %v6050
  %6052 = vdwg.mxu0
  %v6053 = vadd.f32 %v6028, %v6051
  %v6054 = vxor.u32 %v6053, 2147483648
  %v6055 = vmul.f32 %v6054, 1.442695
  %v6056 = vpow.pop %v6055
  %v6057 = vadd.f32 %v6056, 1.0
  %v6058 = vrcp.pop %v6057
  %v6059 = vmul.f32 %v6057, %v6058
  %v6060 = vsub.f32 1.0, %v6059
  %v6061 = vmul.f32 %v6058, %v6060
  %v6062 = vadd.f32 %v6058, %v6061
  %vm6063 = vweird.f32 %v6057
  %vm6064 = vweird.f32 %v6058
  %vm6065 = vmor %vm6063, %vm6064
  %v6066 = vsel %vm6065, %v6058, %v6062
  %v6067 = vand.u32 2147483647, %v6057
  %vm6068 = vcmp.eq.f32.partialorder %v6067, 8.507059e+37
  %v6069 = vand.u32 %v6057, 2147483648
  %v6070 = vor.u32 1.1754944e-38, %v6069
  %v6071 = vsel %vm6068, %v6070, %v6066
  %v6072 = vmul.f32 1.0, %v6071
  %vm6073 = vcmask 1024
  %6074 = vst.msk [vmem:[%s8] sm:$0x3] %vm6073, %v6072
  // Predicated region
  $region34: #{refactory_rnn_forward.1} parent=0 // pred_check
    _
  $region35: #{refactory_rnn_forward.1} parent=0 // pred_check_branch
    %6076 = sbr.rel (0) target = $region37
  $region36: #{refactory_rnn_forward.1} parent=0 // pred_region
    _
  $region37: #{refactory_rnn_forward.1} parent=0 // pred_fallthru
    _
  // Predicated region
  $region38: #{refactory_rnn_forward.1} parent=0 // pred_check
    _
  $region39: #{refactory_rnn_forward.1} parent=0 // pred_check_branch
    %6078 = sbr.rel (0) target = $region41
  $region40: #{refactory_rnn_forward.1} parent=0 // pred_region
    _
  $region41: #{refactory_rnn_forward.1} parent=0 // pred_fallthru
    _
  // Predicated region
  $region42: #{refactory_rnn_forward.1} parent=0 // pred_check
    _
  $region43: #{refactory_rnn_forward.1} parent=0 // pred_check_branch
    %6080 = sbr.rel (0) target = $region45
  $region44: #{refactory_rnn_forward.1} parent=0 // pred_region
    _
  $region45: #{refactory_rnn_forward.1} parent=0 // pred_fallthru
    _
  // Predicated region
  $region46: #{refactory_rnn_forward.1} parent=0 // pred_check
    _
  $region47: #{refactory_rnn_forward.1} parent=0 // pred_check_branch
    %6082 = sbr.rel (0) target = $region49
  $region48: #{refactory_rnn_forward.1} parent=0 // pred_region
    _
  $region49: #{refactory_rnn_forward.1} parent=0 // pred_fallthru
    _

</llo_original>
